<compile_context>
chip_gen: v5e
topology: v5e:2x2
jax: 0.10.0
libtpu: 0.0.40
codegen_flags: <defaults>
</compile_context>

<pallas_src>
import functools

import jax
import jax.numpy as jnp
from jax.experimental import pallas as pl
from jax.experimental.pallas import tpu as pltpu

_BN_EPS = 1e-5
_ALIGN = 8  # sublane alignment for the in-kernel padded scratch buffers


# ----------------------------------------------------------------------------- #
# Fused Pallas kernel: shared conv + all heads (both convs), one image per step
# ----------------------------------------------------------------------------- #
def _center_head_kernel(xpad_ref, w0_ref, s0_ref, w1_ref, s1_ref, w2_ref, s2_ref,
                        feat_ref, out_ref, shared_pad, mid_pad, *, H, W):
    """
    xpad_ref : (1, H+2, W+2, Cin)   input image, zero-padded by 1 in the wrapper
    w0_ref   : (9*Cin, C0)          shared conv weights (BN scale folded)
    s0_ref   : (1, C0)              shared conv shift
    w1_ref   : (9*C0, Cmid)         all heads' first-conv weights, concatenated on Cout
    s1_ref   : (1, Cmid)
    w2_ref   : (9, Cmid, Ctot)      all heads' final-conv weights, block-diagonal on Cin
    s2_ref   : (1, Ctot)
    feat_ref : (1, P, C0)           shared feature output (P = H*W)
    out_ref  : (1, P, Ctot)         concatenated head outputs
    shared_pad, mid_pad : VMEM scratch, zero-padded copies of the intermediates
    """
    P = H * W

    # Zero the padded scratch every step (keeps the border at exactly 0 for the
    # 3x3 zero-padding semantics; safe under "parallel" grid semantics / megacore).
    shared_pad[...] = jnp.zeros_like(shared_pad)
    mid_pad[...] = jnp.zeros_like(mid_pad)

    def taps(src, r0, c0):
        """Nine (P, C) tap slabs of a (rows, cols, C) ref/value, in (ky, kx) order."""
        return [src[r0 + ky:r0 + ky + H, c0 + kx:c0 + kx + W, :].reshape(P, -1)
                for ky in range(3) for kx in range(3)]

    # ---- layer 0: shared conv (Cin -> C0), folded BN + ReLU -------------------
    # Single MXU matmul with K = 9*Cin (taps concatenated along lanes).
    x = xpad_ref[0]                                        # (H+2, W+2, Cin)
    slab0 = jnp.concatenate(taps(x, 0, 0), axis=-1)        # (P, 9*Cin)
    y0 = jnp.dot(slab0, w0_ref[...], preferred_element_type=jnp.float32) + s0_ref[...]
    y0 = jnp.maximum(y0, 0.0)                              # (P, C0)
    feat_ref[0] = y0
    # interior store at an 8-aligned sublane offset; border stays zero
    shared_pad[1:1 + H, _ALIGN:_ALIGN + W, :] = y0.reshape(H, W, y0.shape[-1])

    # ---- layer 1: all heads' first conv (C0 -> Cmid), folded BN + ReLU --------
    slab1 = jnp.concatenate(taps(shared_pad, 0, _ALIGN - 1), axis=-1)   # (P, 9*C0)
    y1 = jnp.dot(slab1, w1_ref[...], preferred_element_type=jnp.float32) + s1_ref[...]
    y1 = jnp.maximum(y1, 0.0)                              # (P, Cmid)
    mid_pad[1:1 + H, _ALIGN:_ALIGN + W, :] = y1.reshape(H, W, y1.shape[-1])

    # ---- layer 2: all heads' final conv (block-diagonal Cmid -> Ctot), bias ----
    # K = Cmid (=384) per tap already fills the MXU depth, so accumulate 9 matmuls
    # instead of materializing a (P, 9*Cmid) slab.
    ctot = out_ref.shape[-1]
    acc = jnp.zeros((P, ctot), jnp.float32)
    t = 0
    for ky in range(3):
        for kx in range(3):
            tap = mid_pad[ky:ky + H,
                          _ALIGN - 1 + kx:_ALIGN - 1 + kx + W, :].reshape(P, -1)
            acc = acc + jnp.dot(tap, w2_ref[t], preferred_element_type=jnp.float32)
            t += 1
    out_ref[0] = acc + s2_ref[...]


# ----------------------------------------------------------------------------- #
# Parameter construction (deterministic, synthetic) + packing for the fused kernel
# ----------------------------------------------------------------------------- #
def _make_conv_layer(key, cin, cout, *, bn, relu, bias_const=None):
    """Conv2d(3x3, bias=True) [+ BatchNorm2d folded in eval mode] [+ ReLU]."""
    kw, kb, kg, kbeta = jax.random.split(key, 4)
    w = 0.1 * jax.random.normal(kw, (3, 3, cin, cout), jnp.float32)
    if bias_const is not None:
        b = jnp.full((cout,), bias_const, jnp.float32)
    else:
        b = 0.01 * jax.random.normal(kb, (cout,), jnp.float32)
    if bn:
        # TODO(synk): BatchNorm2d folded with *inference-mode* running stats
        # (mean=0, var=1 as at init); training-mode batch statistics not modeled.
        gamma = 1.0 + 0.1 * jax.random.normal(kg, (cout,), jnp.float32)
        beta = 0.1 * jax.random.normal(kbeta, (cout,), jnp.float32)
        running_mean = jnp.zeros((cout,), jnp.float32)
        running_var = jnp.ones((cout,), jnp.float32)
        scale = gamma / jnp.sqrt(running_var + _BN_EPS)
        w = w * scale                                   # fold BN scale into weights
        shift = scale * (b - running_mean) + beta
    else:
        shift = b
    return dict(w=w, shift=shift, relu=relu)


def init_center_head_params(key, cfg):
    keys = jax.random.split(key, 2)
    params = {}
    # shared_conv: Conv2d(in_channels, share_conv_channel, 3, pad=1) + BN + ReLU
    params["shared"] = _make_conv_layer(
        keys[0], cfg["in_channels"], cfg["share_conv_channel"], bn=True, relu=True)

    # tasks: one SepHead per task (final_kernel=3, bn=True)
    tasks = []
    task_keys = jax.random.split(keys[1], len(cfg["num_classes"]))
    for num_cls, tkey in zip(cfg["num_classes"], task_keys):
        heads = dict(cfg["common_heads"])
        heads["hm"] = (num_cls, cfg["num_hm_conv"])
        head_params = {}
        hkeys = jax.random.split(tkey, len(heads))
        for (name, (out_ch, num_conv)), hkey in zip(sorted(heads.items()), hkeys):
            lkeys = jax.random.split(hkey, num_conv)
            layers = []
            cin = cfg["share_conv_channel"]
            for i in range(num_conv - 1):
                layers.append(_make_conv_layer(
                    lkeys[i], cin, cfg["head_conv"], bn=True, relu=True))
                cin = cfg["head_conv"]
            # final conv: no BN, no ReLU; hm final bias initialized to init_bias
            bias_const = cfg["init_bias"] if name == "hm" else None
            layers.append(_make_conv_layer(
                lkeys[-1], cin, out_ch, bn=False, relu=False, bias_const=bias_const))
            head_params[name] = layers
        tasks.append(head_params)
    params["tasks"] = tasks
    return params


def pack_center_head_params(params, cfg):
    """Concatenate all heads (across tasks) into the fused-kernel operands."""
    cin = cfg["in_channels"]
    c0 = cfg["share_conv_channel"]
    hc = cfg["head_conv"]

    shared = params["shared"]
    w0 = shared["w"].reshape(9 * cin, c0)
    s0 = shared["shift"].reshape(1, c0)

    # flatten heads across tasks in a fixed deterministic order
    flat_heads = []                                   # (task_idx, name, layers)
    for t_idx, task in enumerate(params["tasks"]):
        for name in sorted(task.keys()):
            flat_heads.append((t_idx, name, task[name]))

    n_heads = len(flat_heads)
    cmid = n_heads * hc

    w1_parts, s1_parts, out_sizes = [], [], []
    for _, _, layers in flat_heads:
        # TODO(synk): heads with num_conv != 2 would need extra fused conv stages.
        assert len(layers) == 2, "fused kernel assumes num_conv == 2 per head"
        w1_parts.append(layers[0]["w"])               # (3,3,c0,hc)
        s1_parts.append(layers[0]["shift"])
        out_sizes.append(layers[1]["w"].shape[-1])
    w1 = jnp.concatenate(w1_parts, axis=-1).reshape(9 * c0, cmid)
    s1 = jnp.concatenate(s1_parts, axis=0).reshape(1, cmid)

    ctot = int(sum(out_sizes))
    w2 = jnp.zeros((9, cmid, ctot), jnp.float32)      # block-diagonal final weights
    s2 = jnp.zeros((ctot,), jnp.float32)
    slices = [dict() for _ in params["tasks"]]
    off = 0
    for h_idx, (t_idx, name, layers) in enumerate(flat_heads):
        out_ch = layers[1]["w"].shape[-1]
        w2 = w2.at[:, h_idx * hc:(h_idx + 1) * hc, off:off + out_ch].set(
            layers[1]["w"].reshape(9, hc, out_ch))
        s2 = s2.at[off:off + out_ch].set(layers[1]["shift"])
        slices[t_idx][name] = (off, out_ch)
        off += out_ch

    return dict(w0=w0, s0=s0, w1=w1, s1=s1, w2=w2, s2=s2.reshape(1, ctot),
                slices=slices)


# ----------------------------------------------------------------------------- #
# CenterHead forward (matches the PyTorch module: returns (red_dict, x_shared))
# ----------------------------------------------------------------------------- #
def center_head_forward(packed, x_nchw):
    n, cin, h, w = x_nchw.shape
    assert h % _ALIGN == 0 and w % _ALIGN == 0, "toy kernel assumes H, W multiples of 8"
    c0 = packed["w0"].shape[-1]
    cmid = packed["w1"].shape[-1]
    ctot = packed["w2"].shape[-1]
    p = h * w

    x_nhwc = jnp.transpose(x_nchw, (0, 2, 3, 1))
    xpad = jnp.pad(x_nhwc, ((0, 0), (1, 1), (1, 1), (0, 0)))   # only the raw input is padded

    kernel = functools.partial(_center_head_kernel, H=h, W=w)
    feat_flat, out_flat = pl.pallas_call(
        kernel,
        out_shape=(jax.ShapeDtypeStruct((n, p, c0), jnp.float32),
                   jax.ShapeDtypeStruct((n, p, ctot), jnp.float32)),
        grid=(n,),
        in_specs=[
            pl.BlockSpec((1, h + 2, w + 2, cin), lambda i: (i, 0, 0, 0)),
            pl.BlockSpec((9 * cin, c0), lambda i: (0, 0)),
            pl.BlockSpec((1, c0), lambda i: (0, 0)),
            pl.BlockSpec((9 * c0, cmid), lambda i: (0, 0)),
            pl.BlockSpec((1, cmid), lambda i: (0, 0)),
            pl.BlockSpec((9, cmid, ctot), lambda i: (0, 0, 0)),
            pl.BlockSpec((1, ctot), lambda i: (0, 0)),
        ],
        out_specs=(
            pl.BlockSpec((1, p, c0), lambda i: (i, 0, 0)),
            pl.BlockSpec((1, p, ctot), lambda i: (i, 0, 0)),
        ),
        scratch_shapes=[
            pltpu.VMEM((h + 2, w + 2 * _ALIGN, c0), jnp.float32),
            pltpu.VMEM((h + 2, w + 2 * _ALIGN, cmid), jnp.float32),
        ],
        compiler_params=pltpu.CompilerParams(
            dimension_semantics=("parallel",)),
    )(xpad, packed["w0"], packed["s0"], packed["w1"], packed["s1"],
      packed["w2"], packed["s2"])

    # single NHWC -> NCHW transpose of each concatenated slab, then split per head
    feat = jnp.transpose(feat_flat.reshape(n, h, w, c0), (0, 3, 1, 2))
    outs = jnp.transpose(out_flat.reshape(n, h, w, ctot), (0, 3, 1, 2))
    red_dict = []
    for task_slices in packed["slices"]:
        red_dict.append({name: outs[:, off:off + sz]
                         for name, (off, sz) in task_slices.items()})
    return red_dict, feat


# ----------------------------------------------------------------------------- #
if __name__ == "__main__":
    cfg = dict(
        in_channels=16,
        share_conv_channel=32,
        head_conv=32,                       # SepHead intermediate channels
        common_heads={"reg": (2, 2), "height": (1, 2), "dim": (3, 2),
                      "rot": (2, 2), "vel": (2, 2)},
        num_classes=[1, 2],                 # two tasks
        num_hm_conv=2,
        init_bias=-2.19,
    )

    key = jax.random.PRNGKey(0)
    kp, kx = jax.random.split(key)
    params = init_center_head_params(kp, cfg)
    packed = pack_center_head_params(params, cfg)

    # input follows the PyTorch convention: NCHW
    x = jax.random.normal(kx, (2, cfg["in_channels"], 16, 16), jnp.float32)

    red_dict, shared_feat = center_head_forward(packed, x)
    jax.block_until_ready((red_dict, shared_feat))

    # light sanity checks on shapes / dict structure
    assert shared_feat.shape == (2, cfg["share_conv_channel"], 16, 16)
    assert len(red_dict) == len(cfg["num_classes"])
    for t, num_cls in enumerate(cfg["num_classes"]):
        assert red_dict[t]["hm"].shape == (2, num_cls, 16, 16)
        assert red_dict[t]["reg"].shape == (2, 2, 16, 16)
        assert red_dict[t]["height"].shape == (2, 1, 16, 16)
        assert red_dict[t]["dim"].shape == (2, 3, 16, 16)
        assert red_dict[t]["rot"].shape == (2, 2, 16, 16)
        assert red_dict[t]["vel"].shape == (2, 2, 16, 16)

    print("KERNEL_OK")
</pallas_src>

<mosaic_0001>
module attributes {stable_mosaic.version = 11 : i64} {
  func.func @_center_head_kernel(%arg0: i32, %arg1: memref<1x18x18x16xf32, #tpu.memory_space<vmem>>, %arg2: memref<144x32xf32, #tpu.memory_space<vmem>>, %arg3: memref<1x32xf32, #tpu.memory_space<vmem>>, %arg4: memref<288x384xf32, #tpu.memory_space<vmem>>, %arg5: memref<1x384xf32, #tpu.memory_space<vmem>>, %arg6: memref<9x384x23xf32, #tpu.memory_space<vmem>>, %arg7: memref<1x23xf32, #tpu.memory_space<vmem>>, %arg8: memref<1x256x32xf32, #tpu.memory_space<vmem>>, %arg9: memref<1x256x23xf32, #tpu.memory_space<vmem>>, %arg10: memref<18x32x32xf32, #tpu.memory_space<vmem>>, %arg11: memref<18x32x384xf32, #tpu.memory_space<vmem>>) attributes {dimension_semantics = [#tpu.dimension_semantics<parallel>], iteration_bounds = array<i64: 2>, scalar_prefetch = 0 : i64, scratch_operands = 2 : i64, tpu.core_type = #tpu.core_type<tc>, window_params = [{transform_indices = @transform_0, window_bounds = array<i64: 1, 18, 18, 16>}, {pipeline_mode = #tpu.pipeline_mode<synchronous>, transform_indices = @transform_1, window_bounds = array<i64: 144, 32>}, {pipeline_mode = #tpu.pipeline_mode<synchronous>, transform_indices = @transform_2, window_bounds = array<i64: 1, 32>}, {pipeline_mode = #tpu.pipeline_mode<synchronous>, transform_indices = @transform_3, window_bounds = array<i64: 288, 384>}, {pipeline_mode = #tpu.pipeline_mode<synchronous>, transform_indices = @transform_4, window_bounds = array<i64: 1, 384>}, {pipeline_mode = #tpu.pipeline_mode<synchronous>, transform_indices = @transform_5, window_bounds = array<i64: 9, 384, 23>}, {pipeline_mode = #tpu.pipeline_mode<synchronous>, transform_indices = @transform_6, window_bounds = array<i64: 1, 23>}, {transform_indices = @transform_7, window_bounds = array<i64: 1, 256, 32>}, {transform_indices = @transform_8, window_bounds = array<i64: 1, 256, 23>}]} {
    %cst = arith.constant 0.000000e+00 : f32
    %0 = vector.broadcast %cst : f32 to vector<18x32x32xf32>
    %c0 = arith.constant 0 : index
    %c0_0 = arith.constant 0 : index
    %c0_1 = arith.constant 0 : index
    %1 = vector.load %arg10[%c0, %c0_0, %c0_1] : memref<18x32x32xf32, #tpu.memory_space<vmem>>, vector<18x32x32xf32>
    tpu.vector_store %arg10[%c0, %c0_0, %c0_1], %0 {strides = array<i32>} : memref<18x32x32xf32, #tpu.memory_space<vmem>>, vector<18x32x32xf32>,
    %cst_2 = arith.constant 0.000000e+00 : f32
    %2 = vector.broadcast %cst_2 : f32 to vector<18x32x384xf32>
    %c0_3 = arith.constant 0 : index
    %c0_4 = arith.constant 0 : index
    %c0_5 = arith.constant 0 : index
    %3 = vector.load %arg11[%c0_3, %c0_4, %c0_5] : memref<18x32x384xf32, #tpu.memory_space<vmem>>, vector<18x32x384xf32>
    tpu.vector_store %arg11[%c0_3, %c0_4, %c0_5], %2 {strides = array<i32>} : memref<18x32x384xf32, #tpu.memory_space<vmem>>, vector<18x32x384xf32>,
    %c0_6 = arith.constant 0 : index
    %c0_7 = arith.constant 0 : index
    %c0_8 = arith.constant 0 : index
    %c0_9 = arith.constant 0 : index
    %4 = vector.load %arg1[%c0_6, %c0_7, %c0_8, %c0_9] : memref<1x18x18x16xf32, #tpu.memory_space<vmem>>, vector<1x18x18x16xf32>
    %5 = vector.shape_cast %4 : vector<1x18x18x16xf32> to vector<18x18x16xf32>
    %6 = vector.extract_strided_slice %5 {offsets = [0, 0, 0], sizes = [16, 16, 16], strides = [1, 1, 1]} : vector<18x18x16xf32> to vector<16x16x16xf32>
    %7 = vector.shape_cast %6 : vector<16x16x16xf32> to vector<256x16xf32>
    %8 = vector.extract_strided_slice %5 {offsets = [0, 1, 0], sizes = [16, 16, 16], strides = [1, 1, 1]} : vector<18x18x16xf32> to vector<16x16x16xf32>
    %9 = vector.shape_cast %8 : vector<16x16x16xf32> to vector<256x16xf32>
    %10 = vector.extract_strided_slice %5 {offsets = [0, 2, 0], sizes = [16, 16, 16], strides = [1, 1, 1]} : vector<18x18x16xf32> to vector<16x16x16xf32>
    %11 = vector.shape_cast %10 : vector<16x16x16xf32> to vector<256x16xf32>
    %12 = vector.extract_strided_slice %5 {offsets = [1, 0, 0], sizes = [16, 16, 16], strides = [1, 1, 1]} : vector<18x18x16xf32> to vector<16x16x16xf32>
    %13 = vector.shape_cast %12 : vector<16x16x16xf32> to vector<256x16xf32>
    %14 = vector.extract_strided_slice %5 {offsets = [1, 1, 0], sizes = [16, 16, 16], strides = [1, 1, 1]} : vector<18x18x16xf32> to vector<16x16x16xf32>
    %15 = vector.shape_cast %14 : vector<16x16x16xf32> to vector<256x16xf32>
    %16 = vector.extract_strided_slice %5 {offsets = [1, 2, 0], sizes = [16, 16, 16], strides = [1, 1, 1]} : vector<18x18x16xf32> to vector<16x16x16xf32>
    %17 = vector.shape_cast %16 : vector<16x16x16xf32> to vector<256x16xf32>
    %18 = vector.extract_strided_slice %5 {offsets = [2, 0, 0], sizes = [16, 16, 16], strides = [1, 1, 1]} : vector<18x18x16xf32> to vector<16x16x16xf32>
    %19 = vector.shape_cast %18 : vector<16x16x16xf32> to vector<256x16xf32>
    %20 = vector.extract_strided_slice %5 {offsets = [2, 1, 0], sizes = [16, 16, 16], strides = [1, 1, 1]} : vector<18x18x16xf32> to vector<16x16x16xf32>
    %21 = vector.shape_cast %20 : vector<16x16x16xf32> to vector<256x16xf32>
    %22 = vector.extract_strided_slice %5 {offsets = [2, 2, 0], sizes = [16, 16, 16], strides = [1, 1, 1]} : vector<18x18x16xf32> to vector<16x16x16xf32>
    %23 = vector.shape_cast %22 : vector<16x16x16xf32> to vector<256x16xf32>
    %24 = tpu.concatenate %7, %9, %11, %13, %15, %17, %19, %21, %23 in 1 : vector<256x16xf32>, vector<256x16xf32>, vector<256x16xf32>, vector<256x16xf32>, vector<256x16xf32>, vector<256x16xf32>, vector<256x16xf32>, vector<256x16xf32>, vector<256x16xf32> -> vector<256x144xf32>
    %c0_10 = arith.constant 0 : index
    %c0_11 = arith.constant 0 : index
    %25 = vector.load %arg2[%c0_10, %c0_11] : memref<144x32xf32, #tpu.memory_space<vmem>>, vector<144x32xf32>
    %cst_12 = arith.constant dense<0.000000e+00> : vector<256x32xf32>
    %26 = tpu.matmul %24, %25, %cst_12 {dimension_numbers = #tpu.dot_dimension_numbers<[1], [0], [0], [1], [0, 0, 1, 1], [], []>} : vector<256x144xf32>, vector<144x32xf32>, vector<256x32xf32> -> vector<256x32xf32>
    %c0_13 = arith.constant 0 : index
    %c0_14 = arith.constant 0 : index
    %27 = vector.load %arg3[%c0_13, %c0_14] : memref<1x32xf32, #tpu.memory_space<vmem>>, vector<1x32xf32>
    %28 = vector.broadcast %27 : vector<1x32xf32> to vector<256x32xf32>
    %29 = arith.addf %26, %28 : vector<256x32xf32>
    %cst_15 = arith.constant 0.000000e+00 : f32
    %30 = vector.broadcast %cst_15 : f32 to vector<256x32xf32>
    %31 = arith.maximumf %29, %30 : vector<256x32xf32>
    %c0_16 = arith.constant 0 : index
    %c0_17 = arith.constant 0 : index
    %c0_18 = arith.constant 0 : index
    %32 = vector.load %arg8[%c0_16, %c0_17, %c0_18] : memref<1x256x32xf32, #tpu.memory_space<vmem>>, vector<1x256x32xf32>
    %33 = vector.shape_cast %32 : vector<1x256x32xf32> to vector<256x32xf32>
    %34 = vector.shape_cast %31 : vector<256x32xf32> to vector<1x256x32xf32>
    tpu.vector_store %arg8[%c0_16, %c0_17, %c0_18], %34 {strides = array<i32>} : memref<1x256x32xf32, #tpu.memory_space<vmem>>, vector<1x256x32xf32>,
    %35 = vector.shape_cast %31 : vector<256x32xf32> to vector<16x16x32xf32>
    %c1 = arith.constant 1 : index
    %c8 = arith.constant 8 : index
    %c0_19 = arith.constant 0 : index
    %36 = vector.load %arg10[%c1, %c8, %c0_19] : memref<18x32x32xf32, #tpu.memory_space<vmem>>, vector<16x16x32xf32>
    tpu.vector_store %arg10[%c1, %c8, %c0_19], %35 {strides = array<i32>} : memref<18x32x32xf32, #tpu.memory_space<vmem>>, vector<16x16x32xf32>,
    %c0_20 = arith.constant 0 : index
    %c7 = arith.constant 7 : index
    %c0_21 = arith.constant 0 : index
    %37 = vector.load %arg10[%c0_20, %c7, %c0_21] : memref<18x32x32xf32, #tpu.memory_space<vmem>>, vector<16x16x32xf32>
    %38 = vector.shape_cast %37 : vector<16x16x32xf32> to vector<256x32xf32>
    %c0_22 = arith.constant 0 : index
    %c8_23 = arith.constant 8 : index
    %c0_24 = arith.constant 0 : index
    %39 = vector.load %arg10[%c0_22, %c8_23, %c0_24] : memref<18x32x32xf32, #tpu.memory_space<vmem>>, vector<16x16x32xf32>
    %40 = vector.shape_cast %39 : vector<16x16x32xf32> to vector<256x32xf32>
    %c0_25 = arith.constant 0 : index
    %c9 = arith.constant 9 : index
    %c0_26 = arith.constant 0 : index
    %41 = vector.load %arg10[%c0_25, %c9, %c0_26] : memref<18x32x32xf32, #tpu.memory_space<vmem>>, vector<16x16x32xf32>
    %42 = vector.shape_cast %41 : vector<16x16x32xf32> to vector<256x32xf32>
    %c1_27 = arith.constant 1 : index
    %c7_28 = arith.constant 7 : index
    %c0_29 = arith.constant 0 : index
    %43 = vector.load %arg10[%c1_27, %c7_28, %c0_29] : memref<18x32x32xf32, #tpu.memory_space<vmem>>, vector<16x16x32xf32>
    %44 = vector.shape_cast %43 : vector<16x16x32xf32> to vector<256x32xf32>
    %c1_30 = arith.constant 1 : index
    %c8_31 = arith.constant 8 : index
    %c0_32 = arith.constant 0 : index
    %45 = vector.load %arg10[%c1_30, %c8_31, %c0_32] : memref<18x32x32xf32, #tpu.memory_space<vmem>>, vector<16x16x32xf32>
    %46 = vector.shape_cast %45 : vector<16x16x32xf32> to vector<256x32xf32>
    %c1_33 = arith.constant 1 : index
    %c9_34 = arith.constant 9 : index
    %c0_35 = arith.constant 0 : index
    %47 = vector.load %arg10[%c1_33, %c9_34, %c0_35] : memref<18x32x32xf32, #tpu.memory_space<vmem>>, vector<16x16x32xf32>
    %48 = vector.shape_cast %47 : vector<16x16x32xf32> to vector<256x32xf32>
    %c2 = arith.constant 2 : index
    %c7_36 = arith.constant 7 : index
    %c0_37 = arith.constant 0 : index
    %49 = vector.load %arg10[%c2, %c7_36, %c0_37] : memref<18x32x32xf32, #tpu.memory_space<vmem>>, vector<16x16x32xf32>
    %50 = vector.shape_cast %49 : vector<16x16x32xf32> to vector<256x32xf32>
    %c2_38 = arith.constant 2 : index
    %c8_39 = arith.constant 8 : index
    %c0_40 = arith.constant 0 : index
    %51 = vector.load %arg10[%c2_38, %c8_39, %c0_40] : memref<18x32x32xf32, #tpu.memory_space<vmem>>, vector<16x16x32xf32>
    %52 = vector.shape_cast %51 : vector<16x16x32xf32> to vector<256x32xf32>
    %c2_41 = arith.constant 2 : index
    %c9_42 = arith.constant 9 : index
    %c0_43 = arith.constant 0 : index
    %53 = vector.load %arg10[%c2_41, %c9_42, %c0_43] : memref<18x32x32xf32, #tpu.memory_space<vmem>>, vector<16x16x32xf32>
    %54 = vector.shape_cast %53 : vector<16x16x32xf32> to vector<256x32xf32>
    %55 = tpu.concatenate %38, %40, %42, %44, %46, %48, %50, %52, %54 in 1 : vector<256x32xf32>, vector<256x32xf32>, vector<256x32xf32>, vector<256x32xf32>, vector<256x32xf32>, vector<256x32xf32>, vector<256x32xf32>, vector<256x32xf32>, vector<256x32xf32> -> vector<256x288xf32>
    %c0_44 = arith.constant 0 : index
    %c0_45 = arith.constant 0 : index
    %56 = vector.load %arg4[%c0_44, %c0_45] : memref<288x384xf32, #tpu.memory_space<vmem>>, vector<288x384xf32>
    %cst_46 = arith.constant dense<0.000000e+00> : vector<256x384xf32>
    %57 = tpu.matmul %55, %56, %cst_46 {dimension_numbers = #tpu.dot_dimension_numbers<[1], [0], [0], [1], [0, 0, 1, 1], [], []>} : vector<256x288xf32>, vector<288x384xf32>, vector<256x384xf32> -> vector<256x384xf32>
    %c0_47 = arith.constant 0 : index
    %c0_48 = arith.constant 0 : index
    %58 = vector.load %arg5[%c0_47, %c0_48] : memref<1x384xf32, #tpu.memory_space<vmem>>, vector<1x384xf32>
    %59 = vector.broadcast %58 : vector<1x384xf32> to vector<256x384xf32>
    %60 = arith.addf %57, %59 : vector<256x384xf32>
    %cst_49 = arith.constant 0.000000e+00 : f32
    %61 = vector.broadcast %cst_49 : f32 to vector<256x384xf32>
    %62 = arith.maximumf %60, %61 : vector<256x384xf32>
    %63 = vector.shape_cast %62 : vector<256x384xf32> to vector<16x16x384xf32>
    %c1_50 = arith.constant 1 : index
    %c8_51 = arith.constant 8 : index
    %c0_52 = arith.constant 0 : index
    %64 = vector.load %arg11[%c1_50, %c8_51, %c0_52] : memref<18x32x384xf32, #tpu.memory_space<vmem>>, vector<16x16x384xf32>
    tpu.vector_store %arg11[%c1_50, %c8_51, %c0_52], %63 {strides = array<i32>} : memref<18x32x384xf32, #tpu.memory_space<vmem>>, vector<16x16x384xf32>,
    %cst_53 = arith.constant 0.000000e+00 : f32
    %65 = vector.broadcast %cst_53 : f32 to vector<256x23xf32>
    %c0_54 = arith.constant 0 : index
    %c7_55 = arith.constant 7 : index
    %c0_56 = arith.constant 0 : index
    %66 = vector.load %arg11[%c0_54, %c7_55, %c0_56] : memref<18x32x384xf32, #tpu.memory_space<vmem>>, vector<16x16x384xf32>
    %67 = vector.shape_cast %66 : vector<16x16x384xf32> to vector<256x384xf32>
    %c0_57 = arith.constant 0 : index
    %c0_58 = arith.constant 0 : index
    %c0_59 = arith.constant 0 : index
    %68 = vector.load %arg6[%c0_57, %c0_58, %c0_59] : memref<9x384x23xf32, #tpu.memory_space<vmem>>, vector<1x384x23xf32>
    %69 = vector.shape_cast %68 : vector<1x384x23xf32> to vector<384x23xf32>
    %cst_60 = arith.constant dense<0.000000e+00> : vector<256x23xf32>
    %70 = tpu.matmul %67, %69, %cst_60 {dimension_numbers = #tpu.dot_dimension_numbers<[1], [0], [0], [1], [0, 0, 1, 1], [], []>} : vector<256x384xf32>, vector<384x23xf32>, vector<256x23xf32> -> vector<256x23xf32>
    %71 = arith.addf %65, %70 : vector<256x23xf32>
    %c0_61 = arith.constant 0 : index
    %c8_62 = arith.constant 8 : index
    %c0_63 = arith.constant 0 : index
    %72 = vector.load %arg11[%c0_61, %c8_62, %c0_63] : memref<18x32x384xf32, #tpu.memory_space<vmem>>, vector<16x16x384xf32>
    %73 = vector.shape_cast %72 : vector<16x16x384xf32> to vector<256x384xf32>
    %c1_64 = arith.constant 1 : index
    %c0_65 = arith.constant 0 : index
    %c0_66 = arith.constant 0 : index
    %74 = vector.load %arg6[%c1_64, %c0_65, %c0_66] : memref<9x384x23xf32, #tpu.memory_space<vmem>>, vector<1x384x23xf32>
    %75 = vector.shape_cast %74 : vector<1x384x23xf32> to vector<384x23xf32>
    %cst_67 = arith.constant dense<0.000000e+00> : vector<256x23xf32>
    %76 = tpu.matmul %73, %75, %cst_67 {dimension_numbers = #tpu.dot_dimension_numbers<[1], [0], [0], [1], [0, 0, 1, 1], [], []>} : vector<256x384xf32>, vector<384x23xf32>, vector<256x23xf32> -> vector<256x23xf32>
    %77 = arith.addf %71, %76 : vector<256x23xf32>
    %c0_68 = arith.constant 0 : index
    %c9_69 = arith.constant 9 : index
    %c0_70 = arith.constant 0 : index
    %78 = vector.load %arg11[%c0_68, %c9_69, %c0_70] : memref<18x32x384xf32, #tpu.memory_space<vmem>>, vector<16x16x384xf32>
    %79 = vector.shape_cast %78 : vector<16x16x384xf32> to vector<256x384xf32>
    %c2_71 = arith.constant 2 : index
    %c0_72 = arith.constant 0 : index
    %c0_73 = arith.constant 0 : index
    %80 = vector.load %arg6[%c2_71, %c0_72, %c0_73] : memref<9x384x23xf32, #tpu.memory_space<vmem>>, vector<1x384x23xf32>
    %81 = vector.shape_cast %80 : vector<1x384x23xf32> to vector<384x23xf32>
    %cst_74 = arith.constant dense<0.000000e+00> : vector<256x23xf32>
    %82 = tpu.matmul %79, %81, %cst_74 {dimension_numbers = #tpu.dot_dimension_numbers<[1], [0], [0], [1], [0, 0, 1, 1], [], []>} : vector<256x384xf32>, vector<384x23xf32>, vector<256x23xf32> -> vector<256x23xf32>
    %83 = arith.addf %77, %82 : vector<256x23xf32>
    %c1_75 = arith.constant 1 : index
    %c7_76 = arith.constant 7 : index
    %c0_77 = arith.constant 0 : index
    %84 = vector.load %arg11[%c1_75, %c7_76, %c0_77] : memref<18x32x384xf32, #tpu.memory_space<vmem>>, vector<16x16x384xf32>
    %85 = vector.shape_cast %84 : vector<16x16x384xf32> to vector<256x384xf32>
    %c3 = arith.constant 3 : index
    %c0_78 = arith.constant 0 : index
    %c0_79 = arith.constant 0 : index
    %86 = vector.load %arg6[%c3, %c0_78, %c0_79] : memref<9x384x23xf32, #tpu.memory_space<vmem>>, vector<1x384x23xf32>
    %87 = vector.shape_cast %86 : vector<1x384x23xf32> to vector<384x23xf32>
    %cst_80 = arith.constant dense<0.000000e+00> : vector<256x23xf32>
    %88 = tpu.matmul %85, %87, %cst_80 {dimension_numbers = #tpu.dot_dimension_numbers<[1], [0], [0], [1], [0, 0, 1, 1], [], []>} : vector<256x384xf32>, vector<384x23xf32>, vector<256x23xf32> -> vector<256x23xf32>
    %89 = arith.addf %83, %88 : vector<256x23xf32>
    %c1_81 = arith.constant 1 : index
    %c8_82 = arith.constant 8 : index
    %c0_83 = arith.constant 0 : index
    %90 = vector.load %arg11[%c1_81, %c8_82, %c0_83] : memref<18x32x384xf32, #tpu.memory_space<vmem>>, vector<16x16x384xf32>
    %91 = vector.shape_cast %90 : vector<16x16x384xf32> to vector<256x384xf32>
    %c4 = arith.constant 4 : index
    %c0_84 = arith.constant 0 : index
    %c0_85 = arith.constant 0 : index
    %92 = vector.load %arg6[%c4, %c0_84, %c0_85] : memref<9x384x23xf32, #tpu.memory_space<vmem>>, vector<1x384x23xf32>
    %93 = vector.shape_cast %92 : vector<1x384x23xf32> to vector<384x23xf32>
    %cst_86 = arith.constant dense<0.000000e+00> : vector<256x23xf32>
    %94 = tpu.matmul %91, %93, %cst_86 {dimension_numbers = #tpu.dot_dimension_numbers<[1], [0], [0], [1], [0, 0, 1, 1], [], []>} : vector<256x384xf32>, vector<384x23xf32>, vector<256x23xf32> -> vector<256x23xf32>
    %95 = arith.addf %89, %94 : vector<256x23xf32>
    %c1_87 = arith.constant 1 : index
    %c9_88 = arith.constant 9 : index
    %c0_89 = arith.constant 0 : index
    %96 = vector.load %arg11[%c1_87, %c9_88, %c0_89] : memref<18x32x384xf32, #tpu.memory_space<vmem>>, vector<16x16x384xf32>
    %97 = vector.shape_cast %96 : vector<16x16x384xf32> to vector<256x384xf32>
    %c5 = arith.constant 5 : index
    %c0_90 = arith.constant 0 : index
    %c0_91 = arith.constant 0 : index
    %98 = vector.load %arg6[%c5, %c0_90, %c0_91] : memref<9x384x23xf32, #tpu.memory_space<vmem>>, vector<1x384x23xf32>
    %99 = vector.shape_cast %98 : vector<1x384x23xf32> to vector<384x23xf32>
    %cst_92 = arith.constant dense<0.000000e+00> : vector<256x23xf32>
    %100 = tpu.matmul %97, %99, %cst_92 {dimension_numbers = #tpu.dot_dimension_numbers<[1], [0], [0], [1], [0, 0, 1, 1], [], []>} : vector<256x384xf32>, vector<384x23xf32>, vector<256x23xf32> -> vector<256x23xf32>
    %101 = arith.addf %95, %100 : vector<256x23xf32>
    %c2_93 = arith.constant 2 : index
    %c7_94 = arith.constant 7 : index
    %c0_95 = arith.constant 0 : index
    %102 = vector.load %arg11[%c2_93, %c7_94, %c0_95] : memref<18x32x384xf32, #tpu.memory_space<vmem>>, vector<16x16x384xf32>
    %103 = vector.shape_cast %102 : vector<16x16x384xf32> to vector<256x384xf32>
    %c6 = arith.constant 6 : index
    %c0_96 = arith.constant 0 : index
    %c0_97 = arith.constant 0 : index
    %104 = vector.load %arg6[%c6, %c0_96, %c0_97] : memref<9x384x23xf32, #tpu.memory_space<vmem>>, vector<1x384x23xf32>
    %105 = vector.shape_cast %104 : vector<1x384x23xf32> to vector<384x23xf32>
    %cst_98 = arith.constant dense<0.000000e+00> : vector<256x23xf32>
    %106 = tpu.matmul %103, %105, %cst_98 {dimension_numbers = #tpu.dot_dimension_numbers<[1], [0], [0], [1], [0, 0, 1, 1], [], []>} : vector<256x384xf32>, vector<384x23xf32>, vector<256x23xf32> -> vector<256x23xf32>
    %107 = arith.addf %101, %106 : vector<256x23xf32>
    %c2_99 = arith.constant 2 : index
    %c8_100 = arith.constant 8 : index
    %c0_101 = arith.constant 0 : index
    %108 = vector.load %arg11[%c2_99, %c8_100, %c0_101] : memref<18x32x384xf32, #tpu.memory_space<vmem>>, vector<16x16x384xf32>
    %109 = vector.shape_cast %108 : vector<16x16x384xf32> to vector<256x384xf32>
    %c7_102 = arith.constant 7 : index
    %c0_103 = arith.constant 0 : index
    %c0_104 = arith.constant 0 : index
    %110 = vector.load %arg6[%c7_102, %c0_103, %c0_104] : memref<9x384x23xf32, #tpu.memory_space<vmem>>, vector<1x384x23xf32>
    %111 = vector.shape_cast %110 : vector<1x384x23xf32> to vector<384x23xf32>
    %cst_105 = arith.constant dense<0.000000e+00> : vector<256x23xf32>
    %112 = tpu.matmul %109, %111, %cst_105 {dimension_numbers = #tpu.dot_dimension_numbers<[1], [0], [0], [1], [0, 0, 1, 1], [], []>} : vector<256x384xf32>, vector<384x23xf32>, vector<256x23xf32> -> vector<256x23xf32>
    %113 = arith.addf %107, %112 : vector<256x23xf32>
    %c2_106 = arith.constant 2 : index
    %c9_107 = arith.constant 9 : index
    %c0_108 = arith.constant 0 : index
    %114 = vector.load %arg11[%c2_106, %c9_107, %c0_108] : memref<18x32x384xf32, #tpu.memory_space<vmem>>, vector<16x16x384xf32>
    %115 = vector.shape_cast %114 : vector<16x16x384xf32> to vector<256x384xf32>
    %c8_109 = arith.constant 8 : index
    %c0_110 = arith.constant 0 : index
    %c0_111 = arith.constant 0 : index
    %116 = vector.load %arg6[%c8_109, %c0_110, %c0_111] : memref<9x384x23xf32, #tpu.memory_space<vmem>>, vector<1x384x23xf32>
    %117 = vector.shape_cast %116 : vector<1x384x23xf32> to vector<384x23xf32>
    %cst_112 = arith.constant dense<0.000000e+00> : vector<256x23xf32>
    %118 = tpu.matmul %115, %117, %cst_112 {dimension_numbers = #tpu.dot_dimension_numbers<[1], [0], [0], [1], [0, 0, 1, 1], [], []>} : vector<256x384xf32>, vector<384x23xf32>, vector<256x23xf32> -> vector<256x23xf32>
    %119 = arith.addf %113, %118 : vector<256x23xf32>
    %c0_113 = arith.constant 0 : index
    %c0_114 = arith.constant 0 : index
    %120 = vector.load %arg7[%c0_113, %c0_114] : memref<1x23xf32, #tpu.memory_space<vmem>>, vector<1x23xf32>
    %121 = vector.broadcast %120 : vector<1x23xf32> to vector<256x23xf32>
    %122 = arith.addf %119, %121 : vector<256x23xf32>
    %c0_115 = arith.constant 0 : index
    %c0_116 = arith.constant 0 : index
    %c0_117 = arith.constant 0 : index
    %123 = vector.load %arg9[%c0_115, %c0_116, %c0_117] : memref<1x256x23xf32, #tpu.memory_space<vmem>>, vector<1x256x23xf32>
    %124 = vector.shape_cast %123 : vector<1x256x23xf32> to vector<256x23xf32>
    %125 = vector.shape_cast %122 : vector<256x23xf32> to vector<1x256x23xf32>
    tpu.vector_store %arg9[%c0_115, %c0_116, %c0_117], %125 {strides = array<i32>} : memref<1x256x23xf32, #tpu.memory_space<vmem>>, vector<1x256x23xf32>,
    return
  }
  func.func @transform_0(%arg0: i32) -> (i32, i32, i32, i32) {
    %c0_i32 = arith.constant 0 : i32
    %c0_i32_0 = arith.constant 0 : i32
    %c0_i32_1 = arith.constant 0 : i32
    %c0_i32_2 = arith.constant 0 : i32
    return %arg0, %c0_i32, %c0_i32_0, %c0_i32_1 : i32, i32, i32, i32
  }
  func.func @transform_1(%arg0: i32) -> (i32, i32) {
    %c0_i32 = arith.constant 0 : i32
    %c0_i32_0 = arith.constant 0 : i32
    %c0_i32_1 = arith.constant 0 : i32
    return %c0_i32, %c0_i32_0 : i32, i32
  }
  func.func @transform_2(%arg0: i32) -> (i32, i32) {
    %c0_i32 = arith.constant 0 : i32
    %c0_i32_0 = arith.constant 0 : i32
    %c0_i32_1 = arith.constant 0 : i32
    return %c0_i32, %c0_i32_0 : i32, i32
  }
  func.func @transform_3(%arg0: i32) -> (i32, i32) {
    %c0_i32 = arith.constant 0 : i32
    %c0_i32_0 = arith.constant 0 : i32
    %c0_i32_1 = arith.constant 0 : i32
    return %c0_i32, %c0_i32_0 : i32, i32
  }
  func.func @transform_4(%arg0: i32) -> (i32, i32) {
    %c0_i32 = arith.constant 0 : i32
    %c0_i32_0 = arith.constant 0 : i32
    %c0_i32_1 = arith.constant 0 : i32
    return %c0_i32, %c0_i32_0 : i32, i32
  }
  func.func @transform_5(%arg0: i32) -> (i32, i32, i32) {
    %c0_i32 = arith.constant 0 : i32
    %c0_i32_0 = arith.constant 0 : i32
    %c0_i32_1 = arith.constant 0 : i32
    %c0_i32_2 = arith.constant 0 : i32
    return %c0_i32, %c0_i32_0, %c0_i32_1 : i32, i32, i32
  }
  func.func @transform_6(%arg0: i32) -> (i32, i32) {
    %c0_i32 = arith.constant 0 : i32
    %c0_i32_0 = arith.constant 0 : i32
    %c0_i32_1 = arith.constant 0 : i32
    return %c0_i32, %c0_i32_0 : i32, i32
  }
  func.func @transform_7(%arg0: i32) -> (i32, i32, i32) {
    %c0_i32 = arith.constant 0 : i32
    %c0_i32_0 = arith.constant 0 : i32
    %c0_i32_1 = arith.constant 0 : i32
    return %arg0, %c0_i32, %c0_i32_0 : i32, i32, i32
  }
  func.func @transform_8(%arg0: i32) -> (i32, i32, i32) {
    %c0_i32 = arith.constant 0 : i32
    %c0_i32_0 = arith.constant 0 : i32
    %c0_i32_1 = arith.constant 0 : i32
    return %arg0, %c0_i32, %c0_i32_0 : i32, i32, i32
  }
}

</mosaic_0001>

<llo_original>
// kernel: tpu_custom_call.1
$region0: #{tpu_custom_call.1}
  #allocation0 [shape = 'u32[]', space=smem, size = 0x4, offset = 0x4, fixed_abs, tag = 'smem constant byte address 0x4 - core index']
  #allocation1 [shape = 'u32[72,128]{1,0:T(1,128)}', space=vmem, size = 0x9000, scoped, tag = 'internal scratch']
  #allocation2 [shape = 'f32[18,32,32]{2,1,0:T(8,128)}', space=vmem, size = 0x48000, scoped, tag = 'scratch operand']
  #allocation3 [shape = 'f32[18,32,384]{2,1,0:T(8,128)}', space=vmem, size = 0xd8000, scoped, tag = 'scratch operand']
  %s0 = inlined_call_operand.vmem [shape: f32[2,18,18,16], index: 0, kind: input, shape index: {}]
  %s1 = inlined_call_operand.vmem [shape: f32[144,32], index: 1, kind: input, shape index: {}]
  %s2 = inlined_call_operand.vmem [shape: f32[1,32], index: 2, kind: input, shape index: {}]
  %s3 = inlined_call_operand.vmem [shape: f32[288,384], index: 3, kind: input, shape index: {}]
  %s4 = inlined_call_operand.vmem [shape: f32[1,384], index: 4, kind: input, shape index: {}]
  %s5 = inlined_call_operand.vmem [shape: f32[9,384,23], index: 5, kind: input, shape index: {}]
  %s6 = inlined_call_operand.vmem [shape: f32[1,23], index: 6, kind: input, shape index: {}]
  %s7 = inlined_call_operand.vmem [shape: f32[2,256,32], index: 7, kind: output, shape index: {0}]
  %s8 = inlined_call_operand.vmem [shape: f32[2,256,23], index: 8, kind: output, shape index: {1}]
  %9 = xla_tuple %s7, %s8
  %s10 = sld [smem:[#allocation0]]
  $region69: #{tpu_custom_call.1} parent=0
    _
  %s12 = ssub.s32 1, %s10
  %s13 = scalar_select 0, %s12, %s10
  loop: start=0, step=1, limit=4
  $region2: #{tpu_custom_call.1} parent=0 // loop_pre_header
    _
  $region3: #{tpu_custom_call.1} parent=0 // loop_header
    %s15 = sphi 0, %s19
    %p16 = scmp.ge.s32.totalorder %s15, 4
    %s25 = sphi 0, %s27
    %s28 = sphi 0, %s25
    %s29 = sphi 0, %s28
    %s45 = sphi 0, %s29
    %s49 = sphi 0, %s49
    %s51 = sphi 0, %s49
    %s52 = sphi 0, %s51
    %s66 = sphi 0, %s52
    %s70 = sphi 0, %s70
    %s72 = sphi 0, %s70
    %s73 = sphi 0, %s72
    %s87 = sphi 0, %s73
    %s91 = sphi 0, %s91
    %s93 = sphi 0, %s91
    %s94 = sphi 0, %s93
    %s108 = sphi 0, %s94
    %s112 = sphi 0, %s112
    %s114 = sphi 0, %s112
    %s115 = sphi 0, %s114
    %s129 = sphi 0, %s115
    %s133 = sphi 0, %s133
    %s135 = sphi 0, %s133
    %s136 = sphi 0, %s135
    %s150 = sphi 0, %s136
    %s154 = sphi 0, %s154
    %s156 = sphi 0, %s154
    %s157 = sphi 0, %s156
    %s171 = sphi 0, %s157
    %s177 = sphi 0, %s179
    %s180 = sphi 0, %s177
    %s181 = sphi 0, %s180
    %s197 = sphi 0, %s181
    %s203 = sphi 0, %s205
    %s206 = sphi 0, %s203
    %s207 = sphi 0, %s206
    %s223 = sphi 0, %s207
  $region4: #{tpu_custom_call.1} parent=0 // loop_header_branch
    %18 = sbr.rel (%p16) target = $region8
  $region5: #{tpu_custom_call.1} parent=0 // loop_body
    %s20 = ssub.s32 %s15, 1
    %s21 = ssub.s32 %s15, 2
    %s22 = sadd.s32 %s15, 1
    %s23 = ssub.s32 %s15, %s22
    %p24 = scmp.eq.s32.totalorder %s23, 0
    %s26 = sadd.s32 %s25, 1
    %s27 = scalar_select %p24, %s25, %s26
    %p30 = pneg %p24
    %p31 = scmp.eq.s32.totalorder %s15, 1
    %p32 = por %p30, %p31
    %p33 = scmp.ne.s32.totalorder %s25, %s28
    %p34 = scmp.eq.s32.totalorder %s15, 0
    %p35 = por %p33, %p34
    %p36 = scmp.ne.s32.totalorder %s25, %s28
    %p37 = scmp.eq.s32.totalorder %s20, 1
    %p38 = por %p36, %p37
    %p39 = scmp.ne.s32.totalorder %s28, %s29
    %p40 = scmp.eq.s32.totalorder %s20, 0
    %p41 = por %p39, %p40
    %p42 = scmp.ne.s32.totalorder %s28, %s29
    %p43 = scmp.eq.s32.totalorder %s21, 1
    %p44 = por %p42, %p43
    %p46 = scmp.ne.s32.totalorder %s29, %s45
    %p47 = scmp.eq.s32.totalorder %s21, 0
    %p48 = por %p46, %p47
    %s50 = sadd.s32 %s49, 1
    %p53 = scmp.eq.s32.totalorder %s15, 1
    %p54 = scmp.ne.s32.totalorder %s49, %s51
    %p55 = scmp.eq.s32.totalorder %s15, 0
    %p56 = por %p54, %p55
    %p57 = scmp.ne.s32.totalorder %s49, %s51
    %p58 = scmp.eq.s32.totalorder %s20, 1
    %p59 = por %p57, %p58
    %p60 = scmp.ne.s32.totalorder %s51, %s52
    %p61 = scmp.eq.s32.totalorder %s20, 0
    %p62 = por %p60, %p61
    %p63 = scmp.ne.s32.totalorder %s51, %s52
    %p64 = scmp.eq.s32.totalorder %s21, 1
    %p65 = por %p63, %p64
    %p67 = scmp.ne.s32.totalorder %s52, %s66
    %p68 = scmp.eq.s32.totalorder %s21, 0
    %p69 = por %p67, %p68
    %s71 = sadd.s32 %s70, 1
    %p74 = scmp.eq.s32.totalorder %s15, 1
    %p75 = scmp.ne.s32.totalorder %s70, %s72
    %p76 = scmp.eq.s32.totalorder %s15, 0
    %p77 = por %p75, %p76
    %p78 = scmp.ne.s32.totalorder %s70, %s72
    %p79 = scmp.eq.s32.totalorder %s20, 1
    %p80 = por %p78, %p79
    %p81 = scmp.ne.s32.totalorder %s72, %s73
    %p82 = scmp.eq.s32.totalorder %s20, 0
    %p83 = por %p81, %p82
    %p84 = scmp.ne.s32.totalorder %s72, %s73
    %p85 = scmp.eq.s32.totalorder %s21, 1
    %p86 = por %p84, %p85
    %p88 = scmp.ne.s32.totalorder %s73, %s87
    %p89 = scmp.eq.s32.totalorder %s21, 0
    %p90 = por %p88, %p89
    %s92 = sadd.s32 %s91, 1
    %p95 = scmp.eq.s32.totalorder %s15, 1
    %p96 = scmp.ne.s32.totalorder %s91, %s93
    %p97 = scmp.eq.s32.totalorder %s15, 0
    %p98 = por %p96, %p97
    %p99 = scmp.ne.s32.totalorder %s91, %s93
    %p100 = scmp.eq.s32.totalorder %s20, 1
    %p101 = por %p99, %p100
    %p102 = scmp.ne.s32.totalorder %s93, %s94
    %p103 = scmp.eq.s32.totalorder %s20, 0
    %p104 = por %p102, %p103
    %p105 = scmp.ne.s32.totalorder %s93, %s94
    %p106 = scmp.eq.s32.totalorder %s21, 1
    %p107 = por %p105, %p106
    %p109 = scmp.ne.s32.totalorder %s94, %s108
    %p110 = scmp.eq.s32.totalorder %s21, 0
    %p111 = por %p109, %p110
    %s113 = sadd.s32 %s112, 1
    %p116 = scmp.eq.s32.totalorder %s15, 1
    %p117 = scmp.ne.s32.totalorder %s112, %s114
    %p118 = scmp.eq.s32.totalorder %s15, 0
    %p119 = por %p117, %p118
    %p120 = scmp.ne.s32.totalorder %s112, %s114
    %p121 = scmp.eq.s32.totalorder %s20, 1
    %p122 = por %p120, %p121
    %p123 = scmp.ne.s32.totalorder %s114, %s115
    %p124 = scmp.eq.s32.totalorder %s20, 0
    %p125 = por %p123, %p124
    %p126 = scmp.ne.s32.totalorder %s114, %s115
    %p127 = scmp.eq.s32.totalorder %s21, 1
    %p128 = por %p126, %p127
    %p130 = scmp.ne.s32.totalorder %s115, %s129
    %p131 = scmp.eq.s32.totalorder %s21, 0
    %p132 = por %p130, %p131
    %s134 = sadd.s32 %s133, 1
    %p137 = scmp.eq.s32.totalorder %s15, 1
    %p138 = scmp.ne.s32.totalorder %s133, %s135
    %p139 = scmp.eq.s32.totalorder %s15, 0
    %p140 = por %p138, %p139
    %p141 = scmp.ne.s32.totalorder %s133, %s135
    %p142 = scmp.eq.s32.totalorder %s20, 1
    %p143 = por %p141, %p142
    %p144 = scmp.ne.s32.totalorder %s135, %s136
    %p145 = scmp.eq.s32.totalorder %s20, 0
    %p146 = por %p144, %p145
    %p147 = scmp.ne.s32.totalorder %s135, %s136
    %p148 = scmp.eq.s32.totalorder %s21, 1
    %p149 = por %p147, %p148
    %p151 = scmp.ne.s32.totalorder %s136, %s150
    %p152 = scmp.eq.s32.totalorder %s21, 0
    %p153 = por %p151, %p152
    %s155 = sadd.s32 %s154, 1
    %p158 = scmp.eq.s32.totalorder %s15, 1
    %p159 = scmp.ne.s32.totalorder %s154, %s156
    %p160 = scmp.eq.s32.totalorder %s15, 0
    %p161 = por %p159, %p160
    %p162 = scmp.ne.s32.totalorder %s154, %s156
    %p163 = scmp.eq.s32.totalorder %s20, 1
    %p164 = por %p162, %p163
    %p165 = scmp.ne.s32.totalorder %s156, %s157
    %p166 = scmp.eq.s32.totalorder %s20, 0
    %p167 = por %p165, %p166
    %p168 = scmp.ne.s32.totalorder %s156, %s157
    %p169 = scmp.eq.s32.totalorder %s21, 1
    %p170 = por %p168, %p169
    %p172 = scmp.ne.s32.totalorder %s157, %s171
    %p173 = scmp.eq.s32.totalorder %s21, 0
    %p174 = por %p172, %p173
    %s175 = ssub.s32 %s15, %s22
    %p176 = scmp.eq.s32.totalorder %s175, 0
    %s178 = sadd.s32 %s177, 1
    %s179 = scalar_select %p176, %s177, %s178
    %p182 = pneg %p176
    %p183 = scmp.eq.s32.totalorder %s15, 1
    %p184 = por %p182, %p183
    %p185 = scmp.ne.s32.totalorder %s177, %s180
    %p186 = scmp.eq.s32.totalorder %s15, 0
    %p187 = por %p185, %p186
    %p188 = scmp.ne.s32.totalorder %s177, %s180
    %p189 = scmp.eq.s32.totalorder %s20, 1
    %p190 = por %p188, %p189
    %p191 = scmp.ne.s32.totalorder %s180, %s181
    %p192 = scmp.eq.s32.totalorder %s20, 0
    %p193 = por %p191, %p192
    %p194 = scmp.ne.s32.totalorder %s180, %s181
    %p195 = scmp.eq.s32.totalorder %s21, 1
    %p196 = por %p194, %p195
    %p198 = scmp.ne.s32.totalorder %s181, %s197
    %p199 = scmp.eq.s32.totalorder %s21, 0
    %p200 = por %p198, %p199
    %s201 = ssub.s32 %s15, %s22
    %p202 = scmp.eq.s32.totalorder %s201, 0
    %s204 = sadd.s32 %s203, 1
    %s205 = scalar_select %p202, %s203, %s204
    %p208 = pneg %p202
    %p209 = scmp.eq.s32.totalorder %s15, 1
    %p210 = por %p208, %p209
    %p211 = scmp.ne.s32.totalorder %s203, %s206
    %p212 = scmp.eq.s32.totalorder %s15, 0
    %p213 = por %p211, %p212
    %p214 = scmp.ne.s32.totalorder %s203, %s206
    %p215 = scmp.eq.s32.totalorder %s20, 1
    %p216 = por %p214, %p215
    %p217 = scmp.ne.s32.totalorder %s206, %s207
    %p218 = scmp.eq.s32.totalorder %s20, 0
    %p219 = por %p217, %p218
    %p220 = scmp.ne.s32.totalorder %s206, %s207
    %p221 = scmp.eq.s32.totalorder %s21, 1
    %p222 = por %p220, %p221
    %p224 = scmp.ne.s32.totalorder %s207, %s223
    %p225 = scmp.eq.s32.totalorder %s21, 0
    %p226 = por %p224, %p225
    %p227 = scmp.le.s32.totalorder 1, %s15
    %p228 = scmp.lt.s32.totalorder %s15, 3
    %p229 = pnand %p227, %p228
    %p230 = pneg %p229
    // Predicated region
    $region9: #{tpu_custom_call.1} parent=5 // pred_check
      _
    $region10: #{tpu_custom_call.1} parent=5 // pred_check_branch
      %232 = sbr.rel (%p229) target = $region12
    $region11: #{tpu_custom_call.1} parent=5 // pred_region
      %s233 = ssub.s32 %s15, 1
      // Predicated region
      $region13: #{tpu_custom_call.1} parent=11 // pred_check
        %p234 = pneg %p62
      $region14: #{tpu_custom_call.1} parent=11 // pred_check_branch
        %236 = sbr.rel (%p234) target = $region16
      $region15: #{tpu_custom_call.1} parent=11 // pred_region
        _
      $region16: #{tpu_custom_call.1} parent=11 // pred_fallthru
        _
      // Predicated region
      $region17: #{tpu_custom_call.1} parent=11 // pred_check
        %p237 = pneg %p83
      $region18: #{tpu_custom_call.1} parent=11 // pred_check_branch
        %239 = sbr.rel (%p237) target = $region20
      $region19: #{tpu_custom_call.1} parent=11 // pred_region
        _
      $region20: #{tpu_custom_call.1} parent=11 // pred_fallthru
        _
      // Predicated region
      $region21: #{tpu_custom_call.1} parent=11 // pred_check
        %p240 = pneg %p104
      $region22: #{tpu_custom_call.1} parent=11 // pred_check_branch
        %242 = sbr.rel (%p240) target = $region24
      $region23: #{tpu_custom_call.1} parent=11 // pred_region
        _
      $region24: #{tpu_custom_call.1} parent=11 // pred_fallthru
        _
      // Predicated region
      $region25: #{tpu_custom_call.1} parent=11 // pred_check
        %p243 = pneg %p125
      $region26: #{tpu_custom_call.1} parent=11 // pred_check_branch
        %245 = sbr.rel (%p243) target = $region28
      $region27: #{tpu_custom_call.1} parent=11 // pred_region
        _
      $region28: #{tpu_custom_call.1} parent=11 // pred_fallthru
        _
      // Predicated region
      $region29: #{tpu_custom_call.1} parent=11 // pred_check
        %p246 = pneg %p146
      $region30: #{tpu_custom_call.1} parent=11 // pred_check_branch
        %248 = sbr.rel (%p246) target = $region32
      $region31: #{tpu_custom_call.1} parent=11 // pred_region
        _
      $region32: #{tpu_custom_call.1} parent=11 // pred_fallthru
        _
      // Predicated region
      $region33: #{tpu_custom_call.1} parent=11 // pred_check
        %p249 = pneg %p167
      $region34: #{tpu_custom_call.1} parent=11 // pred_check_branch
        %251 = sbr.rel (%p249) target = $region36
      $region35: #{tpu_custom_call.1} parent=11 // pred_region
        _
      $region36: #{tpu_custom_call.1} parent=11 // pred_fallthru
        _
    $region12: #{tpu_custom_call.1} parent=5 // pred_fallthru
      _
    %p252 = scmp.lt.s32.totalorder %s15, 2
    // Predicated region
    $region37: #{tpu_custom_call.1} parent=5 // pred_check
      %p253 = pneg %p252
    $region38: #{tpu_custom_call.1} parent=5 // pred_check_branch
      %255 = sbr.rel (%p253) target = $region40
    $region39: #{tpu_custom_call.1} parent=5 // pred_region
      // Predicated region
      $region41: #{tpu_custom_call.1} parent=39 // pred_check
        %p256 = pneg %p35
      $region42: #{tpu_custom_call.1} parent=39 // pred_check_branch
        %258 = sbr.rel (%p256) target = $region44
      $region43: #{tpu_custom_call.1} parent=39 // pred_region
        %p259 = scmp.lt.s32.totalorder %s15, 1
        %s260 = scalar_select %p259, %s15, 1
        %s261 = smul.addr %s260, 54
        %s262 = smul.addr %s261, 8
        %s263 = scalar_lea.vmem %s0, %s262
      $region44: #{tpu_custom_call.1} parent=39 // pred_fallthru
        _
    $region40: #{tpu_custom_call.1} parent=5 // pred_fallthru
      _
    %p264 = scmp.le.s32.totalorder 1, %s15
    %p265 = scmp.lt.s32.totalorder %s15, 3
    %p266 = pnand %p264, %p265
    %p267 = pneg %p266
    // Predicated region
    $region45: #{tpu_custom_call.1} parent=5 // pred_check
      _
    $region46: #{tpu_custom_call.1} parent=5 // pred_check_branch
      %269 = sbr.rel (%p266) target = $region48
    $region47: #{tpu_custom_call.1} parent=5 // pred_region
      %s270 = ssub.s32 %s15, 1
      %p271 = scmp.lt.s32.totalorder %s20, 1
      %s272 = scalar_select %p271, %s20, 1
      %s273 = smul.addr %s272, 54
      %s274 = smul.addr %s273, 8
      %s275 = scalar_lea.vmem %s0, %s274
      %p276 = pneg %p41
      %p277 = pneg %p38
      %p278 = pneg %p62
      %p279 = pneg %p59
      %p280 = pneg %p83
      %p281 = pneg %p80
      %p282 = pneg %p104
      %p283 = pneg %p101
      %p284 = pneg %p125
      %p285 = pneg %p122
      %p286 = pneg %p146
      %p287 = pneg %p143
      %p288 = pneg %p167
      %p289 = pneg %p164
      %p290 = pneg %p193
      %p291 = pneg %p190
      %p292 = scmp.lt.s32.totalorder %s20, 1
      %s293 = scalar_select %p292, %s20, 1
      %s294 = smul.addr %s293, 32
      %s295 = smul.addr %s294, 8
      %s296 = scalar_lea.vmem %s7, %s295
      %p297 = pneg %p219
      %p298 = pneg %p216
      %p299 = scmp.lt.s32.totalorder %s20, 1
      %s300 = scalar_select %p299, %s20, 1
      %s301 = smul.addr %s300, 32
      %s302 = smul.addr %s301, 8
      %s303 = scalar_lea.vmem %s8, %s302
      %p304 = scmp.lt.s32.totalorder %s20, 1
      %s305 = scalar_select %p304, %s20, 1
      %s306 = smul.addr %s305, 54
      %s307 = smul.addr %s306, 8
      %s308 = scalar_lea.vmem %s0, %s307
      %p309 = scmp.lt.s32.totalorder %s20, 1
      %s310 = scalar_select %p309, %s20, 1
      %s311 = smul.addr %s310, 32
      %s312 = smul.addr %s311, 8
      %s313 = scalar_lea.vmem %s7, %s312
      %p314 = scmp.lt.s32.totalorder %s20, 1
      %s315 = scalar_select %p314, %s20, 1
      %s316 = smul.addr %s315, 32
      %s317 = smul.addr %s316, 8
      %s318 = scalar_lea.vmem %s8, %s317
      %vm319 = vcmask 261120
      %320 = vst.msk [vmem:[#allocation2] sm:$0xff] %vm319, 0.0
      %321 = vst.msk [vmem:[#allocation2 + $0x8] sm:$0xff] %vm319, 0.0
      %322 = vst.msk [vmem:[#allocation2 + $0x10] sm:$0xff] %vm319, 0.0
      %323 = vst.msk [vmem:[#allocation2 + $0x18] sm:$0xff] %vm319, 0.0
      %324 = vst.msk [vmem:[#allocation2 + $0x20] sm:$0xff] %vm319, 0.0
      %325 = vst.msk [vmem:[#allocation2 + $0x28] sm:$0xff] %vm319, 0.0
      %326 = vst.msk [vmem:[#allocation2 + $0x30] sm:$0xff] %vm319, 0.0
      %327 = vst.msk [vmem:[#allocation2 + $0x38] sm:$0xff] %vm319, 0.0
      %328 = vst.msk [vmem:[#allocation2 + $0x40] sm:$0xff] %vm319, 0.0
      %329 = vst.msk [vmem:[#allocation2 + $0x48] sm:$0xff] %vm319, 0.0
      %330 = vst.msk [vmem:[#allocation2 + $0x50] sm:$0xff] %vm319, 0.0
      %331 = vst.msk [vmem:[#allocation2 + $0x58] sm:$0xff] %vm319, 0.0
      %332 = vst.msk [vmem:[#allocation2 + $0x60] sm:$0xff] %vm319, 0.0
      %333 = vst.msk [vmem:[#allocation2 + $0x68] sm:$0xff] %vm319, 0.0
      %334 = vst.msk [vmem:[#allocation2 + $0x70] sm:$0xff] %vm319, 0.0
      %335 = vst.msk [vmem:[#allocation2 + $0x78] sm:$0xff] %vm319, 0.0
      %336 = vst.msk [vmem:[#allocation2 + $0x80] sm:$0xff] %vm319, 0.0
      %337 = vst.msk [vmem:[#allocation2 + $0x88] sm:$0xff] %vm319, 0.0
      %338 = vst.msk [vmem:[#allocation2 + $0x90] sm:$0xff] %vm319, 0.0
      %339 = vst.msk [vmem:[#allocation2 + $0x98] sm:$0xff] %vm319, 0.0
      %340 = vst.msk [vmem:[#allocation2 + $0xa0] sm:$0xff] %vm319, 0.0
      %341 = vst.msk [vmem:[#allocation2 + $0xa8] sm:$0xff] %vm319, 0.0
      %342 = vst.msk [vmem:[#allocation2 + $0xb0] sm:$0xff] %vm319, 0.0
      %343 = vst.msk [vmem:[#allocation2 + $0xb8] sm:$0xff] %vm319, 0.0
      %344 = vst.msk [vmem:[#allocation2 + $0xc0] sm:$0xff] %vm319, 0.0
      %345 = vst.msk [vmem:[#allocation2 + $0xc8] sm:$0xff] %vm319, 0.0
      %346 = vst.msk [vmem:[#allocation2 + $0xd0] sm:$0xff] %vm319, 0.0
      %347 = vst.msk [vmem:[#allocation2 + $0xd8] sm:$0xff] %vm319, 0.0
      %348 = vst.msk [vmem:[#allocation2 + $0xe0] sm:$0xff] %vm319, 0.0
      %349 = vst.msk [vmem:[#allocation2 + $0xe8] sm:$0xff] %vm319, 0.0
      %350 = vst.msk [vmem:[#allocation2 + $0xf0] sm:$0xff] %vm319, 0.0
      %351 = vst.msk [vmem:[#allocation2 + $0xf8] sm:$0xff] %vm319, 0.0
      %352 = vst.msk [vmem:[#allocation2 + $0x100] sm:$0xff] %vm319, 0.0
      %353 = vst.msk [vmem:[#allocation2 + $0x108] sm:$0xff] %vm319, 0.0
      %354 = vst.msk [vmem:[#allocation2 + $0x110] sm:$0xff] %vm319, 0.0
      %355 = vst.msk [vmem:[#allocation2 + $0x118] sm:$0xff] %vm319, 0.0
      %356 = vst.msk [vmem:[#allocation2 + $0x120] sm:$0xff] %vm319, 0.0
      %357 = vst.msk [vmem:[#allocation2 + $0x128] sm:$0xff] %vm319, 0.0
      %358 = vst.msk [vmem:[#allocation2 + $0x130] sm:$0xff] %vm319, 0.0
      %359 = vst.msk [vmem:[#allocation2 + $0x138] sm:$0xff] %vm319, 0.0
      %360 = vst.msk [vmem:[#allocation2 + $0x140] sm:$0xff] %vm319, 0.0
      %361 = vst.msk [vmem:[#allocation2 + $0x148] sm:$0xff] %vm319, 0.0
      %362 = vst.msk [vmem:[#allocation2 + $0x150] sm:$0xff] %vm319, 0.0
      %363 = vst.msk [vmem:[#allocation2 + $0x158] sm:$0xff] %vm319, 0.0
      %364 = vst.msk [vmem:[#allocation2 + $0x160] sm:$0xff] %vm319, 0.0
      %365 = vst.msk [vmem:[#allocation2 + $0x168] sm:$0xff] %vm319, 0.0
      %366 = vst.msk [vmem:[#allocation2 + $0x170] sm:$0xff] %vm319, 0.0
      %367 = vst.msk [vmem:[#allocation2 + $0x178] sm:$0xff] %vm319, 0.0
      %368 = vst.msk [vmem:[#allocation2 + $0x180] sm:$0xff] %vm319, 0.0
      %369 = vst.msk [vmem:[#allocation2 + $0x188] sm:$0xff] %vm319, 0.0
      %370 = vst.msk [vmem:[#allocation2 + $0x190] sm:$0xff] %vm319, 0.0
      %371 = vst.msk [vmem:[#allocation2 + $0x198] sm:$0xff] %vm319, 0.0
      %372 = vst.msk [vmem:[#allocation2 + $0x1a0] sm:$0xff] %vm319, 0.0
      %373 = vst.msk [vmem:[#allocation2 + $0x1a8] sm:$0xff] %vm319, 0.0
      %374 = vst.msk [vmem:[#allocation2 + $0x1b0] sm:$0xff] %vm319, 0.0
      %375 = vst.msk [vmem:[#allocation2 + $0x1b8] sm:$0xff] %vm319, 0.0
      %376 = vst.msk [vmem:[#allocation2 + $0x1c0] sm:$0xff] %vm319, 0.0
      %377 = vst.msk [vmem:[#allocation2 + $0x1c8] sm:$0xff] %vm319, 0.0
      %378 = vst.msk [vmem:[#allocation2 + $0x1d0] sm:$0xff] %vm319, 0.0
      %379 = vst.msk [vmem:[#allocation2 + $0x1d8] sm:$0xff] %vm319, 0.0
      %380 = vst.msk [vmem:[#allocation2 + $0x1e0] sm:$0xff] %vm319, 0.0
      %381 = vst.msk [vmem:[#allocation2 + $0x1e8] sm:$0xff] %vm319, 0.0
      %382 = vst.msk [vmem:[#allocation2 + $0x1f0] sm:$0xff] %vm319, 0.0
      %383 = vst.msk [vmem:[#allocation2 + $0x1f8] sm:$0xff] %vm319, 0.0
      %384 = vst.msk [vmem:[#allocation2 + $0x200] sm:$0xff] %vm319, 0.0
      %385 = vst.msk [vmem:[#allocation2 + $0x208] sm:$0xff] %vm319, 0.0
      %386 = vst.msk [vmem:[#allocation2 + $0x210] sm:$0xff] %vm319, 0.0
      %387 = vst.msk [vmem:[#allocation2 + $0x218] sm:$0xff] %vm319, 0.0
      %388 = vst.msk [vmem:[#allocation2 + $0x220] sm:$0xff] %vm319, 0.0
      %389 = vst.msk [vmem:[#allocation2 + $0x228] sm:$0xff] %vm319, 0.0
      %390 = vst.msk [vmem:[#allocation2 + $0x230] sm:$0xff] %vm319, 0.0
      %391 = vst.msk [vmem:[#allocation2 + $0x238] sm:$0xff] %vm319, 0.0
      %392 = vst [vmem:[#allocation3] sm:$0xff] 0.0
      %393 = vst [vmem:[#allocation3 + $0x8] sm:$0xff] 0.0
      %394 = vst [vmem:[#allocation3 + $0x10] sm:$0xff] 0.0
      %395 = vst [vmem:[#allocation3 + $0x18] sm:$0xff] 0.0
      %396 = vst [vmem:[#allocation3 + $0x20] sm:$0xff] 0.0
      %397 = vst [vmem:[#allocation3 + $0x28] sm:$0xff] 0.0
      %398 = vst [vmem:[#allocation3 + $0x30] sm:$0xff] 0.0
      %399 = vst [vmem:[#allocation3 + $0x38] sm:$0xff] 0.0
      %400 = vst [vmem:[#allocation3 + $0x40] sm:$0xff] 0.0
      %401 = vst [vmem:[#allocation3 + $0x48] sm:$0xff] 0.0
      %402 = vst [vmem:[#allocation3 + $0x50] sm:$0xff] 0.0
      %403 = vst [vmem:[#allocation3 + $0x58] sm:$0xff] 0.0
      %404 = vst [vmem:[#allocation3 + $0x60] sm:$0xff] 0.0
      %405 = vst [vmem:[#allocation3 + $0x68] sm:$0xff] 0.0
      %406 = vst [vmem:[#allocation3 + $0x70] sm:$0xff] 0.0
      %407 = vst [vmem:[#allocation3 + $0x78] sm:$0xff] 0.0
      %408 = vst [vmem:[#allocation3 + $0x80] sm:$0xff] 0.0
      %409 = vst [vmem:[#allocation3 + $0x88] sm:$0xff] 0.0
      %410 = vst [vmem:[#allocation3 + $0x90] sm:$0xff] 0.0
      %411 = vst [vmem:[#allocation3 + $0x98] sm:$0xff] 0.0
      %412 = vst [vmem:[#allocation3 + $0xa0] sm:$0xff] 0.0
      %413 = vst [vmem:[#allocation3 + $0xa8] sm:$0xff] 0.0
      %414 = vst [vmem:[#allocation3 + $0xb0] sm:$0xff] 0.0
      %415 = vst [vmem:[#allocation3 + $0xb8] sm:$0xff] 0.0
      %416 = vst [vmem:[#allocation3 + $0xc0] sm:$0xff] 0.0
      %417 = vst [vmem:[#allocation3 + $0xc8] sm:$0xff] 0.0
      %418 = vst [vmem:[#allocation3 + $0xd0] sm:$0xff] 0.0
      %419 = vst [vmem:[#allocation3 + $0xd8] sm:$0xff] 0.0
      %420 = vst [vmem:[#allocation3 + $0xe0] sm:$0xff] 0.0
      %421 = vst [vmem:[#allocation3 + $0xe8] sm:$0xff] 0.0
      %422 = vst [vmem:[#allocation3 + $0xf0] sm:$0xff] 0.0
      %423 = vst [vmem:[#allocation3 + $0xf8] sm:$0xff] 0.0
      %424 = vst [vmem:[#allocation3 + $0x100] sm:$0xff] 0.0
      %425 = vst [vmem:[#allocation3 + $0x108] sm:$0xff] 0.0
      %426 = vst [vmem:[#allocation3 + $0x110] sm:$0xff] 0.0
      %427 = vst [vmem:[#allocation3 + $0x118] sm:$0xff] 0.0
      %428 = vst [vmem:[#allocation3 + $0x120] sm:$0xff] 0.0
      %429 = vst [vmem:[#allocation3 + $0x128] sm:$0xff] 0.0
      %430 = vst [vmem:[#allocation3 + $0x130] sm:$0xff] 0.0
      %431 = vst [vmem:[#allocation3 + $0x138] sm:$0xff] 0.0
      %432 = vst [vmem:[#allocation3 + $0x140] sm:$0xff] 0.0
      %433 = vst [vmem:[#allocation3 + $0x148] sm:$0xff] 0.0
      %434 = vst [vmem:[#allocation3 + $0x150] sm:$0xff] 0.0
      %435 = vst [vmem:[#allocation3 + $0x158] sm:$0xff] 0.0
      %436 = vst [vmem:[#allocation3 + $0x160] sm:$0xff] 0.0
      %437 = vst [vmem:[#allocation3 + $0x168] sm:$0xff] 0.0
      %438 = vst [vmem:[#allocation3 + $0x170] sm:$0xff] 0.0
      %439 = vst [vmem:[#allocation3 + $0x178] sm:$0xff] 0.0
      %440 = vst [vmem:[#allocation3 + $0x180] sm:$0xff] 0.0
      %441 = vst [vmem:[#allocation3 + $0x188] sm:$0xff] 0.0
      %442 = vst [vmem:[#allocation3 + $0x190] sm:$0xff] 0.0
      %443 = vst [vmem:[#allocation3 + $0x198] sm:$0xff] 0.0
      %444 = vst [vmem:[#allocation3 + $0x1a0] sm:$0xff] 0.0
      %445 = vst [vmem:[#allocation3 + $0x1a8] sm:$0xff] 0.0
      %446 = vst [vmem:[#allocation3 + $0x1b0] sm:$0xff] 0.0
      %447 = vst [vmem:[#allocation3 + $0x1b8] sm:$0xff] 0.0
      %448 = vst [vmem:[#allocation3 + $0x1c0] sm:$0xff] 0.0
      %449 = vst [vmem:[#allocation3 + $0x1c8] sm:$0xff] 0.0
      %450 = vst [vmem:[#allocation3 + $0x1d0] sm:$0xff] 0.0
      %451 = vst [vmem:[#allocation3 + $0x1d8] sm:$0xff] 0.0
      %452 = vst [vmem:[#allocation3 + $0x1e0] sm:$0xff] 0.0
      %453 = vst [vmem:[#allocation3 + $0x1e8] sm:$0xff] 0.0
      %454 = vst [vmem:[#allocation3 + $0x1f0] sm:$0xff] 0.0
      %455 = vst [vmem:[#allocation3 + $0x1f8] sm:$0xff] 0.0
      %456 = vst [vmem:[#allocation3 + $0x200] sm:$0xff] 0.0
      %457 = vst [vmem:[#allocation3 + $0x208] sm:$0xff] 0.0
      %458 = vst [vmem:[#allocation3 + $0x210] sm:$0xff] 0.0
      %459 = vst [vmem:[#allocation3 + $0x218] sm:$0xff] 0.0
      %460 = vst [vmem:[#allocation3 + $0x220] sm:$0xff] 0.0
      %461 = vst [vmem:[#allocation3 + $0x228] sm:$0xff] 0.0
      %462 = vst [vmem:[#allocation3 + $0x230] sm:$0xff] 0.0
      %463 = vst [vmem:[#allocation3 + $0x238] sm:$0xff] 0.0
      %464 = vst [vmem:[#allocation3 + $0x240] sm:$0xff] 0.0
      %465 = vst [vmem:[#allocation3 + $0x248] sm:$0xff] 0.0
      %466 = vst [vmem:[#allocation3 + $0x250] sm:$0xff] 0.0
      %467 = vst [vmem:[#allocation3 + $0x258] sm:$0xff] 0.0
      %468 = vst [vmem:[#allocation3 + $0x260] sm:$0xff] 0.0
      %469 = vst [vmem:[#allocation3 + $0x268] sm:$0xff] 0.0
      %470 = vst [vmem:[#allocation3 + $0x270] sm:$0xff] 0.0
      %471 = vst [vmem:[#allocation3 + $0x278] sm:$0xff] 0.0
      %472 = vst [vmem:[#allocation3 + $0x280] sm:$0xff] 0.0
      %473 = vst [vmem:[#allocation3 + $0x288] sm:$0xff] 0.0
      %474 = vst [vmem:[#allocation3 + $0x290] sm:$0xff] 0.0
      %475 = vst [vmem:[#allocation3 + $0x298] sm:$0xff] 0.0
      %476 = vst [vmem:[#allocation3 + $0x2a0] sm:$0xff] 0.0
      %477 = vst [vmem:[#allocation3 + $0x2a8] sm:$0xff] 0.0
      %478 = vst [vmem:[#allocation3 + $0x2b0] sm:$0xff] 0.0
      %479 = vst [vmem:[#allocation3 + $0x2b8] sm:$0xff] 0.0
      %480 = vst [vmem:[#allocation3 + $0x2c0] sm:$0xff] 0.0
      %481 = vst [vmem:[#allocation3 + $0x2c8] sm:$0xff] 0.0
      %482 = vst [vmem:[#allocation3 + $0x2d0] sm:$0xff] 0.0
      %483 = vst [vmem:[#allocation3 + $0x2d8] sm:$0xff] 0.0
      %484 = vst [vmem:[#allocation3 + $0x2e0] sm:$0xff] 0.0
      %485 = vst [vmem:[#allocation3 + $0x2e8] sm:$0xff] 0.0
      %486 = vst [vmem:[#allocation3 + $0x2f0] sm:$0xff] 0.0
      %487 = vst [vmem:[#allocation3 + $0x2f8] sm:$0xff] 0.0
      %488 = vst [vmem:[#allocation3 + $0x300] sm:$0xff] 0.0
      %489 = vst [vmem:[#allocation3 + $0x308] sm:$0xff] 0.0
      %490 = vst [vmem:[#allocation3 + $0x310] sm:$0xff] 0.0
      %491 = vst [vmem:[#allocation3 + $0x318] sm:$0xff] 0.0
      %492 = vst [vmem:[#allocation3 + $0x320] sm:$0xff] 0.0
      %493 = vst [vmem:[#allocation3 + $0x328] sm:$0xff] 0.0
      %494 = vst [vmem:[#allocation3 + $0x330] sm:$0xff] 0.0
      %495 = vst [vmem:[#allocation3 + $0x338] sm:$0xff] 0.0
      %496 = vst [vmem:[#allocation3 + $0x340] sm:$0xff] 0.0
      %497 = vst [vmem:[#allocation3 + $0x348] sm:$0xff] 0.0
      %498 = vst [vmem:[#allocation3 + $0x350] sm:$0xff] 0.0
      %499 = vst [vmem:[#allocation3 + $0x358] sm:$0xff] 0.0
      %500 = vst [vmem:[#allocation3 + $0x360] sm:$0xff] 0.0
      %501 = vst [vmem:[#allocation3 + $0x368] sm:$0xff] 0.0
      %502 = vst [vmem:[#allocation3 + $0x370] sm:$0xff] 0.0
      %503 = vst [vmem:[#allocation3 + $0x378] sm:$0xff] 0.0
      %504 = vst [vmem:[#allocation3 + $0x380] sm:$0xff] 0.0
      %505 = vst [vmem:[#allocation3 + $0x388] sm:$0xff] 0.0
      %506 = vst [vmem:[#allocation3 + $0x390] sm:$0xff] 0.0
      %507 = vst [vmem:[#allocation3 + $0x398] sm:$0xff] 0.0
      %508 = vst [vmem:[#allocation3 + $0x3a0] sm:$0xff] 0.0
      %509 = vst [vmem:[#allocation3 + $0x3a8] sm:$0xff] 0.0
      %510 = vst [vmem:[#allocation3 + $0x3b0] sm:$0xff] 0.0
      %511 = vst [vmem:[#allocation3 + $0x3b8] sm:$0xff] 0.0
      %512 = vst [vmem:[#allocation3 + $0x3c0] sm:$0xff] 0.0
      %513 = vst [vmem:[#allocation3 + $0x3c8] sm:$0xff] 0.0
      %514 = vst [vmem:[#allocation3 + $0x3d0] sm:$0xff] 0.0
      %515 = vst [vmem:[#allocation3 + $0x3d8] sm:$0xff] 0.0
      %516 = vst [vmem:[#allocation3 + $0x3e0] sm:$0xff] 0.0
      %517 = vst [vmem:[#allocation3 + $0x3e8] sm:$0xff] 0.0
      %518 = vst [vmem:[#allocation3 + $0x3f0] sm:$0xff] 0.0
      %519 = vst [vmem:[#allocation3 + $0x3f8] sm:$0xff] 0.0
      %520 = vst [vmem:[#allocation3 + $0x400] sm:$0xff] 0.0
      %521 = vst [vmem:[#allocation3 + $0x408] sm:$0xff] 0.0
      %522 = vst [vmem:[#allocation3 + $0x410] sm:$0xff] 0.0
      %523 = vst [vmem:[#allocation3 + $0x418] sm:$0xff] 0.0
      %524 = vst [vmem:[#allocation3 + $0x420] sm:$0xff] 0.0
      %525 = vst [vmem:[#allocation3 + $0x428] sm:$0xff] 0.0
      %526 = vst [vmem:[#allocation3 + $0x430] sm:$0xff] 0.0
      %527 = vst [vmem:[#allocation3 + $0x438] sm:$0xff] 0.0
      %528 = vst [vmem:[#allocation3 + $0x440] sm:$0xff] 0.0
      %529 = vst [vmem:[#allocation3 + $0x448] sm:$0xff] 0.0
      %530 = vst [vmem:[#allocation3 + $0x450] sm:$0xff] 0.0
      %531 = vst [vmem:[#allocation3 + $0x458] sm:$0xff] 0.0
      %532 = vst [vmem:[#allocation3 + $0x460] sm:$0xff] 0.0
      %533 = vst [vmem:[#allocation3 + $0x468] sm:$0xff] 0.0
      %534 = vst [vmem:[#allocation3 + $0x470] sm:$0xff] 0.0
      %535 = vst [vmem:[#allocation3 + $0x478] sm:$0xff] 0.0
      %536 = vst [vmem:[#allocation3 + $0x480] sm:$0xff] 0.0
      %537 = vst [vmem:[#allocation3 + $0x488] sm:$0xff] 0.0
      %538 = vst [vmem:[#allocation3 + $0x490] sm:$0xff] 0.0
      %539 = vst [vmem:[#allocation3 + $0x498] sm:$0xff] 0.0
      %540 = vst [vmem:[#allocation3 + $0x4a0] sm:$0xff] 0.0
      %541 = vst [vmem:[#allocation3 + $0x4a8] sm:$0xff] 0.0
      %542 = vst [vmem:[#allocation3 + $0x4b0] sm:$0xff] 0.0
      %543 = vst [vmem:[#allocation3 + $0x4b8] sm:$0xff] 0.0
      %544 = vst [vmem:[#allocation3 + $0x4c0] sm:$0xff] 0.0
      %545 = vst [vmem:[#allocation3 + $0x4c8] sm:$0xff] 0.0
      %546 = vst [vmem:[#allocation3 + $0x4d0] sm:$0xff] 0.0
      %547 = vst [vmem:[#allocation3 + $0x4d8] sm:$0xff] 0.0
      %548 = vst [vmem:[#allocation3 + $0x4e0] sm:$0xff] 0.0
      %549 = vst [vmem:[#allocation3 + $0x4e8] sm:$0xff] 0.0
      %550 = vst [vmem:[#allocation3 + $0x4f0] sm:$0xff] 0.0
      %551 = vst [vmem:[#allocation3 + $0x4f8] sm:$0xff] 0.0
      %552 = vst [vmem:[#allocation3 + $0x500] sm:$0xff] 0.0
      %553 = vst [vmem:[#allocation3 + $0x508] sm:$0xff] 0.0
      %554 = vst [vmem:[#allocation3 + $0x510] sm:$0xff] 0.0
      %555 = vst [vmem:[#allocation3 + $0x518] sm:$0xff] 0.0
      %556 = vst [vmem:[#allocation3 + $0x520] sm:$0xff] 0.0
      %557 = vst [vmem:[#allocation3 + $0x528] sm:$0xff] 0.0
      %558 = vst [vmem:[#allocation3 + $0x530] sm:$0xff] 0.0
      %559 = vst [vmem:[#allocation3 + $0x538] sm:$0xff] 0.0
      %560 = vst [vmem:[#allocation3 + $0x540] sm:$0xff] 0.0
      %561 = vst [vmem:[#allocation3 + $0x548] sm:$0xff] 0.0
      %562 = vst [vmem:[#allocation3 + $0x550] sm:$0xff] 0.0
      %563 = vst [vmem:[#allocation3 + $0x558] sm:$0xff] 0.0
      %564 = vst [vmem:[#allocation3 + $0x560] sm:$0xff] 0.0
      %565 = vst [vmem:[#allocation3 + $0x568] sm:$0xff] 0.0
      %566 = vst [vmem:[#allocation3 + $0x570] sm:$0xff] 0.0
      %567 = vst [vmem:[#allocation3 + $0x578] sm:$0xff] 0.0
      %568 = vst [vmem:[#allocation3 + $0x580] sm:$0xff] 0.0
      %569 = vst [vmem:[#allocation3 + $0x588] sm:$0xff] 0.0
      %570 = vst [vmem:[#allocation3 + $0x590] sm:$0xff] 0.0
      %571 = vst [vmem:[#allocation3 + $0x598] sm:$0xff] 0.0
      %572 = vst [vmem:[#allocation3 + $0x5a0] sm:$0xff] 0.0
      %573 = vst [vmem:[#allocation3 + $0x5a8] sm:$0xff] 0.0
      %574 = vst [vmem:[#allocation3 + $0x5b0] sm:$0xff] 0.0
      %575 = vst [vmem:[#allocation3 + $0x5b8] sm:$0xff] 0.0
      %576 = vst [vmem:[#allocation3 + $0x5c0] sm:$0xff] 0.0
      %577 = vst [vmem:[#allocation3 + $0x5c8] sm:$0xff] 0.0
      %578 = vst [vmem:[#allocation3 + $0x5d0] sm:$0xff] 0.0
      %579 = vst [vmem:[#allocation3 + $0x5d8] sm:$0xff] 0.0
      %580 = vst [vmem:[#allocation3 + $0x5e0] sm:$0xff] 0.0
      %581 = vst [vmem:[#allocation3 + $0x5e8] sm:$0xff] 0.0
      %582 = vst [vmem:[#allocation3 + $0x5f0] sm:$0xff] 0.0
      %583 = vst [vmem:[#allocation3 + $0x5f8] sm:$0xff] 0.0
      %584 = vst [vmem:[#allocation3 + $0x600] sm:$0xff] 0.0
      %585 = vst [vmem:[#allocation3 + $0x608] sm:$0xff] 0.0
      %586 = vst [vmem:[#allocation3 + $0x610] sm:$0xff] 0.0
      %587 = vst [vmem:[#allocation3 + $0x618] sm:$0xff] 0.0
      %588 = vst [vmem:[#allocation3 + $0x620] sm:$0xff] 0.0
      %589 = vst [vmem:[#allocation3 + $0x628] sm:$0xff] 0.0
      %590 = vst [vmem:[#allocation3 + $0x630] sm:$0xff] 0.0
      %591 = vst [vmem:[#allocation3 + $0x638] sm:$0xff] 0.0
      %592 = vst [vmem:[#allocation3 + $0x640] sm:$0xff] 0.0
      %593 = vst [vmem:[#allocation3 + $0x648] sm:$0xff] 0.0
      %594 = vst [vmem:[#allocation3 + $0x650] sm:$0xff] 0.0
      %595 = vst [vmem:[#allocation3 + $0x658] sm:$0xff] 0.0
      %596 = vst [vmem:[#allocation3 + $0x660] sm:$0xff] 0.0
      %597 = vst [vmem:[#allocation3 + $0x668] sm:$0xff] 0.0
      %598 = vst [vmem:[#allocation3 + $0x670] sm:$0xff] 0.0
      %599 = vst [vmem:[#allocation3 + $0x678] sm:$0xff] 0.0
      %600 = vst [vmem:[#allocation3 + $0x680] sm:$0xff] 0.0
      %601 = vst [vmem:[#allocation3 + $0x688] sm:$0xff] 0.0
      %602 = vst [vmem:[#allocation3 + $0x690] sm:$0xff] 0.0
      %603 = vst [vmem:[#allocation3 + $0x698] sm:$0xff] 0.0
      %604 = vst [vmem:[#allocation3 + $0x6a0] sm:$0xff] 0.0
      %605 = vst [vmem:[#allocation3 + $0x6a8] sm:$0xff] 0.0
      %606 = vst [vmem:[#allocation3 + $0x6b0] sm:$0xff] 0.0
      %607 = vst [vmem:[#allocation3 + $0x6b8] sm:$0xff] 0.0
      %v608 = vld [vmem:[%s308] sm:$0xff]
      %v609 = vld [vmem:[%s308 + $0x8] sm:$0xff]
      %v610 = vld [vmem:[%s308 + $0x10] sm:$0x3]
      %v611 = vld [vmem:[%s308 + $0x18] sm:$0xff]
      %v612 = vld [vmem:[%s308 + $0x20] sm:$0xff]
      %v613 = vld [vmem:[%s308 + $0x28] sm:$0x3]
      %v614 = vld [vmem:[%s308 + $0x30] sm:$0xff]
      %v615 = vld [vmem:[%s308 + $0x38] sm:$0xff]
      %v616 = vld [vmem:[%s308 + $0x40] sm:$0x3]
      %v617 = vld [vmem:[%s308 + $0x48] sm:$0xff]
      %v618 = vld [vmem:[%s308 + $0x50] sm:$0xff]
      %v619 = vld [vmem:[%s308 + $0x58] sm:$0x3]
      %v620 = vld [vmem:[%s308 + $0x60] sm:$0xff]
      %v621 = vld [vmem:[%s308 + $0x68] sm:$0xff]
      %v622 = vld [vmem:[%s308 + $0x70] sm:$0x3]
      %v623 = vld [vmem:[%s308 + $0x78] sm:$0xff]
      %v624 = vld [vmem:[%s308 + $0x80] sm:$0xff]
      %v625 = vld [vmem:[%s308 + $0x88] sm:$0x3]
      %v626 = vld [vmem:[%s308 + $0x90] sm:$0xff]
      %v627 = vld [vmem:[%s308 + $0x98] sm:$0xff]
      %v628 = vld [vmem:[%s308 + $0xa0] sm:$0x3]
      %v629 = vld [vmem:[%s308 + $0xa8] sm:$0xff]
      %v630 = vld [vmem:[%s308 + $0xb0] sm:$0xff]
      %v631 = vld [vmem:[%s308 + $0xb8] sm:$0x3]
      %v632 = vld [vmem:[%s308 + $0xc0] sm:$0xff]
      %v633 = vld [vmem:[%s308 + $0xc8] sm:$0xff]
      %v634 = vld [vmem:[%s308 + $0xd0] sm:$0x3]
      %v635 = vld [vmem:[%s308 + $0xd8] sm:$0xff]
      %v636 = vld [vmem:[%s308 + $0xe0] sm:$0xff]
      %v637 = vld [vmem:[%s308 + $0xe8] sm:$0x3]
      %v638 = vld [vmem:[%s308 + $0xf0] sm:$0xff]
      %v639 = vld [vmem:[%s308 + $0xf8] sm:$0xff]
      %v640 = vld [vmem:[%s308 + $0x100] sm:$0x3]
      %v641 = vld [vmem:[%s308 + $0x108] sm:$0xff]
      %v642 = vld [vmem:[%s308 + $0x110] sm:$0xff]
      %v643 = vld [vmem:[%s308 + $0x118] sm:$0x3]
      %v644 = vld [vmem:[%s308 + $0x120] sm:$0xff]
      %v645 = vld [vmem:[%s308 + $0x128] sm:$0xff]
      %v646 = vld [vmem:[%s308 + $0x130] sm:$0x3]
      %v647 = vld [vmem:[%s308 + $0x138] sm:$0xff]
      %v648 = vld [vmem:[%s308 + $0x140] sm:$0xff]
      %v649 = vld [vmem:[%s308 + $0x148] sm:$0x3]
      %v650 = vld [vmem:[%s308 + $0x150] sm:$0xff]
      %v651 = vld [vmem:[%s308 + $0x158] sm:$0xff]
      %v652 = vld [vmem:[%s308 + $0x160] sm:$0x3]
      %v653 = vld [vmem:[%s308 + $0x168] sm:$0xff]
      %v654 = vld [vmem:[%s308 + $0x170] sm:$0xff]
      %v655 = vld [vmem:[%s308 + $0x178] sm:$0x3]
      %v656 = vld [vmem:[%s308 + $0x180] sm:$0xff]
      %v657 = vld [vmem:[%s308 + $0x188] sm:$0xff]
      %v658 = vld [vmem:[%s308 + $0x190] sm:$0x3]
      %v659 = vld [vmem:[%s308 + $0x198] sm:$0xff]
      %v660 = vld [vmem:[%s308 + $0x1a0] sm:$0xff]
      %v661 = vld [vmem:[%s308 + $0x1a8] sm:$0x3]
      %vm710 = vcmask 1046528
      %v711 = vrot.slane %v608, 1
      %v712 = vrot.slane %v609, 1
      %v713 = vsel %vm710, %v711, %v712
      %v714 = vrot.slane %v610, 1
      %v715 = vsel %vm710, %v712, %v714
      %v716 = vrot.slane %v611, 1
      %v717 = vrot.slane %v612, 1
      %v718 = vsel %vm710, %v716, %v717
      %v719 = vrot.slane %v613, 1
      %v720 = vsel %vm710, %v717, %v719
      %v721 = vrot.slane %v614, 1
      %v722 = vrot.slane %v615, 1
      %v723 = vsel %vm710, %v721, %v722
      %v724 = vrot.slane %v616, 1
      %v725 = vsel %vm710, %v722, %v724
      %v726 = vrot.slane %v617, 1
      %v727 = vrot.slane %v618, 1
      %v728 = vsel %vm710, %v726, %v727
      %v729 = vrot.slane %v619, 1
      %v730 = vsel %vm710, %v727, %v729
      %v731 = vrot.slane %v620, 1
      %v732 = vrot.slane %v621, 1
      %v733 = vsel %vm710, %v731, %v732
      %v734 = vrot.slane %v622, 1
      %v735 = vsel %vm710, %v732, %v734
      %v736 = vrot.slane %v623, 1
      %v737 = vrot.slane %v624, 1
      %v738 = vsel %vm710, %v736, %v737
      %v739 = vrot.slane %v625, 1
      %v740 = vsel %vm710, %v737, %v739
      %v741 = vrot.slane %v626, 1
      %v742 = vrot.slane %v627, 1
      %v743 = vsel %vm710, %v741, %v742
      %v744 = vrot.slane %v628, 1
      %v745 = vsel %vm710, %v742, %v744
      %v746 = vrot.slane %v629, 1
      %v747 = vrot.slane %v630, 1
      %v748 = vsel %vm710, %v746, %v747
      %v749 = vrot.slane %v631, 1
      %v750 = vsel %vm710, %v747, %v749
      %v751 = vrot.slane %v632, 1
      %v752 = vrot.slane %v633, 1
      %v753 = vsel %vm710, %v751, %v752
      %v754 = vrot.slane %v634, 1
      %v755 = vsel %vm710, %v752, %v754
      %v756 = vrot.slane %v635, 1
      %v757 = vrot.slane %v636, 1
      %v758 = vsel %vm710, %v756, %v757
      %v759 = vrot.slane %v637, 1
      %v760 = vsel %vm710, %v757, %v759
      %v761 = vrot.slane %v638, 1
      %v762 = vrot.slane %v639, 1
      %v763 = vsel %vm710, %v761, %v762
      %v764 = vrot.slane %v640, 1
      %v765 = vsel %vm710, %v762, %v764
      %v766 = vrot.slane %v641, 1
      %v767 = vrot.slane %v642, 1
      %v768 = vsel %vm710, %v766, %v767
      %v769 = vrot.slane %v643, 1
      %v770 = vsel %vm710, %v767, %v769
      %v771 = vrot.slane %v644, 1
      %v772 = vrot.slane %v645, 1
      %v773 = vsel %vm710, %v771, %v772
      %v774 = vrot.slane %v646, 1
      %v775 = vsel %vm710, %v772, %v774
      %v776 = vrot.slane %v647, 1
      %v777 = vrot.slane %v648, 1
      %v778 = vsel %vm710, %v776, %v777
      %v779 = vrot.slane %v649, 1
      %v780 = vsel %vm710, %v777, %v779
      %v781 = vrot.slane %v650, 1
      %v782 = vrot.slane %v651, 1
      %v783 = vsel %vm710, %v781, %v782
      %v784 = vrot.slane %v652, 1
      %v785 = vsel %vm710, %v782, %v784
      %v786 = vrot.slane %v653, 1
      %v787 = vrot.slane %v654, 1
      %v788 = vsel %vm710, %v786, %v787
      %v789 = vrot.slane %v655, 1
      %v790 = vsel %vm710, %v787, %v789
      %vm791 = vcmask 1045504
      %v792 = vrot.slane %v608, 2
      %v793 = vrot.slane %v609, 2
      %v794 = vsel %vm791, %v792, %v793
      %v795 = vrot.slane %v610, 2
      %v796 = vsel %vm791, %v793, %v795
      %v797 = vrot.slane %v611, 2
      %v798 = vrot.slane %v612, 2
      %v799 = vsel %vm791, %v797, %v798
      %v800 = vrot.slane %v613, 2
      %v801 = vsel %vm791, %v798, %v800
      %v802 = vrot.slane %v614, 2
      %v803 = vrot.slane %v615, 2
      %v804 = vsel %vm791, %v802, %v803
      %v805 = vrot.slane %v616, 2
      %v806 = vsel %vm791, %v803, %v805
      %v807 = vrot.slane %v617, 2
      %v808 = vrot.slane %v618, 2
      %v809 = vsel %vm791, %v807, %v808
      %v810 = vrot.slane %v619, 2
      %v811 = vsel %vm791, %v808, %v810
      %v812 = vrot.slane %v620, 2
      %v813 = vrot.slane %v621, 2
      %v814 = vsel %vm791, %v812, %v813
      %v815 = vrot.slane %v622, 2
      %v816 = vsel %vm791, %v813, %v815
      %v817 = vrot.slane %v623, 2
      %v818 = vrot.slane %v624, 2
      %v819 = vsel %vm791, %v817, %v818
      %v820 = vrot.slane %v625, 2
      %v821 = vsel %vm791, %v818, %v820
      %v822 = vrot.slane %v626, 2
      %v823 = vrot.slane %v627, 2
      %v824 = vsel %vm791, %v822, %v823
      %v825 = vrot.slane %v628, 2
      %v826 = vsel %vm791, %v823, %v825
      %v827 = vrot.slane %v629, 2
      %v828 = vrot.slane %v630, 2
      %v829 = vsel %vm791, %v827, %v828
      %v830 = vrot.slane %v631, 2
      %v831 = vsel %vm791, %v828, %v830
      %v832 = vrot.slane %v632, 2
      %v833 = vrot.slane %v633, 2
      %v834 = vsel %vm791, %v832, %v833
      %v835 = vrot.slane %v634, 2
      %v836 = vsel %vm791, %v833, %v835
      %v837 = vrot.slane %v635, 2
      %v838 = vrot.slane %v636, 2
      %v839 = vsel %vm791, %v837, %v838
      %v840 = vrot.slane %v637, 2
      %v841 = vsel %vm791, %v838, %v840
      %v842 = vrot.slane %v638, 2
      %v843 = vrot.slane %v639, 2
      %v844 = vsel %vm791, %v842, %v843
      %v845 = vrot.slane %v640, 2
      %v846 = vsel %vm791, %v843, %v845
      %v847 = vrot.slane %v641, 2
      %v848 = vrot.slane %v642, 2
      %v849 = vsel %vm791, %v847, %v848
      %v850 = vrot.slane %v643, 2
      %v851 = vsel %vm791, %v848, %v850
      %v852 = vrot.slane %v644, 2
      %v853 = vrot.slane %v645, 2
      %v854 = vsel %vm791, %v852, %v853
      %v855 = vrot.slane %v646, 2
      %v856 = vsel %vm791, %v853, %v855
      %v857 = vrot.slane %v647, 2
      %v858 = vrot.slane %v648, 2
      %v859 = vsel %vm791, %v857, %v858
      %v860 = vrot.slane %v649, 2
      %v861 = vsel %vm791, %v858, %v860
      %v862 = vrot.slane %v650, 2
      %v863 = vrot.slane %v651, 2
      %v864 = vsel %vm791, %v862, %v863
      %v865 = vrot.slane %v652, 2
      %v866 = vsel %vm791, %v863, %v865
      %v867 = vrot.slane %v653, 2
      %v868 = vrot.slane %v654, 2
      %v869 = vsel %vm791, %v867, %v868
      %v870 = vrot.slane %v655, 2
      %v871 = vsel %vm791, %v868, %v870
      %v875 = vrot.slane %v656, 1
      %v876 = vrot.slane %v657, 1
      %v877 = vsel %vm710, %v875, %v876
      %v878 = vrot.slane %v658, 1
      %v879 = vsel %vm710, %v876, %v878
      %v880 = vrot.slane %v656, 2
      %v881 = vrot.slane %v657, 2
      %v882 = vsel %vm791, %v880, %v881
      %v883 = vrot.slane %v658, 2
      %v884 = vsel %vm791, %v881, %v883
      %v888 = vrot.slane %v659, 1
      %v889 = vrot.slane %v660, 1
      %v890 = vsel %vm710, %v888, %v889
      %v891 = vrot.slane %v661, 1
      %v892 = vsel %vm710, %v889, %v891
      %v893 = vrot.slane %v659, 2
      %v894 = vrot.slane %v660, 2
      %v895 = vsel %vm791, %v893, %v894
      %v896 = vrot.slane %v661, 2
      %v897 = vsel %vm791, %v894, %v896
      %898 = vrot.lane.b32.xlu0 %v713, 16
      %v899 = vpop.permute.xlu0 %898
      %900 = vrot.lane.b32.xlu0 %v715, 16
      %v901 = vpop.permute.xlu0 %900
      %902 = vrot.lane.b32.xlu0 %v718, 16
      %v903 = vpop.permute.xlu0 %902
      %904 = vrot.lane.b32.xlu0 %v720, 16
      %v905 = vpop.permute.xlu0 %904
      %906 = vrot.lane.b32.xlu0 %v723, 16
      %v907 = vpop.permute.xlu0 %906
      %908 = vrot.lane.b32.xlu0 %v725, 16
      %v909 = vpop.permute.xlu0 %908
      %910 = vrot.lane.b32.xlu0 %v728, 16
      %v911 = vpop.permute.xlu0 %910
      %912 = vrot.lane.b32.xlu0 %v730, 16
      %v913 = vpop.permute.xlu0 %912
      %914 = vrot.lane.b32.xlu0 %v733, 16
      %v915 = vpop.permute.xlu0 %914
      %916 = vrot.lane.b32.xlu0 %v735, 16
      %v917 = vpop.permute.xlu0 %916
      %918 = vrot.lane.b32.xlu0 %v738, 16
      %v919 = vpop.permute.xlu0 %918
      %920 = vrot.lane.b32.xlu0 %v740, 16
      %v921 = vpop.permute.xlu0 %920
      %922 = vrot.lane.b32.xlu0 %v743, 16
      %v923 = vpop.permute.xlu0 %922
      %924 = vrot.lane.b32.xlu0 %v745, 16
      %v925 = vpop.permute.xlu0 %924
      %926 = vrot.lane.b32.xlu0 %v748, 16
      %v927 = vpop.permute.xlu0 %926
      %928 = vrot.lane.b32.xlu0 %v750, 16
      %v929 = vpop.permute.xlu0 %928
      %930 = vrot.lane.b32.xlu0 %v753, 16
      %v931 = vpop.permute.xlu0 %930
      %932 = vrot.lane.b32.xlu0 %v755, 16
      %v933 = vpop.permute.xlu0 %932
      %934 = vrot.lane.b32.xlu0 %v758, 16
      %v935 = vpop.permute.xlu0 %934
      %936 = vrot.lane.b32.xlu0 %v760, 16
      %v937 = vpop.permute.xlu0 %936
      %938 = vrot.lane.b32.xlu0 %v763, 16
      %v939 = vpop.permute.xlu0 %938
      %940 = vrot.lane.b32.xlu0 %v765, 16
      %v941 = vpop.permute.xlu0 %940
      %942 = vrot.lane.b32.xlu0 %v768, 16
      %v943 = vpop.permute.xlu0 %942
      %944 = vrot.lane.b32.xlu0 %v770, 16
      %v945 = vpop.permute.xlu0 %944
      %946 = vrot.lane.b32.xlu0 %v773, 16
      %v947 = vpop.permute.xlu0 %946
      %948 = vrot.lane.b32.xlu0 %v775, 16
      %v949 = vpop.permute.xlu0 %948
      %950 = vrot.lane.b32.xlu0 %v778, 16
      %v951 = vpop.permute.xlu0 %950
      %952 = vrot.lane.b32.xlu0 %v780, 16
      %v953 = vpop.permute.xlu0 %952
      %954 = vrot.lane.b32.xlu0 %v783, 16
      %v955 = vpop.permute.xlu0 %954
      %956 = vrot.lane.b32.xlu0 %v785, 16
      %v957 = vpop.permute.xlu0 %956
      %958 = vrot.lane.b32.xlu0 %v788, 16
      %v959 = vpop.permute.xlu0 %958
      %960 = vrot.lane.b32.xlu0 %v790, 16
      %v961 = vpop.permute.xlu0 %960
      %994 = vrot.lane.b32.xlu0 %v794, 32
      %v995 = vpop.permute.xlu0 %994
      %996 = vrot.lane.b32.xlu0 %v796, 32
      %v997 = vpop.permute.xlu0 %996
      %998 = vrot.lane.b32.xlu0 %v799, 32
      %v999 = vpop.permute.xlu0 %998
      %1000 = vrot.lane.b32.xlu0 %v801, 32
      %v1001 = vpop.permute.xlu0 %1000
      %1002 = vrot.lane.b32.xlu0 %v804, 32
      %v1003 = vpop.permute.xlu0 %1002
      %1004 = vrot.lane.b32.xlu0 %v806, 32
      %v1005 = vpop.permute.xlu0 %1004
      %1006 = vrot.lane.b32.xlu0 %v809, 32
      %v1007 = vpop.permute.xlu0 %1006
      %1008 = vrot.lane.b32.xlu0 %v811, 32
      %v1009 = vpop.permute.xlu0 %1008
      %1010 = vrot.lane.b32.xlu0 %v814, 32
      %v1011 = vpop.permute.xlu0 %1010
      %1012 = vrot.lane.b32.xlu0 %v816, 32
      %v1013 = vpop.permute.xlu0 %1012
      %1014 = vrot.lane.b32.xlu0 %v819, 32
      %v1015 = vpop.permute.xlu0 %1014
      %1016 = vrot.lane.b32.xlu0 %v821, 32
      %v1017 = vpop.permute.xlu0 %1016
      %1018 = vrot.lane.b32.xlu0 %v824, 32
      %v1019 = vpop.permute.xlu0 %1018
      %1020 = vrot.lane.b32.xlu0 %v826, 32
      %v1021 = vpop.permute.xlu0 %1020
      %1022 = vrot.lane.b32.xlu0 %v829, 32
      %v1023 = vpop.permute.xlu0 %1022
      %1024 = vrot.lane.b32.xlu0 %v831, 32
      %v1025 = vpop.permute.xlu0 %1024
      %1026 = vrot.lane.b32.xlu0 %v834, 32
      %v1027 = vpop.permute.xlu0 %1026
      %1028 = vrot.lane.b32.xlu0 %v836, 32
      %v1029 = vpop.permute.xlu0 %1028
      %1030 = vrot.lane.b32.xlu0 %v839, 32
      %v1031 = vpop.permute.xlu0 %1030
      %1032 = vrot.lane.b32.xlu0 %v841, 32
      %v1033 = vpop.permute.xlu0 %1032
      %1034 = vrot.lane.b32.xlu0 %v844, 32
      %v1035 = vpop.permute.xlu0 %1034
      %1036 = vrot.lane.b32.xlu0 %v846, 32
      %v1037 = vpop.permute.xlu0 %1036
      %1038 = vrot.lane.b32.xlu0 %v849, 32
      %v1039 = vpop.permute.xlu0 %1038
      %1040 = vrot.lane.b32.xlu0 %v851, 32
      %v1041 = vpop.permute.xlu0 %1040
      %1042 = vrot.lane.b32.xlu0 %v854, 32
      %v1043 = vpop.permute.xlu0 %1042
      %1044 = vrot.lane.b32.xlu0 %v856, 32
      %v1045 = vpop.permute.xlu0 %1044
      %1046 = vrot.lane.b32.xlu0 %v859, 32
      %v1047 = vpop.permute.xlu0 %1046
      %1048 = vrot.lane.b32.xlu0 %v861, 32
      %v1049 = vpop.permute.xlu0 %1048
      %1050 = vrot.lane.b32.xlu0 %v864, 32
      %v1051 = vpop.permute.xlu0 %1050
      %1052 = vrot.lane.b32.xlu0 %v866, 32
      %v1053 = vpop.permute.xlu0 %1052
      %1054 = vrot.lane.b32.xlu0 %v869, 32
      %v1055 = vpop.permute.xlu0 %1054
      %1056 = vrot.lane.b32.xlu0 %v871, 32
      %v1057 = vpop.permute.xlu0 %1056
      %1090 = vrot.lane.b32.xlu0 %v611, 48
      %v1091 = vpop.permute.xlu0 %1090
      %1092 = vrot.lane.b32.xlu0 %v612, 48
      %v1093 = vpop.permute.xlu0 %1092
      %1094 = vrot.lane.b32.xlu0 %v614, 48
      %v1095 = vpop.permute.xlu0 %1094
      %1096 = vrot.lane.b32.xlu0 %v615, 48
      %v1097 = vpop.permute.xlu0 %1096
      %1098 = vrot.lane.b32.xlu0 %v617, 48
      %v1099 = vpop.permute.xlu0 %1098
      %1100 = vrot.lane.b32.xlu0 %v618, 48
      %v1101 = vpop.permute.xlu0 %1100
      %1102 = vrot.lane.b32.xlu0 %v620, 48
      %v1103 = vpop.permute.xlu0 %1102
      %1104 = vrot.lane.b32.xlu0 %v621, 48
      %v1105 = vpop.permute.xlu0 %1104
      %1106 = vrot.lane.b32.xlu0 %v623, 48
      %v1107 = vpop.permute.xlu0 %1106
      %1108 = vrot.lane.b32.xlu0 %v624, 48
      %v1109 = vpop.permute.xlu0 %1108
      %1110 = vrot.lane.b32.xlu0 %v626, 48
      %v1111 = vpop.permute.xlu0 %1110
      %1112 = vrot.lane.b32.xlu0 %v627, 48
      %v1113 = vpop.permute.xlu0 %1112
      %1114 = vrot.lane.b32.xlu0 %v629, 48
      %v1115 = vpop.permute.xlu0 %1114
      %1116 = vrot.lane.b32.xlu0 %v630, 48
      %v1117 = vpop.permute.xlu0 %1116
      %1118 = vrot.lane.b32.xlu0 %v632, 48
      %v1119 = vpop.permute.xlu0 %1118
      %1120 = vrot.lane.b32.xlu0 %v633, 48
      %v1121 = vpop.permute.xlu0 %1120
      %1122 = vrot.lane.b32.xlu0 %v635, 48
      %v1123 = vpop.permute.xlu0 %1122
      %1124 = vrot.lane.b32.xlu0 %v636, 48
      %v1125 = vpop.permute.xlu0 %1124
      %1126 = vrot.lane.b32.xlu0 %v638, 48
      %v1127 = vpop.permute.xlu0 %1126
      %1128 = vrot.lane.b32.xlu0 %v639, 48
      %v1129 = vpop.permute.xlu0 %1128
      %1130 = vrot.lane.b32.xlu0 %v641, 48
      %v1131 = vpop.permute.xlu0 %1130
      %1132 = vrot.lane.b32.xlu0 %v642, 48
      %v1133 = vpop.permute.xlu0 %1132
      %1134 = vrot.lane.b32.xlu0 %v644, 48
      %v1135 = vpop.permute.xlu0 %1134
      %1136 = vrot.lane.b32.xlu0 %v645, 48
      %v1137 = vpop.permute.xlu0 %1136
      %1138 = vrot.lane.b32.xlu0 %v647, 48
      %v1139 = vpop.permute.xlu0 %1138
      %1140 = vrot.lane.b32.xlu0 %v648, 48
      %v1141 = vpop.permute.xlu0 %1140
      %1142 = vrot.lane.b32.xlu0 %v650, 48
      %v1143 = vpop.permute.xlu0 %1142
      %1144 = vrot.lane.b32.xlu0 %v651, 48
      %v1145 = vpop.permute.xlu0 %1144
      %1146 = vrot.lane.b32.xlu0 %v653, 48
      %v1147 = vpop.permute.xlu0 %1146
      %1148 = vrot.lane.b32.xlu0 %v654, 48
      %v1149 = vpop.permute.xlu0 %1148
      %1150 = vrot.lane.b32.xlu0 %v656, 48
      %v1151 = vpop.permute.xlu0 %1150
      %1152 = vrot.lane.b32.xlu0 %v657, 48
      %v1153 = vpop.permute.xlu0 %1152
      %1186 = vrot.lane.b32.xlu0 %v718, 64
      %v1187 = vpop.permute.xlu0 %1186
      %1188 = vrot.lane.b32.xlu0 %v720, 64
      %v1189 = vpop.permute.xlu0 %1188
      %1190 = vrot.lane.b32.xlu0 %v723, 64
      %v1191 = vpop.permute.xlu0 %1190
      %1192 = vrot.lane.b32.xlu0 %v725, 64
      %v1193 = vpop.permute.xlu0 %1192
      %1194 = vrot.lane.b32.xlu0 %v728, 64
      %v1195 = vpop.permute.xlu0 %1194
      %1196 = vrot.lane.b32.xlu0 %v730, 64
      %v1197 = vpop.permute.xlu0 %1196
      %1198 = vrot.lane.b32.xlu0 %v733, 64
      %v1199 = vpop.permute.xlu0 %1198
      %1200 = vrot.lane.b32.xlu0 %v735, 64
      %v1201 = vpop.permute.xlu0 %1200
      %1202 = vrot.lane.b32.xlu0 %v738, 64
      %v1203 = vpop.permute.xlu0 %1202
      %1204 = vrot.lane.b32.xlu0 %v740, 64
      %v1205 = vpop.permute.xlu0 %1204
      %1206 = vrot.lane.b32.xlu0 %v743, 64
      %v1207 = vpop.permute.xlu0 %1206
      %1208 = vrot.lane.b32.xlu0 %v745, 64
      %v1209 = vpop.permute.xlu0 %1208
      %1210 = vrot.lane.b32.xlu0 %v748, 64
      %v1211 = vpop.permute.xlu0 %1210
      %1212 = vrot.lane.b32.xlu0 %v750, 64
      %v1213 = vpop.permute.xlu0 %1212
      %1214 = vrot.lane.b32.xlu0 %v753, 64
      %v1215 = vpop.permute.xlu0 %1214
      %1216 = vrot.lane.b32.xlu0 %v755, 64
      %v1217 = vpop.permute.xlu0 %1216
      %1218 = vrot.lane.b32.xlu0 %v758, 64
      %v1219 = vpop.permute.xlu0 %1218
      %1220 = vrot.lane.b32.xlu0 %v760, 64
      %v1221 = vpop.permute.xlu0 %1220
      %1222 = vrot.lane.b32.xlu0 %v763, 64
      %v1223 = vpop.permute.xlu0 %1222
      %1224 = vrot.lane.b32.xlu0 %v765, 64
      %v1225 = vpop.permute.xlu0 %1224
      %1226 = vrot.lane.b32.xlu0 %v768, 64
      %v1227 = vpop.permute.xlu0 %1226
      %1228 = vrot.lane.b32.xlu0 %v770, 64
      %v1229 = vpop.permute.xlu0 %1228
      %1230 = vrot.lane.b32.xlu0 %v773, 64
      %v1231 = vpop.permute.xlu0 %1230
      %1232 = vrot.lane.b32.xlu0 %v775, 64
      %v1233 = vpop.permute.xlu0 %1232
      %1234 = vrot.lane.b32.xlu0 %v778, 64
      %v1235 = vpop.permute.xlu0 %1234
      %1236 = vrot.lane.b32.xlu0 %v780, 64
      %v1237 = vpop.permute.xlu0 %1236
      %1238 = vrot.lane.b32.xlu0 %v783, 64
      %v1239 = vpop.permute.xlu0 %1238
      %1240 = vrot.lane.b32.xlu0 %v785, 64
      %v1241 = vpop.permute.xlu0 %1240
      %1242 = vrot.lane.b32.xlu0 %v788, 64
      %v1243 = vpop.permute.xlu0 %1242
      %1244 = vrot.lane.b32.xlu0 %v790, 64
      %v1245 = vpop.permute.xlu0 %1244
      %1246 = vrot.lane.b32.xlu0 %v877, 64
      %v1247 = vpop.permute.xlu0 %1246
      %1248 = vrot.lane.b32.xlu0 %v879, 64
      %v1249 = vpop.permute.xlu0 %1248
      %1282 = vrot.lane.b32.xlu0 %v799, 80
      %v1283 = vpop.permute.xlu0 %1282
      %1284 = vrot.lane.b32.xlu0 %v801, 80
      %v1285 = vpop.permute.xlu0 %1284
      %1286 = vrot.lane.b32.xlu0 %v804, 80
      %v1287 = vpop.permute.xlu0 %1286
      %1288 = vrot.lane.b32.xlu0 %v806, 80
      %v1289 = vpop.permute.xlu0 %1288
      %1290 = vrot.lane.b32.xlu0 %v809, 80
      %v1291 = vpop.permute.xlu0 %1290
      %1292 = vrot.lane.b32.xlu0 %v811, 80
      %v1293 = vpop.permute.xlu0 %1292
      %1294 = vrot.lane.b32.xlu0 %v814, 80
      %v1295 = vpop.permute.xlu0 %1294
      %1296 = vrot.lane.b32.xlu0 %v816, 80
      %v1297 = vpop.permute.xlu0 %1296
      %1298 = vrot.lane.b32.xlu0 %v819, 80
      %v1299 = vpop.permute.xlu0 %1298
      %1300 = vrot.lane.b32.xlu0 %v821, 80
      %v1301 = vpop.permute.xlu0 %1300
      %1302 = vrot.lane.b32.xlu0 %v824, 80
      %v1303 = vpop.permute.xlu0 %1302
      %1304 = vrot.lane.b32.xlu0 %v826, 80
      %v1305 = vpop.permute.xlu0 %1304
      %1306 = vrot.lane.b32.xlu0 %v829, 80
      %v1307 = vpop.permute.xlu0 %1306
      %1308 = vrot.lane.b32.xlu0 %v831, 80
      %v1309 = vpop.permute.xlu0 %1308
      %1310 = vrot.lane.b32.xlu0 %v834, 80
      %v1311 = vpop.permute.xlu0 %1310
      %1312 = vrot.lane.b32.xlu0 %v836, 80
      %v1313 = vpop.permute.xlu0 %1312
      %1314 = vrot.lane.b32.xlu0 %v839, 80
      %v1315 = vpop.permute.xlu0 %1314
      %1316 = vrot.lane.b32.xlu0 %v841, 80
      %v1317 = vpop.permute.xlu0 %1316
      %1318 = vrot.lane.b32.xlu0 %v844, 80
      %v1319 = vpop.permute.xlu0 %1318
      %1320 = vrot.lane.b32.xlu0 %v846, 80
      %v1321 = vpop.permute.xlu0 %1320
      %1322 = vrot.lane.b32.xlu0 %v849, 80
      %v1323 = vpop.permute.xlu0 %1322
      %1324 = vrot.lane.b32.xlu0 %v851, 80
      %v1325 = vpop.permute.xlu0 %1324
      %1326 = vrot.lane.b32.xlu0 %v854, 80
      %v1327 = vpop.permute.xlu0 %1326
      %1328 = vrot.lane.b32.xlu0 %v856, 80
      %v1329 = vpop.permute.xlu0 %1328
      %1330 = vrot.lane.b32.xlu0 %v859, 80
      %v1331 = vpop.permute.xlu0 %1330
      %1332 = vrot.lane.b32.xlu0 %v861, 80
      %v1333 = vpop.permute.xlu0 %1332
      %1334 = vrot.lane.b32.xlu0 %v864, 80
      %v1335 = vpop.permute.xlu0 %1334
      %1336 = vrot.lane.b32.xlu0 %v866, 80
      %v1337 = vpop.permute.xlu0 %1336
      %1338 = vrot.lane.b32.xlu0 %v869, 80
      %v1339 = vpop.permute.xlu0 %1338
      %1340 = vrot.lane.b32.xlu0 %v871, 80
      %v1341 = vpop.permute.xlu0 %1340
      %1342 = vrot.lane.b32.xlu0 %v882, 80
      %v1343 = vpop.permute.xlu0 %1342
      %1344 = vrot.lane.b32.xlu0 %v884, 80
      %v1345 = vpop.permute.xlu0 %1344
      %1378 = vrot.lane.b32.xlu0 %v614, 96
      %v1379 = vpop.permute.xlu0 %1378
      %1380 = vrot.lane.b32.xlu0 %v615, 96
      %v1381 = vpop.permute.xlu0 %1380
      %1382 = vrot.lane.b32.xlu0 %v617, 96
      %v1383 = vpop.permute.xlu0 %1382
      %1384 = vrot.lane.b32.xlu0 %v618, 96
      %v1385 = vpop.permute.xlu0 %1384
      %1386 = vrot.lane.b32.xlu0 %v620, 96
      %v1387 = vpop.permute.xlu0 %1386
      %1388 = vrot.lane.b32.xlu0 %v621, 96
      %v1389 = vpop.permute.xlu0 %1388
      %1390 = vrot.lane.b32.xlu0 %v623, 96
      %v1391 = vpop.permute.xlu0 %1390
      %1392 = vrot.lane.b32.xlu0 %v624, 96
      %v1393 = vpop.permute.xlu0 %1392
      %1394 = vrot.lane.b32.xlu0 %v626, 96
      %v1395 = vpop.permute.xlu0 %1394
      %1396 = vrot.lane.b32.xlu0 %v627, 96
      %v1397 = vpop.permute.xlu0 %1396
      %1398 = vrot.lane.b32.xlu0 %v629, 96
      %v1399 = vpop.permute.xlu0 %1398
      %1400 = vrot.lane.b32.xlu0 %v630, 96
      %v1401 = vpop.permute.xlu0 %1400
      %1402 = vrot.lane.b32.xlu0 %v632, 96
      %v1403 = vpop.permute.xlu0 %1402
      %1404 = vrot.lane.b32.xlu0 %v633, 96
      %v1405 = vpop.permute.xlu0 %1404
      %1406 = vrot.lane.b32.xlu0 %v635, 96
      %v1407 = vpop.permute.xlu0 %1406
      %1408 = vrot.lane.b32.xlu0 %v636, 96
      %v1409 = vpop.permute.xlu0 %1408
      %1410 = vrot.lane.b32.xlu0 %v638, 96
      %v1411 = vpop.permute.xlu0 %1410
      %1412 = vrot.lane.b32.xlu0 %v639, 96
      %v1413 = vpop.permute.xlu0 %1412
      %1414 = vrot.lane.b32.xlu0 %v641, 96
      %v1415 = vpop.permute.xlu0 %1414
      %1416 = vrot.lane.b32.xlu0 %v642, 96
      %v1417 = vpop.permute.xlu0 %1416
      %1418 = vrot.lane.b32.xlu0 %v644, 96
      %v1419 = vpop.permute.xlu0 %1418
      %1420 = vrot.lane.b32.xlu0 %v645, 96
      %v1421 = vpop.permute.xlu0 %1420
      %1422 = vrot.lane.b32.xlu0 %v647, 96
      %v1423 = vpop.permute.xlu0 %1422
      %1424 = vrot.lane.b32.xlu0 %v648, 96
      %v1425 = vpop.permute.xlu0 %1424
      %1426 = vrot.lane.b32.xlu0 %v650, 96
      %v1427 = vpop.permute.xlu0 %1426
      %1428 = vrot.lane.b32.xlu0 %v651, 96
      %v1429 = vpop.permute.xlu0 %1428
      %1430 = vrot.lane.b32.xlu0 %v653, 96
      %v1431 = vpop.permute.xlu0 %1430
      %1432 = vrot.lane.b32.xlu0 %v654, 96
      %v1433 = vpop.permute.xlu0 %1432
      %1434 = vrot.lane.b32.xlu0 %v656, 96
      %v1435 = vpop.permute.xlu0 %1434
      %1436 = vrot.lane.b32.xlu0 %v657, 96
      %v1437 = vpop.permute.xlu0 %1436
      %1438 = vrot.lane.b32.xlu0 %v659, 96
      %v1439 = vpop.permute.xlu0 %1438
      %1440 = vrot.lane.b32.xlu0 %v660, 96
      %v1441 = vpop.permute.xlu0 %1440
      %1474 = vrot.lane.b32.xlu0 %v723, 112
      %v1475 = vpop.permute.xlu0 %1474
      %1476 = vrot.lane.b32.xlu0 %v725, 112
      %v1477 = vpop.permute.xlu0 %1476
      %1478 = vrot.lane.b32.xlu0 %v728, 112
      %v1479 = vpop.permute.xlu0 %1478
      %1480 = vrot.lane.b32.xlu0 %v730, 112
      %v1481 = vpop.permute.xlu0 %1480
      %1482 = vrot.lane.b32.xlu0 %v733, 112
      %v1483 = vpop.permute.xlu0 %1482
      %1484 = vrot.lane.b32.xlu0 %v735, 112
      %v1485 = vpop.permute.xlu0 %1484
      %1486 = vrot.lane.b32.xlu0 %v738, 112
      %v1487 = vpop.permute.xlu0 %1486
      %1488 = vrot.lane.b32.xlu0 %v740, 112
      %v1489 = vpop.permute.xlu0 %1488
      %1490 = vrot.lane.b32.xlu0 %v743, 112
      %v1491 = vpop.permute.xlu0 %1490
      %1492 = vrot.lane.b32.xlu0 %v745, 112
      %v1493 = vpop.permute.xlu0 %1492
      %1494 = vrot.lane.b32.xlu0 %v748, 112
      %v1495 = vpop.permute.xlu0 %1494
      %1496 = vrot.lane.b32.xlu0 %v750, 112
      %v1497 = vpop.permute.xlu0 %1496
      %1498 = vrot.lane.b32.xlu0 %v753, 112
      %v1499 = vpop.permute.xlu0 %1498
      %1500 = vrot.lane.b32.xlu0 %v755, 112
      %v1501 = vpop.permute.xlu0 %1500
      %1502 = vrot.lane.b32.xlu0 %v758, 112
      %v1503 = vpop.permute.xlu0 %1502
      %1504 = vrot.lane.b32.xlu0 %v760, 112
      %v1505 = vpop.permute.xlu0 %1504
      %1506 = vrot.lane.b32.xlu0 %v763, 112
      %v1507 = vpop.permute.xlu0 %1506
      %1508 = vrot.lane.b32.xlu0 %v765, 112
      %v1509 = vpop.permute.xlu0 %1508
      %1510 = vrot.lane.b32.xlu0 %v768, 112
      %v1511 = vpop.permute.xlu0 %1510
      %1512 = vrot.lane.b32.xlu0 %v770, 112
      %v1513 = vpop.permute.xlu0 %1512
      %1514 = vrot.lane.b32.xlu0 %v773, 112
      %v1515 = vpop.permute.xlu0 %1514
      %1516 = vrot.lane.b32.xlu0 %v775, 112
      %v1517 = vpop.permute.xlu0 %1516
      %1518 = vrot.lane.b32.xlu0 %v778, 112
      %v1519 = vpop.permute.xlu0 %1518
      %1520 = vrot.lane.b32.xlu0 %v780, 112
      %v1521 = vpop.permute.xlu0 %1520
      %1522 = vrot.lane.b32.xlu0 %v783, 112
      %v1523 = vpop.permute.xlu0 %1522
      %1524 = vrot.lane.b32.xlu0 %v785, 112
      %v1525 = vpop.permute.xlu0 %1524
      %1526 = vrot.lane.b32.xlu0 %v788, 112
      %v1527 = vpop.permute.xlu0 %1526
      %1528 = vrot.lane.b32.xlu0 %v790, 112
      %v1529 = vpop.permute.xlu0 %1528
      %1530 = vrot.lane.b32.xlu0 %v877, 112
      %v1531 = vpop.permute.xlu0 %1530
      %1532 = vrot.lane.b32.xlu0 %v879, 112
      %v1533 = vpop.permute.xlu0 %1532
      %1534 = vrot.lane.b32.xlu0 %v890, 112
      %v1535 = vpop.permute.xlu0 %1534
      %1536 = vrot.lane.b32.xlu0 %v892, 112
      %v1537 = vpop.permute.xlu0 %1536
      %vm1570 = vcmask 130048
      %v1571 = vsel %vm1570, %v608, %v899
      %v1572 = vsel %vm1570, %v609, %v901
      %v1573 = vsel %vm1570, %v611, %v903
      %v1574 = vsel %vm1570, %v612, %v905
      %v1575 = vsel %vm1570, %v614, %v907
      %v1576 = vsel %vm1570, %v615, %v909
      %v1577 = vsel %vm1570, %v617, %v911
      %v1578 = vsel %vm1570, %v618, %v913
      %v1579 = vsel %vm1570, %v620, %v915
      %v1580 = vsel %vm1570, %v621, %v917
      %v1581 = vsel %vm1570, %v623, %v919
      %v1582 = vsel %vm1570, %v624, %v921
      %v1583 = vsel %vm1570, %v626, %v923
      %v1584 = vsel %vm1570, %v627, %v925
      %v1585 = vsel %vm1570, %v629, %v927
      %v1586 = vsel %vm1570, %v630, %v929
      %v1587 = vsel %vm1570, %v632, %v931
      %v1588 = vsel %vm1570, %v633, %v933
      %v1589 = vsel %vm1570, %v635, %v935
      %v1590 = vsel %vm1570, %v636, %v937
      %v1591 = vsel %vm1570, %v638, %v939
      %v1592 = vsel %vm1570, %v639, %v941
      %v1593 = vsel %vm1570, %v641, %v943
      %v1594 = vsel %vm1570, %v642, %v945
      %v1595 = vsel %vm1570, %v644, %v947
      %v1596 = vsel %vm1570, %v645, %v949
      %v1597 = vsel %vm1570, %v647, %v951
      %v1598 = vsel %vm1570, %v648, %v953
      %v1599 = vsel %vm1570, %v650, %v955
      %v1600 = vsel %vm1570, %v651, %v957
      %v1601 = vsel %vm1570, %v653, %v959
      %v1602 = vsel %vm1570, %v654, %v961
      %v1603 = vsel %vm319, %v1571, %v995
      %v1604 = vsel %vm319, %v1572, %v997
      %v1605 = vsel %vm319, %v1573, %v999
      %v1606 = vsel %vm319, %v1574, %v1001
      %v1607 = vsel %vm319, %v1575, %v1003
      %v1608 = vsel %vm319, %v1576, %v1005
      %v1609 = vsel %vm319, %v1577, %v1007
      %v1610 = vsel %vm319, %v1578, %v1009
      %v1611 = vsel %vm319, %v1579, %v1011
      %v1612 = vsel %vm319, %v1580, %v1013
      %v1613 = vsel %vm319, %v1581, %v1015
      %v1614 = vsel %vm319, %v1582, %v1017
      %v1615 = vsel %vm319, %v1583, %v1019
      %v1616 = vsel %vm319, %v1584, %v1021
      %v1617 = vsel %vm319, %v1585, %v1023
      %v1618 = vsel %vm319, %v1586, %v1025
      %v1619 = vsel %vm319, %v1587, %v1027
      %v1620 = vsel %vm319, %v1588, %v1029
      %v1621 = vsel %vm319, %v1589, %v1031
      %v1622 = vsel %vm319, %v1590, %v1033
      %v1623 = vsel %vm319, %v1591, %v1035
      %v1624 = vsel %vm319, %v1592, %v1037
      %v1625 = vsel %vm319, %v1593, %v1039
      %v1626 = vsel %vm319, %v1594, %v1041
      %v1627 = vsel %vm319, %v1595, %v1043
      %v1628 = vsel %vm319, %v1596, %v1045
      %v1629 = vsel %vm319, %v1597, %v1047
      %v1630 = vsel %vm319, %v1598, %v1049
      %v1631 = vsel %vm319, %v1599, %v1051
      %v1632 = vsel %vm319, %v1600, %v1053
      %v1633 = vsel %vm319, %v1601, %v1055
      %v1634 = vsel %vm319, %v1602, %v1057
      %vm1635 = vcmask 392192
      %v1636 = vsel %vm1635, %v1603, %v1091
      %v1637 = vsel %vm1635, %v1604, %v1093
      %v1638 = vsel %vm1635, %v1605, %v1095
      %v1639 = vsel %vm1635, %v1606, %v1097
      %v1640 = vsel %vm1635, %v1607, %v1099
      %v1641 = vsel %vm1635, %v1608, %v1101
      %v1642 = vsel %vm1635, %v1609, %v1103
      %v1643 = vsel %vm1635, %v1610, %v1105
      %v1644 = vsel %vm1635, %v1611, %v1107
      %v1645 = vsel %vm1635, %v1612, %v1109
      %v1646 = vsel %vm1635, %v1613, %v1111
      %v1647 = vsel %vm1635, %v1614, %v1113
      %v1648 = vsel %vm1635, %v1615, %v1115
      %v1649 = vsel %vm1635, %v1616, %v1117
      %v1650 = vsel %vm1635, %v1617, %v1119
      %v1651 = vsel %vm1635, %v1618, %v1121
      %v1652 = vsel %vm1635, %v1619, %v1123
      %v1653 = vsel %vm1635, %v1620, %v1125
      %v1654 = vsel %vm1635, %v1621, %v1127
      %v1655 = vsel %vm1635, %v1622, %v1129
      %v1656 = vsel %vm1635, %v1623, %v1131
      %v1657 = vsel %vm1635, %v1624, %v1133
      %v1658 = vsel %vm1635, %v1625, %v1135
      %v1659 = vsel %vm1635, %v1626, %v1137
      %v1660 = vsel %vm1635, %v1627, %v1139
      %v1661 = vsel %vm1635, %v1628, %v1141
      %v1662 = vsel %vm1635, %v1629, %v1143
      %v1663 = vsel %vm1635, %v1630, %v1145
      %v1664 = vsel %vm1635, %v1631, %v1147
      %v1665 = vsel %vm1635, %v1632, %v1149
      %v1666 = vsel %vm1635, %v1633, %v1151
      %v1667 = vsel %vm1635, %v1634, %v1153
      %vm1668 = vcmask 523264
      %v1669 = vsel %vm1668, %v1636, %v1187
      %v1670 = vsel %vm1668, %v1637, %v1189
      %v1671 = vsel %vm1668, %v1638, %v1191
      %v1672 = vsel %vm1668, %v1639, %v1193
      %v1673 = vsel %vm1668, %v1640, %v1195
      %v1674 = vsel %vm1668, %v1641, %v1197
      %v1675 = vsel %vm1668, %v1642, %v1199
      %v1676 = vsel %vm1668, %v1643, %v1201
      %v1677 = vsel %vm1668, %v1644, %v1203
      %v1678 = vsel %vm1668, %v1645, %v1205
      %v1679 = vsel %vm1668, %v1646, %v1207
      %v1680 = vsel %vm1668, %v1647, %v1209
      %v1681 = vsel %vm1668, %v1648, %v1211
      %v1682 = vsel %vm1668, %v1649, %v1213
      %v1683 = vsel %vm1668, %v1650, %v1215
      %v1684 = vsel %vm1668, %v1651, %v1217
      %v1685 = vsel %vm1668, %v1652, %v1219
      %v1686 = vsel %vm1668, %v1653, %v1221
      %v1687 = vsel %vm1668, %v1654, %v1223
      %v1688 = vsel %vm1668, %v1655, %v1225
      %v1689 = vsel %vm1668, %v1656, %v1227
      %v1690 = vsel %vm1668, %v1657, %v1229
      %v1691 = vsel %vm1668, %v1658, %v1231
      %v1692 = vsel %vm1668, %v1659, %v1233
      %v1693 = vsel %vm1668, %v1660, %v1235
      %v1694 = vsel %vm1668, %v1661, %v1237
      %v1695 = vsel %vm1668, %v1662, %v1239
      %v1696 = vsel %vm1668, %v1663, %v1241
      %v1697 = vsel %vm1668, %v1664, %v1243
      %v1698 = vsel %vm1668, %v1665, %v1245
      %v1699 = vsel %vm1668, %v1666, %v1247
      %v1700 = vsel %vm1668, %v1667, %v1249
      %vm1701 = vcmask 654336
      %v1702 = vsel %vm1701, %v1669, %v1283
      %v1703 = vsel %vm1701, %v1670, %v1285
      %v1704 = vsel %vm1701, %v1671, %v1287
      %v1705 = vsel %vm1701, %v1672, %v1289
      %v1706 = vsel %vm1701, %v1673, %v1291
      %v1707 = vsel %vm1701, %v1674, %v1293
      %v1708 = vsel %vm1701, %v1675, %v1295
      %v1709 = vsel %vm1701, %v1676, %v1297
      %v1710 = vsel %vm1701, %v1677, %v1299
      %v1711 = vsel %vm1701, %v1678, %v1301
      %v1712 = vsel %vm1701, %v1679, %v1303
      %v1713 = vsel %vm1701, %v1680, %v1305
      %v1714 = vsel %vm1701, %v1681, %v1307
      %v1715 = vsel %vm1701, %v1682, %v1309
      %v1716 = vsel %vm1701, %v1683, %v1311
      %v1717 = vsel %vm1701, %v1684, %v1313
      %v1718 = vsel %vm1701, %v1685, %v1315
      %v1719 = vsel %vm1701, %v1686, %v1317
      %v1720 = vsel %vm1701, %v1687, %v1319
      %v1721 = vsel %vm1701, %v1688, %v1321
      %v1722 = vsel %vm1701, %v1689, %v1323
      %v1723 = vsel %vm1701, %v1690, %v1325
      %v1724 = vsel %vm1701, %v1691, %v1327
      %v1725 = vsel %vm1701, %v1692, %v1329
      %v1726 = vsel %vm1701, %v1693, %v1331
      %v1727 = vsel %vm1701, %v1694, %v1333
      %v1728 = vsel %vm1701, %v1695, %v1335
      %v1729 = vsel %vm1701, %v1696, %v1337
      %v1730 = vsel %vm1701, %v1697, %v1339
      %v1731 = vsel %vm1701, %v1698, %v1341
      %v1732 = vsel %vm1701, %v1699, %v1343
      %v1733 = vsel %vm1701, %v1700, %v1345
      %vm1734 = vcmask 785408
      %v1735 = vsel %vm1734, %v1702, %v1379
      %v1736 = vsel %vm1734, %v1703, %v1381
      %v1737 = vsel %vm1734, %v1704, %v1383
      %v1738 = vsel %vm1734, %v1705, %v1385
      %v1739 = vsel %vm1734, %v1706, %v1387
      %v1740 = vsel %vm1734, %v1707, %v1389
      %v1741 = vsel %vm1734, %v1708, %v1391
      %v1742 = vsel %vm1734, %v1709, %v1393
      %v1743 = vsel %vm1734, %v1710, %v1395
      %v1744 = vsel %vm1734, %v1711, %v1397
      %v1745 = vsel %vm1734, %v1712, %v1399
      %v1746 = vsel %vm1734, %v1713, %v1401
      %v1747 = vsel %vm1734, %v1714, %v1403
      %v1748 = vsel %vm1734, %v1715, %v1405
      %v1749 = vsel %vm1734, %v1716, %v1407
      %v1750 = vsel %vm1734, %v1717, %v1409
      %v1751 = vsel %vm1734, %v1718, %v1411
      %v1752 = vsel %vm1734, %v1719, %v1413
      %v1753 = vsel %vm1734, %v1720, %v1415
      %v1754 = vsel %vm1734, %v1721, %v1417
      %v1755 = vsel %vm1734, %v1722, %v1419
      %v1756 = vsel %vm1734, %v1723, %v1421
      %v1757 = vsel %vm1734, %v1724, %v1423
      %v1758 = vsel %vm1734, %v1725, %v1425
      %v1759 = vsel %vm1734, %v1726, %v1427
      %v1760 = vsel %vm1734, %v1727, %v1429
      %v1761 = vsel %vm1734, %v1728, %v1431
      %v1762 = vsel %vm1734, %v1729, %v1433
      %v1763 = vsel %vm1734, %v1730, %v1435
      %v1764 = vsel %vm1734, %v1731, %v1437
      %v1765 = vsel %vm1734, %v1732, %v1439
      %v1766 = vsel %vm1734, %v1733, %v1441
      %vm1767 = vcmask 916480
      %v1768 = vsel %vm1767, %v1735, %v1475
      %v1769 = vsel %vm1767, %v1736, %v1477
      %v1770 = vsel %vm1767, %v1737, %v1479
      %v1771 = vsel %vm1767, %v1738, %v1481
      %v1772 = vsel %vm1767, %v1739, %v1483
      %v1773 = vsel %vm1767, %v1740, %v1485
      %v1774 = vsel %vm1767, %v1741, %v1487
      %v1775 = vsel %vm1767, %v1742, %v1489
      %v1776 = vsel %vm1767, %v1743, %v1491
      %v1777 = vsel %vm1767, %v1744, %v1493
      %v1778 = vsel %vm1767, %v1745, %v1495
      %v1779 = vsel %vm1767, %v1746, %v1497
      %v1780 = vsel %vm1767, %v1747, %v1499
      %v1781 = vsel %vm1767, %v1748, %v1501
      %v1782 = vsel %vm1767, %v1749, %v1503
      %v1783 = vsel %vm1767, %v1750, %v1505
      %v1784 = vsel %vm1767, %v1751, %v1507
      %v1785 = vsel %vm1767, %v1752, %v1509
      %v1786 = vsel %vm1767, %v1753, %v1511
      %v1787 = vsel %vm1767, %v1754, %v1513
      %v1788 = vsel %vm1767, %v1755, %v1515
      %v1789 = vsel %vm1767, %v1756, %v1517
      %v1790 = vsel %vm1767, %v1757, %v1519
      %v1791 = vsel %vm1767, %v1758, %v1521
      %v1792 = vsel %vm1767, %v1759, %v1523
      %v1793 = vsel %vm1767, %v1760, %v1525
      %v1794 = vsel %vm1767, %v1761, %v1527
      %v1795 = vsel %vm1767, %v1762, %v1529
      %v1796 = vsel %vm1767, %v1763, %v1531
      %v1797 = vsel %vm1767, %v1764, %v1533
      %v1798 = vsel %vm1767, %v1765, %v1535
      %v1799 = vsel %vm1767, %v1766, %v1537
      %v1800 = vld [vmem:[%s1] sm:$0xff]
      %v1801 = vld [vmem:[%s1 + $0x8] sm:$0xff]
      %v1802 = vld [vmem:[%s1 + $0x10] sm:$0xff]
      %v1803 = vld [vmem:[%s1 + $0x18] sm:$0xff]
      %v1804 = vld [vmem:[%s1 + $0x20] sm:$0xff]
      %v1805 = vld [vmem:[%s1 + $0x28] sm:$0xff]
      %v1806 = vld [vmem:[%s1 + $0x30] sm:$0xff]
      %v1807 = vld [vmem:[%s1 + $0x38] sm:$0xff]
      %v1808 = vld [vmem:[%s1 + $0x40] sm:$0xff]
      %v1809 = vld [vmem:[%s1 + $0x48] sm:$0xff]
      %v1810 = vld [vmem:[%s1 + $0x50] sm:$0xff]
      %v1811 = vld [vmem:[%s1 + $0x58] sm:$0xff]
      %v1812 = vld [vmem:[%s1 + $0x60] sm:$0xff]
      %v1813 = vld [vmem:[%s1 + $0x68] sm:$0xff]
      %v1814 = vld [vmem:[%s1 + $0x70] sm:$0xff]
      %v1815 = vld [vmem:[%s1 + $0x78] sm:$0xff]
      %v1816 = vld [vmem:[%s1 + $0x80] sm:$0xff]
      %v1817 = vld [vmem:[%s1 + $0x88] sm:$0xff]
      %v1818 = vld [vmem:[%s2] sm:$0x1]
      %v1820 = vperm.slane %v1818, 0
      %v1822 = vsel %vm1570, %v804, 0
      %v1824 = vsel %vm1570, %v806, 0
      %v1826 = vsel %vm1570, %v809, 0
      %v1828 = vsel %vm1570, %v811, 0
      %v1830 = vsel %vm1570, %v814, 0
      %v1832 = vsel %vm1570, %v816, 0
      %v1834 = vsel %vm1570, %v819, 0
      %v1836 = vsel %vm1570, %v821, 0
      %v1838 = vsel %vm1570, %v824, 0
      %v1840 = vsel %vm1570, %v826, 0
      %v1842 = vsel %vm1570, %v829, 0
      %v1844 = vsel %vm1570, %v831, 0
      %v1846 = vsel %vm1570, %v834, 0
      %v1848 = vsel %vm1570, %v836, 0
      %v1850 = vsel %vm1570, %v839, 0
      %v1852 = vsel %vm1570, %v841, 0
      %v1854 = vsel %vm1570, %v844, 0
      %v1856 = vsel %vm1570, %v846, 0
      %v1858 = vsel %vm1570, %v849, 0
      %v1860 = vsel %vm1570, %v851, 0
      %v1862 = vsel %vm1570, %v854, 0
      %v1864 = vsel %vm1570, %v856, 0
      %v1866 = vsel %vm1570, %v859, 0
      %v1868 = vsel %vm1570, %v861, 0
      %v1870 = vsel %vm1570, %v864, 0
      %v1872 = vsel %vm1570, %v866, 0
      %v1874 = vsel %vm1570, %v869, 0
      %v1876 = vsel %vm1570, %v871, 0
      %v1878 = vsel %vm1570, %v882, 0
      %v1880 = vsel %vm1570, %v884, 0
      %v1882 = vsel %vm1570, %v895, 0
      %v1884 = vsel %vm1570, %v897, 0
      %1886 = vmatpush.msra.mxu0 %v1815
      %1887 = vmatpush.msra.mxu0 %v1814
      %1888 = vmatpush.msra.mxu0 %v1813
      %1889 = vmatpush.msra.mxu0 %v1812
      %1890 = vmatpush.msra.mxu0 %v1811
      %1891 = vmatpush.msra.mxu0 %v1810
      %1892 = vmatpush.msra.mxu0 %v1809
      %1893 = vmatpush.msra.mxu0 %v1808
      %1894 = vmatpush.msra.mxu0 %v1807
      %1895 = vmatpush.msra.mxu0 %v1806
      %1896 = vmatpush.msra.mxu0 %v1805
      %1897 = vmatpush.msra.mxu0 %v1804
      %1898 = vmatpush.msra.mxu0 %v1803
      %1899 = vmatpush.msra.mxu0 %v1802
      %1900 = vmatpush.msra.mxu0 %v1801
      %1901 = vmatpush.msra.mxu0 %v1800
      %1902 = vmatmul.f32.gmra.mxu0 %v1768
      %v1903 = vpop.f32.mrf.mxu0
      %v1904 = vadd.f32 %v1820, %v1903
      %1905 = vmatmul.f32.gmra.mxu0 %v1769
      %v1906 = vpop.f32.mrf.mxu0
      %v1907 = vadd.f32 %v1820, %v1906
      %1908 = vmatmul.f32.gmra.mxu0 %v1770
      %v1909 = vpop.f32.mrf.mxu0
      %v1910 = vadd.f32 %v1820, %v1909
      %1911 = vmatmul.f32.gmra.mxu0 %v1771
      %v1912 = vpop.f32.mrf.mxu0
      %v1913 = vadd.f32 %v1820, %v1912
      %1914 = vmatmul.f32.gmra.mxu0 %v1772
      %v1915 = vpop.f32.mrf.mxu0
      %v1916 = vadd.f32 %v1820, %v1915
      %1917 = vmatmul.f32.gmra.mxu0 %v1773
      %v1918 = vpop.f32.mrf.mxu0
      %v1919 = vadd.f32 %v1820, %v1918
      %1920 = vmatmul.f32.gmra.mxu0 %v1774
      %v1921 = vpop.f32.mrf.mxu0
      %v1922 = vadd.f32 %v1820, %v1921
      %1923 = vmatmul.f32.gmra.mxu0 %v1775
      %v1924 = vpop.f32.mrf.mxu0
      %v1925 = vadd.f32 %v1820, %v1924
      %1926 = vmatmul.f32.gmra.mxu0 %v1776
      %v1927 = vpop.f32.mrf.mxu0
      %v1928 = vadd.f32 %v1820, %v1927
      %1929 = vmatmul.f32.gmra.mxu0 %v1777
      %v1930 = vpop.f32.mrf.mxu0
      %v1931 = vadd.f32 %v1820, %v1930
      %1932 = vmatmul.f32.gmra.mxu0 %v1778
      %v1933 = vpop.f32.mrf.mxu0
      %v1934 = vadd.f32 %v1820, %v1933
      %1935 = vmatmul.f32.gmra.mxu0 %v1779
      %v1936 = vpop.f32.mrf.mxu0
      %v1937 = vadd.f32 %v1820, %v1936
      %1938 = vmatmul.f32.gmra.mxu0 %v1780
      %v1939 = vpop.f32.mrf.mxu0
      %v1940 = vadd.f32 %v1820, %v1939
      %1941 = vmatmul.f32.gmra.mxu0 %v1781
      %v1942 = vpop.f32.mrf.mxu0
      %v1943 = vadd.f32 %v1820, %v1942
      %1944 = vmatmul.f32.gmra.mxu0 %v1782
      %v1945 = vpop.f32.mrf.mxu0
      %v1946 = vadd.f32 %v1820, %v1945
      %1947 = vmatmul.f32.gmra.mxu0 %v1783
      %v1948 = vpop.f32.mrf.mxu0
      %v1949 = vadd.f32 %v1820, %v1948
      %1950 = vmatmul.f32.gmra.mxu0 %v1784
      %v1951 = vpop.f32.mrf.mxu0
      %v1952 = vadd.f32 %v1820, %v1951
      %1953 = vmatmul.f32.gmra.mxu0 %v1785
      %v1954 = vpop.f32.mrf.mxu0
      %v1955 = vadd.f32 %v1820, %v1954
      %1956 = vmatmul.f32.gmra.mxu0 %v1786
      %v1957 = vpop.f32.mrf.mxu0
      %v1958 = vadd.f32 %v1820, %v1957
      %1959 = vmatmul.f32.gmra.mxu0 %v1787
      %v1960 = vpop.f32.mrf.mxu0
      %v1961 = vadd.f32 %v1820, %v1960
      %1962 = vmatmul.f32.gmra.mxu0 %v1788
      %v1963 = vpop.f32.mrf.mxu0
      %v1964 = vadd.f32 %v1820, %v1963
      %1965 = vmatmul.f32.gmra.mxu0 %v1789
      %v1966 = vpop.f32.mrf.mxu0
      %v1967 = vadd.f32 %v1820, %v1966
      %1968 = vmatmul.f32.gmra.mxu0 %v1790
      %v1969 = vpop.f32.mrf.mxu0
      %v1970 = vadd.f32 %v1820, %v1969
      %1971 = vmatmul.f32.gmra.mxu0 %v1791
      %v1972 = vpop.f32.mrf.mxu0
      %v1973 = vadd.f32 %v1820, %v1972
      %1974 = vmatmul.f32.gmra.mxu0 %v1792
      %v1975 = vpop.f32.mrf.mxu0
      %v1976 = vadd.f32 %v1820, %v1975
      %1977 = vmatmul.f32.gmra.mxu0 %v1793
      %v1978 = vpop.f32.mrf.mxu0
      %v1979 = vadd.f32 %v1820, %v1978
      %1980 = vmatmul.f32.gmra.mxu0 %v1794
      %v1981 = vpop.f32.mrf.mxu0
      %v1982 = vadd.f32 %v1820, %v1981
      %1983 = vmatmul.f32.gmra.mxu0 %v1795
      %v1984 = vpop.f32.mrf.mxu0
      %v1985 = vadd.f32 %v1820, %v1984
      %1986 = vmatmul.f32.gmra.mxu0 %v1796
      %v1987 = vpop.f32.mrf.mxu0
      %v1988 = vadd.f32 %v1820, %v1987
      %1989 = vmatmul.f32.gmra.mxu0 %v1797
      %v1990 = vpop.f32.mrf.mxu0
      %v1991 = vadd.f32 %v1820, %v1990
      %1992 = vmatmul.f32.gmra.mxu0 %v1798
      %v1993 = vpop.f32.mrf.mxu0
      %v1994 = vadd.f32 %v1820, %v1993
      %1995 = vmatmul.f32.gmra.mxu0 %v1799
      %v1996 = vpop.f32.mrf.mxu0
      %v1997 = vadd.f32 %v1820, %v1996
      %1998 = vdwg.mxu0
      %1999 = vmatpush.msra.mxu0 0.0
      %2000 = vmatpush.msra.mxu0 0.0
      %2001 = vmatpush.msra.mxu0 0.0
      %2002 = vmatpush.msra.mxu0 0.0
      %2003 = vmatpush.msra.mxu0 0.0
      %2004 = vmatpush.msra.mxu0 0.0
      %2005 = vmatpush.msra.mxu0 0.0
      %2006 = vmatpush.msra.mxu0 0.0
      %2007 = vmatpush.msra.mxu0 0.0
      %2008 = vmatpush.msra.mxu0 0.0
      %2009 = vmatpush.msra.mxu0 0.0
      %2010 = vmatpush.msra.mxu0 0.0
      %2011 = vmatpush.msra.mxu0 0.0
      %2012 = vmatpush.msra.mxu0 0.0
      %2013 = vmatpush.msra.mxu0 %v1817
      %2014 = vmatpush.msra.mxu0 %v1816
      %2015 = vmatmul.f32.gmra.mxu0 %v1822
      %v2016 = vpop.f32.mrf.mxu0
      %v2017 = vadd.f32 %v1904, %v2016
      %2018 = vmatmul.f32.gmra.mxu0 %v1824
      %v2019 = vpop.f32.mrf.mxu0
      %v2020 = vadd.f32 %v1907, %v2019
      %2021 = vmatmul.f32.gmra.mxu0 %v1826
      %v2022 = vpop.f32.mrf.mxu0
      %v2023 = vadd.f32 %v1910, %v2022
      %2024 = vmatmul.f32.gmra.mxu0 %v1828
      %v2025 = vpop.f32.mrf.mxu0
      %v2026 = vadd.f32 %v1913, %v2025
      %2027 = vmatmul.f32.gmra.mxu0 %v1830
      %v2028 = vpop.f32.mrf.mxu0
      %v2029 = vadd.f32 %v1916, %v2028
      %2030 = vmatmul.f32.gmra.mxu0 %v1832
      %v2031 = vpop.f32.mrf.mxu0
      %v2032 = vadd.f32 %v1919, %v2031
      %2033 = vmatmul.f32.gmra.mxu0 %v1834
      %v2034 = vpop.f32.mrf.mxu0
      %v2035 = vadd.f32 %v1922, %v2034
      %2036 = vmatmul.f32.gmra.mxu0 %v1836
      %v2037 = vpop.f32.mrf.mxu0
      %v2038 = vadd.f32 %v1925, %v2037
      %2039 = vmatmul.f32.gmra.mxu0 %v1838
      %v2040 = vpop.f32.mrf.mxu0
      %v2041 = vadd.f32 %v1928, %v2040
      %2042 = vmatmul.f32.gmra.mxu0 %v1840
      %v2043 = vpop.f32.mrf.mxu0
      %v2044 = vadd.f32 %v1931, %v2043
      %2045 = vmatmul.f32.gmra.mxu0 %v1842
      %v2046 = vpop.f32.mrf.mxu0
      %v2047 = vadd.f32 %v1934, %v2046
      %2048 = vmatmul.f32.gmra.mxu0 %v1844
      %v2049 = vpop.f32.mrf.mxu0
      %v2050 = vadd.f32 %v1937, %v2049
      %2051 = vmatmul.f32.gmra.mxu0 %v1846
      %v2052 = vpop.f32.mrf.mxu0
      %v2053 = vadd.f32 %v1940, %v2052
      %2054 = vmatmul.f32.gmra.mxu0 %v1848
      %v2055 = vpop.f32.mrf.mxu0
      %v2056 = vadd.f32 %v1943, %v2055
      %2057 = vmatmul.f32.gmra.mxu0 %v1850
      %v2058 = vpop.f32.mrf.mxu0
      %v2059 = vadd.f32 %v1946, %v2058
      %2060 = vmatmul.f32.gmra.mxu0 %v1852
      %v2061 = vpop.f32.mrf.mxu0
      %v2062 = vadd.f32 %v1949, %v2061
      %2063 = vmatmul.f32.gmra.mxu0 %v1854
      %v2064 = vpop.f32.mrf.mxu0
      %v2065 = vadd.f32 %v1952, %v2064
      %2066 = vmatmul.f32.gmra.mxu0 %v1856
      %v2067 = vpop.f32.mrf.mxu0
      %v2068 = vadd.f32 %v1955, %v2067
      %2069 = vmatmul.f32.gmra.mxu0 %v1858
      %v2070 = vpop.f32.mrf.mxu0
      %v2071 = vadd.f32 %v1958, %v2070
      %2072 = vmatmul.f32.gmra.mxu0 %v1860
      %v2073 = vpop.f32.mrf.mxu0
      %v2074 = vadd.f32 %v1961, %v2073
      %2075 = vmatmul.f32.gmra.mxu0 %v1862
      %v2076 = vpop.f32.mrf.mxu0
      %v2077 = vadd.f32 %v1964, %v2076
      %2078 = vmatmul.f32.gmra.mxu0 %v1864
      %v2079 = vpop.f32.mrf.mxu0
      %v2080 = vadd.f32 %v1967, %v2079
      %2081 = vmatmul.f32.gmra.mxu0 %v1866
      %v2082 = vpop.f32.mrf.mxu0
      %v2083 = vadd.f32 %v1970, %v2082
      %2084 = vmatmul.f32.gmra.mxu0 %v1868
      %v2085 = vpop.f32.mrf.mxu0
      %v2086 = vadd.f32 %v1973, %v2085
      %2087 = vmatmul.f32.gmra.mxu0 %v1870
      %v2088 = vpop.f32.mrf.mxu0
      %v2089 = vadd.f32 %v1976, %v2088
      %2090 = vmatmul.f32.gmra.mxu0 %v1872
      %v2091 = vpop.f32.mrf.mxu0
      %v2092 = vadd.f32 %v1979, %v2091
      %2093 = vmatmul.f32.gmra.mxu0 %v1874
      %v2094 = vpop.f32.mrf.mxu0
      %v2095 = vadd.f32 %v1982, %v2094
      %2096 = vmatmul.f32.gmra.mxu0 %v1876
      %v2097 = vpop.f32.mrf.mxu0
      %v2098 = vadd.f32 %v1985, %v2097
      %2099 = vmatmul.f32.gmra.mxu0 %v1878
      %v2100 = vpop.f32.mrf.mxu0
      %v2101 = vadd.f32 %v1988, %v2100
      %2102 = vmatmul.f32.gmra.mxu0 %v1880
      %v2103 = vpop.f32.mrf.mxu0
      %v2104 = vadd.f32 %v1991, %v2103
      %2105 = vmatmul.f32.gmra.mxu0 %v1882
      %v2106 = vpop.f32.mrf.mxu0
      %v2107 = vadd.f32 %v1994, %v2106
      %2108 = vmatmul.f32.gmra.mxu0 %v1884
      %v2109 = vpop.f32.mrf.mxu0
      %v2110 = vadd.f32 %v1997, %v2109
      %2111 = vdwg.mxu0
      %v2112 = vmax.f32 %v2017, 0.0
      %v2113 = vmax.f32 %v2020, 0.0
      %v2114 = vmax.f32 %v2023, 0.0
      %v2115 = vmax.f32 %v2026, 0.0
      %v2116 = vmax.f32 %v2029, 0.0
      %v2117 = vmax.f32 %v2032, 0.0
      %v2118 = vmax.f32 %v2035, 0.0
      %v2119 = vmax.f32 %v2038, 0.0
      %v2120 = vmax.f32 %v2041, 0.0
      %v2121 = vmax.f32 %v2044, 0.0
      %v2122 = vmax.f32 %v2047, 0.0
      %v2123 = vmax.f32 %v2050, 0.0
      %v2124 = vmax.f32 %v2053, 0.0
      %v2125 = vmax.f32 %v2056, 0.0
      %v2126 = vmax.f32 %v2059, 0.0
      %v2127 = vmax.f32 %v2062, 0.0
      %v2128 = vmax.f32 %v2065, 0.0
      %v2129 = vmax.f32 %v2068, 0.0
      %v2130 = vmax.f32 %v2071, 0.0
      %v2131 = vmax.f32 %v2074, 0.0
      %v2132 = vmax.f32 %v2077, 0.0
      %v2133 = vmax.f32 %v2080, 0.0
      %v2134 = vmax.f32 %v2083, 0.0
      %v2135 = vmax.f32 %v2086, 0.0
      %v2136 = vmax.f32 %v2089, 0.0
      %v2137 = vmax.f32 %v2092, 0.0
      %v2138 = vmax.f32 %v2095, 0.0
      %v2139 = vmax.f32 %v2098, 0.0
      %v2140 = vmax.f32 %v2101, 0.0
      %v2141 = vmax.f32 %v2104, 0.0
      %v2142 = vmax.f32 %v2107, 0.0
      %v2143 = vmax.f32 %v2110, 0.0
      %2144 = vst.msk [vmem:[%s313] sm:$0xff] %vm319, %v2112
      %2145 = vst.msk [vmem:[%s313 + $0x8] sm:$0xff] %vm319, %v2113
      %2146 = vst.msk [vmem:[%s313 + $0x10] sm:$0xff] %vm319, %v2114
      %2147 = vst.msk [vmem:[%s313 + $0x18] sm:$0xff] %vm319, %v2115
      %2148 = vst.msk [vmem:[%s313 + $0x20] sm:$0xff] %vm319, %v2116
      %2149 = vst.msk [vmem:[%s313 + $0x28] sm:$0xff] %vm319, %v2117
      %2150 = vst.msk [vmem:[%s313 + $0x30] sm:$0xff] %vm319, %v2118
      %2151 = vst.msk [vmem:[%s313 + $0x38] sm:$0xff] %vm319, %v2119
      %2152 = vst.msk [vmem:[%s313 + $0x40] sm:$0xff] %vm319, %v2120
      %2153 = vst.msk [vmem:[%s313 + $0x48] sm:$0xff] %vm319, %v2121
      %2154 = vst.msk [vmem:[%s313 + $0x50] sm:$0xff] %vm319, %v2122
      %2155 = vst.msk [vmem:[%s313 + $0x58] sm:$0xff] %vm319, %v2123
      %2156 = vst.msk [vmem:[%s313 + $0x60] sm:$0xff] %vm319, %v2124
      %2157 = vst.msk [vmem:[%s313 + $0x68] sm:$0xff] %vm319, %v2125
      %2158 = vst.msk [vmem:[%s313 + $0x70] sm:$0xff] %vm319, %v2126
      %2159 = vst.msk [vmem:[%s313 + $0x78] sm:$0xff] %vm319, %v2127
      %2160 = vst.msk [vmem:[%s313 + $0x80] sm:$0xff] %vm319, %v2128
      %2161 = vst.msk [vmem:[%s313 + $0x88] sm:$0xff] %vm319, %v2129
      %2162 = vst.msk [vmem:[%s313 + $0x90] sm:$0xff] %vm319, %v2130
      %2163 = vst.msk [vmem:[%s313 + $0x98] sm:$0xff] %vm319, %v2131
      %2164 = vst.msk [vmem:[%s313 + $0xa0] sm:$0xff] %vm319, %v2132
      %2165 = vst.msk [vmem:[%s313 + $0xa8] sm:$0xff] %vm319, %v2133
      %2166 = vst.msk [vmem:[%s313 + $0xb0] sm:$0xff] %vm319, %v2134
      %2167 = vst.msk [vmem:[%s313 + $0xb8] sm:$0xff] %vm319, %v2135
      %2168 = vst.msk [vmem:[%s313 + $0xc0] sm:$0xff] %vm319, %v2136
      %2169 = vst.msk [vmem:[%s313 + $0xc8] sm:$0xff] %vm319, %v2137
      %2170 = vst.msk [vmem:[%s313 + $0xd0] sm:$0xff] %vm319, %v2138
      %2171 = vst.msk [vmem:[%s313 + $0xd8] sm:$0xff] %vm319, %v2139
      %2172 = vst.msk [vmem:[%s313 + $0xe0] sm:$0xff] %vm319, %v2140
      %2173 = vst.msk [vmem:[%s313 + $0xe8] sm:$0xff] %vm319, %v2141
      %2174 = vst.msk [vmem:[%s313 + $0xf0] sm:$0xff] %vm319, %v2142
      %2175 = vst.msk [vmem:[%s313 + $0xf8] sm:$0xff] %vm319, %v2143
      %s2176 = scalar_lea.vmem [#allocation2], 32
      %2177 = vst.msk [vmem:[%s2176 + $0x8] sm:$0xff] %vm319, %v2112
      %2178 = vst.msk [vmem:[%s2176 + $0x10] sm:$0xff] %vm319, %v2113
      %2179 = vst.msk [vmem:[%s2176 + $0x28] sm:$0xff] %vm319, %v2114
      %2180 = vst.msk [vmem:[%s2176 + $0x30] sm:$0xff] %vm319, %v2115
      %2181 = vst.msk [vmem:[%s2176 + $0x48] sm:$0xff] %vm319, %v2116
      %2182 = vst.msk [vmem:[%s2176 + $0x50] sm:$0xff] %vm319, %v2117
      %2183 = vst.msk [vmem:[%s2176 + $0x68] sm:$0xff] %vm319, %v2118
      %2184 = vst.msk [vmem:[%s2176 + $0x70] sm:$0xff] %vm319, %v2119
      %2185 = vst.msk [vmem:[%s2176 + $0x88] sm:$0xff] %vm319, %v2120
      %2186 = vst.msk [vmem:[%s2176 + $0x90] sm:$0xff] %vm319, %v2121
      %2187 = vst.msk [vmem:[%s2176 + $0xa8] sm:$0xff] %vm319, %v2122
      %2188 = vst.msk [vmem:[%s2176 + $0xb0] sm:$0xff] %vm319, %v2123
      %2189 = vst.msk [vmem:[%s2176 + $0xc8] sm:$0xff] %vm319, %v2124
      %2190 = vst.msk [vmem:[%s2176 + $0xd0] sm:$0xff] %vm319, %v2125
      %2191 = vst.msk [vmem:[%s2176 + $0xe8] sm:$0xff] %vm319, %v2126
      %2192 = vst.msk [vmem:[%s2176 + $0xf0] sm:$0xff] %vm319, %v2127
      %2193 = vst.msk [vmem:[%s2176 + $0x108] sm:$0xff] %vm319, %v2128
      %2194 = vst.msk [vmem:[%s2176 + $0x110] sm:$0xff] %vm319, %v2129
      %2195 = vst.msk [vmem:[%s2176 + $0x128] sm:$0xff] %vm319, %v2130
      %2196 = vst.msk [vmem:[%s2176 + $0x130] sm:$0xff] %vm319, %v2131
      %2197 = vst.msk [vmem:[%s2176 + $0x148] sm:$0xff] %vm319, %v2132
      %2198 = vst.msk [vmem:[%s2176 + $0x150] sm:$0xff] %vm319, %v2133
      %2199 = vst.msk [vmem:[%s2176 + $0x168] sm:$0xff] %vm319, %v2134
      %2200 = vst.msk [vmem:[%s2176 + $0x170] sm:$0xff] %vm319, %v2135
      %2201 = vst.msk [vmem:[%s2176 + $0x188] sm:$0xff] %vm319, %v2136
      %2202 = vst.msk [vmem:[%s2176 + $0x190] sm:$0xff] %vm319, %v2137
      %2203 = vst.msk [vmem:[%s2176 + $0x1a8] sm:$0xff] %vm319, %v2138
      %2204 = vst.msk [vmem:[%s2176 + $0x1b0] sm:$0xff] %vm319, %v2139
      %2205 = vst.msk [vmem:[%s2176 + $0x1c8] sm:$0xff] %vm319, %v2140
      %2206 = vst.msk [vmem:[%s2176 + $0x1d0] sm:$0xff] %vm319, %v2141
      %2207 = vst.msk [vmem:[%s2176 + $0x1e8] sm:$0xff] %vm319, %v2142
      %2208 = vst.msk [vmem:[%s2176 + $0x1f0] sm:$0xff] %vm319, %v2143
      %v2209 = vld [vmem:[#allocation2 + $0x7] sm:$0xff]
      %v2210 = vld [vmem:[#allocation2 + $0xf] sm:$0xff]
      %v2211 = vld [vmem:[#allocation2 + $0x27] sm:$0xff]
      %v2212 = vld [vmem:[#allocation2 + $0x2f] sm:$0xff]
      %v2213 = vld [vmem:[#allocation2 + $0x47] sm:$0xff]
      %v2214 = vld [vmem:[#allocation2 + $0x4f] sm:$0xff]
      %v2215 = vld [vmem:[#allocation2 + $0x67] sm:$0xff]
      %v2216 = vld [vmem:[#allocation2 + $0x6f] sm:$0xff]
      %v2217 = vld [vmem:[#allocation2 + $0x87] sm:$0xff]
      %v2218 = vld [vmem:[#allocation2 + $0x8f] sm:$0xff]
      %v2219 = vld [vmem:[#allocation2 + $0xa7] sm:$0xff]
      %v2220 = vld [vmem:[#allocation2 + $0xaf] sm:$0xff]
      %v2221 = vld [vmem:[#allocation2 + $0xc7] sm:$0xff]
      %v2222 = vld [vmem:[#allocation2 + $0xcf] sm:$0xff]
      %v2223 = vld [vmem:[#allocation2 + $0xe7] sm:$0xff]
      %v2224 = vld [vmem:[#allocation2 + $0xef] sm:$0xff]
      %v2225 = vld [vmem:[#allocation2 + $0x107] sm:$0xff]
      %v2226 = vld [vmem:[#allocation2 + $0x10f] sm:$0xff]
      %v2227 = vld [vmem:[#allocation2 + $0x127] sm:$0xff]
      %v2228 = vld [vmem:[#allocation2 + $0x12f] sm:$0xff]
      %v2229 = vld [vmem:[#allocation2 + $0x147] sm:$0xff]
      %v2230 = vld [vmem:[#allocation2 + $0x14f] sm:$0xff]
      %v2231 = vld [vmem:[#allocation2 + $0x167] sm:$0xff]
      %v2232 = vld [vmem:[#allocation2 + $0x16f] sm:$0xff]
      %v2233 = vld [vmem:[#allocation2 + $0x187] sm:$0xff]
      %v2234 = vld [vmem:[#allocation2 + $0x18f] sm:$0xff]
      %v2235 = vld [vmem:[#allocation2 + $0x1a7] sm:$0xff]
      %v2236 = vld [vmem:[#allocation2 + $0x1af] sm:$0xff]
      %v2237 = vld [vmem:[#allocation2 + $0x1c7] sm:$0xff]
      %v2238 = vld [vmem:[#allocation2 + $0x1cf] sm:$0xff]
      %v2239 = vld [vmem:[#allocation2 + $0x1e7] sm:$0xff]
      %v2240 = vld [vmem:[#allocation2 + $0x1ef] sm:$0xff]
      %v2241 = vld [vmem:[#allocation2 + $0x8] sm:$0xff]
      %v2242 = vld [vmem:[#allocation2 + $0x10] sm:$0xff]
      %v2243 = vld [vmem:[#allocation2 + $0x28] sm:$0xff]
      %v2244 = vld [vmem:[#allocation2 + $0x30] sm:$0xff]
      %v2245 = vld [vmem:[#allocation2 + $0x48] sm:$0xff]
      %v2246 = vld [vmem:[#allocation2 + $0x50] sm:$0xff]
      %v2247 = vld [vmem:[#allocation2 + $0x68] sm:$0xff]
      %v2248 = vld [vmem:[#allocation2 + $0x70] sm:$0xff]
      %v2249 = vld [vmem:[#allocation2 + $0x88] sm:$0xff]
      %v2250 = vld [vmem:[#allocation2 + $0x90] sm:$0xff]
      %v2251 = vld [vmem:[#allocation2 + $0xa8] sm:$0xff]
      %v2252 = vld [vmem:[#allocation2 + $0xb0] sm:$0xff]
      %v2253 = vld [vmem:[#allocation2 + $0xc8] sm:$0xff]
      %v2254 = vld [vmem:[#allocation2 + $0xd0] sm:$0xff]
      %v2255 = vld [vmem:[#allocation2 + $0xe8] sm:$0xff]
      %v2256 = vld [vmem:[#allocation2 + $0xf0] sm:$0xff]
      %v2257 = vld [vmem:[#allocation2 + $0x108] sm:$0xff]
      %v2258 = vld [vmem:[#allocation2 + $0x110] sm:$0xff]
      %v2259 = vld [vmem:[#allocation2 + $0x128] sm:$0xff]
      %v2260 = vld [vmem:[#allocation2 + $0x130] sm:$0xff]
      %v2261 = vld [vmem:[#allocation2 + $0x148] sm:$0xff]
      %v2262 = vld [vmem:[#allocation2 + $0x150] sm:$0xff]
      %v2263 = vld [vmem:[#allocation2 + $0x168] sm:$0xff]
      %v2264 = vld [vmem:[#allocation2 + $0x170] sm:$0xff]
      %v2265 = vld [vmem:[#allocation2 + $0x188] sm:$0xff]
      %v2266 = vld [vmem:[#allocation2 + $0x190] sm:$0xff]
      %v2267 = vld [vmem:[#allocation2 + $0x1a8] sm:$0xff]
      %v2268 = vld [vmem:[#allocation2 + $0x1b0] sm:$0xff]
      %v2269 = vld [vmem:[#allocation2 + $0x1c8] sm:$0xff]
      %v2270 = vld [vmem:[#allocation2 + $0x1d0] sm:$0xff]
      %v2271 = vld [vmem:[#allocation2 + $0x1e8] sm:$0xff]
      %v2272 = vld [vmem:[#allocation2 + $0x1f0] sm:$0xff]
      %v2273 = vld [vmem:[#allocation2 + $0x9] sm:$0xff]
      %v2274 = vld [vmem:[#allocation2 + $0x11] sm:$0xff]
      %v2275 = vld [vmem:[#allocation2 + $0x29] sm:$0xff]
      %v2276 = vld [vmem:[#allocation2 + $0x31] sm:$0xff]
      %v2277 = vld [vmem:[#allocation2 + $0x49] sm:$0xff]
      %v2278 = vld [vmem:[#allocation2 + $0x51] sm:$0xff]
      %v2279 = vld [vmem:[#allocation2 + $0x69] sm:$0xff]
      %v2280 = vld [vmem:[#allocation2 + $0x71] sm:$0xff]
      %v2281 = vld [vmem:[#allocation2 + $0x89] sm:$0xff]
      %v2282 = vld [vmem:[#allocation2 + $0x91] sm:$0xff]
      %v2283 = vld [vmem:[#allocation2 + $0xa9] sm:$0xff]
      %v2284 = vld [vmem:[#allocation2 + $0xb1] sm:$0xff]
      %v2285 = vld [vmem:[#allocation2 + $0xc9] sm:$0xff]
      %v2286 = vld [vmem:[#allocation2 + $0xd1] sm:$0xff]
      %v2287 = vld [vmem:[#allocation2 + $0xe9] sm:$0xff]
      %v2288 = vld [vmem:[#allocation2 + $0xf1] sm:$0xff]
      %v2289 = vld [vmem:[#allocation2 + $0x109] sm:$0xff]
      %v2290 = vld [vmem:[#allocation2 + $0x111] sm:$0xff]
      %v2291 = vld [vmem:[#allocation2 + $0x129] sm:$0xff]
      %v2292 = vld [vmem:[#allocation2 + $0x131] sm:$0xff]
      %v2293 = vld [vmem:[#allocation2 + $0x149] sm:$0xff]
      %v2294 = vld [vmem:[#allocation2 + $0x151] sm:$0xff]
      %v2295 = vld [vmem:[#allocation2 + $0x169] sm:$0xff]
      %v2296 = vld [vmem:[#allocation2 + $0x171] sm:$0xff]
      %v2297 = vld [vmem:[#allocation2 + $0x189] sm:$0xff]
      %v2298 = vld [vmem:[#allocation2 + $0x191] sm:$0xff]
      %v2299 = vld [vmem:[#allocation2 + $0x1a9] sm:$0xff]
      %v2300 = vld [vmem:[#allocation2 + $0x1b1] sm:$0xff]
      %v2301 = vld [vmem:[#allocation2 + $0x1c9] sm:$0xff]
      %v2302 = vld [vmem:[#allocation2 + $0x1d1] sm:$0xff]
      %v2303 = vld [vmem:[#allocation2 + $0x1e9] sm:$0xff]
      %v2304 = vld [vmem:[#allocation2 + $0x1f1] sm:$0xff]
      %v2305 = vld [vmem:[%s2176 + $0x7] sm:$0xff]
      %v2306 = vld [vmem:[%s2176 + $0xf] sm:$0xff]
      %v2307 = vld [vmem:[%s2176 + $0x27] sm:$0xff]
      %v2308 = vld [vmem:[%s2176 + $0x2f] sm:$0xff]
      %v2309 = vld [vmem:[%s2176 + $0x47] sm:$0xff]
      %v2310 = vld [vmem:[%s2176 + $0x4f] sm:$0xff]
      %v2311 = vld [vmem:[%s2176 + $0x67] sm:$0xff]
      %v2312 = vld [vmem:[%s2176 + $0x6f] sm:$0xff]
      %v2313 = vld [vmem:[%s2176 + $0x87] sm:$0xff]
      %v2314 = vld [vmem:[%s2176 + $0x8f] sm:$0xff]
      %v2315 = vld [vmem:[%s2176 + $0xa7] sm:$0xff]
      %v2316 = vld [vmem:[%s2176 + $0xaf] sm:$0xff]
      %v2317 = vld [vmem:[%s2176 + $0xc7] sm:$0xff]
      %v2318 = vld [vmem:[%s2176 + $0xcf] sm:$0xff]
      %v2319 = vld [vmem:[%s2176 + $0xe7] sm:$0xff]
      %v2320 = vld [vmem:[%s2176 + $0xef] sm:$0xff]
      %v2321 = vld [vmem:[%s2176 + $0x107] sm:$0xff]
      %v2322 = vld [vmem:[%s2176 + $0x10f] sm:$0xff]
      %v2323 = vld [vmem:[%s2176 + $0x127] sm:$0xff]
      %v2324 = vld [vmem:[%s2176 + $0x12f] sm:$0xff]
      %v2325 = vld [vmem:[%s2176 + $0x147] sm:$0xff]
      %v2326 = vld [vmem:[%s2176 + $0x14f] sm:$0xff]
      %v2327 = vld [vmem:[%s2176 + $0x167] sm:$0xff]
      %v2328 = vld [vmem:[%s2176 + $0x16f] sm:$0xff]
      %v2329 = vld [vmem:[%s2176 + $0x187] sm:$0xff]
      %v2330 = vld [vmem:[%s2176 + $0x18f] sm:$0xff]
      %v2331 = vld [vmem:[%s2176 + $0x1a7] sm:$0xff]
      %v2332 = vld [vmem:[%s2176 + $0x1af] sm:$0xff]
      %v2333 = vld [vmem:[%s2176 + $0x1c7] sm:$0xff]
      %v2334 = vld [vmem:[%s2176 + $0x1cf] sm:$0xff]
      %v2335 = vld [vmem:[%s2176 + $0x1e7] sm:$0xff]
      %v2336 = vld [vmem:[%s2176 + $0x1ef] sm:$0xff]
      %v2337 = vld [vmem:[%s2176 + $0x8] sm:$0xff]
      %v2338 = vld [vmem:[%s2176 + $0x10] sm:$0xff]
      %v2339 = vld [vmem:[%s2176 + $0x28] sm:$0xff]
      %v2340 = vld [vmem:[%s2176 + $0x30] sm:$0xff]
      %v2341 = vld [vmem:[%s2176 + $0x48] sm:$0xff]
      %v2342 = vld [vmem:[%s2176 + $0x50] sm:$0xff]
      %v2343 = vld [vmem:[%s2176 + $0x68] sm:$0xff]
      %v2344 = vld [vmem:[%s2176 + $0x70] sm:$0xff]
      %v2345 = vld [vmem:[%s2176 + $0x88] sm:$0xff]
      %v2346 = vld [vmem:[%s2176 + $0x90] sm:$0xff]
      %v2347 = vld [vmem:[%s2176 + $0xa8] sm:$0xff]
      %v2348 = vld [vmem:[%s2176 + $0xb0] sm:$0xff]
      %v2349 = vld [vmem:[%s2176 + $0xc8] sm:$0xff]
      %v2350 = vld [vmem:[%s2176 + $0xd0] sm:$0xff]
      %v2351 = vld [vmem:[%s2176 + $0xe8] sm:$0xff]
      %v2352 = vld [vmem:[%s2176 + $0xf0] sm:$0xff]
      %v2353 = vld [vmem:[%s2176 + $0x108] sm:$0xff]
      %v2354 = vld [vmem:[%s2176 + $0x110] sm:$0xff]
      %v2355 = vld [vmem:[%s2176 + $0x128] sm:$0xff]
      %v2356 = vld [vmem:[%s2176 + $0x130] sm:$0xff]
      %v2357 = vld [vmem:[%s2176 + $0x148] sm:$0xff]
      %v2358 = vld [vmem:[%s2176 + $0x150] sm:$0xff]
      %v2359 = vld [vmem:[%s2176 + $0x168] sm:$0xff]
      %v2360 = vld [vmem:[%s2176 + $0x170] sm:$0xff]
      %v2361 = vld [vmem:[%s2176 + $0x188] sm:$0xff]
      %v2362 = vld [vmem:[%s2176 + $0x190] sm:$0xff]
      %v2363 = vld [vmem:[%s2176 + $0x1a8] sm:$0xff]
      %v2364 = vld [vmem:[%s2176 + $0x1b0] sm:$0xff]
      %v2365 = vld [vmem:[%s2176 + $0x1c8] sm:$0xff]
      %v2366 = vld [vmem:[%s2176 + $0x1d0] sm:$0xff]
      %v2367 = vld [vmem:[%s2176 + $0x1e8] sm:$0xff]
      %v2368 = vld [vmem:[%s2176 + $0x1f0] sm:$0xff]
      %v2369 = vld [vmem:[%s2176 + $0x9] sm:$0xff]
      %v2370 = vld [vmem:[%s2176 + $0x11] sm:$0xff]
      %v2371 = vld [vmem:[%s2176 + $0x29] sm:$0xff]
      %v2372 = vld [vmem:[%s2176 + $0x31] sm:$0xff]
      %v2373 = vld [vmem:[%s2176 + $0x49] sm:$0xff]
      %v2374 = vld [vmem:[%s2176 + $0x51] sm:$0xff]
      %v2375 = vld [vmem:[%s2176 + $0x69] sm:$0xff]
      %v2376 = vld [vmem:[%s2176 + $0x71] sm:$0xff]
      %v2377 = vld [vmem:[%s2176 + $0x89] sm:$0xff]
      %v2378 = vld [vmem:[%s2176 + $0x91] sm:$0xff]
      %v2379 = vld [vmem:[%s2176 + $0xa9] sm:$0xff]
      %v2380 = vld [vmem:[%s2176 + $0xb1] sm:$0xff]
      %v2381 = vld [vmem:[%s2176 + $0xc9] sm:$0xff]
      %v2382 = vld [vmem:[%s2176 + $0xd1] sm:$0xff]
      %v2383 = vld [vmem:[%s2176 + $0xe9] sm:$0xff]
      %v2384 = vld [vmem:[%s2176 + $0xf1] sm:$0xff]
      %v2385 = vld [vmem:[%s2176 + $0x109] sm:$0xff]
      %v2386 = vld [vmem:[%s2176 + $0x111] sm:$0xff]
      %v2387 = vld [vmem:[%s2176 + $0x129] sm:$0xff]
      %v2388 = vld [vmem:[%s2176 + $0x131] sm:$0xff]
      %v2389 = vld [vmem:[%s2176 + $0x149] sm:$0xff]
      %v2390 = vld [vmem:[%s2176 + $0x151] sm:$0xff]
      %v2391 = vld [vmem:[%s2176 + $0x169] sm:$0xff]
      %v2392 = vld [vmem:[%s2176 + $0x171] sm:$0xff]
      %v2393 = vld [vmem:[%s2176 + $0x189] sm:$0xff]
      %v2394 = vld [vmem:[%s2176 + $0x191] sm:$0xff]
      %v2395 = vld [vmem:[%s2176 + $0x1a9] sm:$0xff]
      %v2396 = vld [vmem:[%s2176 + $0x1b1] sm:$0xff]
      %v2397 = vld [vmem:[%s2176 + $0x1c9] sm:$0xff]
      %v2398 = vld [vmem:[%s2176 + $0x1d1] sm:$0xff]
      %v2399 = vld [vmem:[%s2176 + $0x1e9] sm:$0xff]
      %v2400 = vld [vmem:[%s2176 + $0x1f1] sm:$0xff]
      %s2401 = scalar_lea.vmem [#allocation2], 64
      %v2402 = vld [vmem:[%s2401 + $0x7] sm:$0xff]
      %v2403 = vld [vmem:[%s2401 + $0xf] sm:$0xff]
      %v2404 = vld [vmem:[%s2401 + $0x27] sm:$0xff]
      %v2405 = vld [vmem:[%s2401 + $0x2f] sm:$0xff]
      %v2406 = vld [vmem:[%s2401 + $0x47] sm:$0xff]
      %v2407 = vld [vmem:[%s2401 + $0x4f] sm:$0xff]
      %v2408 = vld [vmem:[%s2401 + $0x67] sm:$0xff]
      %v2409 = vld [vmem:[%s2401 + $0x6f] sm:$0xff]
      %v2410 = vld [vmem:[%s2401 + $0x87] sm:$0xff]
      %v2411 = vld [vmem:[%s2401 + $0x8f] sm:$0xff]
      %v2412 = vld [vmem:[%s2401 + $0xa7] sm:$0xff]
      %v2413 = vld [vmem:[%s2401 + $0xaf] sm:$0xff]
      %v2414 = vld [vmem:[%s2401 + $0xc7] sm:$0xff]
      %v2415 = vld [vmem:[%s2401 + $0xcf] sm:$0xff]
      %v2416 = vld [vmem:[%s2401 + $0xe7] sm:$0xff]
      %v2417 = vld [vmem:[%s2401 + $0xef] sm:$0xff]
      %v2418 = vld [vmem:[%s2401 + $0x107] sm:$0xff]
      %v2419 = vld [vmem:[%s2401 + $0x10f] sm:$0xff]
      %v2420 = vld [vmem:[%s2401 + $0x127] sm:$0xff]
      %v2421 = vld [vmem:[%s2401 + $0x12f] sm:$0xff]
      %v2422 = vld [vmem:[%s2401 + $0x147] sm:$0xff]
      %v2423 = vld [vmem:[%s2401 + $0x14f] sm:$0xff]
      %v2424 = vld [vmem:[%s2401 + $0x167] sm:$0xff]
      %v2425 = vld [vmem:[%s2401 + $0x16f] sm:$0xff]
      %v2426 = vld [vmem:[%s2401 + $0x187] sm:$0xff]
      %v2427 = vld [vmem:[%s2401 + $0x18f] sm:$0xff]
      %v2428 = vld [vmem:[%s2401 + $0x1a7] sm:$0xff]
      %v2429 = vld [vmem:[%s2401 + $0x1af] sm:$0xff]
      %v2430 = vld [vmem:[%s2401 + $0x1c7] sm:$0xff]
      %v2431 = vld [vmem:[%s2401 + $0x1cf] sm:$0xff]
      %v2432 = vld [vmem:[%s2401 + $0x1e7] sm:$0xff]
      %v2433 = vld [vmem:[%s2401 + $0x1ef] sm:$0xff]
      %v2434 = vld [vmem:[%s2401 + $0x8] sm:$0xff]
      %v2435 = vld [vmem:[%s2401 + $0x10] sm:$0xff]
      %v2436 = vld [vmem:[%s2401 + $0x28] sm:$0xff]
      %v2437 = vld [vmem:[%s2401 + $0x30] sm:$0xff]
      %v2438 = vld [vmem:[%s2401 + $0x48] sm:$0xff]
      %v2439 = vld [vmem:[%s2401 + $0x50] sm:$0xff]
      %v2440 = vld [vmem:[%s2401 + $0x68] sm:$0xff]
      %v2441 = vld [vmem:[%s2401 + $0x70] sm:$0xff]
      %v2442 = vld [vmem:[%s2401 + $0x88] sm:$0xff]
      %v2443 = vld [vmem:[%s2401 + $0x90] sm:$0xff]
      %v2444 = vld [vmem:[%s2401 + $0xa8] sm:$0xff]
      %v2445 = vld [vmem:[%s2401 + $0xb0] sm:$0xff]
      %v2446 = vld [vmem:[%s2401 + $0xc8] sm:$0xff]
      %v2447 = vld [vmem:[%s2401 + $0xd0] sm:$0xff]
      %v2448 = vld [vmem:[%s2401 + $0xe8] sm:$0xff]
      %v2449 = vld [vmem:[%s2401 + $0xf0] sm:$0xff]
      %v2450 = vld [vmem:[%s2401 + $0x108] sm:$0xff]
      %v2451 = vld [vmem:[%s2401 + $0x110] sm:$0xff]
      %v2452 = vld [vmem:[%s2401 + $0x128] sm:$0xff]
      %v2453 = vld [vmem:[%s2401 + $0x130] sm:$0xff]
      %v2454 = vld [vmem:[%s2401 + $0x148] sm:$0xff]
      %v2455 = vld [vmem:[%s2401 + $0x150] sm:$0xff]
      %v2456 = vld [vmem:[%s2401 + $0x168] sm:$0xff]
      %v2457 = vld [vmem:[%s2401 + $0x170] sm:$0xff]
      %v2458 = vld [vmem:[%s2401 + $0x188] sm:$0xff]
      %v2459 = vld [vmem:[%s2401 + $0x190] sm:$0xff]
      %v2460 = vld [vmem:[%s2401 + $0x1a8] sm:$0xff]
      %v2461 = vld [vmem:[%s2401 + $0x1b0] sm:$0xff]
      %v2462 = vld [vmem:[%s2401 + $0x1c8] sm:$0xff]
      %v2463 = vld [vmem:[%s2401 + $0x1d0] sm:$0xff]
      %v2464 = vld [vmem:[%s2401 + $0x1e8] sm:$0xff]
      %v2465 = vld [vmem:[%s2401 + $0x1f0] sm:$0xff]
      %v2466 = vld [vmem:[%s2401 + $0x9] sm:$0xff]
      %v2467 = vld [vmem:[%s2401 + $0x11] sm:$0xff]
      %v2468 = vld [vmem:[%s2401 + $0x29] sm:$0xff]
      %v2469 = vld [vmem:[%s2401 + $0x31] sm:$0xff]
      %v2470 = vld [vmem:[%s2401 + $0x49] sm:$0xff]
      %v2471 = vld [vmem:[%s2401 + $0x51] sm:$0xff]
      %v2472 = vld [vmem:[%s2401 + $0x69] sm:$0xff]
      %v2473 = vld [vmem:[%s2401 + $0x71] sm:$0xff]
      %v2474 = vld [vmem:[%s2401 + $0x89] sm:$0xff]
      %v2475 = vld [vmem:[%s2401 + $0x91] sm:$0xff]
      %v2476 = vld [vmem:[%s2401 + $0xa9] sm:$0xff]
      %v2477 = vld [vmem:[%s2401 + $0xb1] sm:$0xff]
      %v2478 = vld [vmem:[%s2401 + $0xc9] sm:$0xff]
      %v2479 = vld [vmem:[%s2401 + $0xd1] sm:$0xff]
      %v2480 = vld [vmem:[%s2401 + $0xe9] sm:$0xff]
      %v2481 = vld [vmem:[%s2401 + $0xf1] sm:$0xff]
      %v2482 = vld [vmem:[%s2401 + $0x109] sm:$0xff]
      %v2483 = vld [vmem:[%s2401 + $0x111] sm:$0xff]
      %v2484 = vld [vmem:[%s2401 + $0x129] sm:$0xff]
      %v2485 = vld [vmem:[%s2401 + $0x131] sm:$0xff]
      %v2486 = vld [vmem:[%s2401 + $0x149] sm:$0xff]
      %v2487 = vld [vmem:[%s2401 + $0x151] sm:$0xff]
      %v2488 = vld [vmem:[%s2401 + $0x169] sm:$0xff]
      %v2489 = vld [vmem:[%s2401 + $0x171] sm:$0xff]
      %v2490 = vld [vmem:[%s2401 + $0x189] sm:$0xff]
      %v2491 = vld [vmem:[%s2401 + $0x191] sm:$0xff]
      %v2492 = vld [vmem:[%s2401 + $0x1a9] sm:$0xff]
      %v2493 = vld [vmem:[%s2401 + $0x1b1] sm:$0xff]
      %v2494 = vld [vmem:[%s2401 + $0x1c9] sm:$0xff]
      %v2495 = vld [vmem:[%s2401 + $0x1d1] sm:$0xff]
      %v2496 = vld [vmem:[%s2401 + $0x1e9] sm:$0xff]
      %v2497 = vld [vmem:[%s2401 + $0x1f1] sm:$0xff]
      %2530 = vrot.lane.b32.xlu0 %v2241, 32
      %v2531 = vpop.permute.xlu0 %2530
      %2532 = vrot.lane.b32.xlu0 %v2242, 32
      %v2533 = vpop.permute.xlu0 %2532
      %2534 = vrot.lane.b32.xlu0 %v2243, 32
      %v2535 = vpop.permute.xlu0 %2534
      %2536 = vrot.lane.b32.xlu0 %v2244, 32
      %v2537 = vpop.permute.xlu0 %2536
      %2538 = vrot.lane.b32.xlu0 %v2245, 32
      %v2539 = vpop.permute.xlu0 %2538
      %2540 = vrot.lane.b32.xlu0 %v2246, 32
      %v2541 = vpop.permute.xlu0 %2540
      %2542 = vrot.lane.b32.xlu0 %v2247, 32
      %v2543 = vpop.permute.xlu0 %2542
      %2544 = vrot.lane.b32.xlu0 %v2248, 32
      %v2545 = vpop.permute.xlu0 %2544
      %2546 = vrot.lane.b32.xlu0 %v2249, 32
      %v2547 = vpop.permute.xlu0 %2546
      %2548 = vrot.lane.b32.xlu0 %v2250, 32
      %v2549 = vpop.permute.xlu0 %2548
      %2550 = vrot.lane.b32.xlu0 %v2251, 32
      %v2551 = vpop.permute.xlu0 %2550
      %2552 = vrot.lane.b32.xlu0 %v2252, 32
      %v2553 = vpop.permute.xlu0 %2552
      %2554 = vrot.lane.b32.xlu0 %v2253, 32
      %v2555 = vpop.permute.xlu0 %2554
      %2556 = vrot.lane.b32.xlu0 %v2254, 32
      %v2557 = vpop.permute.xlu0 %2556
      %2558 = vrot.lane.b32.xlu0 %v2255, 32
      %v2559 = vpop.permute.xlu0 %2558
      %2560 = vrot.lane.b32.xlu0 %v2256, 32
      %v2561 = vpop.permute.xlu0 %2560
      %2562 = vrot.lane.b32.xlu0 %v2257, 32
      %v2563 = vpop.permute.xlu0 %2562
      %2564 = vrot.lane.b32.xlu0 %v2258, 32
      %v2565 = vpop.permute.xlu0 %2564
      %2566 = vrot.lane.b32.xlu0 %v2259, 32
      %v2567 = vpop.permute.xlu0 %2566
      %2568 = vrot.lane.b32.xlu0 %v2260, 32
      %v2569 = vpop.permute.xlu0 %2568
      %2570 = vrot.lane.b32.xlu0 %v2261, 32
      %v2571 = vpop.permute.xlu0 %2570
      %2572 = vrot.lane.b32.xlu0 %v2262, 32
      %v2573 = vpop.permute.xlu0 %2572
      %2574 = vrot.lane.b32.xlu0 %v2263, 32
      %v2575 = vpop.permute.xlu0 %2574
      %2576 = vrot.lane.b32.xlu0 %v2264, 32
      %v2577 = vpop.permute.xlu0 %2576
      %2578 = vrot.lane.b32.xlu0 %v2265, 32
      %v2579 = vpop.permute.xlu0 %2578
      %2580 = vrot.lane.b32.xlu0 %v2266, 32
      %v2581 = vpop.permute.xlu0 %2580
      %2582 = vrot.lane.b32.xlu0 %v2267, 32
      %v2583 = vpop.permute.xlu0 %2582
      %2584 = vrot.lane.b32.xlu0 %v2268, 32
      %v2585 = vpop.permute.xlu0 %2584
      %2586 = vrot.lane.b32.xlu0 %v2269, 32
      %v2587 = vpop.permute.xlu0 %2586
      %2588 = vrot.lane.b32.xlu0 %v2270, 32
      %v2589 = vpop.permute.xlu0 %2588
      %2590 = vrot.lane.b32.xlu0 %v2271, 32
      %v2591 = vpop.permute.xlu0 %2590
      %2592 = vrot.lane.b32.xlu0 %v2272, 32
      %v2593 = vpop.permute.xlu0 %2592
      %2658 = vrot.lane.b32.xlu0 %v2273, 64
      %v2659 = vpop.permute.xlu0 %2658
      %2660 = vrot.lane.b32.xlu0 %v2274, 64
      %v2661 = vpop.permute.xlu0 %2660
      %2662 = vrot.lane.b32.xlu0 %v2275, 64
      %v2663 = vpop.permute.xlu0 %2662
      %2664 = vrot.lane.b32.xlu0 %v2276, 64
      %v2665 = vpop.permute.xlu0 %2664
      %2666 = vrot.lane.b32.xlu0 %v2277, 64
      %v2667 = vpop.permute.xlu0 %2666
      %2668 = vrot.lane.b32.xlu0 %v2278, 64
      %v2669 = vpop.permute.xlu0 %2668
      %2670 = vrot.lane.b32.xlu0 %v2279, 64
      %v2671 = vpop.permute.xlu0 %2670
      %2672 = vrot.lane.b32.xlu0 %v2280, 64
      %v2673 = vpop.permute.xlu0 %2672
      %2674 = vrot.lane.b32.xlu0 %v2281, 64
      %v2675 = vpop.permute.xlu0 %2674
      %2676 = vrot.lane.b32.xlu0 %v2282, 64
      %v2677 = vpop.permute.xlu0 %2676
      %2678 = vrot.lane.b32.xlu0 %v2283, 64
      %v2679 = vpop.permute.xlu0 %2678
      %2680 = vrot.lane.b32.xlu0 %v2284, 64
      %v2681 = vpop.permute.xlu0 %2680
      %2682 = vrot.lane.b32.xlu0 %v2285, 64
      %v2683 = vpop.permute.xlu0 %2682
      %2684 = vrot.lane.b32.xlu0 %v2286, 64
      %v2685 = vpop.permute.xlu0 %2684
      %2686 = vrot.lane.b32.xlu0 %v2287, 64
      %v2687 = vpop.permute.xlu0 %2686
      %2688 = vrot.lane.b32.xlu0 %v2288, 64
      %v2689 = vpop.permute.xlu0 %2688
      %2690 = vrot.lane.b32.xlu0 %v2289, 64
      %v2691 = vpop.permute.xlu0 %2690
      %2692 = vrot.lane.b32.xlu0 %v2290, 64
      %v2693 = vpop.permute.xlu0 %2692
      %2694 = vrot.lane.b32.xlu0 %v2291, 64
      %v2695 = vpop.permute.xlu0 %2694
      %2696 = vrot.lane.b32.xlu0 %v2292, 64
      %v2697 = vpop.permute.xlu0 %2696
      %2698 = vrot.lane.b32.xlu0 %v2293, 64
      %v2699 = vpop.permute.xlu0 %2698
      %2700 = vrot.lane.b32.xlu0 %v2294, 64
      %v2701 = vpop.permute.xlu0 %2700
      %2702 = vrot.lane.b32.xlu0 %v2295, 64
      %v2703 = vpop.permute.xlu0 %2702
      %2704 = vrot.lane.b32.xlu0 %v2296, 64
      %v2705 = vpop.permute.xlu0 %2704
      %2706 = vrot.lane.b32.xlu0 %v2297, 64
      %v2707 = vpop.permute.xlu0 %2706
      %2708 = vrot.lane.b32.xlu0 %v2298, 64
      %v2709 = vpop.permute.xlu0 %2708
      %2710 = vrot.lane.b32.xlu0 %v2299, 64
      %v2711 = vpop.permute.xlu0 %2710
      %2712 = vrot.lane.b32.xlu0 %v2300, 64
      %v2713 = vpop.permute.xlu0 %2712
      %2714 = vrot.lane.b32.xlu0 %v2301, 64
      %v2715 = vpop.permute.xlu0 %2714
      %2716 = vrot.lane.b32.xlu0 %v2302, 64
      %v2717 = vpop.permute.xlu0 %2716
      %2718 = vrot.lane.b32.xlu0 %v2303, 64
      %v2719 = vpop.permute.xlu0 %2718
      %2720 = vrot.lane.b32.xlu0 %v2304, 64
      %v2721 = vpop.permute.xlu0 %2720
      %2786 = vrot.lane.b32.xlu0 %v2305, 96
      %v2787 = vpop.permute.xlu0 %2786
      %2788 = vrot.lane.b32.xlu0 %v2306, 96
      %v2789 = vpop.permute.xlu0 %2788
      %2790 = vrot.lane.b32.xlu0 %v2307, 96
      %v2791 = vpop.permute.xlu0 %2790
      %2792 = vrot.lane.b32.xlu0 %v2308, 96
      %v2793 = vpop.permute.xlu0 %2792
      %2794 = vrot.lane.b32.xlu0 %v2309, 96
      %v2795 = vpop.permute.xlu0 %2794
      %2796 = vrot.lane.b32.xlu0 %v2310, 96
      %v2797 = vpop.permute.xlu0 %2796
      %2798 = vrot.lane.b32.xlu0 %v2311, 96
      %v2799 = vpop.permute.xlu0 %2798
      %2800 = vrot.lane.b32.xlu0 %v2312, 96
      %v2801 = vpop.permute.xlu0 %2800
      %2802 = vrot.lane.b32.xlu0 %v2313, 96
      %v2803 = vpop.permute.xlu0 %2802
      %2804 = vrot.lane.b32.xlu0 %v2314, 96
      %v2805 = vpop.permute.xlu0 %2804
      %2806 = vrot.lane.b32.xlu0 %v2315, 96
      %v2807 = vpop.permute.xlu0 %2806
      %2808 = vrot.lane.b32.xlu0 %v2316, 96
      %v2809 = vpop.permute.xlu0 %2808
      %2810 = vrot.lane.b32.xlu0 %v2317, 96
      %v2811 = vpop.permute.xlu0 %2810
      %2812 = vrot.lane.b32.xlu0 %v2318, 96
      %v2813 = vpop.permute.xlu0 %2812
      %2814 = vrot.lane.b32.xlu0 %v2319, 96
      %v2815 = vpop.permute.xlu0 %2814
      %2816 = vrot.lane.b32.xlu0 %v2320, 96
      %v2817 = vpop.permute.xlu0 %2816
      %2818 = vrot.lane.b32.xlu0 %v2321, 96
      %v2819 = vpop.permute.xlu0 %2818
      %2820 = vrot.lane.b32.xlu0 %v2322, 96
      %v2821 = vpop.permute.xlu0 %2820
      %2822 = vrot.lane.b32.xlu0 %v2323, 96
      %v2823 = vpop.permute.xlu0 %2822
      %2824 = vrot.lane.b32.xlu0 %v2324, 96
      %v2825 = vpop.permute.xlu0 %2824
      %2826 = vrot.lane.b32.xlu0 %v2325, 96
      %v2827 = vpop.permute.xlu0 %2826
      %2828 = vrot.lane.b32.xlu0 %v2326, 96
      %v2829 = vpop.permute.xlu0 %2828
      %2830 = vrot.lane.b32.xlu0 %v2327, 96
      %v2831 = vpop.permute.xlu0 %2830
      %2832 = vrot.lane.b32.xlu0 %v2328, 96
      %v2833 = vpop.permute.xlu0 %2832
      %2834 = vrot.lane.b32.xlu0 %v2329, 96
      %v2835 = vpop.permute.xlu0 %2834
      %2836 = vrot.lane.b32.xlu0 %v2330, 96
      %v2837 = vpop.permute.xlu0 %2836
      %2838 = vrot.lane.b32.xlu0 %v2331, 96
      %v2839 = vpop.permute.xlu0 %2838
      %2840 = vrot.lane.b32.xlu0 %v2332, 96
      %v2841 = vpop.permute.xlu0 %2840
      %2842 = vrot.lane.b32.xlu0 %v2333, 96
      %v2843 = vpop.permute.xlu0 %2842
      %2844 = vrot.lane.b32.xlu0 %v2334, 96
      %v2845 = vpop.permute.xlu0 %2844
      %2846 = vrot.lane.b32.xlu0 %v2335, 96
      %v2847 = vpop.permute.xlu0 %2846
      %2848 = vrot.lane.b32.xlu0 %v2336, 96
      %v2849 = vpop.permute.xlu0 %2848
      %2914 = vrot.lane.b32.xlu0 %v2369, 32
      %v2915 = vpop.permute.xlu0 %2914
      %2916 = vrot.lane.b32.xlu0 %v2370, 32
      %v2917 = vpop.permute.xlu0 %2916
      %2918 = vrot.lane.b32.xlu0 %v2371, 32
      %v2919 = vpop.permute.xlu0 %2918
      %2920 = vrot.lane.b32.xlu0 %v2372, 32
      %v2921 = vpop.permute.xlu0 %2920
      %2922 = vrot.lane.b32.xlu0 %v2373, 32
      %v2923 = vpop.permute.xlu0 %2922
      %2924 = vrot.lane.b32.xlu0 %v2374, 32
      %v2925 = vpop.permute.xlu0 %2924
      %2926 = vrot.lane.b32.xlu0 %v2375, 32
      %v2927 = vpop.permute.xlu0 %2926
      %2928 = vrot.lane.b32.xlu0 %v2376, 32
      %v2929 = vpop.permute.xlu0 %2928
      %2930 = vrot.lane.b32.xlu0 %v2377, 32
      %v2931 = vpop.permute.xlu0 %2930
      %2932 = vrot.lane.b32.xlu0 %v2378, 32
      %v2933 = vpop.permute.xlu0 %2932
      %2934 = vrot.lane.b32.xlu0 %v2379, 32
      %v2935 = vpop.permute.xlu0 %2934
      %2936 = vrot.lane.b32.xlu0 %v2380, 32
      %v2937 = vpop.permute.xlu0 %2936
      %2938 = vrot.lane.b32.xlu0 %v2381, 32
      %v2939 = vpop.permute.xlu0 %2938
      %2940 = vrot.lane.b32.xlu0 %v2382, 32
      %v2941 = vpop.permute.xlu0 %2940
      %2942 = vrot.lane.b32.xlu0 %v2383, 32
      %v2943 = vpop.permute.xlu0 %2942
      %2944 = vrot.lane.b32.xlu0 %v2384, 32
      %v2945 = vpop.permute.xlu0 %2944
      %2946 = vrot.lane.b32.xlu0 %v2385, 32
      %v2947 = vpop.permute.xlu0 %2946
      %2948 = vrot.lane.b32.xlu0 %v2386, 32
      %v2949 = vpop.permute.xlu0 %2948
      %2950 = vrot.lane.b32.xlu0 %v2387, 32
      %v2951 = vpop.permute.xlu0 %2950
      %2952 = vrot.lane.b32.xlu0 %v2388, 32
      %v2953 = vpop.permute.xlu0 %2952
      %2954 = vrot.lane.b32.xlu0 %v2389, 32
      %v2955 = vpop.permute.xlu0 %2954
      %2956 = vrot.lane.b32.xlu0 %v2390, 32
      %v2957 = vpop.permute.xlu0 %2956
      %2958 = vrot.lane.b32.xlu0 %v2391, 32
      %v2959 = vpop.permute.xlu0 %2958
      %2960 = vrot.lane.b32.xlu0 %v2392, 32
      %v2961 = vpop.permute.xlu0 %2960
      %2962 = vrot.lane.b32.xlu0 %v2393, 32
      %v2963 = vpop.permute.xlu0 %2962
      %2964 = vrot.lane.b32.xlu0 %v2394, 32
      %v2965 = vpop.permute.xlu0 %2964
      %2966 = vrot.lane.b32.xlu0 %v2395, 32
      %v2967 = vpop.permute.xlu0 %2966
      %2968 = vrot.lane.b32.xlu0 %v2396, 32
      %v2969 = vpop.permute.xlu0 %2968
      %2970 = vrot.lane.b32.xlu0 %v2397, 32
      %v2971 = vpop.permute.xlu0 %2970
      %2972 = vrot.lane.b32.xlu0 %v2398, 32
      %v2973 = vpop.permute.xlu0 %2972
      %2974 = vrot.lane.b32.xlu0 %v2399, 32
      %v2975 = vpop.permute.xlu0 %2974
      %2976 = vrot.lane.b32.xlu0 %v2400, 32
      %v2977 = vpop.permute.xlu0 %2976
      %3042 = vrot.lane.b32.xlu0 %v2402, 64
      %v3043 = vpop.permute.xlu0 %3042
      %3044 = vrot.lane.b32.xlu0 %v2403, 64
      %v3045 = vpop.permute.xlu0 %3044
      %3046 = vrot.lane.b32.xlu0 %v2404, 64
      %v3047 = vpop.permute.xlu0 %3046
      %3048 = vrot.lane.b32.xlu0 %v2405, 64
      %v3049 = vpop.permute.xlu0 %3048
      %3050 = vrot.lane.b32.xlu0 %v2406, 64
      %v3051 = vpop.permute.xlu0 %3050
      %3052 = vrot.lane.b32.xlu0 %v2407, 64
      %v3053 = vpop.permute.xlu0 %3052
      %3054 = vrot.lane.b32.xlu0 %v2408, 64
      %v3055 = vpop.permute.xlu0 %3054
      %3056 = vrot.lane.b32.xlu0 %v2409, 64
      %v3057 = vpop.permute.xlu0 %3056
      %3058 = vrot.lane.b32.xlu0 %v2410, 64
      %v3059 = vpop.permute.xlu0 %3058
      %3060 = vrot.lane.b32.xlu0 %v2411, 64
      %v3061 = vpop.permute.xlu0 %3060
      %3062 = vrot.lane.b32.xlu0 %v2412, 64
      %v3063 = vpop.permute.xlu0 %3062
      %3064 = vrot.lane.b32.xlu0 %v2413, 64
      %v3065 = vpop.permute.xlu0 %3064
      %3066 = vrot.lane.b32.xlu0 %v2414, 64
      %v3067 = vpop.permute.xlu0 %3066
      %3068 = vrot.lane.b32.xlu0 %v2415, 64
      %v3069 = vpop.permute.xlu0 %3068
      %3070 = vrot.lane.b32.xlu0 %v2416, 64
      %v3071 = vpop.permute.xlu0 %3070
      %3072 = vrot.lane.b32.xlu0 %v2417, 64
      %v3073 = vpop.permute.xlu0 %3072
      %3074 = vrot.lane.b32.xlu0 %v2418, 64
      %v3075 = vpop.permute.xlu0 %3074
      %3076 = vrot.lane.b32.xlu0 %v2419, 64
      %v3077 = vpop.permute.xlu0 %3076
      %3078 = vrot.lane.b32.xlu0 %v2420, 64
      %v3079 = vpop.permute.xlu0 %3078
      %3080 = vrot.lane.b32.xlu0 %v2421, 64
      %v3081 = vpop.permute.xlu0 %3080
      %3082 = vrot.lane.b32.xlu0 %v2422, 64
      %v3083 = vpop.permute.xlu0 %3082
      %3084 = vrot.lane.b32.xlu0 %v2423, 64
      %v3085 = vpop.permute.xlu0 %3084
      %3086 = vrot.lane.b32.xlu0 %v2424, 64
      %v3087 = vpop.permute.xlu0 %3086
      %3088 = vrot.lane.b32.xlu0 %v2425, 64
      %v3089 = vpop.permute.xlu0 %3088
      %3090 = vrot.lane.b32.xlu0 %v2426, 64
      %v3091 = vpop.permute.xlu0 %3090
      %3092 = vrot.lane.b32.xlu0 %v2427, 64
      %v3093 = vpop.permute.xlu0 %3092
      %3094 = vrot.lane.b32.xlu0 %v2428, 64
      %v3095 = vpop.permute.xlu0 %3094
      %3096 = vrot.lane.b32.xlu0 %v2429, 64
      %v3097 = vpop.permute.xlu0 %3096
      %3098 = vrot.lane.b32.xlu0 %v2430, 64
      %v3099 = vpop.permute.xlu0 %3098
      %3100 = vrot.lane.b32.xlu0 %v2431, 64
      %v3101 = vpop.permute.xlu0 %3100
      %3102 = vrot.lane.b32.xlu0 %v2432, 64
      %v3103 = vpop.permute.xlu0 %3102
      %3104 = vrot.lane.b32.xlu0 %v2433, 64
      %v3105 = vpop.permute.xlu0 %3104
      %3170 = vrot.lane.b32.xlu0 %v2434, 96
      %v3171 = vpop.permute.xlu0 %3170
      %3172 = vrot.lane.b32.xlu0 %v2435, 96
      %v3173 = vpop.permute.xlu0 %3172
      %3174 = vrot.lane.b32.xlu0 %v2436, 96
      %v3175 = vpop.permute.xlu0 %3174
      %3176 = vrot.lane.b32.xlu0 %v2437, 96
      %v3177 = vpop.permute.xlu0 %3176
      %3178 = vrot.lane.b32.xlu0 %v2438, 96
      %v3179 = vpop.permute.xlu0 %3178
      %3180 = vrot.lane.b32.xlu0 %v2439, 96
      %v3181 = vpop.permute.xlu0 %3180
      %3182 = vrot.lane.b32.xlu0 %v2440, 96
      %v3183 = vpop.permute.xlu0 %3182
      %3184 = vrot.lane.b32.xlu0 %v2441, 96
      %v3185 = vpop.permute.xlu0 %3184
      %3186 = vrot.lane.b32.xlu0 %v2442, 96
      %v3187 = vpop.permute.xlu0 %3186
      %3188 = vrot.lane.b32.xlu0 %v2443, 96
      %v3189 = vpop.permute.xlu0 %3188
      %3190 = vrot.lane.b32.xlu0 %v2444, 96
      %v3191 = vpop.permute.xlu0 %3190
      %3192 = vrot.lane.b32.xlu0 %v2445, 96
      %v3193 = vpop.permute.xlu0 %3192
      %3194 = vrot.lane.b32.xlu0 %v2446, 96
      %v3195 = vpop.permute.xlu0 %3194
      %3196 = vrot.lane.b32.xlu0 %v2447, 96
      %v3197 = vpop.permute.xlu0 %3196
      %3198 = vrot.lane.b32.xlu0 %v2448, 96
      %v3199 = vpop.permute.xlu0 %3198
      %3200 = vrot.lane.b32.xlu0 %v2449, 96
      %v3201 = vpop.permute.xlu0 %3200
      %3202 = vrot.lane.b32.xlu0 %v2450, 96
      %v3203 = vpop.permute.xlu0 %3202
      %3204 = vrot.lane.b32.xlu0 %v2451, 96
      %v3205 = vpop.permute.xlu0 %3204
      %3206 = vrot.lane.b32.xlu0 %v2452, 96
      %v3207 = vpop.permute.xlu0 %3206
      %3208 = vrot.lane.b32.xlu0 %v2453, 96
      %v3209 = vpop.permute.xlu0 %3208
      %3210 = vrot.lane.b32.xlu0 %v2454, 96
      %v3211 = vpop.permute.xlu0 %3210
      %3212 = vrot.lane.b32.xlu0 %v2455, 96
      %v3213 = vpop.permute.xlu0 %3212
      %3214 = vrot.lane.b32.xlu0 %v2456, 96
      %v3215 = vpop.permute.xlu0 %3214
      %3216 = vrot.lane.b32.xlu0 %v2457, 96
      %v3217 = vpop.permute.xlu0 %3216
      %3218 = vrot.lane.b32.xlu0 %v2458, 96
      %v3219 = vpop.permute.xlu0 %3218
      %3220 = vrot.lane.b32.xlu0 %v2459, 96
      %v3221 = vpop.permute.xlu0 %3220
      %3222 = vrot.lane.b32.xlu0 %v2460, 96
      %v3223 = vpop.permute.xlu0 %3222
      %3224 = vrot.lane.b32.xlu0 %v2461, 96
      %v3225 = vpop.permute.xlu0 %3224
      %3226 = vrot.lane.b32.xlu0 %v2462, 96
      %v3227 = vpop.permute.xlu0 %3226
      %3228 = vrot.lane.b32.xlu0 %v2463, 96
      %v3229 = vpop.permute.xlu0 %3228
      %3230 = vrot.lane.b32.xlu0 %v2464, 96
      %v3231 = vpop.permute.xlu0 %3230
      %3232 = vrot.lane.b32.xlu0 %v2465, 96
      %v3233 = vpop.permute.xlu0 %3232
      %v3266 = vsel %vm319, %v2209, %v2531
      %v3267 = vsel %vm319, %v2210, %v2533
      %v3268 = vsel %vm319, %v2211, %v2535
      %v3269 = vsel %vm319, %v2212, %v2537
      %v3270 = vsel %vm319, %v2213, %v2539
      %v3271 = vsel %vm319, %v2214, %v2541
      %v3272 = vsel %vm319, %v2215, %v2543
      %v3273 = vsel %vm319, %v2216, %v2545
      %v3274 = vsel %vm319, %v2217, %v2547
      %v3275 = vsel %vm319, %v2218, %v2549
      %v3276 = vsel %vm319, %v2219, %v2551
      %v3277 = vsel %vm319, %v2220, %v2553
      %v3278 = vsel %vm319, %v2221, %v2555
      %v3279 = vsel %vm319, %v2222, %v2557
      %v3280 = vsel %vm319, %v2223, %v2559
      %v3281 = vsel %vm319, %v2224, %v2561
      %v3282 = vsel %vm319, %v2225, %v2563
      %v3283 = vsel %vm319, %v2226, %v2565
      %v3284 = vsel %vm319, %v2227, %v2567
      %v3285 = vsel %vm319, %v2228, %v2569
      %v3286 = vsel %vm319, %v2229, %v2571
      %v3287 = vsel %vm319, %v2230, %v2573
      %v3288 = vsel %vm319, %v2231, %v2575
      %v3289 = vsel %vm319, %v2232, %v2577
      %v3290 = vsel %vm319, %v2233, %v2579
      %v3291 = vsel %vm319, %v2234, %v2581
      %v3292 = vsel %vm319, %v2235, %v2583
      %v3293 = vsel %vm319, %v2236, %v2585
      %v3294 = vsel %vm319, %v2237, %v2587
      %v3295 = vsel %vm319, %v2238, %v2589
      %v3296 = vsel %vm319, %v2239, %v2591
      %v3297 = vsel %vm319, %v2240, %v2593
      %v3298 = vsel %vm1668, %v3266, %v2659
      %v3299 = vsel %vm1668, %v3267, %v2661
      %v3300 = vsel %vm1668, %v3268, %v2663
      %v3301 = vsel %vm1668, %v3269, %v2665
      %v3302 = vsel %vm1668, %v3270, %v2667
      %v3303 = vsel %vm1668, %v3271, %v2669
      %v3304 = vsel %vm1668, %v3272, %v2671
      %v3305 = vsel %vm1668, %v3273, %v2673
      %v3306 = vsel %vm1668, %v3274, %v2675
      %v3307 = vsel %vm1668, %v3275, %v2677
      %v3308 = vsel %vm1668, %v3276, %v2679
      %v3309 = vsel %vm1668, %v3277, %v2681
      %v3310 = vsel %vm1668, %v3278, %v2683
      %v3311 = vsel %vm1668, %v3279, %v2685
      %v3312 = vsel %vm1668, %v3280, %v2687
      %v3313 = vsel %vm1668, %v3281, %v2689
      %v3314 = vsel %vm1668, %v3282, %v2691
      %v3315 = vsel %vm1668, %v3283, %v2693
      %v3316 = vsel %vm1668, %v3284, %v2695
      %v3317 = vsel %vm1668, %v3285, %v2697
      %v3318 = vsel %vm1668, %v3286, %v2699
      %v3319 = vsel %vm1668, %v3287, %v2701
      %v3320 = vsel %vm1668, %v3288, %v2703
      %v3321 = vsel %vm1668, %v3289, %v2705
      %v3322 = vsel %vm1668, %v3290, %v2707
      %v3323 = vsel %vm1668, %v3291, %v2709
      %v3324 = vsel %vm1668, %v3292, %v2711
      %v3325 = vsel %vm1668, %v3293, %v2713
      %v3326 = vsel %vm1668, %v3294, %v2715
      %v3327 = vsel %vm1668, %v3295, %v2717
      %v3328 = vsel %vm1668, %v3296, %v2719
      %v3329 = vsel %vm1668, %v3297, %v2721
      %v3330 = vsel %vm1734, %v3298, %v2787
      %v3331 = vsel %vm1734, %v3299, %v2789
      %v3332 = vsel %vm1734, %v3300, %v2791
      %v3333 = vsel %vm1734, %v3301, %v2793
      %v3334 = vsel %vm1734, %v3302, %v2795
      %v3335 = vsel %vm1734, %v3303, %v2797
      %v3336 = vsel %vm1734, %v3304, %v2799
      %v3337 = vsel %vm1734, %v3305, %v2801
      %v3338 = vsel %vm1734, %v3306, %v2803
      %v3339 = vsel %vm1734, %v3307, %v2805
      %v3340 = vsel %vm1734, %v3308, %v2807
      %v3341 = vsel %vm1734, %v3309, %v2809
      %v3342 = vsel %vm1734, %v3310, %v2811
      %v3343 = vsel %vm1734, %v3311, %v2813
      %v3344 = vsel %vm1734, %v3312, %v2815
      %v3345 = vsel %vm1734, %v3313, %v2817
      %v3346 = vsel %vm1734, %v3314, %v2819
      %v3347 = vsel %vm1734, %v3315, %v2821
      %v3348 = vsel %vm1734, %v3316, %v2823
      %v3349 = vsel %vm1734, %v3317, %v2825
      %v3350 = vsel %vm1734, %v3318, %v2827
      %v3351 = vsel %vm1734, %v3319, %v2829
      %v3352 = vsel %vm1734, %v3320, %v2831
      %v3353 = vsel %vm1734, %v3321, %v2833
      %v3354 = vsel %vm1734, %v3322, %v2835
      %v3355 = vsel %vm1734, %v3323, %v2837
      %v3356 = vsel %vm1734, %v3324, %v2839
      %v3357 = vsel %vm1734, %v3325, %v2841
      %v3358 = vsel %vm1734, %v3326, %v2843
      %v3359 = vsel %vm1734, %v3327, %v2845
      %v3360 = vsel %vm1734, %v3328, %v2847
      %v3361 = vsel %vm1734, %v3329, %v2849
      %v3362 = vsel %vm319, %v2337, %v2915
      %v3363 = vsel %vm319, %v2338, %v2917
      %v3364 = vsel %vm319, %v2339, %v2919
      %v3365 = vsel %vm319, %v2340, %v2921
      %v3366 = vsel %vm319, %v2341, %v2923
      %v3367 = vsel %vm319, %v2342, %v2925
      %v3368 = vsel %vm319, %v2343, %v2927
      %v3369 = vsel %vm319, %v2344, %v2929
      %v3370 = vsel %vm319, %v2345, %v2931
      %v3371 = vsel %vm319, %v2346, %v2933
      %v3372 = vsel %vm319, %v2347, %v2935
      %v3373 = vsel %vm319, %v2348, %v2937
      %v3374 = vsel %vm319, %v2349, %v2939
      %v3375 = vsel %vm319, %v2350, %v2941
      %v3376 = vsel %vm319, %v2351, %v2943
      %v3377 = vsel %vm319, %v2352, %v2945
      %v3378 = vsel %vm319, %v2353, %v2947
      %v3379 = vsel %vm319, %v2354, %v2949
      %v3380 = vsel %vm319, %v2355, %v2951
      %v3381 = vsel %vm319, %v2356, %v2953
      %v3382 = vsel %vm319, %v2357, %v2955
      %v3383 = vsel %vm319, %v2358, %v2957
      %v3384 = vsel %vm319, %v2359, %v2959
      %v3385 = vsel %vm319, %v2360, %v2961
      %v3386 = vsel %vm319, %v2361, %v2963
      %v3387 = vsel %vm319, %v2362, %v2965
      %v3388 = vsel %vm319, %v2363, %v2967
      %v3389 = vsel %vm319, %v2364, %v2969
      %v3390 = vsel %vm319, %v2365, %v2971
      %v3391 = vsel %vm319, %v2366, %v2973
      %v3392 = vsel %vm319, %v2367, %v2975
      %v3393 = vsel %vm319, %v2368, %v2977
      %v3394 = vsel %vm1668, %v3362, %v3043
      %v3395 = vsel %vm1668, %v3363, %v3045
      %v3396 = vsel %vm1668, %v3364, %v3047
      %v3397 = vsel %vm1668, %v3365, %v3049
      %v3398 = vsel %vm1668, %v3366, %v3051
      %v3399 = vsel %vm1668, %v3367, %v3053
      %v3400 = vsel %vm1668, %v3368, %v3055
      %v3401 = vsel %vm1668, %v3369, %v3057
      %v3402 = vsel %vm1668, %v3370, %v3059
      %v3403 = vsel %vm1668, %v3371, %v3061
      %v3404 = vsel %vm1668, %v3372, %v3063
      %v3405 = vsel %vm1668, %v3373, %v3065
      %v3406 = vsel %vm1668, %v3374, %v3067
      %v3407 = vsel %vm1668, %v3375, %v3069
      %v3408 = vsel %vm1668, %v3376, %v3071
      %v3409 = vsel %vm1668, %v3377, %v3073
      %v3410 = vsel %vm1668, %v3378, %v3075
      %v3411 = vsel %vm1668, %v3379, %v3077
      %v3412 = vsel %vm1668, %v3380, %v3079
      %v3413 = vsel %vm1668, %v3381, %v3081
      %v3414 = vsel %vm1668, %v3382, %v3083
      %v3415 = vsel %vm1668, %v3383, %v3085
      %v3416 = vsel %vm1668, %v3384, %v3087
      %v3417 = vsel %vm1668, %v3385, %v3089
      %v3418 = vsel %vm1668, %v3386, %v3091
      %v3419 = vsel %vm1668, %v3387, %v3093
      %v3420 = vsel %vm1668, %v3388, %v3095
      %v3421 = vsel %vm1668, %v3389, %v3097
      %v3422 = vsel %vm1668, %v3390, %v3099
      %v3423 = vsel %vm1668, %v3391, %v3101
      %v3424 = vsel %vm1668, %v3392, %v3103
      %v3425 = vsel %vm1668, %v3393, %v3105
      %v3426 = vsel %vm1734, %v3394, %v3171
      %v3427 = vsel %vm1734, %v3395, %v3173
      %v3428 = vsel %vm1734, %v3396, %v3175
      %v3429 = vsel %vm1734, %v3397, %v3177
      %v3430 = vsel %vm1734, %v3398, %v3179
      %v3431 = vsel %vm1734, %v3399, %v3181
      %v3432 = vsel %vm1734, %v3400, %v3183
      %v3433 = vsel %vm1734, %v3401, %v3185
      %v3434 = vsel %vm1734, %v3402, %v3187
      %v3435 = vsel %vm1734, %v3403, %v3189
      %v3436 = vsel %vm1734, %v3404, %v3191
      %v3437 = vsel %vm1734, %v3405, %v3193
      %v3438 = vsel %vm1734, %v3406, %v3195
      %v3439 = vsel %vm1734, %v3407, %v3197
      %v3440 = vsel %vm1734, %v3408, %v3199
      %v3441 = vsel %vm1734, %v3409, %v3201
      %v3442 = vsel %vm1734, %v3410, %v3203
      %v3443 = vsel %vm1734, %v3411, %v3205
      %v3444 = vsel %vm1734, %v3412, %v3207
      %v3445 = vsel %vm1734, %v3413, %v3209
      %v3446 = vsel %vm1734, %v3414, %v3211
      %v3447 = vsel %vm1734, %v3415, %v3213
      %v3448 = vsel %vm1734, %v3416, %v3215
      %v3449 = vsel %vm1734, %v3417, %v3217
      %v3450 = vsel %vm1734, %v3418, %v3219
      %v3451 = vsel %vm1734, %v3419, %v3221
      %v3452 = vsel %vm1734, %v3420, %v3223
      %v3453 = vsel %vm1734, %v3421, %v3225
      %v3454 = vsel %vm1734, %v3422, %v3227
      %v3455 = vsel %vm1734, %v3423, %v3229
      %v3456 = vsel %vm1734, %v3424, %v3231
      %v3457 = vsel %vm1734, %v3425, %v3233
      %v3458 = vld [vmem:[%s3] sm:$0xff]
      %v3459 = vld [vmem:[%s3 + $0x8] sm:$0xff]
      %v3460 = vld [vmem:[%s3 + $0x10] sm:$0xff]
      %v3461 = vld [vmem:[%s3 + $0x18] sm:$0xff]
      %v3462 = vld [vmem:[%s3 + $0x20] sm:$0xff]
      %v3463 = vld [vmem:[%s3 + $0x28] sm:$0xff]
      %v3464 = vld [vmem:[%s3 + $0x30] sm:$0xff]
      %v3465 = vld [vmem:[%s3 + $0x38] sm:$0xff]
      %v3466 = vld [vmem:[%s3 + $0x40] sm:$0xff]
      %v3467 = vld [vmem:[%s3 + $0x48] sm:$0xff]
      %v3468 = vld [vmem:[%s3 + $0x50] sm:$0xff]
      %v3469 = vld [vmem:[%s3 + $0x58] sm:$0xff]
      %v3470 = vld [vmem:[%s3 + $0x60] sm:$0xff]
      %v3471 = vld [vmem:[%s3 + $0x68] sm:$0xff]
      %v3472 = vld [vmem:[%s3 + $0x70] sm:$0xff]
      %v3473 = vld [vmem:[%s3 + $0x78] sm:$0xff]
      %v3474 = vld [vmem:[%s3 + $0x80] sm:$0xff]
      %v3475 = vld [vmem:[%s3 + $0x88] sm:$0xff]
      %v3476 = vld [vmem:[%s3 + $0x90] sm:$0xff]
      %v3477 = vld [vmem:[%s3 + $0x98] sm:$0xff]
      %v3478 = vld [vmem:[%s3 + $0xa0] sm:$0xff]
      %v3479 = vld [vmem:[%s3 + $0xa8] sm:$0xff]
      %v3480 = vld [vmem:[%s3 + $0xb0] sm:$0xff]
      %v3481 = vld [vmem:[%s3 + $0xb8] sm:$0xff]
      %v3482 = vld [vmem:[%s3 + $0xc0] sm:$0xff]
      %v3483 = vld [vmem:[%s3 + $0xc8] sm:$0xff]
      %v3484 = vld [vmem:[%s3 + $0xd0] sm:$0xff]
      %v3485 = vld [vmem:[%s3 + $0xd8] sm:$0xff]
      %v3486 = vld [vmem:[%s3 + $0xe0] sm:$0xff]
      %v3487 = vld [vmem:[%s3 + $0xe8] sm:$0xff]
      %v3488 = vld [vmem:[%s3 + $0xf0] sm:$0xff]
      %v3489 = vld [vmem:[%s3 + $0xf8] sm:$0xff]
      %v3490 = vld [vmem:[%s3 + $0x100] sm:$0xff]
      %v3491 = vld [vmem:[%s3 + $0x108] sm:$0xff]
      %v3492 = vld [vmem:[%s3 + $0x110] sm:$0xff]
      %v3493 = vld [vmem:[%s3 + $0x118] sm:$0xff]
      %v3494 = vld [vmem:[%s3 + $0x120] sm:$0xff]
      %v3495 = vld [vmem:[%s3 + $0x128] sm:$0xff]
      %v3496 = vld [vmem:[%s3 + $0x130] sm:$0xff]
      %v3497 = vld [vmem:[%s3 + $0x138] sm:$0xff]
      %v3498 = vld [vmem:[%s3 + $0x140] sm:$0xff]
      %v3499 = vld [vmem:[%s3 + $0x148] sm:$0xff]
      %v3500 = vld [vmem:[%s3 + $0x150] sm:$0xff]
      %v3501 = vld [vmem:[%s3 + $0x158] sm:$0xff]
      %v3502 = vld [vmem:[%s3 + $0x160] sm:$0xff]
      %v3503 = vld [vmem:[%s3 + $0x168] sm:$0xff]
      %v3504 = vld [vmem:[%s3 + $0x170] sm:$0xff]
      %v3505 = vld [vmem:[%s3 + $0x178] sm:$0xff]
      %v3506 = vld [vmem:[%s3 + $0x180] sm:$0xff]
      %v3507 = vld [vmem:[%s3 + $0x188] sm:$0xff]
      %v3508 = vld [vmem:[%s3 + $0x190] sm:$0xff]
      %v3509 = vld [vmem:[%s3 + $0x198] sm:$0xff]
      %v3510 = vld [vmem:[%s3 + $0x1a0] sm:$0xff]
      %v3511 = vld [vmem:[%s3 + $0x1a8] sm:$0xff]
      %v3512 = vld [vmem:[%s3 + $0x1b0] sm:$0xff]
      %v3513 = vld [vmem:[%s3 + $0x1b8] sm:$0xff]
      %v3514 = vld [vmem:[%s3 + $0x1c0] sm:$0xff]
      %v3515 = vld [vmem:[%s3 + $0x1c8] sm:$0xff]
      %v3516 = vld [vmem:[%s3 + $0x1d0] sm:$0xff]
      %v3517 = vld [vmem:[%s3 + $0x1d8] sm:$0xff]
      %v3518 = vld [vmem:[%s3 + $0x1e0] sm:$0xff]
      %v3519 = vld [vmem:[%s3 + $0x1e8] sm:$0xff]
      %v3520 = vld [vmem:[%s3 + $0x1f0] sm:$0xff]
      %v3521 = vld [vmem:[%s3 + $0x1f8] sm:$0xff]
      %v3522 = vld [vmem:[%s3 + $0x200] sm:$0xff]
      %v3523 = vld [vmem:[%s3 + $0x208] sm:$0xff]
      %v3524 = vld [vmem:[%s3 + $0x210] sm:$0xff]
      %v3525 = vld [vmem:[%s3 + $0x218] sm:$0xff]
      %v3526 = vld [vmem:[%s3 + $0x220] sm:$0xff]
      %v3527 = vld [vmem:[%s3 + $0x228] sm:$0xff]
      %v3528 = vld [vmem:[%s3 + $0x230] sm:$0xff]
      %v3529 = vld [vmem:[%s3 + $0x238] sm:$0xff]
      %v3530 = vld [vmem:[%s3 + $0x240] sm:$0xff]
      %v3531 = vld [vmem:[%s3 + $0x248] sm:$0xff]
      %v3532 = vld [vmem:[%s3 + $0x250] sm:$0xff]
      %v3533 = vld [vmem:[%s3 + $0x258] sm:$0xff]
      %v3534 = vld [vmem:[%s3 + $0x260] sm:$0xff]
      %v3535 = vld [vmem:[%s3 + $0x268] sm:$0xff]
      %v3536 = vld [vmem:[%s3 + $0x270] sm:$0xff]
      %v3537 = vld [vmem:[%s3 + $0x278] sm:$0xff]
      %v3538 = vld [vmem:[%s3 + $0x280] sm:$0xff]
      %v3539 = vld [vmem:[%s3 + $0x288] sm:$0xff]
      %v3540 = vld [vmem:[%s3 + $0x290] sm:$0xff]
      %v3541 = vld [vmem:[%s3 + $0x298] sm:$0xff]
      %v3542 = vld [vmem:[%s3 + $0x2a0] sm:$0xff]
      %v3543 = vld [vmem:[%s3 + $0x2a8] sm:$0xff]
      %v3544 = vld [vmem:[%s3 + $0x2b0] sm:$0xff]
      %v3545 = vld [vmem:[%s3 + $0x2b8] sm:$0xff]
      %v3546 = vld [vmem:[%s3 + $0x2c0] sm:$0xff]
      %v3547 = vld [vmem:[%s3 + $0x2c8] sm:$0xff]
      %v3548 = vld [vmem:[%s3 + $0x2d0] sm:$0xff]
      %v3549 = vld [vmem:[%s3 + $0x2d8] sm:$0xff]
      %v3550 = vld [vmem:[%s3 + $0x2e0] sm:$0xff]
      %v3551 = vld [vmem:[%s3 + $0x2e8] sm:$0xff]
      %v3552 = vld [vmem:[%s3 + $0x2f0] sm:$0xff]
      %v3553 = vld [vmem:[%s3 + $0x2f8] sm:$0xff]
      %v3554 = vld [vmem:[%s3 + $0x300] sm:$0xff]
      %v3555 = vld [vmem:[%s3 + $0x308] sm:$0xff]
      %v3556 = vld [vmem:[%s3 + $0x310] sm:$0xff]
      %v3557 = vld [vmem:[%s3 + $0x318] sm:$0xff]
      %v3558 = vld [vmem:[%s3 + $0x320] sm:$0xff]
      %v3559 = vld [vmem:[%s3 + $0x328] sm:$0xff]
      %v3560 = vld [vmem:[%s3 + $0x330] sm:$0xff]
      %v3561 = vld [vmem:[%s3 + $0x338] sm:$0xff]
      %v3562 = vld [vmem:[%s3 + $0x340] sm:$0xff]
      %v3563 = vld [vmem:[%s3 + $0x348] sm:$0xff]
      %v3564 = vld [vmem:[%s3 + $0x350] sm:$0xff]
      %v3565 = vld [vmem:[%s3 + $0x358] sm:$0xff]
      %v3566 = vld [vmem:[%s4] sm:$0x7]
      %v3568 = vperm.slane %v3566, 0
      %v3569 = vperm.slane %v3566, 1
      %v3570 = vperm.slane %v3566, 2
      %v3575 = vsel %vm319, %v2466, 0
      %v3578 = vsel %vm319, %v2467, 0
      %v3581 = vsel %vm319, %v2468, 0
      %v3584 = vsel %vm319, %v2469, 0
      %v3587 = vsel %vm319, %v2470, 0
      %v3590 = vsel %vm319, %v2471, 0
      %v3593 = vsel %vm319, %v2472, 0
      %v3596 = vsel %vm319, %v2473, 0
      %v3599 = vsel %vm319, %v2474, 0
      %v3602 = vsel %vm319, %v2475, 0
      %v3605 = vsel %vm319, %v2476, 0
      %v3608 = vsel %vm319, %v2477, 0
      %v3611 = vsel %vm319, %v2478, 0
      %v3614 = vsel %vm319, %v2479, 0
      %v3617 = vsel %vm319, %v2480, 0
      %v3620 = vsel %vm319, %v2481, 0
      %v3623 = vsel %vm319, %v2482, 0
      %v3626 = vsel %vm319, %v2483, 0
      %v3629 = vsel %vm319, %v2484, 0
      %v3632 = vsel %vm319, %v2485, 0
      %v3635 = vsel %vm319, %v2486, 0
      %v3638 = vsel %vm319, %v2487, 0
      %v3641 = vsel %vm319, %v2488, 0
      %v3644 = vsel %vm319, %v2489, 0
      %v3647 = vsel %vm319, %v2490, 0
      %v3650 = vsel %vm319, %v2491, 0
      %v3653 = vsel %vm319, %v2492, 0
      %v3656 = vsel %vm319, %v2493, 0
      %v3659 = vsel %vm319, %v2494, 0
      %v3662 = vsel %vm319, %v2495, 0
      %v3665 = vsel %vm319, %v2496, 0
      %v3668 = vsel %vm319, %v2497, 0
      %3670 = vmatpush.msra.mxu0 %v3503
      %3671 = vmatpush.msra.mxu0 %v3500
      %3672 = vmatpush.msra.mxu0 %v3497
      %3673 = vmatpush.msra.mxu0 %v3494
      %3674 = vmatpush.msra.mxu0 %v3491
      %3675 = vmatpush.msra.mxu0 %v3488
      %3676 = vmatpush.msra.mxu0 %v3485
      %3677 = vmatpush.msra.mxu0 %v3482
      %3678 = vmatpush.msra.mxu0 %v3479
      %3679 = vmatpush.msra.mxu0 %v3476
      %3680 = vmatpush.msra.mxu0 %v3473
      %3681 = vmatpush.msra.mxu0 %v3470
      %3682 = vmatpush.msra.mxu0 %v3467
      %3683 = vmatpush.msra.mxu0 %v3464
      %3684 = vmatpush.msra.mxu0 %v3461
      %3685 = vmatpush.msra.mxu0 %v3458
      %3686 = vmatmul.f32.gmra.mxu0 %v3330
      %v3687 = vpop.f32.mrf.mxu0
      %v3688 = vadd.f32 %v3568, %v3687
      %3689 = vmatmul.f32.gmra.mxu0 %v3331
      %v3690 = vpop.f32.mrf.mxu0
      %v3691 = vadd.f32 %v3568, %v3690
      %3692 = vmatmul.f32.gmra.mxu0 %v3332
      %v3693 = vpop.f32.mrf.mxu0
      %v3694 = vadd.f32 %v3568, %v3693
      %3695 = vmatmul.f32.gmra.mxu0 %v3333
      %v3696 = vpop.f32.mrf.mxu0
      %v3697 = vadd.f32 %v3568, %v3696
      %3698 = vmatmul.f32.gmra.mxu0 %v3334
      %v3699 = vpop.f32.mrf.mxu0
      %v3700 = vadd.f32 %v3568, %v3699
      %3701 = vmatmul.f32.gmra.mxu0 %v3335
      %v3702 = vpop.f32.mrf.mxu0
      %v3703 = vadd.f32 %v3568, %v3702
      %3704 = vmatmul.f32.gmra.mxu0 %v3336
      %v3705 = vpop.f32.mrf.mxu0
      %v3706 = vadd.f32 %v3568, %v3705
      %3707 = vmatmul.f32.gmra.mxu0 %v3337
      %v3708 = vpop.f32.mrf.mxu0
      %v3709 = vadd.f32 %v3568, %v3708
      %3710 = vmatmul.f32.gmra.mxu0 %v3338
      %v3711 = vpop.f32.mrf.mxu0
      %v3712 = vadd.f32 %v3568, %v3711
      %3713 = vmatmul.f32.gmra.mxu0 %v3339
      %v3714 = vpop.f32.mrf.mxu0
      %v3715 = vadd.f32 %v3568, %v3714
      %3716 = vmatmul.f32.gmra.mxu0 %v3340
      %v3717 = vpop.f32.mrf.mxu0
      %v3718 = vadd.f32 %v3568, %v3717
      %3719 = vmatmul.f32.gmra.mxu0 %v3341
      %v3720 = vpop.f32.mrf.mxu0
      %v3721 = vadd.f32 %v3568, %v3720
      %3722 = vmatmul.f32.gmra.mxu0 %v3342
      %v3723 = vpop.f32.mrf.mxu0
      %v3724 = vadd.f32 %v3568, %v3723
      %3725 = vmatmul.f32.gmra.mxu0 %v3343
      %v3726 = vpop.f32.mrf.mxu0
      %v3727 = vadd.f32 %v3568, %v3726
      %3728 = vmatmul.f32.gmra.mxu0 %v3344
      %v3729 = vpop.f32.mrf.mxu0
      %v3730 = vadd.f32 %v3568, %v3729
      %3731 = vmatmul.f32.gmra.mxu0 %v3345
      %v3732 = vpop.f32.mrf.mxu0
      %v3733 = vadd.f32 %v3568, %v3732
      %3734 = vmatmul.f32.gmra.mxu0 %v3346
      %v3735 = vpop.f32.mrf.mxu0
      %v3736 = vadd.f32 %v3568, %v3735
      %3737 = vmatmul.f32.gmra.mxu0 %v3347
      %v3738 = vpop.f32.mrf.mxu0
      %v3739 = vadd.f32 %v3568, %v3738
      %3740 = vmatmul.f32.gmra.mxu0 %v3348
      %v3741 = vpop.f32.mrf.mxu0
      %v3742 = vadd.f32 %v3568, %v3741
      %3743 = vmatmul.f32.gmra.mxu0 %v3349
      %v3744 = vpop.f32.mrf.mxu0
      %v3745 = vadd.f32 %v3568, %v3744
      %3746 = vmatmul.f32.gmra.mxu0 %v3350
      %v3747 = vpop.f32.mrf.mxu0
      %v3748 = vadd.f32 %v3568, %v3747
      %3749 = vmatmul.f32.gmra.mxu0 %v3351
      %v3750 = vpop.f32.mrf.mxu0
      %v3751 = vadd.f32 %v3568, %v3750
      %3752 = vmatmul.f32.gmra.mxu0 %v3352
      %v3753 = vpop.f32.mrf.mxu0
      %v3754 = vadd.f32 %v3568, %v3753
      %3755 = vmatmul.f32.gmra.mxu0 %v3353
      %v3756 = vpop.f32.mrf.mxu0
      %v3757 = vadd.f32 %v3568, %v3756
      %3758 = vmatmul.f32.gmra.mxu0 %v3354
      %v3759 = vpop.f32.mrf.mxu0
      %v3760 = vadd.f32 %v3568, %v3759
      %3761 = vmatmul.f32.gmra.mxu0 %v3355
      %v3762 = vpop.f32.mrf.mxu0
      %v3763 = vadd.f32 %v3568, %v3762
      %3764 = vmatmul.f32.gmra.mxu0 %v3356
      %v3765 = vpop.f32.mrf.mxu0
      %v3766 = vadd.f32 %v3568, %v3765
      %3767 = vmatmul.f32.gmra.mxu0 %v3357
      %v3768 = vpop.f32.mrf.mxu0
      %v3769 = vadd.f32 %v3568, %v3768
      %3770 = vmatmul.f32.gmra.mxu0 %v3358
      %v3771 = vpop.f32.mrf.mxu0
      %v3772 = vadd.f32 %v3568, %v3771
      %3773 = vmatmul.f32.gmra.mxu0 %v3359
      %v3774 = vpop.f32.mrf.mxu0
      %v3775 = vadd.f32 %v3568, %v3774
      %3776 = vmatmul.f32.gmra.mxu0 %v3360
      %v3777 = vpop.f32.mrf.mxu0
      %v3778 = vadd.f32 %v3568, %v3777
      %3779 = vmatmul.f32.gmra.mxu0 %v3361
      %v3780 = vpop.f32.mrf.mxu0
      %v3781 = vadd.f32 %v3568, %v3780
      %3782 = vdwg.mxu0
      %3783 = vmatpush.msra.mxu0 %v3551
      %3784 = vmatpush.msra.mxu0 %v3548
      %3785 = vmatpush.msra.mxu0 %v3545
      %3786 = vmatpush.msra.mxu0 %v3542
      %3787 = vmatpush.msra.mxu0 %v3539
      %3788 = vmatpush.msra.mxu0 %v3536
      %3789 = vmatpush.msra.mxu0 %v3533
      %3790 = vmatpush.msra.mxu0 %v3530
      %3791 = vmatpush.msra.mxu0 %v3527
      %3792 = vmatpush.msra.mxu0 %v3524
      %3793 = vmatpush.msra.mxu0 %v3521
      %3794 = vmatpush.msra.mxu0 %v3518
      %3795 = vmatpush.msra.mxu0 %v3515
      %3796 = vmatpush.msra.mxu0 %v3512
      %3797 = vmatpush.msra.mxu0 %v3509
      %3798 = vmatpush.msra.mxu0 %v3506
      %3799 = vmatmul.f32.gmra.mxu0 %v3426
      %v3800 = vpop.f32.mrf.mxu0
      %v3801 = vadd.f32 %v3688, %v3800
      %3802 = vmatmul.f32.gmra.mxu0 %v3427
      %v3803 = vpop.f32.mrf.mxu0
      %v3804 = vadd.f32 %v3691, %v3803
      %3805 = vmatmul.f32.gmra.mxu0 %v3428
      %v3806 = vpop.f32.mrf.mxu0
      %v3807 = vadd.f32 %v3694, %v3806
      %3808 = vmatmul.f32.gmra.mxu0 %v3429
      %v3809 = vpop.f32.mrf.mxu0
      %v3810 = vadd.f32 %v3697, %v3809
      %3811 = vmatmul.f32.gmra.mxu0 %v3430
      %v3812 = vpop.f32.mrf.mxu0
      %v3813 = vadd.f32 %v3700, %v3812
      %3814 = vmatmul.f32.gmra.mxu0 %v3431
      %v3815 = vpop.f32.mrf.mxu0
      %v3816 = vadd.f32 %v3703, %v3815
      %3817 = vmatmul.f32.gmra.mxu0 %v3432
      %v3818 = vpop.f32.mrf.mxu0
      %v3819 = vadd.f32 %v3706, %v3818
      %3820 = vmatmul.f32.gmra.mxu0 %v3433
      %v3821 = vpop.f32.mrf.mxu0
      %v3822 = vadd.f32 %v3709, %v3821
      %3823 = vmatmul.f32.gmra.mxu0 %v3434
      %v3824 = vpop.f32.mrf.mxu0
      %v3825 = vadd.f32 %v3712, %v3824
      %3826 = vmatmul.f32.gmra.mxu0 %v3435
      %v3827 = vpop.f32.mrf.mxu0
      %v3828 = vadd.f32 %v3715, %v3827
      %3829 = vmatmul.f32.gmra.mxu0 %v3436
      %v3830 = vpop.f32.mrf.mxu0
      %v3831 = vadd.f32 %v3718, %v3830
      %3832 = vmatmul.f32.gmra.mxu0 %v3437
      %v3833 = vpop.f32.mrf.mxu0
      %v3834 = vadd.f32 %v3721, %v3833
      %3835 = vmatmul.f32.gmra.mxu0 %v3438
      %v3836 = vpop.f32.mrf.mxu0
      %v3837 = vadd.f32 %v3724, %v3836
      %3838 = vmatmul.f32.gmra.mxu0 %v3439
      %v3839 = vpop.f32.mrf.mxu0
      %v3840 = vadd.f32 %v3727, %v3839
      %3841 = vmatmul.f32.gmra.mxu0 %v3440
      %v3842 = vpop.f32.mrf.mxu0
      %v3843 = vadd.f32 %v3730, %v3842
      %3844 = vmatmul.f32.gmra.mxu0 %v3441
      %v3845 = vpop.f32.mrf.mxu0
      %v3846 = vadd.f32 %v3733, %v3845
      %3847 = vmatmul.f32.gmra.mxu0 %v3442
      %v3848 = vpop.f32.mrf.mxu0
      %v3849 = vadd.f32 %v3736, %v3848
      %3850 = vmatmul.f32.gmra.mxu0 %v3443
      %v3851 = vpop.f32.mrf.mxu0
      %v3852 = vadd.f32 %v3739, %v3851
      %3853 = vmatmul.f32.gmra.mxu0 %v3444
      %v3854 = vpop.f32.mrf.mxu0
      %v3855 = vadd.f32 %v3742, %v3854
      %3856 = vmatmul.f32.gmra.mxu0 %v3445
      %v3857 = vpop.f32.mrf.mxu0
      %v3858 = vadd.f32 %v3745, %v3857
      %3859 = vmatmul.f32.gmra.mxu0 %v3446
      %v3860 = vpop.f32.mrf.mxu0
      %v3861 = vadd.f32 %v3748, %v3860
      %3862 = vmatmul.f32.gmra.mxu0 %v3447
      %v3863 = vpop.f32.mrf.mxu0
      %v3864 = vadd.f32 %v3751, %v3863
      %3865 = vmatmul.f32.gmra.mxu0 %v3448
      %v3866 = vpop.f32.mrf.mxu0
      %v3867 = vadd.f32 %v3754, %v3866
      %3868 = vmatmul.f32.gmra.mxu0 %v3449
      %v3869 = vpop.f32.mrf.mxu0
      %v3870 = vadd.f32 %v3757, %v3869
      %3871 = vmatmul.f32.gmra.mxu0 %v3450
      %v3872 = vpop.f32.mrf.mxu0
      %v3873 = vadd.f32 %v3760, %v3872
      %3874 = vmatmul.f32.gmra.mxu0 %v3451
      %v3875 = vpop.f32.mrf.mxu0
      %v3876 = vadd.f32 %v3763, %v3875
      %3877 = vmatmul.f32.gmra.mxu0 %v3452
      %v3878 = vpop.f32.mrf.mxu0
      %v3879 = vadd.f32 %v3766, %v3878
      %3880 = vmatmul.f32.gmra.mxu0 %v3453
      %v3881 = vpop.f32.mrf.mxu0
      %v3882 = vadd.f32 %v3769, %v3881
      %3883 = vmatmul.f32.gmra.mxu0 %v3454
      %v3884 = vpop.f32.mrf.mxu0
      %v3885 = vadd.f32 %v3772, %v3884
      %3886 = vmatmul.f32.gmra.mxu0 %v3455
      %v3887 = vpop.f32.mrf.mxu0
      %v3888 = vadd.f32 %v3775, %v3887
      %3889 = vmatmul.f32.gmra.mxu0 %v3456
      %v3890 = vpop.f32.mrf.mxu0
      %v3891 = vadd.f32 %v3778, %v3890
      %3892 = vmatmul.f32.gmra.mxu0 %v3457
      %v3893 = vpop.f32.mrf.mxu0
      %v3894 = vadd.f32 %v3781, %v3893
      %3895 = vdwg.mxu0
      %3896 = vmatpush.msra.mxu0 0.0
      %3897 = vmatpush.msra.mxu0 0.0
      %3898 = vmatpush.msra.mxu0 0.0
      %3899 = vmatpush.msra.mxu0 0.0
      %3900 = vmatpush.msra.mxu0 0.0
      %3901 = vmatpush.msra.mxu0 0.0
      %3902 = vmatpush.msra.mxu0 0.0
      %3903 = vmatpush.msra.mxu0 0.0
      %3904 = vmatpush.msra.mxu0 0.0
      %3905 = vmatpush.msra.mxu0 0.0
      %3906 = vmatpush.msra.mxu0 0.0
      %3907 = vmatpush.msra.mxu0 0.0
      %3908 = vmatpush.msra.mxu0 %v3563
      %3909 = vmatpush.msra.mxu0 %v3560
      %3910 = vmatpush.msra.mxu0 %v3557
      %3911 = vmatpush.msra.mxu0 %v3554
      %3912 = vmatmul.f32.gmra.mxu0 %v3575
      %v3913 = vpop.f32.mrf.mxu0
      %v3914 = vadd.f32 %v3801, %v3913
      %3915 = vmatmul.f32.gmra.mxu0 %v3578
      %v3916 = vpop.f32.mrf.mxu0
      %v3917 = vadd.f32 %v3804, %v3916
      %3918 = vmatmul.f32.gmra.mxu0 %v3581
      %v3919 = vpop.f32.mrf.mxu0
      %v3920 = vadd.f32 %v3807, %v3919
      %3921 = vmatmul.f32.gmra.mxu0 %v3584
      %v3922 = vpop.f32.mrf.mxu0
      %v3923 = vadd.f32 %v3810, %v3922
      %3924 = vmatmul.f32.gmra.mxu0 %v3587
      %v3925 = vpop.f32.mrf.mxu0
      %v3926 = vadd.f32 %v3813, %v3925
      %3927 = vmatmul.f32.gmra.mxu0 %v3590
      %v3928 = vpop.f32.mrf.mxu0
      %v3929 = vadd.f32 %v3816, %v3928
      %3930 = vmatmul.f32.gmra.mxu0 %v3593
      %v3931 = vpop.f32.mrf.mxu0
      %v3932 = vadd.f32 %v3819, %v3931
      %3933 = vmatmul.f32.gmra.mxu0 %v3596
      %v3934 = vpop.f32.mrf.mxu0
      %v3935 = vadd.f32 %v3822, %v3934
      %3936 = vmatmul.f32.gmra.mxu0 %v3599
      %v3937 = vpop.f32.mrf.mxu0
      %v3938 = vadd.f32 %v3825, %v3937
      %3939 = vmatmul.f32.gmra.mxu0 %v3602
      %v3940 = vpop.f32.mrf.mxu0
      %v3941 = vadd.f32 %v3828, %v3940
      %3942 = vmatmul.f32.gmra.mxu0 %v3605
      %v3943 = vpop.f32.mrf.mxu0
      %v3944 = vadd.f32 %v3831, %v3943
      %3945 = vmatmul.f32.gmra.mxu0 %v3608
      %v3946 = vpop.f32.mrf.mxu0
      %v3947 = vadd.f32 %v3834, %v3946
      %3948 = vmatmul.f32.gmra.mxu0 %v3611
      %v3949 = vpop.f32.mrf.mxu0
      %v3950 = vadd.f32 %v3837, %v3949
      %3951 = vmatmul.f32.gmra.mxu0 %v3614
      %v3952 = vpop.f32.mrf.mxu0
      %v3953 = vadd.f32 %v3840, %v3952
      %3954 = vmatmul.f32.gmra.mxu0 %v3617
      %v3955 = vpop.f32.mrf.mxu0
      %v3956 = vadd.f32 %v3843, %v3955
      %3957 = vmatmul.f32.gmra.mxu0 %v3620
      %v3958 = vpop.f32.mrf.mxu0
      %v3959 = vadd.f32 %v3846, %v3958
      %3960 = vmatmul.f32.gmra.mxu0 %v3623
      %v3961 = vpop.f32.mrf.mxu0
      %v3962 = vadd.f32 %v3849, %v3961
      %3963 = vmatmul.f32.gmra.mxu0 %v3626
      %v3964 = vpop.f32.mrf.mxu0
      %v3965 = vadd.f32 %v3852, %v3964
      %3966 = vmatmul.f32.gmra.mxu0 %v3629
      %v3967 = vpop.f32.mrf.mxu0
      %v3968 = vadd.f32 %v3855, %v3967
      %3969 = vmatmul.f32.gmra.mxu0 %v3632
      %v3970 = vpop.f32.mrf.mxu0
      %v3971 = vadd.f32 %v3858, %v3970
      %3972 = vmatmul.f32.gmra.mxu0 %v3635
      %v3973 = vpop.f32.mrf.mxu0
      %v3974 = vadd.f32 %v3861, %v3973
      %3975 = vmatmul.f32.gmra.mxu0 %v3638
      %v3976 = vpop.f32.mrf.mxu0
      %v3977 = vadd.f32 %v3864, %v3976
      %3978 = vmatmul.f32.gmra.mxu0 %v3641
      %v3979 = vpop.f32.mrf.mxu0
      %v3980 = vadd.f32 %v3867, %v3979
      %3981 = vmatmul.f32.gmra.mxu0 %v3644
      %v3982 = vpop.f32.mrf.mxu0
      %v3983 = vadd.f32 %v3870, %v3982
      %3984 = vmatmul.f32.gmra.mxu0 %v3647
      %v3985 = vpop.f32.mrf.mxu0
      %v3986 = vadd.f32 %v3873, %v3985
      %3987 = vmatmul.f32.gmra.mxu0 %v3650
      %v3988 = vpop.f32.mrf.mxu0
      %v3989 = vadd.f32 %v3876, %v3988
      %3990 = vmatmul.f32.gmra.mxu0 %v3653
      %v3991 = vpop.f32.mrf.mxu0
      %v3992 = vadd.f32 %v3879, %v3991
      %3993 = vmatmul.f32.gmra.mxu0 %v3656
      %v3994 = vpop.f32.mrf.mxu0
      %v3995 = vadd.f32 %v3882, %v3994
      %3996 = vmatmul.f32.gmra.mxu0 %v3659
      %v3997 = vpop.f32.mrf.mxu0
      %v3998 = vadd.f32 %v3885, %v3997
      %3999 = vmatmul.f32.gmra.mxu0 %v3662
      %v4000 = vpop.f32.mrf.mxu0
      %v4001 = vadd.f32 %v3888, %v4000
      %4002 = vmatmul.f32.gmra.mxu0 %v3665
      %v4003 = vpop.f32.mrf.mxu0
      %v4004 = vadd.f32 %v3891, %v4003
      %4005 = vmatmul.f32.gmra.mxu0 %v3668
      %v4006 = vpop.f32.mrf.mxu0
      %v4007 = vadd.f32 %v3894, %v4006
      %4008 = vdwg.mxu0
      %4009 = vmatpush.msra.mxu0 %v3504
      %4010 = vmatpush.msra.mxu0 %v3501
      %4011 = vmatpush.msra.mxu0 %v3498
      %4012 = vmatpush.msra.mxu0 %v3495
      %4013 = vmatpush.msra.mxu0 %v3492
      %4014 = vmatpush.msra.mxu0 %v3489
      %4015 = vmatpush.msra.mxu0 %v3486
      %4016 = vmatpush.msra.mxu0 %v3483
      %4017 = vmatpush.msra.mxu0 %v3480
      %4018 = vmatpush.msra.mxu0 %v3477
      %4019 = vmatpush.msra.mxu0 %v3474
      %4020 = vmatpush.msra.mxu0 %v3471
      %4021 = vmatpush.msra.mxu0 %v3468
      %4022 = vmatpush.msra.mxu0 %v3465
      %4023 = vmatpush.msra.mxu0 %v3462
      %4024 = vmatpush.msra.mxu0 %v3459
      %4025 = vmatmul.f32.gmra.mxu0 %v3330
      %v4026 = vpop.f32.mrf.mxu0
      %v4027 = vadd.f32 %v3569, %v4026
      %4028 = vmatmul.f32.gmra.mxu0 %v3331
      %v4029 = vpop.f32.mrf.mxu0
      %v4030 = vadd.f32 %v3569, %v4029
      %4031 = vmatmul.f32.gmra.mxu0 %v3332
      %v4032 = vpop.f32.mrf.mxu0
      %v4033 = vadd.f32 %v3569, %v4032
      %4034 = vmatmul.f32.gmra.mxu0 %v3333
      %v4035 = vpop.f32.mrf.mxu0
      %v4036 = vadd.f32 %v3569, %v4035
      %4037 = vmatmul.f32.gmra.mxu0 %v3334
      %v4038 = vpop.f32.mrf.mxu0
      %v4039 = vadd.f32 %v3569, %v4038
      %4040 = vmatmul.f32.gmra.mxu0 %v3335
      %v4041 = vpop.f32.mrf.mxu0
      %v4042 = vadd.f32 %v3569, %v4041
      %4043 = vmatmul.f32.gmra.mxu0 %v3336
      %v4044 = vpop.f32.mrf.mxu0
      %v4045 = vadd.f32 %v3569, %v4044
      %4046 = vmatmul.f32.gmra.mxu0 %v3337
      %v4047 = vpop.f32.mrf.mxu0
      %v4048 = vadd.f32 %v3569, %v4047
      %4049 = vmatmul.f32.gmra.mxu0 %v3338
      %v4050 = vpop.f32.mrf.mxu0
      %v4051 = vadd.f32 %v3569, %v4050
      %4052 = vmatmul.f32.gmra.mxu0 %v3339
      %v4053 = vpop.f32.mrf.mxu0
      %v4054 = vadd.f32 %v3569, %v4053
      %4055 = vmatmul.f32.gmra.mxu0 %v3340
      %v4056 = vpop.f32.mrf.mxu0
      %v4057 = vadd.f32 %v3569, %v4056
      %4058 = vmatmul.f32.gmra.mxu0 %v3341
      %v4059 = vpop.f32.mrf.mxu0
      %v4060 = vadd.f32 %v3569, %v4059
      %4061 = vmatmul.f32.gmra.mxu0 %v3342
      %v4062 = vpop.f32.mrf.mxu0
      %v4063 = vadd.f32 %v3569, %v4062
      %4064 = vmatmul.f32.gmra.mxu0 %v3343
      %v4065 = vpop.f32.mrf.mxu0
      %v4066 = vadd.f32 %v3569, %v4065
      %4067 = vmatmul.f32.gmra.mxu0 %v3344
      %v4068 = vpop.f32.mrf.mxu0
      %v4069 = vadd.f32 %v3569, %v4068
      %4070 = vmatmul.f32.gmra.mxu0 %v3345
      %v4071 = vpop.f32.mrf.mxu0
      %v4072 = vadd.f32 %v3569, %v4071
      %4073 = vmatmul.f32.gmra.mxu0 %v3346
      %v4074 = vpop.f32.mrf.mxu0
      %v4075 = vadd.f32 %v3569, %v4074
      %4076 = vmatmul.f32.gmra.mxu0 %v3347
      %v4077 = vpop.f32.mrf.mxu0
      %v4078 = vadd.f32 %v3569, %v4077
      %4079 = vmatmul.f32.gmra.mxu0 %v3348
      %v4080 = vpop.f32.mrf.mxu0
      %v4081 = vadd.f32 %v3569, %v4080
      %4082 = vmatmul.f32.gmra.mxu0 %v3349
      %v4083 = vpop.f32.mrf.mxu0
      %v4084 = vadd.f32 %v3569, %v4083
      %4085 = vmatmul.f32.gmra.mxu0 %v3350
      %v4086 = vpop.f32.mrf.mxu0
      %v4087 = vadd.f32 %v3569, %v4086
      %4088 = vmatmul.f32.gmra.mxu0 %v3351
      %v4089 = vpop.f32.mrf.mxu0
      %v4090 = vadd.f32 %v3569, %v4089
      %4091 = vmatmul.f32.gmra.mxu0 %v3352
      %v4092 = vpop.f32.mrf.mxu0
      %v4093 = vadd.f32 %v3569, %v4092
      %4094 = vmatmul.f32.gmra.mxu0 %v3353
      %v4095 = vpop.f32.mrf.mxu0
      %v4096 = vadd.f32 %v3569, %v4095
      %4097 = vmatmul.f32.gmra.mxu0 %v3354
      %v4098 = vpop.f32.mrf.mxu0
      %v4099 = vadd.f32 %v3569, %v4098
      %4100 = vmatmul.f32.gmra.mxu0 %v3355
      %v4101 = vpop.f32.mrf.mxu0
      %v4102 = vadd.f32 %v3569, %v4101
      %4103 = vmatmul.f32.gmra.mxu0 %v3356
      %v4104 = vpop.f32.mrf.mxu0
      %v4105 = vadd.f32 %v3569, %v4104
      %4106 = vmatmul.f32.gmra.mxu0 %v3357
      %v4107 = vpop.f32.mrf.mxu0
      %v4108 = vadd.f32 %v3569, %v4107
      %4109 = vmatmul.f32.gmra.mxu0 %v3358
      %v4110 = vpop.f32.mrf.mxu0
      %v4111 = vadd.f32 %v3569, %v4110
      %4112 = vmatmul.f32.gmra.mxu0 %v3359
      %v4113 = vpop.f32.mrf.mxu0
      %v4114 = vadd.f32 %v3569, %v4113
      %4115 = vmatmul.f32.gmra.mxu0 %v3360
      %v4116 = vpop.f32.mrf.mxu0
      %v4117 = vadd.f32 %v3569, %v4116
      %4118 = vmatmul.f32.gmra.mxu0 %v3361
      %v4119 = vpop.f32.mrf.mxu0
      %v4120 = vadd.f32 %v3569, %v4119
      %4121 = vdwg.mxu0
      %4122 = vmatpush.msra.mxu0 %v3552
      %4123 = vmatpush.msra.mxu0 %v3549
      %4124 = vmatpush.msra.mxu0 %v3546
      %4125 = vmatpush.msra.mxu0 %v3543
      %4126 = vmatpush.msra.mxu0 %v3540
      %4127 = vmatpush.msra.mxu0 %v3537
      %4128 = vmatpush.msra.mxu0 %v3534
      %4129 = vmatpush.msra.mxu0 %v3531
      %4130 = vmatpush.msra.mxu0 %v3528
      %4131 = vmatpush.msra.mxu0 %v3525
      %4132 = vmatpush.msra.mxu0 %v3522
      %4133 = vmatpush.msra.mxu0 %v3519
      %4134 = vmatpush.msra.mxu0 %v3516
      %4135 = vmatpush.msra.mxu0 %v3513
      %4136 = vmatpush.msra.mxu0 %v3510
      %4137 = vmatpush.msra.mxu0 %v3507
      %4138 = vmatmul.f32.gmra.mxu0 %v3426
      %v4139 = vpop.f32.mrf.mxu0
      %v4140 = vadd.f32 %v4027, %v4139
      %4141 = vmatmul.f32.gmra.mxu0 %v3427
      %v4142 = vpop.f32.mrf.mxu0
      %v4143 = vadd.f32 %v4030, %v4142
      %4144 = vmatmul.f32.gmra.mxu0 %v3428
      %v4145 = vpop.f32.mrf.mxu0
      %v4146 = vadd.f32 %v4033, %v4145
      %4147 = vmatmul.f32.gmra.mxu0 %v3429
      %v4148 = vpop.f32.mrf.mxu0
      %v4149 = vadd.f32 %v4036, %v4148
      %4150 = vmatmul.f32.gmra.mxu0 %v3430
      %v4151 = vpop.f32.mrf.mxu0
      %v4152 = vadd.f32 %v4039, %v4151
      %4153 = vmatmul.f32.gmra.mxu0 %v3431
      %v4154 = vpop.f32.mrf.mxu0
      %v4155 = vadd.f32 %v4042, %v4154
      %4156 = vmatmul.f32.gmra.mxu0 %v3432
      %v4157 = vpop.f32.mrf.mxu0
      %v4158 = vadd.f32 %v4045, %v4157
      %4159 = vmatmul.f32.gmra.mxu0 %v3433
      %v4160 = vpop.f32.mrf.mxu0
      %v4161 = vadd.f32 %v4048, %v4160
      %4162 = vmatmul.f32.gmra.mxu0 %v3434
      %v4163 = vpop.f32.mrf.mxu0
      %v4164 = vadd.f32 %v4051, %v4163
      %4165 = vmatmul.f32.gmra.mxu0 %v3435
      %v4166 = vpop.f32.mrf.mxu0
      %v4167 = vadd.f32 %v4054, %v4166
      %4168 = vmatmul.f32.gmra.mxu0 %v3436
      %v4169 = vpop.f32.mrf.mxu0
      %v4170 = vadd.f32 %v4057, %v4169
      %4171 = vmatmul.f32.gmra.mxu0 %v3437
      %v4172 = vpop.f32.mrf.mxu0
      %v4173 = vadd.f32 %v4060, %v4172
      %4174 = vmatmul.f32.gmra.mxu0 %v3438
      %v4175 = vpop.f32.mrf.mxu0
      %v4176 = vadd.f32 %v4063, %v4175
      %4177 = vmatmul.f32.gmra.mxu0 %v3439
      %v4178 = vpop.f32.mrf.mxu0
      %v4179 = vadd.f32 %v4066, %v4178
      %4180 = vmatmul.f32.gmra.mxu0 %v3440
      %v4181 = vpop.f32.mrf.mxu0
      %v4182 = vadd.f32 %v4069, %v4181
      %4183 = vmatmul.f32.gmra.mxu0 %v3441
      %v4184 = vpop.f32.mrf.mxu0
      %v4185 = vadd.f32 %v4072, %v4184
      %4186 = vmatmul.f32.gmra.mxu0 %v3442
      %v4187 = vpop.f32.mrf.mxu0
      %v4188 = vadd.f32 %v4075, %v4187
      %4189 = vmatmul.f32.gmra.mxu0 %v3443
      %v4190 = vpop.f32.mrf.mxu0
      %v4191 = vadd.f32 %v4078, %v4190
      %4192 = vmatmul.f32.gmra.mxu0 %v3444
      %v4193 = vpop.f32.mrf.mxu0
      %v4194 = vadd.f32 %v4081, %v4193
      %4195 = vmatmul.f32.gmra.mxu0 %v3445
      %v4196 = vpop.f32.mrf.mxu0
      %v4197 = vadd.f32 %v4084, %v4196
      %4198 = vmatmul.f32.gmra.mxu0 %v3446
      %v4199 = vpop.f32.mrf.mxu0
      %v4200 = vadd.f32 %v4087, %v4199
      %4201 = vmatmul.f32.gmra.mxu0 %v3447
      %v4202 = vpop.f32.mrf.mxu0
      %v4203 = vadd.f32 %v4090, %v4202
      %4204 = vmatmul.f32.gmra.mxu0 %v3448
      %v4205 = vpop.f32.mrf.mxu0
      %v4206 = vadd.f32 %v4093, %v4205
      %4207 = vmatmul.f32.gmra.mxu0 %v3449
      %v4208 = vpop.f32.mrf.mxu0
      %v4209 = vadd.f32 %v4096, %v4208
      %4210 = vmatmul.f32.gmra.mxu0 %v3450
      %v4211 = vpop.f32.mrf.mxu0
      %v4212 = vadd.f32 %v4099, %v4211
      %4213 = vmatmul.f32.gmra.mxu0 %v3451
      %v4214 = vpop.f32.mrf.mxu0
      %v4215 = vadd.f32 %v4102, %v4214
      %4216 = vmatmul.f32.gmra.mxu0 %v3452
      %v4217 = vpop.f32.mrf.mxu0
      %v4218 = vadd.f32 %v4105, %v4217
      %4219 = vmatmul.f32.gmra.mxu0 %v3453
      %v4220 = vpop.f32.mrf.mxu0
      %v4221 = vadd.f32 %v4108, %v4220
      %4222 = vmatmul.f32.gmra.mxu0 %v3454
      %v4223 = vpop.f32.mrf.mxu0
      %v4224 = vadd.f32 %v4111, %v4223
      %4225 = vmatmul.f32.gmra.mxu0 %v3455
      %v4226 = vpop.f32.mrf.mxu0
      %v4227 = vadd.f32 %v4114, %v4226
      %4228 = vmatmul.f32.gmra.mxu0 %v3456
      %v4229 = vpop.f32.mrf.mxu0
      %v4230 = vadd.f32 %v4117, %v4229
      %4231 = vmatmul.f32.gmra.mxu0 %v3457
      %v4232 = vpop.f32.mrf.mxu0
      %v4233 = vadd.f32 %v4120, %v4232
      %4234 = vdwg.mxu0
      %4235 = vmatpush.msra.mxu0 0.0
      %4236 = vmatpush.msra.mxu0 0.0
      %4237 = vmatpush.msra.mxu0 0.0
      %4238 = vmatpush.msra.mxu0 0.0
      %4239 = vmatpush.msra.mxu0 0.0
      %4240 = vmatpush.msra.mxu0 0.0
      %4241 = vmatpush.msra.mxu0 0.0
      %4242 = vmatpush.msra.mxu0 0.0
      %4243 = vmatpush.msra.mxu0 0.0
      %4244 = vmatpush.msra.mxu0 0.0
      %4245 = vmatpush.msra.mxu0 0.0
      %4246 = vmatpush.msra.mxu0 0.0
      %4247 = vmatpush.msra.mxu0 %v3564
      %4248 = vmatpush.msra.mxu0 %v3561
      %4249 = vmatpush.msra.mxu0 %v3558
      %4250 = vmatpush.msra.mxu0 %v3555
      %4251 = vmatmul.f32.gmra.mxu0 %v3575
      %v4252 = vpop.f32.mrf.mxu0
      %v4253 = vadd.f32 %v4140, %v4252
      %4254 = vmatmul.f32.gmra.mxu0 %v3578
      %v4255 = vpop.f32.mrf.mxu0
      %v4256 = vadd.f32 %v4143, %v4255
      %4257 = vmatmul.f32.gmra.mxu0 %v3581
      %v4258 = vpop.f32.mrf.mxu0
      %v4259 = vadd.f32 %v4146, %v4258
      %4260 = vmatmul.f32.gmra.mxu0 %v3584
      %v4261 = vpop.f32.mrf.mxu0
      %v4262 = vadd.f32 %v4149, %v4261
      %4263 = vmatmul.f32.gmra.mxu0 %v3587
      %v4264 = vpop.f32.mrf.mxu0
      %v4265 = vadd.f32 %v4152, %v4264
      %4266 = vmatmul.f32.gmra.mxu0 %v3590
      %v4267 = vpop.f32.mrf.mxu0
      %v4268 = vadd.f32 %v4155, %v4267
      %4269 = vmatmul.f32.gmra.mxu0 %v3593
      %v4270 = vpop.f32.mrf.mxu0
      %v4271 = vadd.f32 %v4158, %v4270
      %4272 = vmatmul.f32.gmra.mxu0 %v3596
      %v4273 = vpop.f32.mrf.mxu0
      %v4274 = vadd.f32 %v4161, %v4273
      %4275 = vmatmul.f32.gmra.mxu0 %v3599
      %v4276 = vpop.f32.mrf.mxu0
      %v4277 = vadd.f32 %v4164, %v4276
      %4278 = vmatmul.f32.gmra.mxu0 %v3602
      %v4279 = vpop.f32.mrf.mxu0
      %v4280 = vadd.f32 %v4167, %v4279
      %4281 = vmatmul.f32.gmra.mxu0 %v3605
      %v4282 = vpop.f32.mrf.mxu0
      %v4283 = vadd.f32 %v4170, %v4282
      %4284 = vmatmul.f32.gmra.mxu0 %v3608
      %v4285 = vpop.f32.mrf.mxu0
      %v4286 = vadd.f32 %v4173, %v4285
      %4287 = vmatmul.f32.gmra.mxu0 %v3611
      %v4288 = vpop.f32.mrf.mxu0
      %v4289 = vadd.f32 %v4176, %v4288
      %4290 = vmatmul.f32.gmra.mxu0 %v3614
      %v4291 = vpop.f32.mrf.mxu0
      %v4292 = vadd.f32 %v4179, %v4291
      %4293 = vmatmul.f32.gmra.mxu0 %v3617
      %v4294 = vpop.f32.mrf.mxu0
      %v4295 = vadd.f32 %v4182, %v4294
      %4296 = vmatmul.f32.gmra.mxu0 %v3620
      %v4297 = vpop.f32.mrf.mxu0
      %v4298 = vadd.f32 %v4185, %v4297
      %4299 = vmatmul.f32.gmra.mxu0 %v3623
      %v4300 = vpop.f32.mrf.mxu0
      %v4301 = vadd.f32 %v4188, %v4300
      %4302 = vmatmul.f32.gmra.mxu0 %v3626
      %v4303 = vpop.f32.mrf.mxu0
      %v4304 = vadd.f32 %v4191, %v4303
      %4305 = vmatmul.f32.gmra.mxu0 %v3629
      %v4306 = vpop.f32.mrf.mxu0
      %v4307 = vadd.f32 %v4194, %v4306
      %4308 = vmatmul.f32.gmra.mxu0 %v3632
      %v4309 = vpop.f32.mrf.mxu0
      %v4310 = vadd.f32 %v4197, %v4309
      %4311 = vmatmul.f32.gmra.mxu0 %v3635
      %v4312 = vpop.f32.mrf.mxu0
      %v4313 = vadd.f32 %v4200, %v4312
      %4314 = vmatmul.f32.gmra.mxu0 %v3638
      %v4315 = vpop.f32.mrf.mxu0
      %v4316 = vadd.f32 %v4203, %v4315
      %4317 = vmatmul.f32.gmra.mxu0 %v3641
      %v4318 = vpop.f32.mrf.mxu0
      %v4319 = vadd.f32 %v4206, %v4318
      %4320 = vmatmul.f32.gmra.mxu0 %v3644
      %v4321 = vpop.f32.mrf.mxu0
      %v4322 = vadd.f32 %v4209, %v4321
      %4323 = vmatmul.f32.gmra.mxu0 %v3647
      %v4324 = vpop.f32.mrf.mxu0
      %v4325 = vadd.f32 %v4212, %v4324
      %4326 = vmatmul.f32.gmra.mxu0 %v3650
      %v4327 = vpop.f32.mrf.mxu0
      %v4328 = vadd.f32 %v4215, %v4327
      %4329 = vmatmul.f32.gmra.mxu0 %v3653
      %v4330 = vpop.f32.mrf.mxu0
      %v4331 = vadd.f32 %v4218, %v4330
      %4332 = vmatmul.f32.gmra.mxu0 %v3656
      %v4333 = vpop.f32.mrf.mxu0
      %v4334 = vadd.f32 %v4221, %v4333
      %4335 = vmatmul.f32.gmra.mxu0 %v3659
      %v4336 = vpop.f32.mrf.mxu0
      %v4337 = vadd.f32 %v4224, %v4336
      %4338 = vmatmul.f32.gmra.mxu0 %v3662
      %v4339 = vpop.f32.mrf.mxu0
      %v4340 = vadd.f32 %v4227, %v4339
      %4341 = vmatmul.f32.gmra.mxu0 %v3665
      %v4342 = vpop.f32.mrf.mxu0
      %v4343 = vadd.f32 %v4230, %v4342
      %4344 = vmatmul.f32.gmra.mxu0 %v3668
      %v4345 = vpop.f32.mrf.mxu0
      %v4346 = vadd.f32 %v4233, %v4345
      %4347 = vdwg.mxu0
      %4348 = vmatpush.msra.mxu0 %v3505
      %4349 = vmatpush.msra.mxu0 %v3502
      %4350 = vmatpush.msra.mxu0 %v3499
      %4351 = vmatpush.msra.mxu0 %v3496
      %4352 = vmatpush.msra.mxu0 %v3493
      %4353 = vmatpush.msra.mxu0 %v3490
      %4354 = vmatpush.msra.mxu0 %v3487
      %4355 = vmatpush.msra.mxu0 %v3484
      %4356 = vmatpush.msra.mxu0 %v3481
      %4357 = vmatpush.msra.mxu0 %v3478
      %4358 = vmatpush.msra.mxu0 %v3475
      %4359 = vmatpush.msra.mxu0 %v3472
      %4360 = vmatpush.msra.mxu0 %v3469
      %4361 = vmatpush.msra.mxu0 %v3466
      %4362 = vmatpush.msra.mxu0 %v3463
      %4363 = vmatpush.msra.mxu0 %v3460
      %4364 = vmatmul.f32.gmra.mxu0 %v3330
      %v4365 = vpop.f32.mrf.mxu0
      %v4366 = vadd.f32 %v3570, %v4365
      %4367 = vmatmul.f32.gmra.mxu0 %v3331
      %v4368 = vpop.f32.mrf.mxu0
      %v4369 = vadd.f32 %v3570, %v4368
      %4370 = vmatmul.f32.gmra.mxu0 %v3332
      %v4371 = vpop.f32.mrf.mxu0
      %v4372 = vadd.f32 %v3570, %v4371
      %4373 = vmatmul.f32.gmra.mxu0 %v3333
      %v4374 = vpop.f32.mrf.mxu0
      %v4375 = vadd.f32 %v3570, %v4374
      %4376 = vmatmul.f32.gmra.mxu0 %v3334
      %v4377 = vpop.f32.mrf.mxu0
      %v4378 = vadd.f32 %v3570, %v4377
      %4379 = vmatmul.f32.gmra.mxu0 %v3335
      %v4380 = vpop.f32.mrf.mxu0
      %v4381 = vadd.f32 %v3570, %v4380
      %4382 = vmatmul.f32.gmra.mxu0 %v3336
      %v4383 = vpop.f32.mrf.mxu0
      %v4384 = vadd.f32 %v3570, %v4383
      %4385 = vmatmul.f32.gmra.mxu0 %v3337
      %v4386 = vpop.f32.mrf.mxu0
      %v4387 = vadd.f32 %v3570, %v4386
      %4388 = vmatmul.f32.gmra.mxu0 %v3338
      %v4389 = vpop.f32.mrf.mxu0
      %v4390 = vadd.f32 %v3570, %v4389
      %4391 = vmatmul.f32.gmra.mxu0 %v3339
      %v4392 = vpop.f32.mrf.mxu0
      %v4393 = vadd.f32 %v3570, %v4392
      %4394 = vmatmul.f32.gmra.mxu0 %v3340
      %v4395 = vpop.f32.mrf.mxu0
      %v4396 = vadd.f32 %v3570, %v4395
      %4397 = vmatmul.f32.gmra.mxu0 %v3341
      %v4398 = vpop.f32.mrf.mxu0
      %v4399 = vadd.f32 %v3570, %v4398
      %4400 = vmatmul.f32.gmra.mxu0 %v3342
      %v4401 = vpop.f32.mrf.mxu0
      %v4402 = vadd.f32 %v3570, %v4401
      %4403 = vmatmul.f32.gmra.mxu0 %v3343
      %v4404 = vpop.f32.mrf.mxu0
      %v4405 = vadd.f32 %v3570, %v4404
      %4406 = vmatmul.f32.gmra.mxu0 %v3344
      %v4407 = vpop.f32.mrf.mxu0
      %v4408 = vadd.f32 %v3570, %v4407
      %4409 = vmatmul.f32.gmra.mxu0 %v3345
      %v4410 = vpop.f32.mrf.mxu0
      %v4411 = vadd.f32 %v3570, %v4410
      %4412 = vmatmul.f32.gmra.mxu0 %v3346
      %v4413 = vpop.f32.mrf.mxu0
      %v4414 = vadd.f32 %v3570, %v4413
      %4415 = vmatmul.f32.gmra.mxu0 %v3347
      %v4416 = vpop.f32.mrf.mxu0
      %v4417 = vadd.f32 %v3570, %v4416
      %4418 = vmatmul.f32.gmra.mxu0 %v3348
      %v4419 = vpop.f32.mrf.mxu0
      %v4420 = vadd.f32 %v3570, %v4419
      %4421 = vmatmul.f32.gmra.mxu0 %v3349
      %v4422 = vpop.f32.mrf.mxu0
      %v4423 = vadd.f32 %v3570, %v4422
      %4424 = vmatmul.f32.gmra.mxu0 %v3350
      %v4425 = vpop.f32.mrf.mxu0
      %v4426 = vadd.f32 %v3570, %v4425
      %4427 = vmatmul.f32.gmra.mxu0 %v3351
      %v4428 = vpop.f32.mrf.mxu0
      %v4429 = vadd.f32 %v3570, %v4428
      %4430 = vmatmul.f32.gmra.mxu0 %v3352
      %v4431 = vpop.f32.mrf.mxu0
      %v4432 = vadd.f32 %v3570, %v4431
      %4433 = vmatmul.f32.gmra.mxu0 %v3353
      %v4434 = vpop.f32.mrf.mxu0
      %v4435 = vadd.f32 %v3570, %v4434
      %4436 = vmatmul.f32.gmra.mxu0 %v3354
      %v4437 = vpop.f32.mrf.mxu0
      %v4438 = vadd.f32 %v3570, %v4437
      %4439 = vmatmul.f32.gmra.mxu0 %v3355
      %v4440 = vpop.f32.mrf.mxu0
      %v4441 = vadd.f32 %v3570, %v4440
      %4442 = vmatmul.f32.gmra.mxu0 %v3356
      %v4443 = vpop.f32.mrf.mxu0
      %v4444 = vadd.f32 %v3570, %v4443
      %4445 = vmatmul.f32.gmra.mxu0 %v3357
      %v4446 = vpop.f32.mrf.mxu0
      %v4447 = vadd.f32 %v3570, %v4446
      %4448 = vmatmul.f32.gmra.mxu0 %v3358
      %v4449 = vpop.f32.mrf.mxu0
      %v4450 = vadd.f32 %v3570, %v4449
      %4451 = vmatmul.f32.gmra.mxu0 %v3359
      %v4452 = vpop.f32.mrf.mxu0
      %v4453 = vadd.f32 %v3570, %v4452
      %4454 = vmatmul.f32.gmra.mxu0 %v3360
      %v4455 = vpop.f32.mrf.mxu0
      %v4456 = vadd.f32 %v3570, %v4455
      %4457 = vmatmul.f32.gmra.mxu0 %v3361
      %v4458 = vpop.f32.mrf.mxu0
      %v4459 = vadd.f32 %v3570, %v4458
      %4460 = vdwg.mxu0
      %4461 = vmatpush.msra.mxu0 %v3553
      %4462 = vmatpush.msra.mxu0 %v3550
      %4463 = vmatpush.msra.mxu0 %v3547
      %4464 = vmatpush.msra.mxu0 %v3544
      %4465 = vmatpush.msra.mxu0 %v3541
      %4466 = vmatpush.msra.mxu0 %v3538
      %4467 = vmatpush.msra.mxu0 %v3535
      %4468 = vmatpush.msra.mxu0 %v3532
      %4469 = vmatpush.msra.mxu0 %v3529
      %4470 = vmatpush.msra.mxu0 %v3526
      %4471 = vmatpush.msra.mxu0 %v3523
      %4472 = vmatpush.msra.mxu0 %v3520
      %4473 = vmatpush.msra.mxu0 %v3517
      %4474 = vmatpush.msra.mxu0 %v3514
      %4475 = vmatpush.msra.mxu0 %v3511
      %4476 = vmatpush.msra.mxu0 %v3508
      %4477 = vmatmul.f32.gmra.mxu0 %v3426
      %v4478 = vpop.f32.mrf.mxu0
      %v4479 = vadd.f32 %v4366, %v4478
      %4480 = vmatmul.f32.gmra.mxu0 %v3427
      %v4481 = vpop.f32.mrf.mxu0
      %v4482 = vadd.f32 %v4369, %v4481
      %4483 = vmatmul.f32.gmra.mxu0 %v3428
      %v4484 = vpop.f32.mrf.mxu0
      %v4485 = vadd.f32 %v4372, %v4484
      %4486 = vmatmul.f32.gmra.mxu0 %v3429
      %v4487 = vpop.f32.mrf.mxu0
      %v4488 = vadd.f32 %v4375, %v4487
      %4489 = vmatmul.f32.gmra.mxu0 %v3430
      %v4490 = vpop.f32.mrf.mxu0
      %v4491 = vadd.f32 %v4378, %v4490
      %4492 = vmatmul.f32.gmra.mxu0 %v3431
      %v4493 = vpop.f32.mrf.mxu0
      %v4494 = vadd.f32 %v4381, %v4493
      %4495 = vmatmul.f32.gmra.mxu0 %v3432
      %v4496 = vpop.f32.mrf.mxu0
      %v4497 = vadd.f32 %v4384, %v4496
      %4498 = vmatmul.f32.gmra.mxu0 %v3433
      %v4499 = vpop.f32.mrf.mxu0
      %v4500 = vadd.f32 %v4387, %v4499
      %4501 = vmatmul.f32.gmra.mxu0 %v3434
      %v4502 = vpop.f32.mrf.mxu0
      %v4503 = vadd.f32 %v4390, %v4502
      %4504 = vmatmul.f32.gmra.mxu0 %v3435
      %v4505 = vpop.f32.mrf.mxu0
      %v4506 = vadd.f32 %v4393, %v4505
      %4507 = vmatmul.f32.gmra.mxu0 %v3436
      %v4508 = vpop.f32.mrf.mxu0
      %v4509 = vadd.f32 %v4396, %v4508
      %4510 = vmatmul.f32.gmra.mxu0 %v3437
      %v4511 = vpop.f32.mrf.mxu0
      %v4512 = vadd.f32 %v4399, %v4511
      %4513 = vmatmul.f32.gmra.mxu0 %v3438
      %v4514 = vpop.f32.mrf.mxu0
      %v4515 = vadd.f32 %v4402, %v4514
      %4516 = vmatmul.f32.gmra.mxu0 %v3439
      %v4517 = vpop.f32.mrf.mxu0
      %v4518 = vadd.f32 %v4405, %v4517
      %4519 = vmatmul.f32.gmra.mxu0 %v3440
      %v4520 = vpop.f32.mrf.mxu0
      %v4521 = vadd.f32 %v4408, %v4520
      %4522 = vmatmul.f32.gmra.mxu0 %v3441
      %v4523 = vpop.f32.mrf.mxu0
      %v4524 = vadd.f32 %v4411, %v4523
      %4525 = vmatmul.f32.gmra.mxu0 %v3442
      %v4526 = vpop.f32.mrf.mxu0
      %v4527 = vadd.f32 %v4414, %v4526
      %4528 = vmatmul.f32.gmra.mxu0 %v3443
      %v4529 = vpop.f32.mrf.mxu0
      %v4530 = vadd.f32 %v4417, %v4529
      %4531 = vmatmul.f32.gmra.mxu0 %v3444
      %v4532 = vpop.f32.mrf.mxu0
      %v4533 = vadd.f32 %v4420, %v4532
      %4534 = vmatmul.f32.gmra.mxu0 %v3445
      %v4535 = vpop.f32.mrf.mxu0
      %v4536 = vadd.f32 %v4423, %v4535
      %4537 = vmatmul.f32.gmra.mxu0 %v3446
      %v4538 = vpop.f32.mrf.mxu0
      %v4539 = vadd.f32 %v4426, %v4538
      %4540 = vmatmul.f32.gmra.mxu0 %v3447
      %v4541 = vpop.f32.mrf.mxu0
      %v4542 = vadd.f32 %v4429, %v4541
      %4543 = vmatmul.f32.gmra.mxu0 %v3448
      %v4544 = vpop.f32.mrf.mxu0
      %v4545 = vadd.f32 %v4432, %v4544
      %4546 = vmatmul.f32.gmra.mxu0 %v3449
      %v4547 = vpop.f32.mrf.mxu0
      %v4548 = vadd.f32 %v4435, %v4547
      %4549 = vmatmul.f32.gmra.mxu0 %v3450
      %v4550 = vpop.f32.mrf.mxu0
      %v4551 = vadd.f32 %v4438, %v4550
      %4552 = vmatmul.f32.gmra.mxu0 %v3451
      %v4553 = vpop.f32.mrf.mxu0
      %v4554 = vadd.f32 %v4441, %v4553
      %4555 = vmatmul.f32.gmra.mxu0 %v3452
      %v4556 = vpop.f32.mrf.mxu0
      %v4557 = vadd.f32 %v4444, %v4556
      %4558 = vmatmul.f32.gmra.mxu0 %v3453
      %v4559 = vpop.f32.mrf.mxu0
      %v4560 = vadd.f32 %v4447, %v4559
      %4561 = vmatmul.f32.gmra.mxu0 %v3454
      %v4562 = vpop.f32.mrf.mxu0
      %v4563 = vadd.f32 %v4450, %v4562
      %4564 = vmatmul.f32.gmra.mxu0 %v3455
      %v4565 = vpop.f32.mrf.mxu0
      %v4566 = vadd.f32 %v4453, %v4565
      %4567 = vmatmul.f32.gmra.mxu0 %v3456
      %v4568 = vpop.f32.mrf.mxu0
      %v4569 = vadd.f32 %v4456, %v4568
      %4570 = vmatmul.f32.gmra.mxu0 %v3457
      %v4571 = vpop.f32.mrf.mxu0
      %v4572 = vadd.f32 %v4459, %v4571
      %4573 = vdwg.mxu0
      %4574 = vmatpush.msra.mxu0 0.0
      %4575 = vmatpush.msra.mxu0 0.0
      %4576 = vmatpush.msra.mxu0 0.0
      %4577 = vmatpush.msra.mxu0 0.0
      %4578 = vmatpush.msra.mxu0 0.0
      %4579 = vmatpush.msra.mxu0 0.0
      %4580 = vmatpush.msra.mxu0 0.0
      %4581 = vmatpush.msra.mxu0 0.0
      %4582 = vmatpush.msra.mxu0 0.0
      %4583 = vmatpush.msra.mxu0 0.0
      %4584 = vmatpush.msra.mxu0 0.0
      %4585 = vmatpush.msra.mxu0 0.0
      %4586 = vmatpush.msra.mxu0 %v3565
      %4587 = vmatpush.msra.mxu0 %v3562
      %4588 = vmatpush.msra.mxu0 %v3559
      %4589 = vmatpush.msra.mxu0 %v3556
      %4590 = vmatmul.f32.gmra.mxu0 %v3575
      %v4591 = vpop.f32.mrf.mxu0
      %v4592 = vadd.f32 %v4479, %v4591
      %4593 = vmatmul.f32.gmra.mxu0 %v3578
      %v4594 = vpop.f32.mrf.mxu0
      %v4595 = vadd.f32 %v4482, %v4594
      %4596 = vmatmul.f32.gmra.mxu0 %v3581
      %v4597 = vpop.f32.mrf.mxu0
      %v4598 = vadd.f32 %v4485, %v4597
      %4599 = vmatmul.f32.gmra.mxu0 %v3584
      %v4600 = vpop.f32.mrf.mxu0
      %v4601 = vadd.f32 %v4488, %v4600
      %4602 = vmatmul.f32.gmra.mxu0 %v3587
      %v4603 = vpop.f32.mrf.mxu0
      %v4604 = vadd.f32 %v4491, %v4603
      %4605 = vmatmul.f32.gmra.mxu0 %v3590
      %v4606 = vpop.f32.mrf.mxu0
      %v4607 = vadd.f32 %v4494, %v4606
      %4608 = vmatmul.f32.gmra.mxu0 %v3593
      %v4609 = vpop.f32.mrf.mxu0
      %v4610 = vadd.f32 %v4497, %v4609
      %4611 = vmatmul.f32.gmra.mxu0 %v3596
      %v4612 = vpop.f32.mrf.mxu0
      %v4613 = vadd.f32 %v4500, %v4612
      %4614 = vmatmul.f32.gmra.mxu0 %v3599
      %v4615 = vpop.f32.mrf.mxu0
      %v4616 = vadd.f32 %v4503, %v4615
      %4617 = vmatmul.f32.gmra.mxu0 %v3602
      %v4618 = vpop.f32.mrf.mxu0
      %v4619 = vadd.f32 %v4506, %v4618
      %4620 = vmatmul.f32.gmra.mxu0 %v3605
      %v4621 = vpop.f32.mrf.mxu0
      %v4622 = vadd.f32 %v4509, %v4621
      %4623 = vmatmul.f32.gmra.mxu0 %v3608
      %v4624 = vpop.f32.mrf.mxu0
      %v4625 = vadd.f32 %v4512, %v4624
      %4626 = vmatmul.f32.gmra.mxu0 %v3611
      %v4627 = vpop.f32.mrf.mxu0
      %v4628 = vadd.f32 %v4515, %v4627
      %4629 = vmatmul.f32.gmra.mxu0 %v3614
      %v4630 = vpop.f32.mrf.mxu0
      %v4631 = vadd.f32 %v4518, %v4630
      %4632 = vmatmul.f32.gmra.mxu0 %v3617
      %v4633 = vpop.f32.mrf.mxu0
      %v4634 = vadd.f32 %v4521, %v4633
      %4635 = vmatmul.f32.gmra.mxu0 %v3620
      %v4636 = vpop.f32.mrf.mxu0
      %v4637 = vadd.f32 %v4524, %v4636
      %4638 = vmatmul.f32.gmra.mxu0 %v3623
      %v4639 = vpop.f32.mrf.mxu0
      %v4640 = vadd.f32 %v4527, %v4639
      %4641 = vmatmul.f32.gmra.mxu0 %v3626
      %v4642 = vpop.f32.mrf.mxu0
      %v4643 = vadd.f32 %v4530, %v4642
      %4644 = vmatmul.f32.gmra.mxu0 %v3629
      %v4645 = vpop.f32.mrf.mxu0
      %v4646 = vadd.f32 %v4533, %v4645
      %4647 = vmatmul.f32.gmra.mxu0 %v3632
      %v4648 = vpop.f32.mrf.mxu0
      %v4649 = vadd.f32 %v4536, %v4648
      %4650 = vmatmul.f32.gmra.mxu0 %v3635
      %v4651 = vpop.f32.mrf.mxu0
      %v4652 = vadd.f32 %v4539, %v4651
      %4653 = vmatmul.f32.gmra.mxu0 %v3638
      %v4654 = vpop.f32.mrf.mxu0
      %v4655 = vadd.f32 %v4542, %v4654
      %4656 = vmatmul.f32.gmra.mxu0 %v3641
      %v4657 = vpop.f32.mrf.mxu0
      %v4658 = vadd.f32 %v4545, %v4657
      %4659 = vmatmul.f32.gmra.mxu0 %v3644
      %v4660 = vpop.f32.mrf.mxu0
      %v4661 = vadd.f32 %v4548, %v4660
      %4662 = vmatmul.f32.gmra.mxu0 %v3647
      %v4663 = vpop.f32.mrf.mxu0
      %v4664 = vadd.f32 %v4551, %v4663
      %4665 = vmatmul.f32.gmra.mxu0 %v3650
      %v4666 = vpop.f32.mrf.mxu0
      %v4667 = vadd.f32 %v4554, %v4666
      %4668 = vmatmul.f32.gmra.mxu0 %v3653
      %v4669 = vpop.f32.mrf.mxu0
      %v4670 = vadd.f32 %v4557, %v4669
      %4671 = vmatmul.f32.gmra.mxu0 %v3656
      %v4672 = vpop.f32.mrf.mxu0
      %v4673 = vadd.f32 %v4560, %v4672
      %4674 = vmatmul.f32.gmra.mxu0 %v3659
      %v4675 = vpop.f32.mrf.mxu0
      %v4676 = vadd.f32 %v4563, %v4675
      %4677 = vmatmul.f32.gmra.mxu0 %v3662
      %v4678 = vpop.f32.mrf.mxu0
      %v4679 = vadd.f32 %v4566, %v4678
      %4680 = vmatmul.f32.gmra.mxu0 %v3665
      %v4681 = vpop.f32.mrf.mxu0
      %v4682 = vadd.f32 %v4569, %v4681
      %4683 = vmatmul.f32.gmra.mxu0 %v3668
      %v4684 = vpop.f32.mrf.mxu0
      %v4685 = vadd.f32 %v4572, %v4684
      %4686 = vdwg.mxu0
      %v4687 = vmax.f32 %v3914, 0.0
      %v4688 = vmax.f32 %v4253, 0.0
      %v4689 = vmax.f32 %v4592, 0.0
      %v4690 = vmax.f32 %v3917, 0.0
      %v4691 = vmax.f32 %v4256, 0.0
      %v4692 = vmax.f32 %v4595, 0.0
      %v4693 = vmax.f32 %v3920, 0.0
      %v4694 = vmax.f32 %v4259, 0.0
      %v4695 = vmax.f32 %v4598, 0.0
      %v4696 = vmax.f32 %v3923, 0.0
      %v4697 = vmax.f32 %v4262, 0.0
      %v4698 = vmax.f32 %v4601, 0.0
      %v4699 = vmax.f32 %v3926, 0.0
      %v4700 = vmax.f32 %v4265, 0.0
      %v4701 = vmax.f32 %v4604, 0.0
      %v4702 = vmax.f32 %v3929, 0.0
      %v4703 = vmax.f32 %v4268, 0.0
      %v4704 = vmax.f32 %v4607, 0.0
      %v4705 = vmax.f32 %v3932, 0.0
      %v4706 = vmax.f32 %v4271, 0.0
      %v4707 = vmax.f32 %v4610, 0.0
      %v4708 = vmax.f32 %v3935, 0.0
      %v4709 = vmax.f32 %v4274, 0.0
      %v4710 = vmax.f32 %v4613, 0.0
      %v4711 = vmax.f32 %v3938, 0.0
      %v4712 = vmax.f32 %v4277, 0.0
      %v4713 = vmax.f32 %v4616, 0.0
      %v4714 = vmax.f32 %v3941, 0.0
      %v4715 = vmax.f32 %v4280, 0.0
      %v4716 = vmax.f32 %v4619, 0.0
      %v4717 = vmax.f32 %v3944, 0.0
      %v4718 = vmax.f32 %v4283, 0.0
      %v4719 = vmax.f32 %v4622, 0.0
      %v4720 = vmax.f32 %v3947, 0.0
      %v4721 = vmax.f32 %v4286, 0.0
      %v4722 = vmax.f32 %v4625, 0.0
      %v4723 = vmax.f32 %v3950, 0.0
      %v4724 = vmax.f32 %v4289, 0.0
      %v4725 = vmax.f32 %v4628, 0.0
      %v4726 = vmax.f32 %v3953, 0.0
      %v4727 = vmax.f32 %v4292, 0.0
      %v4728 = vmax.f32 %v4631, 0.0
      %v4729 = vmax.f32 %v3956, 0.0
      %v4730 = vmax.f32 %v4295, 0.0
      %v4731 = vmax.f32 %v4634, 0.0
      %v4732 = vmax.f32 %v3959, 0.0
      %v4733 = vmax.f32 %v4298, 0.0
      %v4734 = vmax.f32 %v4637, 0.0
      %v4735 = vmax.f32 %v3962, 0.0
      %v4736 = vmax.f32 %v4301, 0.0
      %v4737 = vmax.f32 %v4640, 0.0
      %v4738 = vmax.f32 %v3965, 0.0
      %v4739 = vmax.f32 %v4304, 0.0
      %v4740 = vmax.f32 %v4643, 0.0
      %v4741 = vmax.f32 %v3968, 0.0
      %v4742 = vmax.f32 %v4307, 0.0
      %v4743 = vmax.f32 %v4646, 0.0
      %v4744 = vmax.f32 %v3971, 0.0
      %v4745 = vmax.f32 %v4310, 0.0
      %v4746 = vmax.f32 %v4649, 0.0
      %v4747 = vmax.f32 %v3974, 0.0
      %v4748 = vmax.f32 %v4313, 0.0
      %v4749 = vmax.f32 %v4652, 0.0
      %v4750 = vmax.f32 %v3977, 0.0
      %v4751 = vmax.f32 %v4316, 0.0
      %v4752 = vmax.f32 %v4655, 0.0
      %v4753 = vmax.f32 %v3980, 0.0
      %v4754 = vmax.f32 %v4319, 0.0
      %v4755 = vmax.f32 %v4658, 0.0
      %v4756 = vmax.f32 %v3983, 0.0
      %v4757 = vmax.f32 %v4322, 0.0
      %v4758 = vmax.f32 %v4661, 0.0
      %v4759 = vmax.f32 %v3986, 0.0
      %v4760 = vmax.f32 %v4325, 0.0
      %v4761 = vmax.f32 %v4664, 0.0
      %v4762 = vmax.f32 %v3989, 0.0
      %v4763 = vmax.f32 %v4328, 0.0
      %v4764 = vmax.f32 %v4667, 0.0
      %v4765 = vmax.f32 %v3992, 0.0
      %v4766 = vmax.f32 %v4331, 0.0
      %v4767 = vmax.f32 %v4670, 0.0
      %v4768 = vmax.f32 %v3995, 0.0
      %v4769 = vmax.f32 %v4334, 0.0
      %v4770 = vmax.f32 %v4673, 0.0
      %v4771 = vmax.f32 %v3998, 0.0
      %v4772 = vmax.f32 %v4337, 0.0
      %v4773 = vmax.f32 %v4676, 0.0
      %v4774 = vmax.f32 %v4001, 0.0
      %v4775 = vmax.f32 %v4340, 0.0
      %v4776 = vmax.f32 %v4679, 0.0
      %v4777 = vmax.f32 %v4004, 0.0
      %v4778 = vmax.f32 %v4343, 0.0
      %v4779 = vmax.f32 %v4682, 0.0
      %v4780 = vmax.f32 %v4007, 0.0
      %v4781 = vmax.f32 %v4346, 0.0
      %v4782 = vmax.f32 %v4685, 0.0
      %s4783 = scalar_lea.vmem [#allocation3], 96
      %4784 = vst [vmem:[%s4783 + $0x18] sm:$0xff] %v4687
      %4785 = vst [vmem:[%s4783 + $0x20] sm:$0xff] %v4688
      %4786 = vst [vmem:[%s4783 + $0x28] sm:$0xff] %v4689
      %4787 = vst [vmem:[%s4783 + $0x30] sm:$0xff] %v4690
      %4788 = vst [vmem:[%s4783 + $0x38] sm:$0xff] %v4691
      %4789 = vst [vmem:[%s4783 + $0x40] sm:$0xff] %v4692
      %4790 = vst [vmem:[%s4783 + $0x78] sm:$0xff] %v4693
      %4791 = vst [vmem:[%s4783 + $0x80] sm:$0xff] %v4694
      %4792 = vst [vmem:[%s4783 + $0x88] sm:$0xff] %v4695
      %4793 = vst [vmem:[%s4783 + $0x90] sm:$0xff] %v4696
      %4794 = vst [vmem:[%s4783 + $0x98] sm:$0xff] %v4697
      %4795 = vst [vmem:[%s4783 + $0xa0] sm:$0xff] %v4698
      %4796 = vst [vmem:[%s4783 + $0xd8] sm:$0xff] %v4699
      %4797 = vst [vmem:[%s4783 + $0xe0] sm:$0xff] %v4700
      %4798 = vst [vmem:[%s4783 + $0xe8] sm:$0xff] %v4701
      %4799 = vst [vmem:[%s4783 + $0xf0] sm:$0xff] %v4702
      %4800 = vst [vmem:[%s4783 + $0xf8] sm:$0xff] %v4703
      %4801 = vst [vmem:[%s4783 + $0x100] sm:$0xff] %v4704
      %4802 = vst [vmem:[%s4783 + $0x138] sm:$0xff] %v4705
      %4803 = vst [vmem:[%s4783 + $0x140] sm:$0xff] %v4706
      %4804 = vst [vmem:[%s4783 + $0x148] sm:$0xff] %v4707
      %4805 = vst [vmem:[%s4783 + $0x150] sm:$0xff] %v4708
      %4806 = vst [vmem:[%s4783 + $0x158] sm:$0xff] %v4709
      %4807 = vst [vmem:[%s4783 + $0x160] sm:$0xff] %v4710
      %4808 = vst [vmem:[%s4783 + $0x198] sm:$0xff] %v4711
      %4809 = vst [vmem:[%s4783 + $0x1a0] sm:$0xff] %v4712
      %4810 = vst [vmem:[%s4783 + $0x1a8] sm:$0xff] %v4713
      %4811 = vst [vmem:[%s4783 + $0x1b0] sm:$0xff] %v4714
      %4812 = vst [vmem:[%s4783 + $0x1b8] sm:$0xff] %v4715
      %4813 = vst [vmem:[%s4783 + $0x1c0] sm:$0xff] %v4716
      %4814 = vst [vmem:[%s4783 + $0x1f8] sm:$0xff] %v4717
      %4815 = vst [vmem:[%s4783 + $0x200] sm:$0xff] %v4718
      %4816 = vst [vmem:[%s4783 + $0x208] sm:$0xff] %v4719
      %4817 = vst [vmem:[%s4783 + $0x210] sm:$0xff] %v4720
      %4818 = vst [vmem:[%s4783 + $0x218] sm:$0xff] %v4721
      %4819 = vst [vmem:[%s4783 + $0x220] sm:$0xff] %v4722
      %4820 = vst [vmem:[%s4783 + $0x258] sm:$0xff] %v4723
      %4821 = vst [vmem:[%s4783 + $0x260] sm:$0xff] %v4724
      %4822 = vst [vmem:[%s4783 + $0x268] sm:$0xff] %v4725
      %4823 = vst [vmem:[%s4783 + $0x270] sm:$0xff] %v4726
      %4824 = vst [vmem:[%s4783 + $0x278] sm:$0xff] %v4727
      %4825 = vst [vmem:[%s4783 + $0x280] sm:$0xff] %v4728
      %4826 = vst [vmem:[%s4783 + $0x2b8] sm:$0xff] %v4729
      %4827 = vst [vmem:[%s4783 + $0x2c0] sm:$0xff] %v4730
      %4828 = vst [vmem:[%s4783 + $0x2c8] sm:$0xff] %v4731
      %4829 = vst [vmem:[%s4783 + $0x2d0] sm:$0xff] %v4732
      %4830 = vst [vmem:[%s4783 + $0x2d8] sm:$0xff] %v4733
      %4831 = vst [vmem:[%s4783 + $0x2e0] sm:$0xff] %v4734
      %4832 = vst [vmem:[%s4783 + $0x318] sm:$0xff] %v4735
      %4833 = vst [vmem:[%s4783 + $0x320] sm:$0xff] %v4736
      %4834 = vst [vmem:[%s4783 + $0x328] sm:$0xff] %v4737
      %4835 = vst [vmem:[%s4783 + $0x330] sm:$0xff] %v4738
      %4836 = vst [vmem:[%s4783 + $0x338] sm:$0xff] %v4739
      %4837 = vst [vmem:[%s4783 + $0x340] sm:$0xff] %v4740
      %4838 = vst [vmem:[%s4783 + $0x378] sm:$0xff] %v4741
      %4839 = vst [vmem:[%s4783 + $0x380] sm:$0xff] %v4742
      %4840 = vst [vmem:[%s4783 + $0x388] sm:$0xff] %v4743
      %4841 = vst [vmem:[%s4783 + $0x390] sm:$0xff] %v4744
      %4842 = vst [vmem:[%s4783 + $0x398] sm:$0xff] %v4745
      %4843 = vst [vmem:[%s4783 + $0x3a0] sm:$0xff] %v4746
      %4844 = vst [vmem:[%s4783 + $0x3d8] sm:$0xff] %v4747
      %4845 = vst [vmem:[%s4783 + $0x3e0] sm:$0xff] %v4748
      %4846 = vst [vmem:[%s4783 + $0x3e8] sm:$0xff] %v4749
      %4847 = vst [vmem:[%s4783 + $0x3f0] sm:$0xff] %v4750
      %4848 = vst [vmem:[%s4783 + $0x3f8] sm:$0xff] %v4751
      %4849 = vst [vmem:[%s4783 + $0x400] sm:$0xff] %v4752
      %4850 = vst [vmem:[%s4783 + $0x438] sm:$0xff] %v4753
      %4851 = vst [vmem:[%s4783 + $0x440] sm:$0xff] %v4754
      %4852 = vst [vmem:[%s4783 + $0x448] sm:$0xff] %v4755
      %4853 = vst [vmem:[%s4783 + $0x450] sm:$0xff] %v4756
      %4854 = vst [vmem:[%s4783 + $0x458] sm:$0xff] %v4757
      %4855 = vst [vmem:[%s4783 + $0x460] sm:$0xff] %v4758
      %4856 = vst [vmem:[%s4783 + $0x498] sm:$0xff] %v4759
      %4857 = vst [vmem:[%s4783 + $0x4a0] sm:$0xff] %v4760
      %4858 = vst [vmem:[%s4783 + $0x4a8] sm:$0xff] %v4761
      %4859 = vst [vmem:[%s4783 + $0x4b0] sm:$0xff] %v4762
      %4860 = vst [vmem:[%s4783 + $0x4b8] sm:$0xff] %v4763
      %4861 = vst [vmem:[%s4783 + $0x4c0] sm:$0xff] %v4764
      %4862 = vst [vmem:[%s4783 + $0x4f8] sm:$0xff] %v4765
      %4863 = vst [vmem:[%s4783 + $0x500] sm:$0xff] %v4766
      %4864 = vst [vmem:[%s4783 + $0x508] sm:$0xff] %v4767
      %4865 = vst [vmem:[%s4783 + $0x510] sm:$0xff] %v4768
      %4866 = vst [vmem:[%s4783 + $0x518] sm:$0xff] %v4769
      %4867 = vst [vmem:[%s4783 + $0x520] sm:$0xff] %v4770
      %4868 = vst [vmem:[%s4783 + $0x558] sm:$0xff] %v4771
      %4869 = vst [vmem:[%s4783 + $0x560] sm:$0xff] %v4772
      %4870 = vst [vmem:[%s4783 + $0x568] sm:$0xff] %v4773
      %4871 = vst [vmem:[%s4783 + $0x570] sm:$0xff] %v4774
      %4872 = vst [vmem:[%s4783 + $0x578] sm:$0xff] %v4775
      %4873 = vst [vmem:[%s4783 + $0x580] sm:$0xff] %v4776
      %4874 = vst [vmem:[%s4783 + $0x5b8] sm:$0xff] %v4777
      %4875 = vst [vmem:[%s4783 + $0x5c0] sm:$0xff] %v4778
      %4876 = vst [vmem:[%s4783 + $0x5c8] sm:$0xff] %v4779
      %4877 = vst [vmem:[%s4783 + $0x5d0] sm:$0xff] %v4780
      %4878 = vst [vmem:[%s4783 + $0x5d8] sm:$0xff] %v4781
      %4879 = vst [vmem:[%s4783 + $0x5e0] sm:$0xff] %v4782
      %v4880 = vld [vmem:[#allocation3] sm:$0x80]
      %v4881 = vld [vmem:[#allocation3 + $0x8] sm:$0x80]
      %v4882 = vld [vmem:[#allocation3 + $0x10] sm:$0x80]
      %v4883 = vld [vmem:[#allocation3 + $0x18] sm:$0xff]
      %v4884 = vld [vmem:[#allocation3 + $0x20] sm:$0xff]
      %v4885 = vld [vmem:[#allocation3 + $0x28] sm:$0xff]
      %v4886 = vld [vmem:[#allocation3 + $0x30] sm:$0x7f]
      %v4887 = vld [vmem:[#allocation3 + $0x38] sm:$0x7f]
      %v4888 = vld [vmem:[#allocation3 + $0x40] sm:$0x7f]
      %v4889 = vld [vmem:[#allocation3 + $0x60] sm:$0x80]
      %v4890 = vld [vmem:[#allocation3 + $0x68] sm:$0x80]
      %v4891 = vld [vmem:[#allocation3 + $0x70] sm:$0x80]
      %v4892 = vld [vmem:[#allocation3 + $0x78] sm:$0xff]
      %v4893 = vld [vmem:[#allocation3 + $0x80] sm:$0xff]
      %v4894 = vld [vmem:[#allocation3 + $0x88] sm:$0xff]
      %v4895 = vld [vmem:[#allocation3 + $0x90] sm:$0x7f]
      %v4896 = vld [vmem:[#allocation3 + $0x98] sm:$0x7f]
      %v4897 = vld [vmem:[#allocation3 + $0xa0] sm:$0x7f]
      %v4898 = vld [vmem:[#allocation3 + $0xc0] sm:$0x80]
      %v4899 = vld [vmem:[#allocation3 + $0xc8] sm:$0x80]
      %v4900 = vld [vmem:[#allocation3 + $0xd0] sm:$0x80]
      %v4901 = vld [vmem:[#allocation3 + $0xd8] sm:$0xff]
      %v4902 = vld [vmem:[#allocation3 + $0xe0] sm:$0xff]
      %v4903 = vld [vmem:[#allocation3 + $0xe8] sm:$0xff]
      %v4904 = vld [vmem:[#allocation3 + $0xf0] sm:$0x7f]
      %v4905 = vld [vmem:[#allocation3 + $0xf8] sm:$0x7f]
      %v4906 = vld [vmem:[#allocation3 + $0x100] sm:$0x7f]
      %v4907 = vld [vmem:[#allocation3 + $0x120] sm:$0x80]
      %v4908 = vld [vmem:[#allocation3 + $0x128] sm:$0x80]
      %v4909 = vld [vmem:[#allocation3 + $0x130] sm:$0x80]
      %v4910 = vld [vmem:[#allocation3 + $0x138] sm:$0xff]
      %v4911 = vld [vmem:[#allocation3 + $0x140] sm:$0xff]
      %v4912 = vld [vmem:[#allocation3 + $0x148] sm:$0xff]
      %v4913 = vld [vmem:[#allocation3 + $0x150] sm:$0x7f]
      %v4914 = vld [vmem:[#allocation3 + $0x158] sm:$0x7f]
      %v4915 = vld [vmem:[#allocation3 + $0x160] sm:$0x7f]
      %v4916 = vld [vmem:[#allocation3 + $0x180] sm:$0x80]
      %v4917 = vld [vmem:[#allocation3 + $0x188] sm:$0x80]
      %v4918 = vld [vmem:[#allocation3 + $0x190] sm:$0x80]
      %v4919 = vld [vmem:[#allocation3 + $0x198] sm:$0xff]
      %v4920 = vld [vmem:[#allocation3 + $0x1a0] sm:$0xff]
      %v4921 = vld [vmem:[#allocation3 + $0x1a8] sm:$0xff]
      %v4922 = vld [vmem:[#allocation3 + $0x1b0] sm:$0x7f]
      %v4923 = vld [vmem:[#allocation3 + $0x1b8] sm:$0x7f]
      %v4924 = vld [vmem:[#allocation3 + $0x1c0] sm:$0x7f]
      %v4925 = vld [vmem:[#allocation3 + $0x1e0] sm:$0x80]
      %v4926 = vld [vmem:[#allocation3 + $0x1e8] sm:$0x80]
      %v4927 = vld [vmem:[#allocation3 + $0x1f0] sm:$0x80]
      %v4928 = vld [vmem:[#allocation3 + $0x1f8] sm:$0xff]
      %v4929 = vld [vmem:[#allocation3 + $0x200] sm:$0xff]
      %v4930 = vld [vmem:[#allocation3 + $0x208] sm:$0xff]
      %v4931 = vld [vmem:[#allocation3 + $0x210] sm:$0x7f]
      %v4932 = vld [vmem:[#allocation3 + $0x218] sm:$0x7f]
      %v4933 = vld [vmem:[#allocation3 + $0x220] sm:$0x7f]
      %v4934 = vld [vmem:[#allocation3 + $0x240] sm:$0x80]
      %v4935 = vld [vmem:[#allocation3 + $0x248] sm:$0x80]
      %v4936 = vld [vmem:[#allocation3 + $0x250] sm:$0x80]
      %v4937 = vld [vmem:[#allocation3 + $0x258] sm:$0xff]
      %v4938 = vld [vmem:[#allocation3 + $0x260] sm:$0xff]
      %v4939 = vld [vmem:[#allocation3 + $0x268] sm:$0xff]
      %v4940 = vld [vmem:[#allocation3 + $0x270] sm:$0x7f]
      %v4941 = vld [vmem:[#allocation3 + $0x278] sm:$0x7f]
      %v4942 = vld [vmem:[#allocation3 + $0x280] sm:$0x7f]
      %v4943 = vld [vmem:[#allocation3 + $0x2a0] sm:$0x80]
      %v4944 = vld [vmem:[#allocation3 + $0x2a8] sm:$0x80]
      %v4945 = vld [vmem:[#allocation3 + $0x2b0] sm:$0x80]
      %v4946 = vld [vmem:[#allocation3 + $0x2b8] sm:$0xff]
      %v4947 = vld [vmem:[#allocation3 + $0x2c0] sm:$0xff]
      %v4948 = vld [vmem:[#allocation3 + $0x2c8] sm:$0xff]
      %v4949 = vld [vmem:[#allocation3 + $0x2d0] sm:$0x7f]
      %v4950 = vld [vmem:[#allocation3 + $0x2d8] sm:$0x7f]
      %v4951 = vld [vmem:[#allocation3 + $0x2e0] sm:$0x7f]
      %v4952 = vld [vmem:[#allocation3 + $0x300] sm:$0x80]
      %v4953 = vld [vmem:[#allocation3 + $0x308] sm:$0x80]
      %v4954 = vld [vmem:[#allocation3 + $0x310] sm:$0x80]
      %v4955 = vld [vmem:[#allocation3 + $0x318] sm:$0xff]
      %v4956 = vld [vmem:[#allocation3 + $0x320] sm:$0xff]
      %v4957 = vld [vmem:[#allocation3 + $0x328] sm:$0xff]
      %v4958 = vld [vmem:[#allocation3 + $0x330] sm:$0x7f]
      %v4959 = vld [vmem:[#allocation3 + $0x338] sm:$0x7f]
      %v4960 = vld [vmem:[#allocation3 + $0x340] sm:$0x7f]
      %v4961 = vld [vmem:[#allocation3 + $0x360] sm:$0x80]
      %v4962 = vld [vmem:[#allocation3 + $0x368] sm:$0x80]
      %v4963 = vld [vmem:[#allocation3 + $0x370] sm:$0x80]
      %v4964 = vld [vmem:[#allocation3 + $0x378] sm:$0xff]
      %v4965 = vld [vmem:[#allocation3 + $0x380] sm:$0xff]
      %v4966 = vld [vmem:[#allocation3 + $0x388] sm:$0xff]
      %v4967 = vld [vmem:[#allocation3 + $0x390] sm:$0x7f]
      %v4968 = vld [vmem:[#allocation3 + $0x398] sm:$0x7f]
      %v4969 = vld [vmem:[#allocation3 + $0x3a0] sm:$0x7f]
      %v4970 = vld [vmem:[#allocation3 + $0x3c0] sm:$0x80]
      %v4971 = vld [vmem:[#allocation3 + $0x3c8] sm:$0x80]
      %v4972 = vld [vmem:[#allocation3 + $0x3d0] sm:$0x80]
      %v4973 = vld [vmem:[#allocation3 + $0x3d8] sm:$0xff]
      %v4974 = vld [vmem:[#allocation3 + $0x3e0] sm:$0xff]
      %v4975 = vld [vmem:[#allocation3 + $0x3e8] sm:$0xff]
      %v4976 = vld [vmem:[#allocation3 + $0x3f0] sm:$0x7f]
      %v4977 = vld [vmem:[#allocation3 + $0x3f8] sm:$0x7f]
      %v4978 = vld [vmem:[#allocation3 + $0x400] sm:$0x7f]
      %v4979 = vld [vmem:[#allocation3 + $0x420] sm:$0x80]
      %v4980 = vld [vmem:[#allocation3 + $0x428] sm:$0x80]
      %v4981 = vld [vmem:[#allocation3 + $0x430] sm:$0x80]
      %v4982 = vld [vmem:[#allocation3 + $0x438] sm:$0xff]
      %v4983 = vld [vmem:[#allocation3 + $0x440] sm:$0xff]
      %v4984 = vld [vmem:[#allocation3 + $0x448] sm:$0xff]
      %v4985 = vld [vmem:[#allocation3 + $0x450] sm:$0x7f]
      %v4986 = vld [vmem:[#allocation3 + $0x458] sm:$0x7f]
      %v4987 = vld [vmem:[#allocation3 + $0x460] sm:$0x7f]
      %v4988 = vld [vmem:[#allocation3 + $0x480] sm:$0x80]
      %v4989 = vld [vmem:[#allocation3 + $0x488] sm:$0x80]
      %v4990 = vld [vmem:[#allocation3 + $0x490] sm:$0x80]
      %v4991 = vld [vmem:[#allocation3 + $0x498] sm:$0xff]
      %v4992 = vld [vmem:[#allocation3 + $0x4a0] sm:$0xff]
      %v4993 = vld [vmem:[#allocation3 + $0x4a8] sm:$0xff]
      %v4994 = vld [vmem:[#allocation3 + $0x4b0] sm:$0x7f]
      %v4995 = vld [vmem:[#allocation3 + $0x4b8] sm:$0x7f]
      %v4996 = vld [vmem:[#allocation3 + $0x4c0] sm:$0x7f]
      %v4997 = vld [vmem:[#allocation3 + $0x4e0] sm:$0x80]
      %v4998 = vld [vmem:[#allocation3 + $0x4e8] sm:$0x80]
      %v4999 = vld [vmem:[#allocation3 + $0x4f0] sm:$0x80]
      %v5000 = vld [vmem:[#allocation3 + $0x4f8] sm:$0xff]
      %v5001 = vld [vmem:[#allocation3 + $0x500] sm:$0xff]
      %v5002 = vld [vmem:[#allocation3 + $0x508] sm:$0xff]
      %v5003 = vld [vmem:[#allocation3 + $0x510] sm:$0x7f]
      %v5004 = vld [vmem:[#allocation3 + $0x518] sm:$0x7f]
      %v5005 = vld [vmem:[#allocation3 + $0x520] sm:$0x7f]
      %v5006 = vld [vmem:[#allocation3 + $0x540] sm:$0x80]
      %v5007 = vld [vmem:[#allocation3 + $0x548] sm:$0x80]
      %v5008 = vld [vmem:[#allocation3 + $0x550] sm:$0x80]
      %v5009 = vld [vmem:[#allocation3 + $0x558] sm:$0xff]
      %v5010 = vld [vmem:[#allocation3 + $0x560] sm:$0xff]
      %v5011 = vld [vmem:[#allocation3 + $0x568] sm:$0xff]
      %v5012 = vld [vmem:[#allocation3 + $0x570] sm:$0x7f]
      %v5013 = vld [vmem:[#allocation3 + $0x578] sm:$0x7f]
      %v5014 = vld [vmem:[#allocation3 + $0x580] sm:$0x7f]
      %v5015 = vld [vmem:[#allocation3 + $0x5a0] sm:$0x80]
      %v5016 = vld [vmem:[#allocation3 + $0x5a8] sm:$0x80]
      %v5017 = vld [vmem:[#allocation3 + $0x5b0] sm:$0x80]
      %v5018 = vld [vmem:[#allocation3 + $0x5b8] sm:$0xff]
      %v5019 = vld [vmem:[#allocation3 + $0x5c0] sm:$0xff]
      %v5020 = vld [vmem:[#allocation3 + $0x5c8] sm:$0xff]
      %v5021 = vld [vmem:[#allocation3 + $0x5d0] sm:$0x7f]
      %v5022 = vld [vmem:[#allocation3 + $0x5d8] sm:$0x7f]
      %v5023 = vld [vmem:[#allocation3 + $0x5e0] sm:$0x7f]
      %vm5168 = vcmask 1040384
      %v5169 = vrot.slane %v4880, 7
      %v5170 = vrot.slane %v4883, 7
      %v5171 = vsel %vm5168, %v5169, %v5170
      %v5172 = vrot.slane %v4881, 7
      %v5173 = vrot.slane %v4884, 7
      %v5174 = vsel %vm5168, %v5172, %v5173
      %v5175 = vrot.slane %v4882, 7
      %v5176 = vrot.slane %v4885, 7
      %v5177 = vsel %vm5168, %v5175, %v5176
      %v5178 = vrot.slane %v4886, 7
      %v5179 = vsel %vm5168, %v5170, %v5178
      %v5180 = vrot.slane %v4887, 7
      %v5181 = vsel %vm5168, %v5173, %v5180
      %v5182 = vrot.slane %v4888, 7
      %v5183 = vsel %vm5168, %v5176, %v5182
      %v5184 = vrot.slane %v4889, 7
      %v5185 = vrot.slane %v4892, 7
      %v5186 = vsel %vm5168, %v5184, %v5185
      %v5187 = vrot.slane %v4890, 7
      %v5188 = vrot.slane %v4893, 7
      %v5189 = vsel %vm5168, %v5187, %v5188
      %v5190 = vrot.slane %v4891, 7
      %v5191 = vrot.slane %v4894, 7
      %v5192 = vsel %vm5168, %v5190, %v5191
      %v5193 = vrot.slane %v4895, 7
      %v5194 = vsel %vm5168, %v5185, %v5193
      %v5195 = vrot.slane %v4896, 7
      %v5196 = vsel %vm5168, %v5188, %v5195
      %v5197 = vrot.slane %v4897, 7
      %v5198 = vsel %vm5168, %v5191, %v5197
      %v5199 = vrot.slane %v4898, 7
      %v5200 = vrot.slane %v4901, 7
      %v5201 = vsel %vm5168, %v5199, %v5200
      %v5202 = vrot.slane %v4899, 7
      %v5203 = vrot.slane %v4902, 7
      %v5204 = vsel %vm5168, %v5202, %v5203
      %v5205 = vrot.slane %v4900, 7
      %v5206 = vrot.slane %v4903, 7
      %v5207 = vsel %vm5168, %v5205, %v5206
      %v5208 = vrot.slane %v4904, 7
      %v5209 = vsel %vm5168, %v5200, %v5208
      %v5210 = vrot.slane %v4905, 7
      %v5211 = vsel %vm5168, %v5203, %v5210
      %v5212 = vrot.slane %v4906, 7
      %v5213 = vsel %vm5168, %v5206, %v5212
      %v5214 = vrot.slane %v4907, 7
      %v5215 = vrot.slane %v4910, 7
      %v5216 = vsel %vm5168, %v5214, %v5215
      %v5217 = vrot.slane %v4908, 7
      %v5218 = vrot.slane %v4911, 7
      %v5219 = vsel %vm5168, %v5217, %v5218
      %v5220 = vrot.slane %v4909, 7
      %v5221 = vrot.slane %v4912, 7
      %v5222 = vsel %vm5168, %v5220, %v5221
      %v5223 = vrot.slane %v4913, 7
      %v5224 = vsel %vm5168, %v5215, %v5223
      %v5225 = vrot.slane %v4914, 7
      %v5226 = vsel %vm5168, %v5218, %v5225
      %v5227 = vrot.slane %v4915, 7
      %v5228 = vsel %vm5168, %v5221, %v5227
      %v5229 = vrot.slane %v4916, 7
      %v5230 = vrot.slane %v4919, 7
      %v5231 = vsel %vm5168, %v5229, %v5230
      %v5232 = vrot.slane %v4917, 7
      %v5233 = vrot.slane %v4920, 7
      %v5234 = vsel %vm5168, %v5232, %v5233
      %v5235 = vrot.slane %v4918, 7
      %v5236 = vrot.slane %v4921, 7
      %v5237 = vsel %vm5168, %v5235, %v5236
      %v5238 = vrot.slane %v4922, 7
      %v5239 = vsel %vm5168, %v5230, %v5238
      %v5240 = vrot.slane %v4923, 7
      %v5241 = vsel %vm5168, %v5233, %v5240
      %v5242 = vrot.slane %v4924, 7
      %v5243 = vsel %vm5168, %v5236, %v5242
      %v5244 = vrot.slane %v4925, 7
      %v5245 = vrot.slane %v4928, 7
      %v5246 = vsel %vm5168, %v5244, %v5245
      %v5247 = vrot.slane %v4926, 7
      %v5248 = vrot.slane %v4929, 7
      %v5249 = vsel %vm5168, %v5247, %v5248
      %v5250 = vrot.slane %v4927, 7
      %v5251 = vrot.slane %v4930, 7
      %v5252 = vsel %vm5168, %v5250, %v5251
      %v5253 = vrot.slane %v4931, 7
      %v5254 = vsel %vm5168, %v5245, %v5253
      %v5255 = vrot.slane %v4932, 7
      %v5256 = vsel %vm5168, %v5248, %v5255
      %v5257 = vrot.slane %v4933, 7
      %v5258 = vsel %vm5168, %v5251, %v5257
      %v5259 = vrot.slane %v4934, 7
      %v5260 = vrot.slane %v4937, 7
      %v5261 = vsel %vm5168, %v5259, %v5260
      %v5262 = vrot.slane %v4935, 7
      %v5263 = vrot.slane %v4938, 7
      %v5264 = vsel %vm5168, %v5262, %v5263
      %v5265 = vrot.slane %v4936, 7
      %v5266 = vrot.slane %v4939, 7
      %v5267 = vsel %vm5168, %v5265, %v5266
      %v5268 = vrot.slane %v4940, 7
      %v5269 = vsel %vm5168, %v5260, %v5268
      %v5270 = vrot.slane %v4941, 7
      %v5271 = vsel %vm5168, %v5263, %v5270
      %v5272 = vrot.slane %v4942, 7
      %v5273 = vsel %vm5168, %v5266, %v5272
      %v5274 = vrot.slane %v4943, 7
      %v5275 = vrot.slane %v4946, 7
      %v5276 = vsel %vm5168, %v5274, %v5275
      %v5277 = vrot.slane %v4944, 7
      %v5278 = vrot.slane %v4947, 7
      %v5279 = vsel %vm5168, %v5277, %v5278
      %v5280 = vrot.slane %v4945, 7
      %v5281 = vrot.slane %v4948, 7
      %v5282 = vsel %vm5168, %v5280, %v5281
      %v5283 = vrot.slane %v4949, 7
      %v5284 = vsel %vm5168, %v5275, %v5283
      %v5285 = vrot.slane %v4950, 7
      %v5286 = vsel %vm5168, %v5278, %v5285
      %v5287 = vrot.slane %v4951, 7
      %v5288 = vsel %vm5168, %v5281, %v5287
      %v5289 = vrot.slane %v4952, 7
      %v5290 = vrot.slane %v4955, 7
      %v5291 = vsel %vm5168, %v5289, %v5290
      %v5292 = vrot.slane %v4953, 7
      %v5293 = vrot.slane %v4956, 7
      %v5294 = vsel %vm5168, %v5292, %v5293
      %v5295 = vrot.slane %v4954, 7
      %v5296 = vrot.slane %v4957, 7
      %v5297 = vsel %vm5168, %v5295, %v5296
      %v5298 = vrot.slane %v4958, 7
      %v5299 = vsel %vm5168, %v5290, %v5298
      %v5300 = vrot.slane %v4959, 7
      %v5301 = vsel %vm5168, %v5293, %v5300
      %v5302 = vrot.slane %v4960, 7
      %v5303 = vsel %vm5168, %v5296, %v5302
      %v5304 = vrot.slane %v4961, 7
      %v5305 = vrot.slane %v4964, 7
      %v5306 = vsel %vm5168, %v5304, %v5305
      %v5307 = vrot.slane %v4962, 7
      %v5308 = vrot.slane %v4965, 7
      %v5309 = vsel %vm5168, %v5307, %v5308
      %v5310 = vrot.slane %v4963, 7
      %v5311 = vrot.slane %v4966, 7
      %v5312 = vsel %vm5168, %v5310, %v5311
      %v5313 = vrot.slane %v4967, 7
      %v5314 = vsel %vm5168, %v5305, %v5313
      %v5315 = vrot.slane %v4968, 7
      %v5316 = vsel %vm5168, %v5308, %v5315
      %v5317 = vrot.slane %v4969, 7
      %v5318 = vsel %vm5168, %v5311, %v5317
      %v5319 = vrot.slane %v4970, 7
      %v5320 = vrot.slane %v4973, 7
      %v5321 = vsel %vm5168, %v5319, %v5320
      %v5322 = vrot.slane %v4971, 7
      %v5323 = vrot.slane %v4974, 7
      %v5324 = vsel %vm5168, %v5322, %v5323
      %v5325 = vrot.slane %v4972, 7
      %v5326 = vrot.slane %v4975, 7
      %v5327 = vsel %vm5168, %v5325, %v5326
      %v5328 = vrot.slane %v4976, 7
      %v5329 = vsel %vm5168, %v5320, %v5328
      %v5330 = vrot.slane %v4977, 7
      %v5331 = vsel %vm5168, %v5323, %v5330
      %v5332 = vrot.slane %v4978, 7
      %v5333 = vsel %vm5168, %v5326, %v5332
      %v5334 = vrot.slane %v4979, 7
      %v5335 = vrot.slane %v4982, 7
      %v5336 = vsel %vm5168, %v5334, %v5335
      %v5337 = vrot.slane %v4980, 7
      %v5338 = vrot.slane %v4983, 7
      %v5339 = vsel %vm5168, %v5337, %v5338
      %v5340 = vrot.slane %v4981, 7
      %v5341 = vrot.slane %v4984, 7
      %v5342 = vsel %vm5168, %v5340, %v5341
      %v5343 = vrot.slane %v4985, 7
      %v5344 = vsel %vm5168, %v5335, %v5343
      %v5345 = vrot.slane %v4986, 7
      %v5346 = vsel %vm5168, %v5338, %v5345
      %v5347 = vrot.slane %v4987, 7
      %v5348 = vsel %vm5168, %v5341, %v5347
      %v5349 = vrot.slane %v4988, 7
      %v5350 = vrot.slane %v4991, 7
      %v5351 = vsel %vm5168, %v5349, %v5350
      %v5352 = vrot.slane %v4989, 7
      %v5353 = vrot.slane %v4992, 7
      %v5354 = vsel %vm5168, %v5352, %v5353
      %v5355 = vrot.slane %v4990, 7
      %v5356 = vrot.slane %v4993, 7
      %v5357 = vsel %vm5168, %v5355, %v5356
      %v5358 = vrot.slane %v4994, 7
      %v5359 = vsel %vm5168, %v5350, %v5358
      %v5360 = vrot.slane %v4995, 7
      %v5361 = vsel %vm5168, %v5353, %v5360
      %v5362 = vrot.slane %v4996, 7
      %v5363 = vsel %vm5168, %v5356, %v5362
      %v5364 = vrot.slane %v4997, 7
      %v5365 = vrot.slane %v5000, 7
      %v5366 = vsel %vm5168, %v5364, %v5365
      %v5367 = vrot.slane %v4998, 7
      %v5368 = vrot.slane %v5001, 7
      %v5369 = vsel %vm5168, %v5367, %v5368
      %v5370 = vrot.slane %v4999, 7
      %v5371 = vrot.slane %v5002, 7
      %v5372 = vsel %vm5168, %v5370, %v5371
      %v5373 = vrot.slane %v5003, 7
      %v5374 = vsel %vm5168, %v5365, %v5373
      %v5375 = vrot.slane %v5004, 7
      %v5376 = vsel %vm5168, %v5368, %v5375
      %v5377 = vrot.slane %v5005, 7
      %v5378 = vsel %vm5168, %v5371, %v5377
      %v5379 = vrot.slane %v5006, 7
      %v5380 = vrot.slane %v5009, 7
      %v5381 = vsel %vm5168, %v5379, %v5380
      %v5382 = vrot.slane %v5007, 7
      %v5383 = vrot.slane %v5010, 7
      %v5384 = vsel %vm5168, %v5382, %v5383
      %v5385 = vrot.slane %v5008, 7
      %v5386 = vrot.slane %v5011, 7
      %v5387 = vsel %vm5168, %v5385, %v5386
      %v5388 = vrot.slane %v5012, 7
      %v5389 = vsel %vm5168, %v5380, %v5388
      %v5390 = vrot.slane %v5013, 7
      %v5391 = vsel %vm5168, %v5383, %v5390
      %v5392 = vrot.slane %v5014, 7
      %v5393 = vsel %vm5168, %v5386, %v5392
      %v5394 = vrot.slane %v5015, 7
      %v5395 = vrot.slane %v5018, 7
      %v5396 = vsel %vm5168, %v5394, %v5395
      %v5397 = vrot.slane %v5016, 7
      %v5398 = vrot.slane %v5019, 7
      %v5399 = vsel %vm5168, %v5397, %v5398
      %v5400 = vrot.slane %v5017, 7
      %v5401 = vrot.slane %v5020, 7
      %v5402 = vsel %vm5168, %v5400, %v5401
      %v5403 = vrot.slane %v5021, 7
      %v5404 = vsel %vm5168, %v5395, %v5403
      %v5405 = vrot.slane %v5022, 7
      %v5406 = vsel %vm5168, %v5398, %v5405
      %v5407 = vrot.slane %v5023, 7
      %v5408 = vsel %vm5168, %v5401, %v5407
      %v5505 = vld [vmem:[%s5] sm:$0xff]
      %v5506 = vld [vmem:[%s5 + $0x8] sm:$0xff]
      %v5507 = vld [vmem:[%s5 + $0x10] sm:$0xff]
      %v5508 = vld [vmem:[%s5 + $0x18] sm:$0xff]
      %v5509 = vld [vmem:[%s5 + $0x20] sm:$0xff]
      %v5510 = vld [vmem:[%s5 + $0x28] sm:$0xff]
      %v5511 = vld [vmem:[%s5 + $0x30] sm:$0xff]
      %v5512 = vld [vmem:[%s5 + $0x38] sm:$0xff]
      %v5513 = vld [vmem:[%s5 + $0x40] sm:$0xff]
      %v5514 = vld [vmem:[%s5 + $0x48] sm:$0xff]
      %v5515 = vld [vmem:[%s5 + $0x50] sm:$0xff]
      %v5516 = vld [vmem:[%s5 + $0x58] sm:$0xff]
      %v5517 = vld [vmem:[%s5 + $0x60] sm:$0xff]
      %v5518 = vld [vmem:[%s5 + $0x68] sm:$0xff]
      %v5519 = vld [vmem:[%s5 + $0x70] sm:$0xff]
      %v5520 = vld [vmem:[%s5 + $0x78] sm:$0xff]
      %v5521 = vld [vmem:[%s5 + $0x80] sm:$0xff]
      %v5522 = vld [vmem:[%s5 + $0x88] sm:$0xff]
      %v5523 = vld [vmem:[%s5 + $0x90] sm:$0xff]
      %v5524 = vld [vmem:[%s5 + $0x98] sm:$0xff]
      %v5525 = vld [vmem:[%s5 + $0xa0] sm:$0xff]
      %v5526 = vld [vmem:[%s5 + $0xa8] sm:$0xff]
      %v5527 = vld [vmem:[%s5 + $0xb0] sm:$0xff]
      %v5528 = vld [vmem:[%s5 + $0xb8] sm:$0xff]
      %v5529 = vld [vmem:[%s5 + $0xc0] sm:$0xff]
      %v5530 = vld [vmem:[%s5 + $0xc8] sm:$0xff]
      %v5531 = vld [vmem:[%s5 + $0xd0] sm:$0xff]
      %v5532 = vld [vmem:[%s5 + $0xd8] sm:$0xff]
      %v5533 = vld [vmem:[%s5 + $0xe0] sm:$0xff]
      %v5534 = vld [vmem:[%s5 + $0xe8] sm:$0xff]
      %v5535 = vld [vmem:[%s5 + $0xf0] sm:$0xff]
      %v5536 = vld [vmem:[%s5 + $0xf8] sm:$0xff]
      %v5537 = vld [vmem:[%s5 + $0x100] sm:$0xff]
      %v5538 = vld [vmem:[%s5 + $0x108] sm:$0xff]
      %v5539 = vld [vmem:[%s5 + $0x110] sm:$0xff]
      %v5540 = vld [vmem:[%s5 + $0x118] sm:$0xff]
      %v5541 = vld [vmem:[%s5 + $0x120] sm:$0xff]
      %v5542 = vld [vmem:[%s5 + $0x128] sm:$0xff]
      %v5543 = vld [vmem:[%s5 + $0x130] sm:$0xff]
      %v5544 = vld [vmem:[%s5 + $0x138] sm:$0xff]
      %v5545 = vld [vmem:[%s5 + $0x140] sm:$0xff]
      %v5546 = vld [vmem:[%s5 + $0x148] sm:$0xff]
      %v5547 = vld [vmem:[%s5 + $0x150] sm:$0xff]
      %v5548 = vld [vmem:[%s5 + $0x158] sm:$0xff]
      %v5549 = vld [vmem:[%s5 + $0x160] sm:$0xff]
      %v5550 = vld [vmem:[%s5 + $0x168] sm:$0xff]
      %v5551 = vld [vmem:[%s5 + $0x170] sm:$0xff]
      %v5552 = vld [vmem:[%s5 + $0x178] sm:$0xff]
      %v5553 = vld [vmem:[#allocation3 + $0x30] sm:$0xff]
      %v5554 = vld [vmem:[#allocation3 + $0x38] sm:$0xff]
      %v5555 = vld [vmem:[#allocation3 + $0x40] sm:$0xff]
      %v5556 = vld [vmem:[#allocation3 + $0x90] sm:$0xff]
      %v5557 = vld [vmem:[#allocation3 + $0x98] sm:$0xff]
      %v5558 = vld [vmem:[#allocation3 + $0xa0] sm:$0xff]
      %v5559 = vld [vmem:[#allocation3 + $0xf0] sm:$0xff]
      %v5560 = vld [vmem:[#allocation3 + $0xf8] sm:$0xff]
      %v5561 = vld [vmem:[#allocation3 + $0x100] sm:$0xff]
      %v5562 = vld [vmem:[#allocation3 + $0x150] sm:$0xff]
      %v5563 = vld [vmem:[#allocation3 + $0x158] sm:$0xff]
      %v5564 = vld [vmem:[#allocation3 + $0x160] sm:$0xff]
      %v5565 = vld [vmem:[#allocation3 + $0x1b0] sm:$0xff]
      %v5566 = vld [vmem:[#allocation3 + $0x1b8] sm:$0xff]
      %v5567 = vld [vmem:[#allocation3 + $0x1c0] sm:$0xff]
      %v5568 = vld [vmem:[#allocation3 + $0x210] sm:$0xff]
      %v5569 = vld [vmem:[#allocation3 + $0x218] sm:$0xff]
      %v5570 = vld [vmem:[#allocation3 + $0x220] sm:$0xff]
      %v5571 = vld [vmem:[#allocation3 + $0x270] sm:$0xff]
      %v5572 = vld [vmem:[#allocation3 + $0x278] sm:$0xff]
      %v5573 = vld [vmem:[#allocation3 + $0x280] sm:$0xff]
      %v5574 = vld [vmem:[#allocation3 + $0x2d0] sm:$0xff]
      %v5575 = vld [vmem:[#allocation3 + $0x2d8] sm:$0xff]
      %v5576 = vld [vmem:[#allocation3 + $0x2e0] sm:$0xff]
      %v5577 = vld [vmem:[#allocation3 + $0x330] sm:$0xff]
      %v5578 = vld [vmem:[#allocation3 + $0x338] sm:$0xff]
      %v5579 = vld [vmem:[#allocation3 + $0x340] sm:$0xff]
      %v5580 = vld [vmem:[#allocation3 + $0x390] sm:$0xff]
      %v5581 = vld [vmem:[#allocation3 + $0x398] sm:$0xff]
      %v5582 = vld [vmem:[#allocation3 + $0x3a0] sm:$0xff]
      %v5583 = vld [vmem:[#allocation3 + $0x3f0] sm:$0xff]
      %v5584 = vld [vmem:[#allocation3 + $0x3f8] sm:$0xff]
      %v5585 = vld [vmem:[#allocation3 + $0x400] sm:$0xff]
      %v5586 = vld [vmem:[#allocation3 + $0x450] sm:$0xff]
      %v5587 = vld [vmem:[#allocation3 + $0x458] sm:$0xff]
      %v5588 = vld [vmem:[#allocation3 + $0x460] sm:$0xff]
      %v5589 = vld [vmem:[#allocation3 + $0x4b0] sm:$0xff]
      %v5590 = vld [vmem:[#allocation3 + $0x4b8] sm:$0xff]
      %v5591 = vld [vmem:[#allocation3 + $0x4c0] sm:$0xff]
      %v5592 = vld [vmem:[#allocation3 + $0x510] sm:$0xff]
      %v5593 = vld [vmem:[#allocation3 + $0x518] sm:$0xff]
      %v5594 = vld [vmem:[#allocation3 + $0x520] sm:$0xff]
      %v5595 = vld [vmem:[#allocation3 + $0x570] sm:$0xff]
      %v5596 = vld [vmem:[#allocation3 + $0x578] sm:$0xff]
      %v5597 = vld [vmem:[#allocation3 + $0x580] sm:$0xff]
      %v5598 = vld [vmem:[#allocation3 + $0x5d0] sm:$0xff]
      %v5599 = vld [vmem:[#allocation3 + $0x5d8] sm:$0xff]
      %v5600 = vld [vmem:[#allocation3 + $0x5e0] sm:$0xff]
      %s5601 = scalar_lea.vmem %s5, 384
      %v5602 = vld [vmem:[%s5601] sm:$0xff]
      %v5603 = vld [vmem:[%s5601 + $0x8] sm:$0xff]
      %v5604 = vld [vmem:[%s5601 + $0x10] sm:$0xff]
      %v5605 = vld [vmem:[%s5601 + $0x18] sm:$0xff]
      %v5606 = vld [vmem:[%s5601 + $0x20] sm:$0xff]
      %v5607 = vld [vmem:[%s5601 + $0x28] sm:$0xff]
      %v5608 = vld [vmem:[%s5601 + $0x30] sm:$0xff]
      %v5609 = vld [vmem:[%s5601 + $0x38] sm:$0xff]
      %v5610 = vld [vmem:[%s5601 + $0x40] sm:$0xff]
      %v5611 = vld [vmem:[%s5601 + $0x48] sm:$0xff]
      %v5612 = vld [vmem:[%s5601 + $0x50] sm:$0xff]
      %v5613 = vld [vmem:[%s5601 + $0x58] sm:$0xff]
      %v5614 = vld [vmem:[%s5601 + $0x60] sm:$0xff]
      %v5615 = vld [vmem:[%s5601 + $0x68] sm:$0xff]
      %v5616 = vld [vmem:[%s5601 + $0x70] sm:$0xff]
      %v5617 = vld [vmem:[%s5601 + $0x78] sm:$0xff]
      %v5618 = vld [vmem:[%s5601 + $0x80] sm:$0xff]
      %v5619 = vld [vmem:[%s5601 + $0x88] sm:$0xff]
      %v5620 = vld [vmem:[%s5601 + $0x90] sm:$0xff]
      %v5621 = vld [vmem:[%s5601 + $0x98] sm:$0xff]
      %v5622 = vld [vmem:[%s5601 + $0xa0] sm:$0xff]
      %v5623 = vld [vmem:[%s5601 + $0xa8] sm:$0xff]
      %v5624 = vld [vmem:[%s5601 + $0xb0] sm:$0xff]
      %v5625 = vld [vmem:[%s5601 + $0xb8] sm:$0xff]
      %v5626 = vld [vmem:[%s5601 + $0xc0] sm:$0xff]
      %v5627 = vld [vmem:[%s5601 + $0xc8] sm:$0xff]
      %v5628 = vld [vmem:[%s5601 + $0xd0] sm:$0xff]
      %v5629 = vld [vmem:[%s5601 + $0xd8] sm:$0xff]
      %v5630 = vld [vmem:[%s5601 + $0xe0] sm:$0xff]
      %v5631 = vld [vmem:[%s5601 + $0xe8] sm:$0xff]
      %v5632 = vld [vmem:[%s5601 + $0xf0] sm:$0xff]
      %v5633 = vld [vmem:[%s5601 + $0xf8] sm:$0xff]
      %v5634 = vld [vmem:[%s5601 + $0x100] sm:$0xff]
      %v5635 = vld [vmem:[%s5601 + $0x108] sm:$0xff]
      %v5636 = vld [vmem:[%s5601 + $0x110] sm:$0xff]
      %v5637 = vld [vmem:[%s5601 + $0x118] sm:$0xff]
      %v5638 = vld [vmem:[%s5601 + $0x120] sm:$0xff]
      %v5639 = vld [vmem:[%s5601 + $0x128] sm:$0xff]
      %v5640 = vld [vmem:[%s5601 + $0x130] sm:$0xff]
      %v5641 = vld [vmem:[%s5601 + $0x138] sm:$0xff]
      %v5642 = vld [vmem:[%s5601 + $0x140] sm:$0xff]
      %v5643 = vld [vmem:[%s5601 + $0x148] sm:$0xff]
      %v5644 = vld [vmem:[%s5601 + $0x150] sm:$0xff]
      %v5645 = vld [vmem:[%s5601 + $0x158] sm:$0xff]
      %v5646 = vld [vmem:[%s5601 + $0x160] sm:$0xff]
      %v5647 = vld [vmem:[%s5601 + $0x168] sm:$0xff]
      %v5648 = vld [vmem:[%s5601 + $0x170] sm:$0xff]
      %v5649 = vld [vmem:[%s5601 + $0x178] sm:$0xff]
      %5650 = vmatpush.msra.mxu0 %v5617
      %5651 = vmatpush.msra.mxu0 %v5616
      %5652 = vmatpush.msra.mxu0 %v5615
      %5653 = vmatpush.msra.mxu0 %v5614
      %5654 = vmatpush.msra.mxu0 %v5613
      %5655 = vmatpush.msra.mxu0 %v5612
      %5656 = vmatpush.msra.mxu0 %v5611
      %5657 = vmatpush.msra.mxu0 %v5610
      %5658 = vmatpush.msra.mxu0 %v5609
      %5659 = vmatpush.msra.mxu0 %v5608
      %5660 = vmatpush.msra.mxu0 %v5607
      %5661 = vmatpush.msra.mxu0 %v5606
      %5662 = vmatpush.msra.mxu0 %v5605
      %5663 = vmatpush.msra.mxu0 %v5604
      %5664 = vmatpush.msra.mxu0 %v5603
      %5665 = vmatpush.msra.mxu0 %v5602
      %5666 = vmatmul.f32.gmra.mxu0 %v4883
      %v5667 = vpop.f32.mrf.mxu0
      %v5668 = vadd.f32 0.0, %v5667
      %5669 = vmatmul.f32.gmra.mxu0 %v5553
      %v5670 = vpop.f32.mrf.mxu0
      %v5671 = vadd.f32 0.0, %v5670
      %5672 = vmatmul.f32.gmra.mxu0 %v4892
      %v5673 = vpop.f32.mrf.mxu0
      %v5674 = vadd.f32 0.0, %v5673
      %5675 = vmatmul.f32.gmra.mxu0 %v5556
      %v5676 = vpop.f32.mrf.mxu0
      %v5677 = vadd.f32 0.0, %v5676
      %5678 = vmatmul.f32.gmra.mxu0 %v4901
      %v5679 = vpop.f32.mrf.mxu0
      %v5680 = vadd.f32 0.0, %v5679
      %5681 = vmatmul.f32.gmra.mxu0 %v5559
      %v5682 = vpop.f32.mrf.mxu0
      %v5683 = vadd.f32 0.0, %v5682
      %5684 = vmatmul.f32.gmra.mxu0 %v4910
      %v5685 = vpop.f32.mrf.mxu0
      %v5686 = vadd.f32 0.0, %v5685
      %5687 = vmatmul.f32.gmra.mxu0 %v5562
      %v5688 = vpop.f32.mrf.mxu0
      %v5689 = vadd.f32 0.0, %v5688
      %5690 = vmatmul.f32.gmra.mxu0 %v4919
      %v5691 = vpop.f32.mrf.mxu0
      %v5692 = vadd.f32 0.0, %v5691
      %5693 = vmatmul.f32.gmra.mxu0 %v5565
      %v5694 = vpop.f32.mrf.mxu0
      %v5695 = vadd.f32 0.0, %v5694
      %5696 = vmatmul.f32.gmra.mxu0 %v4928
      %v5697 = vpop.f32.mrf.mxu0
      %v5698 = vadd.f32 0.0, %v5697
      %5699 = vmatmul.f32.gmra.mxu0 %v5568
      %v5700 = vpop.f32.mrf.mxu0
      %v5701 = vadd.f32 0.0, %v5700
      %5702 = vmatmul.f32.gmra.mxu0 %v4937
      %v5703 = vpop.f32.mrf.mxu0
      %v5704 = vadd.f32 0.0, %v5703
      %5705 = vmatmul.f32.gmra.mxu0 %v5571
      %v5706 = vpop.f32.mrf.mxu0
      %v5707 = vadd.f32 0.0, %v5706
      %5708 = vmatmul.f32.gmra.mxu0 %v4946
      %v5709 = vpop.f32.mrf.mxu0
      %v5710 = vadd.f32 0.0, %v5709
      %5711 = vmatmul.f32.gmra.mxu0 %v5574
      %v5712 = vpop.f32.mrf.mxu0
      %v5713 = vadd.f32 0.0, %v5712
      %5714 = vmatmul.f32.gmra.mxu0 %v4955
      %v5715 = vpop.f32.mrf.mxu0
      %v5716 = vadd.f32 0.0, %v5715
      %5717 = vmatmul.f32.gmra.mxu0 %v5577
      %v5718 = vpop.f32.mrf.mxu0
      %v5719 = vadd.f32 0.0, %v5718
      %5720 = vmatmul.f32.gmra.mxu0 %v4964
      %v5721 = vpop.f32.mrf.mxu0
      %v5722 = vadd.f32 0.0, %v5721
      %5723 = vmatmul.f32.gmra.mxu0 %v5580
      %v5724 = vpop.f32.mrf.mxu0
      %v5725 = vadd.f32 0.0, %v5724
      %5726 = vmatmul.f32.gmra.mxu0 %v4973
      %v5727 = vpop.f32.mrf.mxu0
      %v5728 = vadd.f32 0.0, %v5727
      %5729 = vmatmul.f32.gmra.mxu0 %v5583
      %v5730 = vpop.f32.mrf.mxu0
      %v5731 = vadd.f32 0.0, %v5730
      %5732 = vmatmul.f32.gmra.mxu0 %v4982
      %v5733 = vpop.f32.mrf.mxu0
      %v5734 = vadd.f32 0.0, %v5733
      %5735 = vmatmul.f32.gmra.mxu0 %v5586
      %v5736 = vpop.f32.mrf.mxu0
      %v5737 = vadd.f32 0.0, %v5736
      %5738 = vmatmul.f32.gmra.mxu0 %v4991
      %v5739 = vpop.f32.mrf.mxu0
      %v5740 = vadd.f32 0.0, %v5739
      %5741 = vmatmul.f32.gmra.mxu0 %v5589
      %v5742 = vpop.f32.mrf.mxu0
      %v5743 = vadd.f32 0.0, %v5742
      %5744 = vmatmul.f32.gmra.mxu0 %v5000
      %v5745 = vpop.f32.mrf.mxu0
      %v5746 = vadd.f32 0.0, %v5745
      %5747 = vmatmul.f32.gmra.mxu0 %v5592
      %v5748 = vpop.f32.mrf.mxu0
      %v5749 = vadd.f32 0.0, %v5748
      %5750 = vmatmul.f32.gmra.mxu0 %v5009
      %v5751 = vpop.f32.mrf.mxu0
      %v5752 = vadd.f32 0.0, %v5751
      %5753 = vmatmul.f32.gmra.mxu0 %v5595
      %v5754 = vpop.f32.mrf.mxu0
      %v5755 = vadd.f32 0.0, %v5754
      %5756 = vmatmul.f32.gmra.mxu0 %v5018
      %v5757 = vpop.f32.mrf.mxu0
      %v5758 = vadd.f32 0.0, %v5757
      %5759 = vmatmul.f32.gmra.mxu0 %v5598
      %v5760 = vpop.f32.mrf.mxu0
      %v5761 = vadd.f32 0.0, %v5760
      %5762 = vdwg.mxu0
      %5763 = vmatpush.msra.mxu0 %v5633
      %5764 = vmatpush.msra.mxu0 %v5632
      %5765 = vmatpush.msra.mxu0 %v5631
      %5766 = vmatpush.msra.mxu0 %v5630
      %5767 = vmatpush.msra.mxu0 %v5629
      %5768 = vmatpush.msra.mxu0 %v5628
      %5769 = vmatpush.msra.mxu0 %v5627
      %5770 = vmatpush.msra.mxu0 %v5626
      %5771 = vmatpush.msra.mxu0 %v5625
      %5772 = vmatpush.msra.mxu0 %v5624
      %5773 = vmatpush.msra.mxu0 %v5623
      %5774 = vmatpush.msra.mxu0 %v5622
      %5775 = vmatpush.msra.mxu0 %v5621
      %5776 = vmatpush.msra.mxu0 %v5620
      %5777 = vmatpush.msra.mxu0 %v5619
      %5778 = vmatpush.msra.mxu0 %v5618
      %5779 = vmatmul.f32.gmra.mxu0 %v4884
      %v5780 = vpop.f32.mrf.mxu0
      %v5781 = vadd.f32 %v5668, %v5780
      %5782 = vmatmul.f32.gmra.mxu0 %v5554
      %v5783 = vpop.f32.mrf.mxu0
      %v5784 = vadd.f32 %v5671, %v5783
      %5785 = vmatmul.f32.gmra.mxu0 %v4893
      %v5786 = vpop.f32.mrf.mxu0
      %v5787 = vadd.f32 %v5674, %v5786
      %5788 = vmatmul.f32.gmra.mxu0 %v5557
      %v5789 = vpop.f32.mrf.mxu0
      %v5790 = vadd.f32 %v5677, %v5789
      %5791 = vmatmul.f32.gmra.mxu0 %v4902
      %v5792 = vpop.f32.mrf.mxu0
      %v5793 = vadd.f32 %v5680, %v5792
      %5794 = vmatmul.f32.gmra.mxu0 %v5560
      %v5795 = vpop.f32.mrf.mxu0
      %v5796 = vadd.f32 %v5683, %v5795
      %5797 = vmatmul.f32.gmra.mxu0 %v4911
      %v5798 = vpop.f32.mrf.mxu0
      %v5799 = vadd.f32 %v5686, %v5798
      %5800 = vmatmul.f32.gmra.mxu0 %v5563
      %v5801 = vpop.f32.mrf.mxu0
      %v5802 = vadd.f32 %v5689, %v5801
      %5803 = vmatmul.f32.gmra.mxu0 %v4920
      %v5804 = vpop.f32.mrf.mxu0
      %v5805 = vadd.f32 %v5692, %v5804
      %5806 = vmatmul.f32.gmra.mxu0 %v5566
      %v5807 = vpop.f32.mrf.mxu0
      %v5808 = vadd.f32 %v5695, %v5807
      %5809 = vmatmul.f32.gmra.mxu0 %v4929
      %v5810 = vpop.f32.mrf.mxu0
      %v5811 = vadd.f32 %v5698, %v5810
      %5812 = vmatmul.f32.gmra.mxu0 %v5569
      %v5813 = vpop.f32.mrf.mxu0
      %v5814 = vadd.f32 %v5701, %v5813
      %5815 = vmatmul.f32.gmra.mxu0 %v4938
      %v5816 = vpop.f32.mrf.mxu0
      %v5817 = vadd.f32 %v5704, %v5816
      %5818 = vmatmul.f32.gmra.mxu0 %v5572
      %v5819 = vpop.f32.mrf.mxu0
      %v5820 = vadd.f32 %v5707, %v5819
      %5821 = vmatmul.f32.gmra.mxu0 %v4947
      %v5822 = vpop.f32.mrf.mxu0
      %v5823 = vadd.f32 %v5710, %v5822
      %5824 = vmatmul.f32.gmra.mxu0 %v5575
      %v5825 = vpop.f32.mrf.mxu0
      %v5826 = vadd.f32 %v5713, %v5825
      %5827 = vmatmul.f32.gmra.mxu0 %v4956
      %v5828 = vpop.f32.mrf.mxu0
      %v5829 = vadd.f32 %v5716, %v5828
      %5830 = vmatmul.f32.gmra.mxu0 %v5578
      %v5831 = vpop.f32.mrf.mxu0
      %v5832 = vadd.f32 %v5719, %v5831
      %5833 = vmatmul.f32.gmra.mxu0 %v4965
      %v5834 = vpop.f32.mrf.mxu0
      %v5835 = vadd.f32 %v5722, %v5834
      %5836 = vmatmul.f32.gmra.mxu0 %v5581
      %v5837 = vpop.f32.mrf.mxu0
      %v5838 = vadd.f32 %v5725, %v5837
      %5839 = vmatmul.f32.gmra.mxu0 %v4974
      %v5840 = vpop.f32.mrf.mxu0
      %v5841 = vadd.f32 %v5728, %v5840
      %5842 = vmatmul.f32.gmra.mxu0 %v5584
      %v5843 = vpop.f32.mrf.mxu0
      %v5844 = vadd.f32 %v5731, %v5843
      %5845 = vmatmul.f32.gmra.mxu0 %v4983
      %v5846 = vpop.f32.mrf.mxu0
      %v5847 = vadd.f32 %v5734, %v5846
      %5848 = vmatmul.f32.gmra.mxu0 %v5587
      %v5849 = vpop.f32.mrf.mxu0
      %v5850 = vadd.f32 %v5737, %v5849
      %5851 = vmatmul.f32.gmra.mxu0 %v4992
      %v5852 = vpop.f32.mrf.mxu0
      %v5853 = vadd.f32 %v5740, %v5852
      %5854 = vmatmul.f32.gmra.mxu0 %v5590
      %v5855 = vpop.f32.mrf.mxu0
      %v5856 = vadd.f32 %v5743, %v5855
      %5857 = vmatmul.f32.gmra.mxu0 %v5001
      %v5858 = vpop.f32.mrf.mxu0
      %v5859 = vadd.f32 %v5746, %v5858
      %5860 = vmatmul.f32.gmra.mxu0 %v5593
      %v5861 = vpop.f32.mrf.mxu0
      %v5862 = vadd.f32 %v5749, %v5861
      %5863 = vmatmul.f32.gmra.mxu0 %v5010
      %v5864 = vpop.f32.mrf.mxu0
      %v5865 = vadd.f32 %v5752, %v5864
      %5866 = vmatmul.f32.gmra.mxu0 %v5596
      %v5867 = vpop.f32.mrf.mxu0
      %v5868 = vadd.f32 %v5755, %v5867
      %5869 = vmatmul.f32.gmra.mxu0 %v5019
      %v5870 = vpop.f32.mrf.mxu0
      %v5871 = vadd.f32 %v5758, %v5870
      %5872 = vmatmul.f32.gmra.mxu0 %v5599
      %v5873 = vpop.f32.mrf.mxu0
      %v5874 = vadd.f32 %v5761, %v5873
      %5875 = vdwg.mxu0
      %5876 = vmatpush.msra.mxu0 %v5649
      %5877 = vmatpush.msra.mxu0 %v5648
      %5878 = vmatpush.msra.mxu0 %v5647
      %5879 = vmatpush.msra.mxu0 %v5646
      %5880 = vmatpush.msra.mxu0 %v5645
      %5881 = vmatpush.msra.mxu0 %v5644
      %5882 = vmatpush.msra.mxu0 %v5643
      %5883 = vmatpush.msra.mxu0 %v5642
      %5884 = vmatpush.msra.mxu0 %v5641
      %5885 = vmatpush.msra.mxu0 %v5640
      %5886 = vmatpush.msra.mxu0 %v5639
      %5887 = vmatpush.msra.mxu0 %v5638
      %5888 = vmatpush.msra.mxu0 %v5637
      %5889 = vmatpush.msra.mxu0 %v5636
      %5890 = vmatpush.msra.mxu0 %v5635
      %5891 = vmatpush.msra.mxu0 %v5634
      %5892 = vmatmul.f32.gmra.mxu0 %v4885
      %v5893 = vpop.f32.mrf.mxu0
      %v5894 = vadd.f32 %v5781, %v5893
      %5895 = vmatmul.f32.gmra.mxu0 %v5555
      %v5896 = vpop.f32.mrf.mxu0
      %v5897 = vadd.f32 %v5784, %v5896
      %5898 = vmatmul.f32.gmra.mxu0 %v4894
      %v5899 = vpop.f32.mrf.mxu0
      %v5900 = vadd.f32 %v5787, %v5899
      %5901 = vmatmul.f32.gmra.mxu0 %v5558
      %v5902 = vpop.f32.mrf.mxu0
      %v5903 = vadd.f32 %v5790, %v5902
      %5904 = vmatmul.f32.gmra.mxu0 %v4903
      %v5905 = vpop.f32.mrf.mxu0
      %v5906 = vadd.f32 %v5793, %v5905
      %5907 = vmatmul.f32.gmra.mxu0 %v5561
      %v5908 = vpop.f32.mrf.mxu0
      %v5909 = vadd.f32 %v5796, %v5908
      %5910 = vmatmul.f32.gmra.mxu0 %v4912
      %v5911 = vpop.f32.mrf.mxu0
      %v5912 = vadd.f32 %v5799, %v5911
      %5913 = vmatmul.f32.gmra.mxu0 %v5564
      %v5914 = vpop.f32.mrf.mxu0
      %v5915 = vadd.f32 %v5802, %v5914
      %5916 = vmatmul.f32.gmra.mxu0 %v4921
      %v5917 = vpop.f32.mrf.mxu0
      %v5918 = vadd.f32 %v5805, %v5917
      %5919 = vmatmul.f32.gmra.mxu0 %v5567
      %v5920 = vpop.f32.mrf.mxu0
      %v5921 = vadd.f32 %v5808, %v5920
      %5922 = vmatmul.f32.gmra.mxu0 %v4930
      %v5923 = vpop.f32.mrf.mxu0
      %v5924 = vadd.f32 %v5811, %v5923
      %5925 = vmatmul.f32.gmra.mxu0 %v5570
      %v5926 = vpop.f32.mrf.mxu0
      %v5927 = vadd.f32 %v5814, %v5926
      %5928 = vmatmul.f32.gmra.mxu0 %v4939
      %v5929 = vpop.f32.mrf.mxu0
      %v5930 = vadd.f32 %v5817, %v5929
      %5931 = vmatmul.f32.gmra.mxu0 %v5573
      %v5932 = vpop.f32.mrf.mxu0
      %v5933 = vadd.f32 %v5820, %v5932
      %5934 = vmatmul.f32.gmra.mxu0 %v4948
      %v5935 = vpop.f32.mrf.mxu0
      %v5936 = vadd.f32 %v5823, %v5935
      %5937 = vmatmul.f32.gmra.mxu0 %v5576
      %v5938 = vpop.f32.mrf.mxu0
      %v5939 = vadd.f32 %v5826, %v5938
      %5940 = vmatmul.f32.gmra.mxu0 %v4957
      %v5941 = vpop.f32.mrf.mxu0
      %v5942 = vadd.f32 %v5829, %v5941
      %5943 = vmatmul.f32.gmra.mxu0 %v5579
      %v5944 = vpop.f32.mrf.mxu0
      %v5945 = vadd.f32 %v5832, %v5944
      %5946 = vmatmul.f32.gmra.mxu0 %v4966
      %v5947 = vpop.f32.mrf.mxu0
      %v5948 = vadd.f32 %v5835, %v5947
      %5949 = vmatmul.f32.gmra.mxu0 %v5582
      %v5950 = vpop.f32.mrf.mxu0
      %v5951 = vadd.f32 %v5838, %v5950
      %5952 = vmatmul.f32.gmra.mxu0 %v4975
      %v5953 = vpop.f32.mrf.mxu0
      %v5954 = vadd.f32 %v5841, %v5953
      %5955 = vmatmul.f32.gmra.mxu0 %v5585
      %v5956 = vpop.f32.mrf.mxu0
      %v5957 = vadd.f32 %v5844, %v5956
      %5958 = vmatmul.f32.gmra.mxu0 %v4984
      %v5959 = vpop.f32.mrf.mxu0
      %v5960 = vadd.f32 %v5847, %v5959
      %5961 = vmatmul.f32.gmra.mxu0 %v5588
      %v5962 = vpop.f32.mrf.mxu0
      %v5963 = vadd.f32 %v5850, %v5962
      %5964 = vmatmul.f32.gmra.mxu0 %v4993
      %v5965 = vpop.f32.mrf.mxu0
      %v5966 = vadd.f32 %v5853, %v5965
      %5967 = vmatmul.f32.gmra.mxu0 %v5591
      %v5968 = vpop.f32.mrf.mxu0
      %v5969 = vadd.f32 %v5856, %v5968
      %5970 = vmatmul.f32.gmra.mxu0 %v5002
      %v5971 = vpop.f32.mrf.mxu0
      %v5972 = vadd.f32 %v5859, %v5971
      %5973 = vmatmul.f32.gmra.mxu0 %v5594
      %v5974 = vpop.f32.mrf.mxu0
      %v5975 = vadd.f32 %v5862, %v5974
      %5976 = vmatmul.f32.gmra.mxu0 %v5011
      %v5977 = vpop.f32.mrf.mxu0
      %v5978 = vadd.f32 %v5865, %v5977
      %5979 = vmatmul.f32.gmra.mxu0 %v5597
      %v5980 = vpop.f32.mrf.mxu0
      %v5981 = vadd.f32 %v5868, %v5980
      %5982 = vmatmul.f32.gmra.mxu0 %v5020
      %v5983 = vpop.f32.mrf.mxu0
      %v5984 = vadd.f32 %v5871, %v5983
      %5985 = vmatmul.f32.gmra.mxu0 %v5600
      %v5986 = vpop.f32.mrf.mxu0
      %v5987 = vadd.f32 %v5874, %v5986
      %5988 = vdwg.mxu0
      %5989 = vmatpush.msra.mxu0 %v5520
      %5990 = vmatpush.msra.mxu0 %v5519
      %5991 = vmatpush.msra.mxu0 %v5518
      %5992 = vmatpush.msra.mxu0 %v5517
      %5993 = vmatpush.msra.mxu0 %v5516
      %5994 = vmatpush.msra.mxu0 %v5515
      %5995 = vmatpush.msra.mxu0 %v5514
      %5996 = vmatpush.msra.mxu0 %v5513
      %5997 = vmatpush.msra.mxu0 %v5512
      %5998 = vmatpush.msra.mxu0 %v5511
      %5999 = vmatpush.msra.mxu0 %v5510
      %6000 = vmatpush.msra.mxu0 %v5509
      %6001 = vmatpush.msra.mxu0 %v5508
      %6002 = vmatpush.msra.mxu0 %v5507
      %6003 = vmatpush.msra.mxu0 %v5506
      %6004 = vmatpush.msra.mxu0 %v5505
      %6005 = vmatmul.f32.gmra.mxu0 %v5171
      %v6006 = vpop.f32.mrf.mxu0
      %v6007 = vadd.f32 %v5894, %v6006
      %6008 = vmatmul.f32.gmra.mxu0 %v5179
      %v6009 = vpop.f32.mrf.mxu0
      %v6010 = vadd.f32 %v5897, %v6009
      %6011 = vmatmul.f32.gmra.mxu0 %v5186
      %v6012 = vpop.f32.mrf.mxu0
      %v6013 = vadd.f32 %v5900, %v6012
      %6014 = vmatmul.f32.gmra.mxu0 %v5194
      %v6015 = vpop.f32.mrf.mxu0
      %v6016 = vadd.f32 %v5903, %v6015
      %6017 = vmatmul.f32.gmra.mxu0 %v5201
      %v6018 = vpop.f32.mrf.mxu0
      %v6019 = vadd.f32 %v5906, %v6018
      %6020 = vmatmul.f32.gmra.mxu0 %v5209
      %v6021 = vpop.f32.mrf.mxu0
      %v6022 = vadd.f32 %v5909, %v6021
      %6023 = vmatmul.f32.gmra.mxu0 %v5216
      %v6024 = vpop.f32.mrf.mxu0
      %v6025 = vadd.f32 %v5912, %v6024
      %6026 = vmatmul.f32.gmra.mxu0 %v5224
      %v6027 = vpop.f32.mrf.mxu0
      %v6028 = vadd.f32 %v5915, %v6027
      %6029 = vmatmul.f32.gmra.mxu0 %v5231
      %v6030 = vpop.f32.mrf.mxu0
      %v6031 = vadd.f32 %v5918, %v6030
      %6032 = vmatmul.f32.gmra.mxu0 %v5239
      %v6033 = vpop.f32.mrf.mxu0
      %v6034 = vadd.f32 %v5921, %v6033
      %6035 = vmatmul.f32.gmra.mxu0 %v5246
      %v6036 = vpop.f32.mrf.mxu0
      %v6037 = vadd.f32 %v5924, %v6036
      %6038 = vmatmul.f32.gmra.mxu0 %v5254
      %v6039 = vpop.f32.mrf.mxu0
      %v6040 = vadd.f32 %v5927, %v6039
      %6041 = vmatmul.f32.gmra.mxu0 %v5261
      %v6042 = vpop.f32.mrf.mxu0
      %v6043 = vadd.f32 %v5930, %v6042
      %6044 = vmatmul.f32.gmra.mxu0 %v5269
      %v6045 = vpop.f32.mrf.mxu0
      %v6046 = vadd.f32 %v5933, %v6045
      %6047 = vmatmul.f32.gmra.mxu0 %v5276
      %v6048 = vpop.f32.mrf.mxu0
      %v6049 = vadd.f32 %v5936, %v6048
      %6050 = vmatmul.f32.gmra.mxu0 %v5284
      %v6051 = vpop.f32.mrf.mxu0
      %v6052 = vadd.f32 %v5939, %v6051
      %6053 = vmatmul.f32.gmra.mxu0 %v5291
      %v6054 = vpop.f32.mrf.mxu0
      %v6055 = vadd.f32 %v5942, %v6054
      %6056 = vmatmul.f32.gmra.mxu0 %v5299
      %v6057 = vpop.f32.mrf.mxu0
      %v6058 = vadd.f32 %v5945, %v6057
      %6059 = vmatmul.f32.gmra.mxu0 %v5306
      %v6060 = vpop.f32.mrf.mxu0
      %v6061 = vadd.f32 %v5948, %v6060
      %6062 = vmatmul.f32.gmra.mxu0 %v5314
      %v6063 = vpop.f32.mrf.mxu0
      %v6064 = vadd.f32 %v5951, %v6063
      %6065 = vmatmul.f32.gmra.mxu0 %v5321
      %v6066 = vpop.f32.mrf.mxu0
      %v6067 = vadd.f32 %v5954, %v6066
      %6068 = vmatmul.f32.gmra.mxu0 %v5329
      %v6069 = vpop.f32.mrf.mxu0
      %v6070 = vadd.f32 %v5957, %v6069
      %6071 = vmatmul.f32.gmra.mxu0 %v5336
      %v6072 = vpop.f32.mrf.mxu0
      %v6073 = vadd.f32 %v5960, %v6072
      %6074 = vmatmul.f32.gmra.mxu0 %v5344
      %v6075 = vpop.f32.mrf.mxu0
      %v6076 = vadd.f32 %v5963, %v6075
      %6077 = vmatmul.f32.gmra.mxu0 %v5351
      %v6078 = vpop.f32.mrf.mxu0
      %v6079 = vadd.f32 %v5966, %v6078
      %6080 = vmatmul.f32.gmra.mxu0 %v5359
      %v6081 = vpop.f32.mrf.mxu0
      %v6082 = vadd.f32 %v5969, %v6081
      %6083 = vmatmul.f32.gmra.mxu0 %v5366
      %v6084 = vpop.f32.mrf.mxu0
      %v6085 = vadd.f32 %v5972, %v6084
      %6086 = vmatmul.f32.gmra.mxu0 %v5374
      %v6087 = vpop.f32.mrf.mxu0
      %v6088 = vadd.f32 %v5975, %v6087
      %6089 = vmatmul.f32.gmra.mxu0 %v5381
      %v6090 = vpop.f32.mrf.mxu0
      %v6091 = vadd.f32 %v5978, %v6090
      %6092 = vmatmul.f32.gmra.mxu0 %v5389
      %v6093 = vpop.f32.mrf.mxu0
      %v6094 = vadd.f32 %v5981, %v6093
      %6095 = vmatmul.f32.gmra.mxu0 %v5396
      %v6096 = vpop.f32.mrf.mxu0
      %v6097 = vadd.f32 %v5984, %v6096
      %6098 = vmatmul.f32.gmra.mxu0 %v5404
      %v6099 = vpop.f32.mrf.mxu0
      %v6100 = vadd.f32 %v5987, %v6099
      %6101 = vdwg.mxu0
      %6102 = vmatpush.msra.mxu0 %v5536
      %6103 = vmatpush.msra.mxu0 %v5535
      %6104 = vmatpush.msra.mxu0 %v5534
      %6105 = vmatpush.msra.mxu0 %v5533
      %6106 = vmatpush.msra.mxu0 %v5532
      %6107 = vmatpush.msra.mxu0 %v5531
      %6108 = vmatpush.msra.mxu0 %v5530
      %6109 = vmatpush.msra.mxu0 %v5529
      %6110 = vmatpush.msra.mxu0 %v5528
      %6111 = vmatpush.msra.mxu0 %v5527
      %6112 = vmatpush.msra.mxu0 %v5526
      %6113 = vmatpush.msra.mxu0 %v5525
      %6114 = vmatpush.msra.mxu0 %v5524
      %6115 = vmatpush.msra.mxu0 %v5523
      %6116 = vmatpush.msra.mxu0 %v5522
      %6117 = vmatpush.msra.mxu0 %v5521
      %6118 = vmatmul.f32.gmra.mxu0 %v5174
      %v6119 = vpop.f32.mrf.mxu0
      %v6120 = vadd.f32 %v6007, %v6119
      %6121 = vmatmul.f32.gmra.mxu0 %v5181
      %v6122 = vpop.f32.mrf.mxu0
      %v6123 = vadd.f32 %v6010, %v6122
      %6124 = vmatmul.f32.gmra.mxu0 %v5189
      %v6125 = vpop.f32.mrf.mxu0
      %v6126 = vadd.f32 %v6013, %v6125
      %6127 = vmatmul.f32.gmra.mxu0 %v5196
      %v6128 = vpop.f32.mrf.mxu0
      %v6129 = vadd.f32 %v6016, %v6128
      %6130 = vmatmul.f32.gmra.mxu0 %v5204
      %v6131 = vpop.f32.mrf.mxu0
      %v6132 = vadd.f32 %v6019, %v6131
      %6133 = vmatmul.f32.gmra.mxu0 %v5211
      %v6134 = vpop.f32.mrf.mxu0
      %v6135 = vadd.f32 %v6022, %v6134
      %6136 = vmatmul.f32.gmra.mxu0 %v5219
      %v6137 = vpop.f32.mrf.mxu0
      %v6138 = vadd.f32 %v6025, %v6137
      %6139 = vmatmul.f32.gmra.mxu0 %v5226
      %v6140 = vpop.f32.mrf.mxu0
      %v6141 = vadd.f32 %v6028, %v6140
      %6142 = vmatmul.f32.gmra.mxu0 %v5234
      %v6143 = vpop.f32.mrf.mxu0
      %v6144 = vadd.f32 %v6031, %v6143
      %6145 = vmatmul.f32.gmra.mxu0 %v5241
      %v6146 = vpop.f32.mrf.mxu0
      %v6147 = vadd.f32 %v6034, %v6146
      %6148 = vmatmul.f32.gmra.mxu0 %v5249
      %v6149 = vpop.f32.mrf.mxu0
      %v6150 = vadd.f32 %v6037, %v6149
      %6151 = vmatmul.f32.gmra.mxu0 %v5256
      %v6152 = vpop.f32.mrf.mxu0
      %v6153 = vadd.f32 %v6040, %v6152
      %6154 = vmatmul.f32.gmra.mxu0 %v5264
      %v6155 = vpop.f32.mrf.mxu0
      %v6156 = vadd.f32 %v6043, %v6155
      %6157 = vmatmul.f32.gmra.mxu0 %v5271
      %v6158 = vpop.f32.mrf.mxu0
      %v6159 = vadd.f32 %v6046, %v6158
      %6160 = vmatmul.f32.gmra.mxu0 %v5279
      %v6161 = vpop.f32.mrf.mxu0
      %v6162 = vadd.f32 %v6049, %v6161
      %6163 = vmatmul.f32.gmra.mxu0 %v5286
      %v6164 = vpop.f32.mrf.mxu0
      %v6165 = vadd.f32 %v6052, %v6164
      %6166 = vmatmul.f32.gmra.mxu0 %v5294
      %v6167 = vpop.f32.mrf.mxu0
      %v6168 = vadd.f32 %v6055, %v6167
      %6169 = vmatmul.f32.gmra.mxu0 %v5301
      %v6170 = vpop.f32.mrf.mxu0
      %v6171 = vadd.f32 %v6058, %v6170
      %6172 = vmatmul.f32.gmra.mxu0 %v5309
      %v6173 = vpop.f32.mrf.mxu0
      %v6174 = vadd.f32 %v6061, %v6173
      %6175 = vmatmul.f32.gmra.mxu0 %v5316
      %v6176 = vpop.f32.mrf.mxu0
      %v6177 = vadd.f32 %v6064, %v6176
      %6178 = vmatmul.f32.gmra.mxu0 %v5324
      %v6179 = vpop.f32.mrf.mxu0
      %v6180 = vadd.f32 %v6067, %v6179
      %6181 = vmatmul.f32.gmra.mxu0 %v5331
      %v6182 = vpop.f32.mrf.mxu0
      %v6183 = vadd.f32 %v6070, %v6182
      %6184 = vmatmul.f32.gmra.mxu0 %v5339
      %v6185 = vpop.f32.mrf.mxu0
      %v6186 = vadd.f32 %v6073, %v6185
      %6187 = vmatmul.f32.gmra.mxu0 %v5346
      %v6188 = vpop.f32.mrf.mxu0
      %v6189 = vadd.f32 %v6076, %v6188
      %6190 = vmatmul.f32.gmra.mxu0 %v5354
      %v6191 = vpop.f32.mrf.mxu0
      %v6192 = vadd.f32 %v6079, %v6191
      %6193 = vmatmul.f32.gmra.mxu0 %v5361
      %v6194 = vpop.f32.mrf.mxu0
      %v6195 = vadd.f32 %v6082, %v6194
      %6196 = vmatmul.f32.gmra.mxu0 %v5369
      %v6197 = vpop.f32.mrf.mxu0
      %v6198 = vadd.f32 %v6085, %v6197
      %6199 = vmatmul.f32.gmra.mxu0 %v5376
      %v6200 = vpop.f32.mrf.mxu0
      %v6201 = vadd.f32 %v6088, %v6200
      %6202 = vmatmul.f32.gmra.mxu0 %v5384
      %v6203 = vpop.f32.mrf.mxu0
      %v6204 = vadd.f32 %v6091, %v6203
      %6205 = vmatmul.f32.gmra.mxu0 %v5391
      %v6206 = vpop.f32.mrf.mxu0
      %v6207 = vadd.f32 %v6094, %v6206
      %6208 = vmatmul.f32.gmra.mxu0 %v5399
      %v6209 = vpop.f32.mrf.mxu0
      %v6210 = vadd.f32 %v6097, %v6209
      %6211 = vmatmul.f32.gmra.mxu0 %v5406
      %v6212 = vpop.f32.mrf.mxu0
      %v6213 = vadd.f32 %v6100, %v6212
      %6214 = vdwg.mxu0
      %6215 = vmatpush.msra.mxu0 %v5552
      %6216 = vmatpush.msra.mxu0 %v5551
      %6217 = vmatpush.msra.mxu0 %v5550
      %6218 = vmatpush.msra.mxu0 %v5549
      %6219 = vmatpush.msra.mxu0 %v5548
      %6220 = vmatpush.msra.mxu0 %v5547
      %6221 = vmatpush.msra.mxu0 %v5546
      %6222 = vmatpush.msra.mxu0 %v5545
      %6223 = vmatpush.msra.mxu0 %v5544
      %6224 = vmatpush.msra.mxu0 %v5543
      %6225 = vmatpush.msra.mxu0 %v5542
      %6226 = vmatpush.msra.mxu0 %v5541
      %6227 = vmatpush.msra.mxu0 %v5540
      %6228 = vmatpush.msra.mxu0 %v5539
      %6229 = vmatpush.msra.mxu0 %v5538
      %6230 = vmatpush.msra.mxu0 %v5537
      %6231 = vmatmul.f32.gmra.mxu0 %v5177
      %v6232 = vpop.f32.mrf.mxu0
      %v6233 = vadd.f32 %v6120, %v6232
      %6234 = vmatmul.f32.gmra.mxu0 %v5183
      %v6235 = vpop.f32.mrf.mxu0
      %v6236 = vadd.f32 %v6123, %v6235
      %6237 = vmatmul.f32.gmra.mxu0 %v5192
      %v6238 = vpop.f32.mrf.mxu0
      %v6239 = vadd.f32 %v6126, %v6238
      %6240 = vmatmul.f32.gmra.mxu0 %v5198
      %v6241 = vpop.f32.mrf.mxu0
      %v6242 = vadd.f32 %v6129, %v6241
      %6243 = vmatmul.f32.gmra.mxu0 %v5207
      %v6244 = vpop.f32.mrf.mxu0
      %v6245 = vadd.f32 %v6132, %v6244
      %6246 = vmatmul.f32.gmra.mxu0 %v5213
      %v6247 = vpop.f32.mrf.mxu0
      %v6248 = vadd.f32 %v6135, %v6247
      %6249 = vmatmul.f32.gmra.mxu0 %v5222
      %v6250 = vpop.f32.mrf.mxu0
      %v6251 = vadd.f32 %v6138, %v6250
      %6252 = vmatmul.f32.gmra.mxu0 %v5228
      %v6253 = vpop.f32.mrf.mxu0
      %v6254 = vadd.f32 %v6141, %v6253
      %6255 = vmatmul.f32.gmra.mxu0 %v5237
      %v6256 = vpop.f32.mrf.mxu0
      %v6257 = vadd.f32 %v6144, %v6256
      %6258 = vmatmul.f32.gmra.mxu0 %v5243
      %v6259 = vpop.f32.mrf.mxu0
      %v6260 = vadd.f32 %v6147, %v6259
      %6261 = vmatmul.f32.gmra.mxu0 %v5252
      %v6262 = vpop.f32.mrf.mxu0
      %v6263 = vadd.f32 %v6150, %v6262
      %6264 = vmatmul.f32.gmra.mxu0 %v5258
      %v6265 = vpop.f32.mrf.mxu0
      %v6266 = vadd.f32 %v6153, %v6265
      %6267 = vmatmul.f32.gmra.mxu0 %v5267
      %v6268 = vpop.f32.mrf.mxu0
      %v6269 = vadd.f32 %v6156, %v6268
      %6270 = vmatmul.f32.gmra.mxu0 %v5273
      %v6271 = vpop.f32.mrf.mxu0
      %v6272 = vadd.f32 %v6159, %v6271
      %6273 = vmatmul.f32.gmra.mxu0 %v5282
      %v6274 = vpop.f32.mrf.mxu0
      %v6275 = vadd.f32 %v6162, %v6274
      %6276 = vmatmul.f32.gmra.mxu0 %v5288
      %v6277 = vpop.f32.mrf.mxu0
      %v6278 = vadd.f32 %v6165, %v6277
      %6279 = vmatmul.f32.gmra.mxu0 %v5297
      %v6280 = vpop.f32.mrf.mxu0
      %v6281 = vadd.f32 %v6168, %v6280
      %6282 = vmatmul.f32.gmra.mxu0 %v5303
      %v6283 = vpop.f32.mrf.mxu0
      %v6284 = vadd.f32 %v6171, %v6283
      %6285 = vmatmul.f32.gmra.mxu0 %v5312
      %v6286 = vpop.f32.mrf.mxu0
      %v6287 = vadd.f32 %v6174, %v6286
      %6288 = vmatmul.f32.gmra.mxu0 %v5318
      %v6289 = vpop.f32.mrf.mxu0
      %v6290 = vadd.f32 %v6177, %v6289
      %6291 = vmatmul.f32.gmra.mxu0 %v5327
      %v6292 = vpop.f32.mrf.mxu0
      %v6293 = vadd.f32 %v6180, %v6292
      %6294 = vmatmul.f32.gmra.mxu0 %v5333
      %v6295 = vpop.f32.mrf.mxu0
      %v6296 = vadd.f32 %v6183, %v6295
      %6297 = vmatmul.f32.gmra.mxu0 %v5342
      %v6298 = vpop.f32.mrf.mxu0
      %v6299 = vadd.f32 %v6186, %v6298
      %6300 = vmatmul.f32.gmra.mxu0 %v5348
      %v6301 = vpop.f32.mrf.mxu0
      %v6302 = vadd.f32 %v6189, %v6301
      %6303 = vmatmul.f32.gmra.mxu0 %v5357
      %v6304 = vpop.f32.mrf.mxu0
      %v6305 = vadd.f32 %v6192, %v6304
      %6306 = vmatmul.f32.gmra.mxu0 %v5363
      %v6307 = vpop.f32.mrf.mxu0
      %v6308 = vadd.f32 %v6195, %v6307
      %6309 = vmatmul.f32.gmra.mxu0 %v5372
      %v6310 = vpop.f32.mrf.mxu0
      %v6311 = vadd.f32 %v6198, %v6310
      %6312 = vmatmul.f32.gmra.mxu0 %v5378
      %v6313 = vpop.f32.mrf.mxu0
      %v6314 = vadd.f32 %v6201, %v6313
      %6315 = vmatmul.f32.gmra.mxu0 %v5387
      %v6316 = vpop.f32.mrf.mxu0
      %v6317 = vadd.f32 %v6204, %v6316
      %6318 = vmatmul.f32.gmra.mxu0 %v5393
      %v6319 = vpop.f32.mrf.mxu0
      %v6320 = vadd.f32 %v6207, %v6319
      %6321 = vmatmul.f32.gmra.mxu0 %v5402
      %v6322 = vpop.f32.mrf.mxu0
      %v6323 = vadd.f32 %v6210, %v6322
      %6324 = vmatmul.f32.gmra.mxu0 %v5408
      %v6325 = vpop.f32.mrf.mxu0
      %v6326 = vadd.f32 %v6213, %v6325
      %6327 = vdwg.mxu0
      %v6328 = vld [vmem:[#allocation3 + $0x18] sm:$0xfe]
      %v6329 = vld [vmem:[#allocation3 + $0x20] sm:$0xfe]
      %v6330 = vld [vmem:[#allocation3 + $0x28] sm:$0xfe]
      %v6331 = vld [vmem:[#allocation3 + $0x30] sm:$0xff]
      %v6332 = vld [vmem:[#allocation3 + $0x38] sm:$0xff]
      %v6333 = vld [vmem:[#allocation3 + $0x40] sm:$0xff]
      %v6334 = vld [vmem:[#allocation3 + $0x48] sm:$0x1]
      %v6335 = vld [vmem:[#allocation3 + $0x50] sm:$0x1]
      %v6336 = vld [vmem:[#allocation3 + $0x58] sm:$0x1]
      %v6337 = vld [vmem:[#allocation3 + $0x78] sm:$0xfe]
      %v6338 = vld [vmem:[#allocation3 + $0x80] sm:$0xfe]
      %v6339 = vld [vmem:[#allocation3 + $0x88] sm:$0xfe]
      %v6340 = vld [vmem:[#allocation3 + $0x90] sm:$0xff]
      %v6341 = vld [vmem:[#allocation3 + $0x98] sm:$0xff]
      %v6342 = vld [vmem:[#allocation3 + $0xa0] sm:$0xff]
      %v6343 = vld [vmem:[#allocation3 + $0xa8] sm:$0x1]
      %v6344 = vld [vmem:[#allocation3 + $0xb0] sm:$0x1]
      %v6345 = vld [vmem:[#allocation3 + $0xb8] sm:$0x1]
      %v6346 = vld [vmem:[#allocation3 + $0xd8] sm:$0xfe]
      %v6347 = vld [vmem:[#allocation3 + $0xe0] sm:$0xfe]
      %v6348 = vld [vmem:[#allocation3 + $0xe8] sm:$0xfe]
      %v6349 = vld [vmem:[#allocation3 + $0xf0] sm:$0xff]
      %v6350 = vld [vmem:[#allocation3 + $0xf8] sm:$0xff]
      %v6351 = vld [vmem:[#allocation3 + $0x100] sm:$0xff]
      %v6352 = vld [vmem:[#allocation3 + $0x108] sm:$0x1]
      %v6353 = vld [vmem:[#allocation3 + $0x110] sm:$0x1]
      %v6354 = vld [vmem:[#allocation3 + $0x118] sm:$0x1]
      %v6355 = vld [vmem:[#allocation3 + $0x138] sm:$0xfe]
      %v6356 = vld [vmem:[#allocation3 + $0x140] sm:$0xfe]
      %v6357 = vld [vmem:[#allocation3 + $0x148] sm:$0xfe]
      %v6358 = vld [vmem:[#allocation3 + $0x150] sm:$0xff]
      %v6359 = vld [vmem:[#allocation3 + $0x158] sm:$0xff]
      %v6360 = vld [vmem:[#allocation3 + $0x160] sm:$0xff]
      %v6361 = vld [vmem:[#allocation3 + $0x168] sm:$0x1]
      %v6362 = vld [vmem:[#allocation3 + $0x170] sm:$0x1]
      %v6363 = vld [vmem:[#allocation3 + $0x178] sm:$0x1]
      %v6364 = vld [vmem:[#allocation3 + $0x198] sm:$0xfe]
      %v6365 = vld [vmem:[#allocation3 + $0x1a0] sm:$0xfe]
      %v6366 = vld [vmem:[#allocation3 + $0x1a8] sm:$0xfe]
      %v6367 = vld [vmem:[#allocation3 + $0x1b0] sm:$0xff]
      %v6368 = vld [vmem:[#allocation3 + $0x1b8] sm:$0xff]
      %v6369 = vld [vmem:[#allocation3 + $0x1c0] sm:$0xff]
      %v6370 = vld [vmem:[#allocation3 + $0x1c8] sm:$0x1]
      %v6371 = vld [vmem:[#allocation3 + $0x1d0] sm:$0x1]
      %v6372 = vld [vmem:[#allocation3 + $0x1d8] sm:$0x1]
      %v6373 = vld [vmem:[#allocation3 + $0x1f8] sm:$0xfe]
      %v6374 = vld [vmem:[#allocation3 + $0x200] sm:$0xfe]
      %v6375 = vld [vmem:[#allocation3 + $0x208] sm:$0xfe]
      %v6376 = vld [vmem:[#allocation3 + $0x210] sm:$0xff]
      %v6377 = vld [vmem:[#allocation3 + $0x218] sm:$0xff]
      %v6378 = vld [vmem:[#allocation3 + $0x220] sm:$0xff]
      %v6379 = vld [vmem:[#allocation3 + $0x228] sm:$0x1]
      %v6380 = vld [vmem:[#allocation3 + $0x230] sm:$0x1]
      %v6381 = vld [vmem:[#allocation3 + $0x238] sm:$0x1]
      %v6382 = vld [vmem:[#allocation3 + $0x258] sm:$0xfe]
      %v6383 = vld [vmem:[#allocation3 + $0x260] sm:$0xfe]
      %v6384 = vld [vmem:[#allocation3 + $0x268] sm:$0xfe]
      %v6385 = vld [vmem:[#allocation3 + $0x270] sm:$0xff]
      %v6386 = vld [vmem:[#allocation3 + $0x278] sm:$0xff]
      %v6387 = vld [vmem:[#allocation3 + $0x280] sm:$0xff]
      %v6388 = vld [vmem:[#allocation3 + $0x288] sm:$0x1]
      %v6389 = vld [vmem:[#allocation3 + $0x290] sm:$0x1]
      %v6390 = vld [vmem:[#allocation3 + $0x298] sm:$0x1]
      %v6391 = vld [vmem:[#allocation3 + $0x2b8] sm:$0xfe]
      %v6392 = vld [vmem:[#allocation3 + $0x2c0] sm:$0xfe]
      %v6393 = vld [vmem:[#allocation3 + $0x2c8] sm:$0xfe]
      %v6394 = vld [vmem:[#allocation3 + $0x2d0] sm:$0xff]
      %v6395 = vld [vmem:[#allocation3 + $0x2d8] sm:$0xff]
      %v6396 = vld [vmem:[#allocation3 + $0x2e0] sm:$0xff]
      %v6397 = vld [vmem:[#allocation3 + $0x2e8] sm:$0x1]
      %v6398 = vld [vmem:[#allocation3 + $0x2f0] sm:$0x1]
      %v6399 = vld [vmem:[#allocation3 + $0x2f8] sm:$0x1]
      %v6400 = vld [vmem:[#allocation3 + $0x318] sm:$0xfe]
      %v6401 = vld [vmem:[#allocation3 + $0x320] sm:$0xfe]
      %v6402 = vld [vmem:[#allocation3 + $0x328] sm:$0xfe]
      %v6403 = vld [vmem:[#allocation3 + $0x330] sm:$0xff]
      %v6404 = vld [vmem:[#allocation3 + $0x338] sm:$0xff]
      %v6405 = vld [vmem:[#allocation3 + $0x340] sm:$0xff]
      %v6406 = vld [vmem:[#allocation3 + $0x348] sm:$0x1]
      %v6407 = vld [vmem:[#allocation3 + $0x350] sm:$0x1]
      %v6408 = vld [vmem:[#allocation3 + $0x358] sm:$0x1]
      %v6409 = vld [vmem:[#allocation3 + $0x378] sm:$0xfe]
      %v6410 = vld [vmem:[#allocation3 + $0x380] sm:$0xfe]
      %v6411 = vld [vmem:[#allocation3 + $0x388] sm:$0xfe]
      %v6412 = vld [vmem:[#allocation3 + $0x390] sm:$0xff]
      %v6413 = vld [vmem:[#allocation3 + $0x398] sm:$0xff]
      %v6414 = vld [vmem:[#allocation3 + $0x3a0] sm:$0xff]
      %v6415 = vld [vmem:[#allocation3 + $0x3a8] sm:$0x1]
      %v6416 = vld [vmem:[#allocation3 + $0x3b0] sm:$0x1]
      %v6417 = vld [vmem:[#allocation3 + $0x3b8] sm:$0x1]
      %v6418 = vld [vmem:[#allocation3 + $0x3d8] sm:$0xfe]
      %v6419 = vld [vmem:[#allocation3 + $0x3e0] sm:$0xfe]
      %v6420 = vld [vmem:[#allocation3 + $0x3e8] sm:$0xfe]
      %v6421 = vld [vmem:[#allocation3 + $0x3f0] sm:$0xff]
      %v6422 = vld [vmem:[#allocation3 + $0x3f8] sm:$0xff]
      %v6423 = vld [vmem:[#allocation3 + $0x400] sm:$0xff]
      %v6424 = vld [vmem:[#allocation3 + $0x408] sm:$0x1]
      %v6425 = vld [vmem:[#allocation3 + $0x410] sm:$0x1]
      %v6426 = vld [vmem:[#allocation3 + $0x418] sm:$0x1]
      %v6427 = vld [vmem:[#allocation3 + $0x438] sm:$0xfe]
      %v6428 = vld [vmem:[#allocation3 + $0x440] sm:$0xfe]
      %v6429 = vld [vmem:[#allocation3 + $0x448] sm:$0xfe]
      %v6430 = vld [vmem:[#allocation3 + $0x450] sm:$0xff]
      %v6431 = vld [vmem:[#allocation3 + $0x458] sm:$0xff]
      %v6432 = vld [vmem:[#allocation3 + $0x460] sm:$0xff]
      %v6433 = vld [vmem:[#allocation3 + $0x468] sm:$0x1]
      %v6434 = vld [vmem:[#allocation3 + $0x470] sm:$0x1]
      %v6435 = vld [vmem:[#allocation3 + $0x478] sm:$0x1]
      %v6436 = vld [vmem:[#allocation3 + $0x498] sm:$0xfe]
      %v6437 = vld [vmem:[#allocation3 + $0x4a0] sm:$0xfe]
      %v6438 = vld [vmem:[#allocation3 + $0x4a8] sm:$0xfe]
      %v6439 = vld [vmem:[#allocation3 + $0x4b0] sm:$0xff]
      %v6440 = vld [vmem:[#allocation3 + $0x4b8] sm:$0xff]
      %v6441 = vld [vmem:[#allocation3 + $0x4c0] sm:$0xff]
      %v6442 = vld [vmem:[#allocation3 + $0x4c8] sm:$0x1]
      %v6443 = vld [vmem:[#allocation3 + $0x4d0] sm:$0x1]
      %v6444 = vld [vmem:[#allocation3 + $0x4d8] sm:$0x1]
      %v6445 = vld [vmem:[#allocation3 + $0x4f8] sm:$0xfe]
      %v6446 = vld [vmem:[#allocation3 + $0x500] sm:$0xfe]
      %v6447 = vld [vmem:[#allocation3 + $0x508] sm:$0xfe]
      %v6448 = vld [vmem:[#allocation3 + $0x510] sm:$0xff]
      %v6449 = vld [vmem:[#allocation3 + $0x518] sm:$0xff]
      %v6450 = vld [vmem:[#allocation3 + $0x520] sm:$0xff]
      %v6451 = vld [vmem:[#allocation3 + $0x528] sm:$0x1]
      %v6452 = vld [vmem:[#allocation3 + $0x530] sm:$0x1]
      %v6453 = vld [vmem:[#allocation3 + $0x538] sm:$0x1]
      %v6454 = vld [vmem:[#allocation3 + $0x558] sm:$0xfe]
      %v6455 = vld [vmem:[#allocation3 + $0x560] sm:$0xfe]
      %v6456 = vld [vmem:[#allocation3 + $0x568] sm:$0xfe]
      %v6457 = vld [vmem:[#allocation3 + $0x570] sm:$0xff]
      %v6458 = vld [vmem:[#allocation3 + $0x578] sm:$0xff]
      %v6459 = vld [vmem:[#allocation3 + $0x580] sm:$0xff]
      %v6460 = vld [vmem:[#allocation3 + $0x588] sm:$0x1]
      %v6461 = vld [vmem:[#allocation3 + $0x590] sm:$0x1]
      %v6462 = vld [vmem:[#allocation3 + $0x598] sm:$0x1]
      %v6463 = vld [vmem:[#allocation3 + $0x5b8] sm:$0xfe]
      %v6464 = vld [vmem:[#allocation3 + $0x5c0] sm:$0xfe]
      %v6465 = vld [vmem:[#allocation3 + $0x5c8] sm:$0xfe]
      %v6466 = vld [vmem:[#allocation3 + $0x5d0] sm:$0xff]
      %v6467 = vld [vmem:[#allocation3 + $0x5d8] sm:$0xff]
      %v6468 = vld [vmem:[#allocation3 + $0x5e0] sm:$0xff]
      %v6469 = vld [vmem:[#allocation3 + $0x5e8] sm:$0x1]
      %v6470 = vld [vmem:[#allocation3 + $0x5f0] sm:$0x1]
      %v6471 = vld [vmem:[#allocation3 + $0x5f8] sm:$0x1]
      %v6616 = vrot.slane %v6328, 1
      %v6617 = vrot.slane %v6331, 1
      %v6618 = vsel %vm710, %v6616, %v6617
      %v6619 = vrot.slane %v6329, 1
      %v6620 = vrot.slane %v6332, 1
      %v6621 = vsel %vm710, %v6619, %v6620
      %v6622 = vrot.slane %v6330, 1
      %v6623 = vrot.slane %v6333, 1
      %v6624 = vsel %vm710, %v6622, %v6623
      %v6625 = vrot.slane %v6334, 1
      %v6626 = vsel %vm710, %v6617, %v6625
      %v6627 = vrot.slane %v6335, 1
      %v6628 = vsel %vm710, %v6620, %v6627
      %v6629 = vrot.slane %v6336, 1
      %v6630 = vsel %vm710, %v6623, %v6629
      %v6631 = vrot.slane %v6337, 1
      %v6632 = vrot.slane %v6340, 1
      %v6633 = vsel %vm710, %v6631, %v6632
      %v6634 = vrot.slane %v6338, 1
      %v6635 = vrot.slane %v6341, 1
      %v6636 = vsel %vm710, %v6634, %v6635
      %v6637 = vrot.slane %v6339, 1
      %v6638 = vrot.slane %v6342, 1
      %v6639 = vsel %vm710, %v6637, %v6638
      %v6640 = vrot.slane %v6343, 1
      %v6641 = vsel %vm710, %v6632, %v6640
      %v6642 = vrot.slane %v6344, 1
      %v6643 = vsel %vm710, %v6635, %v6642
      %v6644 = vrot.slane %v6345, 1
      %v6645 = vsel %vm710, %v6638, %v6644
      %v6646 = vrot.slane %v6346, 1
      %v6647 = vrot.slane %v6349, 1
      %v6648 = vsel %vm710, %v6646, %v6647
      %v6649 = vrot.slane %v6347, 1
      %v6650 = vrot.slane %v6350, 1
      %v6651 = vsel %vm710, %v6649, %v6650
      %v6652 = vrot.slane %v6348, 1
      %v6653 = vrot.slane %v6351, 1
      %v6654 = vsel %vm710, %v6652, %v6653
      %v6655 = vrot.slane %v6352, 1
      %v6656 = vsel %vm710, %v6647, %v6655
      %v6657 = vrot.slane %v6353, 1
      %v6658 = vsel %vm710, %v6650, %v6657
      %v6659 = vrot.slane %v6354, 1
      %v6660 = vsel %vm710, %v6653, %v6659
      %v6661 = vrot.slane %v6355, 1
      %v6662 = vrot.slane %v6358, 1
      %v6663 = vsel %vm710, %v6661, %v6662
      %v6664 = vrot.slane %v6356, 1
      %v6665 = vrot.slane %v6359, 1
      %v6666 = vsel %vm710, %v6664, %v6665
      %v6667 = vrot.slane %v6357, 1
      %v6668 = vrot.slane %v6360, 1
      %v6669 = vsel %vm710, %v6667, %v6668
      %v6670 = vrot.slane %v6361, 1
      %v6671 = vsel %vm710, %v6662, %v6670
      %v6672 = vrot.slane %v6362, 1
      %v6673 = vsel %vm710, %v6665, %v6672
      %v6674 = vrot.slane %v6363, 1
      %v6675 = vsel %vm710, %v6668, %v6674
      %v6676 = vrot.slane %v6364, 1
      %v6677 = vrot.slane %v6367, 1
      %v6678 = vsel %vm710, %v6676, %v6677
      %v6679 = vrot.slane %v6365, 1
      %v6680 = vrot.slane %v6368, 1
      %v6681 = vsel %vm710, %v6679, %v6680
      %v6682 = vrot.slane %v6366, 1
      %v6683 = vrot.slane %v6369, 1
      %v6684 = vsel %vm710, %v6682, %v6683
      %v6685 = vrot.slane %v6370, 1
      %v6686 = vsel %vm710, %v6677, %v6685
      %v6687 = vrot.slane %v6371, 1
      %v6688 = vsel %vm710, %v6680, %v6687
      %v6689 = vrot.slane %v6372, 1
      %v6690 = vsel %vm710, %v6683, %v6689
      %v6691 = vrot.slane %v6373, 1
      %v6692 = vrot.slane %v6376, 1
      %v6693 = vsel %vm710, %v6691, %v6692
      %v6694 = vrot.slane %v6374, 1
      %v6695 = vrot.slane %v6377, 1
      %v6696 = vsel %vm710, %v6694, %v6695
      %v6697 = vrot.slane %v6375, 1
      %v6698 = vrot.slane %v6378, 1
      %v6699 = vsel %vm710, %v6697, %v6698
      %v6700 = vrot.slane %v6379, 1
      %v6701 = vsel %vm710, %v6692, %v6700
      %v6702 = vrot.slane %v6380, 1
      %v6703 = vsel %vm710, %v6695, %v6702
      %v6704 = vrot.slane %v6381, 1
      %v6705 = vsel %vm710, %v6698, %v6704
      %v6706 = vrot.slane %v6382, 1
      %v6707 = vrot.slane %v6385, 1
      %v6708 = vsel %vm710, %v6706, %v6707
      %v6709 = vrot.slane %v6383, 1
      %v6710 = vrot.slane %v6386, 1
      %v6711 = vsel %vm710, %v6709, %v6710
      %v6712 = vrot.slane %v6384, 1
      %v6713 = vrot.slane %v6387, 1
      %v6714 = vsel %vm710, %v6712, %v6713
      %v6715 = vrot.slane %v6388, 1
      %v6716 = vsel %vm710, %v6707, %v6715
      %v6717 = vrot.slane %v6389, 1
      %v6718 = vsel %vm710, %v6710, %v6717
      %v6719 = vrot.slane %v6390, 1
      %v6720 = vsel %vm710, %v6713, %v6719
      %v6721 = vrot.slane %v6391, 1
      %v6722 = vrot.slane %v6394, 1
      %v6723 = vsel %vm710, %v6721, %v6722
      %v6724 = vrot.slane %v6392, 1
      %v6725 = vrot.slane %v6395, 1
      %v6726 = vsel %vm710, %v6724, %v6725
      %v6727 = vrot.slane %v6393, 1
      %v6728 = vrot.slane %v6396, 1
      %v6729 = vsel %vm710, %v6727, %v6728
      %v6730 = vrot.slane %v6397, 1
      %v6731 = vsel %vm710, %v6722, %v6730
      %v6732 = vrot.slane %v6398, 1
      %v6733 = vsel %vm710, %v6725, %v6732
      %v6734 = vrot.slane %v6399, 1
      %v6735 = vsel %vm710, %v6728, %v6734
      %v6736 = vrot.slane %v6400, 1
      %v6737 = vrot.slane %v6403, 1
      %v6738 = vsel %vm710, %v6736, %v6737
      %v6739 = vrot.slane %v6401, 1
      %v6740 = vrot.slane %v6404, 1
      %v6741 = vsel %vm710, %v6739, %v6740
      %v6742 = vrot.slane %v6402, 1
      %v6743 = vrot.slane %v6405, 1
      %v6744 = vsel %vm710, %v6742, %v6743
      %v6745 = vrot.slane %v6406, 1
      %v6746 = vsel %vm710, %v6737, %v6745
      %v6747 = vrot.slane %v6407, 1
      %v6748 = vsel %vm710, %v6740, %v6747
      %v6749 = vrot.slane %v6408, 1
      %v6750 = vsel %vm710, %v6743, %v6749
      %v6751 = vrot.slane %v6409, 1
      %v6752 = vrot.slane %v6412, 1
      %v6753 = vsel %vm710, %v6751, %v6752
      %v6754 = vrot.slane %v6410, 1
      %v6755 = vrot.slane %v6413, 1
      %v6756 = vsel %vm710, %v6754, %v6755
      %v6757 = vrot.slane %v6411, 1
      %v6758 = vrot.slane %v6414, 1
      %v6759 = vsel %vm710, %v6757, %v6758
      %v6760 = vrot.slane %v6415, 1
      %v6761 = vsel %vm710, %v6752, %v6760
      %v6762 = vrot.slane %v6416, 1
      %v6763 = vsel %vm710, %v6755, %v6762
      %v6764 = vrot.slane %v6417, 1
      %v6765 = vsel %vm710, %v6758, %v6764
      %v6766 = vrot.slane %v6418, 1
      %v6767 = vrot.slane %v6421, 1
      %v6768 = vsel %vm710, %v6766, %v6767
      %v6769 = vrot.slane %v6419, 1
      %v6770 = vrot.slane %v6422, 1
      %v6771 = vsel %vm710, %v6769, %v6770
      %v6772 = vrot.slane %v6420, 1
      %v6773 = vrot.slane %v6423, 1
      %v6774 = vsel %vm710, %v6772, %v6773
      %v6775 = vrot.slane %v6424, 1
      %v6776 = vsel %vm710, %v6767, %v6775
      %v6777 = vrot.slane %v6425, 1
      %v6778 = vsel %vm710, %v6770, %v6777
      %v6779 = vrot.slane %v6426, 1
      %v6780 = vsel %vm710, %v6773, %v6779
      %v6781 = vrot.slane %v6427, 1
      %v6782 = vrot.slane %v6430, 1
      %v6783 = vsel %vm710, %v6781, %v6782
      %v6784 = vrot.slane %v6428, 1
      %v6785 = vrot.slane %v6431, 1
      %v6786 = vsel %vm710, %v6784, %v6785
      %v6787 = vrot.slane %v6429, 1
      %v6788 = vrot.slane %v6432, 1
      %v6789 = vsel %vm710, %v6787, %v6788
      %v6790 = vrot.slane %v6433, 1
      %v6791 = vsel %vm710, %v6782, %v6790
      %v6792 = vrot.slane %v6434, 1
      %v6793 = vsel %vm710, %v6785, %v6792
      %v6794 = vrot.slane %v6435, 1
      %v6795 = vsel %vm710, %v6788, %v6794
      %v6796 = vrot.slane %v6436, 1
      %v6797 = vrot.slane %v6439, 1
      %v6798 = vsel %vm710, %v6796, %v6797
      %v6799 = vrot.slane %v6437, 1
      %v6800 = vrot.slane %v6440, 1
      %v6801 = vsel %vm710, %v6799, %v6800
      %v6802 = vrot.slane %v6438, 1
      %v6803 = vrot.slane %v6441, 1
      %v6804 = vsel %vm710, %v6802, %v6803
      %v6805 = vrot.slane %v6442, 1
      %v6806 = vsel %vm710, %v6797, %v6805
      %v6807 = vrot.slane %v6443, 1
      %v6808 = vsel %vm710, %v6800, %v6807
      %v6809 = vrot.slane %v6444, 1
      %v6810 = vsel %vm710, %v6803, %v6809
      %v6811 = vrot.slane %v6445, 1
      %v6812 = vrot.slane %v6448, 1
      %v6813 = vsel %vm710, %v6811, %v6812
      %v6814 = vrot.slane %v6446, 1
      %v6815 = vrot.slane %v6449, 1
      %v6816 = vsel %vm710, %v6814, %v6815
      %v6817 = vrot.slane %v6447, 1
      %v6818 = vrot.slane %v6450, 1
      %v6819 = vsel %vm710, %v6817, %v6818
      %v6820 = vrot.slane %v6451, 1
      %v6821 = vsel %vm710, %v6812, %v6820
      %v6822 = vrot.slane %v6452, 1
      %v6823 = vsel %vm710, %v6815, %v6822
      %v6824 = vrot.slane %v6453, 1
      %v6825 = vsel %vm710, %v6818, %v6824
      %v6826 = vrot.slane %v6454, 1
      %v6827 = vrot.slane %v6457, 1
      %v6828 = vsel %vm710, %v6826, %v6827
      %v6829 = vrot.slane %v6455, 1
      %v6830 = vrot.slane %v6458, 1
      %v6831 = vsel %vm710, %v6829, %v6830
      %v6832 = vrot.slane %v6456, 1
      %v6833 = vrot.slane %v6459, 1
      %v6834 = vsel %vm710, %v6832, %v6833
      %v6835 = vrot.slane %v6460, 1
      %v6836 = vsel %vm710, %v6827, %v6835
      %v6837 = vrot.slane %v6461, 1
      %v6838 = vsel %vm710, %v6830, %v6837
      %v6839 = vrot.slane %v6462, 1
      %v6840 = vsel %vm710, %v6833, %v6839
      %v6841 = vrot.slane %v6463, 1
      %v6842 = vrot.slane %v6466, 1
      %v6843 = vsel %vm710, %v6841, %v6842
      %v6844 = vrot.slane %v6464, 1
      %v6845 = vrot.slane %v6467, 1
      %v6846 = vsel %vm710, %v6844, %v6845
      %v6847 = vrot.slane %v6465, 1
      %v6848 = vrot.slane %v6468, 1
      %v6849 = vsel %vm710, %v6847, %v6848
      %v6850 = vrot.slane %v6469, 1
      %v6851 = vsel %vm710, %v6842, %v6850
      %v6852 = vrot.slane %v6470, 1
      %v6853 = vsel %vm710, %v6845, %v6852
      %v6854 = vrot.slane %v6471, 1
      %v6855 = vsel %vm710, %v6848, %v6854
      %s6952 = scalar_lea.vmem %s5, 768
      %v6953 = vld [vmem:[%s6952] sm:$0xff]
      %v6954 = vld [vmem:[%s6952 + $0x8] sm:$0xff]
      %v6955 = vld [vmem:[%s6952 + $0x10] sm:$0xff]
      %v6956 = vld [vmem:[%s6952 + $0x18] sm:$0xff]
      %v6957 = vld [vmem:[%s6952 + $0x20] sm:$0xff]
      %v6958 = vld [vmem:[%s6952 + $0x28] sm:$0xff]
      %v6959 = vld [vmem:[%s6952 + $0x30] sm:$0xff]
      %v6960 = vld [vmem:[%s6952 + $0x38] sm:$0xff]
      %v6961 = vld [vmem:[%s6952 + $0x40] sm:$0xff]
      %v6962 = vld [vmem:[%s6952 + $0x48] sm:$0xff]
      %v6963 = vld [vmem:[%s6952 + $0x50] sm:$0xff]
      %v6964 = vld [vmem:[%s6952 + $0x58] sm:$0xff]
      %v6965 = vld [vmem:[%s6952 + $0x60] sm:$0xff]
      %v6966 = vld [vmem:[%s6952 + $0x68] sm:$0xff]
      %v6967 = vld [vmem:[%s6952 + $0x70] sm:$0xff]
      %v6968 = vld [vmem:[%s6952 + $0x78] sm:$0xff]
      %v6969 = vld [vmem:[%s6952 + $0x80] sm:$0xff]
      %v6970 = vld [vmem:[%s6952 + $0x88] sm:$0xff]
      %v6971 = vld [vmem:[%s6952 + $0x90] sm:$0xff]
      %v6972 = vld [vmem:[%s6952 + $0x98] sm:$0xff]
      %v6973 = vld [vmem:[%s6952 + $0xa0] sm:$0xff]
      %v6974 = vld [vmem:[%s6952 + $0xa8] sm:$0xff]
      %v6975 = vld [vmem:[%s6952 + $0xb0] sm:$0xff]
      %v6976 = vld [vmem:[%s6952 + $0xb8] sm:$0xff]
      %v6977 = vld [vmem:[%s6952 + $0xc0] sm:$0xff]
      %v6978 = vld [vmem:[%s6952 + $0xc8] sm:$0xff]
      %v6979 = vld [vmem:[%s6952 + $0xd0] sm:$0xff]
      %v6980 = vld [vmem:[%s6952 + $0xd8] sm:$0xff]
      %v6981 = vld [vmem:[%s6952 + $0xe0] sm:$0xff]
      %v6982 = vld [vmem:[%s6952 + $0xe8] sm:$0xff]
      %v6983 = vld [vmem:[%s6952 + $0xf0] sm:$0xff]
      %v6984 = vld [vmem:[%s6952 + $0xf8] sm:$0xff]
      %v6985 = vld [vmem:[%s6952 + $0x100] sm:$0xff]
      %v6986 = vld [vmem:[%s6952 + $0x108] sm:$0xff]
      %v6987 = vld [vmem:[%s6952 + $0x110] sm:$0xff]
      %v6988 = vld [vmem:[%s6952 + $0x118] sm:$0xff]
      %v6989 = vld [vmem:[%s6952 + $0x120] sm:$0xff]
      %v6990 = vld [vmem:[%s6952 + $0x128] sm:$0xff]
      %v6991 = vld [vmem:[%s6952 + $0x130] sm:$0xff]
      %v6992 = vld [vmem:[%s6952 + $0x138] sm:$0xff]
      %v6993 = vld [vmem:[%s6952 + $0x140] sm:$0xff]
      %v6994 = vld [vmem:[%s6952 + $0x148] sm:$0xff]
      %v6995 = vld [vmem:[%s6952 + $0x150] sm:$0xff]
      %v6996 = vld [vmem:[%s6952 + $0x158] sm:$0xff]
      %v6997 = vld [vmem:[%s6952 + $0x160] sm:$0xff]
      %v6998 = vld [vmem:[%s6952 + $0x168] sm:$0xff]
      %v6999 = vld [vmem:[%s6952 + $0x170] sm:$0xff]
      %v7000 = vld [vmem:[%s6952 + $0x178] sm:$0xff]
      %7001 = vmatpush.msra.mxu0 %v6968
      %7002 = vmatpush.msra.mxu0 %v6967
      %7003 = vmatpush.msra.mxu0 %v6966
      %7004 = vmatpush.msra.mxu0 %v6965
      %7005 = vmatpush.msra.mxu0 %v6964
      %7006 = vmatpush.msra.mxu0 %v6963
      %7007 = vmatpush.msra.mxu0 %v6962
      %7008 = vmatpush.msra.mxu0 %v6961
      %7009 = vmatpush.msra.mxu0 %v6960
      %7010 = vmatpush.msra.mxu0 %v6959
      %7011 = vmatpush.msra.mxu0 %v6958
      %7012 = vmatpush.msra.mxu0 %v6957
      %7013 = vmatpush.msra.mxu0 %v6956
      %7014 = vmatpush.msra.mxu0 %v6955
      %7015 = vmatpush.msra.mxu0 %v6954
      %7016 = vmatpush.msra.mxu0 %v6953
      %7017 = vmatmul.f32.gmra.mxu0 %v6618
      %v7018 = vpop.f32.mrf.mxu0
      %v7019 = vadd.f32 0.0, %v7018
      %7020 = vmatmul.f32.gmra.mxu0 %v6626
      %v7021 = vpop.f32.mrf.mxu0
      %v7022 = vadd.f32 0.0, %v7021
      %7023 = vmatmul.f32.gmra.mxu0 %v6633
      %v7024 = vpop.f32.mrf.mxu0
      %v7025 = vadd.f32 0.0, %v7024
      %7026 = vmatmul.f32.gmra.mxu0 %v6641
      %v7027 = vpop.f32.mrf.mxu0
      %v7028 = vadd.f32 0.0, %v7027
      %7029 = vmatmul.f32.gmra.mxu0 %v6648
      %v7030 = vpop.f32.mrf.mxu0
      %v7031 = vadd.f32 0.0, %v7030
      %7032 = vmatmul.f32.gmra.mxu0 %v6656
      %v7033 = vpop.f32.mrf.mxu0
      %v7034 = vadd.f32 0.0, %v7033
      %7035 = vmatmul.f32.gmra.mxu0 %v6663
      %v7036 = vpop.f32.mrf.mxu0
      %v7037 = vadd.f32 0.0, %v7036
      %7038 = vmatmul.f32.gmra.mxu0 %v6671
      %v7039 = vpop.f32.mrf.mxu0
      %v7040 = vadd.f32 0.0, %v7039
      %7041 = vmatmul.f32.gmra.mxu0 %v6678
      %v7042 = vpop.f32.mrf.mxu0
      %v7043 = vadd.f32 0.0, %v7042
      %7044 = vmatmul.f32.gmra.mxu0 %v6686
      %v7045 = vpop.f32.mrf.mxu0
      %v7046 = vadd.f32 0.0, %v7045
      %7047 = vmatmul.f32.gmra.mxu0 %v6693
      %v7048 = vpop.f32.mrf.mxu0
      %v7049 = vadd.f32 0.0, %v7048
      %7050 = vmatmul.f32.gmra.mxu0 %v6701
      %v7051 = vpop.f32.mrf.mxu0
      %v7052 = vadd.f32 0.0, %v7051
      %7053 = vmatmul.f32.gmra.mxu0 %v6708
      %v7054 = vpop.f32.mrf.mxu0
      %v7055 = vadd.f32 0.0, %v7054
      %7056 = vmatmul.f32.gmra.mxu0 %v6716
      %v7057 = vpop.f32.mrf.mxu0
      %v7058 = vadd.f32 0.0, %v7057
      %7059 = vmatmul.f32.gmra.mxu0 %v6723
      %v7060 = vpop.f32.mrf.mxu0
      %v7061 = vadd.f32 0.0, %v7060
      %7062 = vmatmul.f32.gmra.mxu0 %v6731
      %v7063 = vpop.f32.mrf.mxu0
      %v7064 = vadd.f32 0.0, %v7063
      %7065 = vmatmul.f32.gmra.mxu0 %v6738
      %v7066 = vpop.f32.mrf.mxu0
      %v7067 = vadd.f32 0.0, %v7066
      %7068 = vmatmul.f32.gmra.mxu0 %v6746
      %v7069 = vpop.f32.mrf.mxu0
      %v7070 = vadd.f32 0.0, %v7069
      %7071 = vmatmul.f32.gmra.mxu0 %v6753
      %v7072 = vpop.f32.mrf.mxu0
      %v7073 = vadd.f32 0.0, %v7072
      %7074 = vmatmul.f32.gmra.mxu0 %v6761
      %v7075 = vpop.f32.mrf.mxu0
      %v7076 = vadd.f32 0.0, %v7075
      %7077 = vmatmul.f32.gmra.mxu0 %v6768
      %v7078 = vpop.f32.mrf.mxu0
      %v7079 = vadd.f32 0.0, %v7078
      %7080 = vmatmul.f32.gmra.mxu0 %v6776
      %v7081 = vpop.f32.mrf.mxu0
      %v7082 = vadd.f32 0.0, %v7081
      %7083 = vmatmul.f32.gmra.mxu0 %v6783
      %v7084 = vpop.f32.mrf.mxu0
      %v7085 = vadd.f32 0.0, %v7084
      %7086 = vmatmul.f32.gmra.mxu0 %v6791
      %v7087 = vpop.f32.mrf.mxu0
      %v7088 = vadd.f32 0.0, %v7087
      %7089 = vmatmul.f32.gmra.mxu0 %v6798
      %v7090 = vpop.f32.mrf.mxu0
      %v7091 = vadd.f32 0.0, %v7090
      %7092 = vmatmul.f32.gmra.mxu0 %v6806
      %v7093 = vpop.f32.mrf.mxu0
      %v7094 = vadd.f32 0.0, %v7093
      %7095 = vmatmul.f32.gmra.mxu0 %v6813
      %v7096 = vpop.f32.mrf.mxu0
      %v7097 = vadd.f32 0.0, %v7096
      %7098 = vmatmul.f32.gmra.mxu0 %v6821
      %v7099 = vpop.f32.mrf.mxu0
      %v7100 = vadd.f32 0.0, %v7099
      %7101 = vmatmul.f32.gmra.mxu0 %v6828
      %v7102 = vpop.f32.mrf.mxu0
      %v7103 = vadd.f32 0.0, %v7102
      %7104 = vmatmul.f32.gmra.mxu0 %v6836
      %v7105 = vpop.f32.mrf.mxu0
      %v7106 = vadd.f32 0.0, %v7105
      %7107 = vmatmul.f32.gmra.mxu0 %v6843
      %v7108 = vpop.f32.mrf.mxu0
      %v7109 = vadd.f32 0.0, %v7108
      %7110 = vmatmul.f32.gmra.mxu0 %v6851
      %v7111 = vpop.f32.mrf.mxu0
      %v7112 = vadd.f32 0.0, %v7111
      %7113 = vdwg.mxu0
      %7114 = vmatpush.msra.mxu0 %v6984
      %7115 = vmatpush.msra.mxu0 %v6983
      %7116 = vmatpush.msra.mxu0 %v6982
      %7117 = vmatpush.msra.mxu0 %v6981
      %7118 = vmatpush.msra.mxu0 %v6980
      %7119 = vmatpush.msra.mxu0 %v6979
      %7120 = vmatpush.msra.mxu0 %v6978
      %7121 = vmatpush.msra.mxu0 %v6977
      %7122 = vmatpush.msra.mxu0 %v6976
      %7123 = vmatpush.msra.mxu0 %v6975
      %7124 = vmatpush.msra.mxu0 %v6974
      %7125 = vmatpush.msra.mxu0 %v6973
      %7126 = vmatpush.msra.mxu0 %v6972
      %7127 = vmatpush.msra.mxu0 %v6971
      %7128 = vmatpush.msra.mxu0 %v6970
      %7129 = vmatpush.msra.mxu0 %v6969
      %7130 = vmatmul.f32.gmra.mxu0 %v6621
      %v7131 = vpop.f32.mrf.mxu0
      %v7132 = vadd.f32 %v7019, %v7131
      %7133 = vmatmul.f32.gmra.mxu0 %v6628
      %v7134 = vpop.f32.mrf.mxu0
      %v7135 = vadd.f32 %v7022, %v7134
      %7136 = vmatmul.f32.gmra.mxu0 %v6636
      %v7137 = vpop.f32.mrf.mxu0
      %v7138 = vadd.f32 %v7025, %v7137
      %7139 = vmatmul.f32.gmra.mxu0 %v6643
      %v7140 = vpop.f32.mrf.mxu0
      %v7141 = vadd.f32 %v7028, %v7140
      %7142 = vmatmul.f32.gmra.mxu0 %v6651
      %v7143 = vpop.f32.mrf.mxu0
      %v7144 = vadd.f32 %v7031, %v7143
      %7145 = vmatmul.f32.gmra.mxu0 %v6658
      %v7146 = vpop.f32.mrf.mxu0
      %v7147 = vadd.f32 %v7034, %v7146
      %7148 = vmatmul.f32.gmra.mxu0 %v6666
      %v7149 = vpop.f32.mrf.mxu0
      %v7150 = vadd.f32 %v7037, %v7149
      %7151 = vmatmul.f32.gmra.mxu0 %v6673
      %v7152 = vpop.f32.mrf.mxu0
      %v7153 = vadd.f32 %v7040, %v7152
      %7154 = vmatmul.f32.gmra.mxu0 %v6681
      %v7155 = vpop.f32.mrf.mxu0
      %v7156 = vadd.f32 %v7043, %v7155
      %7157 = vmatmul.f32.gmra.mxu0 %v6688
      %v7158 = vpop.f32.mrf.mxu0
      %v7159 = vadd.f32 %v7046, %v7158
      %7160 = vmatmul.f32.gmra.mxu0 %v6696
      %v7161 = vpop.f32.mrf.mxu0
      %v7162 = vadd.f32 %v7049, %v7161
      %7163 = vmatmul.f32.gmra.mxu0 %v6703
      %v7164 = vpop.f32.mrf.mxu0
      %v7165 = vadd.f32 %v7052, %v7164
      %7166 = vmatmul.f32.gmra.mxu0 %v6711
      %v7167 = vpop.f32.mrf.mxu0
      %v7168 = vadd.f32 %v7055, %v7167
      %7169 = vmatmul.f32.gmra.mxu0 %v6718
      %v7170 = vpop.f32.mrf.mxu0
      %v7171 = vadd.f32 %v7058, %v7170
      %7172 = vmatmul.f32.gmra.mxu0 %v6726
      %v7173 = vpop.f32.mrf.mxu0
      %v7174 = vadd.f32 %v7061, %v7173
      %7175 = vmatmul.f32.gmra.mxu0 %v6733
      %v7176 = vpop.f32.mrf.mxu0
      %v7177 = vadd.f32 %v7064, %v7176
      %7178 = vmatmul.f32.gmra.mxu0 %v6741
      %v7179 = vpop.f32.mrf.mxu0
      %v7180 = vadd.f32 %v7067, %v7179
      %7181 = vmatmul.f32.gmra.mxu0 %v6748
      %v7182 = vpop.f32.mrf.mxu0
      %v7183 = vadd.f32 %v7070, %v7182
      %7184 = vmatmul.f32.gmra.mxu0 %v6756
      %v7185 = vpop.f32.mrf.mxu0
      %v7186 = vadd.f32 %v7073, %v7185
      %7187 = vmatmul.f32.gmra.mxu0 %v6763
      %v7188 = vpop.f32.mrf.mxu0
      %v7189 = vadd.f32 %v7076, %v7188
      %7190 = vmatmul.f32.gmra.mxu0 %v6771
      %v7191 = vpop.f32.mrf.mxu0
      %v7192 = vadd.f32 %v7079, %v7191
      %7193 = vmatmul.f32.gmra.mxu0 %v6778
      %v7194 = vpop.f32.mrf.mxu0
      %v7195 = vadd.f32 %v7082, %v7194
      %7196 = vmatmul.f32.gmra.mxu0 %v6786
      %v7197 = vpop.f32.mrf.mxu0
      %v7198 = vadd.f32 %v7085, %v7197
      %7199 = vmatmul.f32.gmra.mxu0 %v6793
      %v7200 = vpop.f32.mrf.mxu0
      %v7201 = vadd.f32 %v7088, %v7200
      %7202 = vmatmul.f32.gmra.mxu0 %v6801
      %v7203 = vpop.f32.mrf.mxu0
      %v7204 = vadd.f32 %v7091, %v7203
      %7205 = vmatmul.f32.gmra.mxu0 %v6808
      %v7206 = vpop.f32.mrf.mxu0
      %v7207 = vadd.f32 %v7094, %v7206
      %7208 = vmatmul.f32.gmra.mxu0 %v6816
      %v7209 = vpop.f32.mrf.mxu0
      %v7210 = vadd.f32 %v7097, %v7209
      %7211 = vmatmul.f32.gmra.mxu0 %v6823
      %v7212 = vpop.f32.mrf.mxu0
      %v7213 = vadd.f32 %v7100, %v7212
      %7214 = vmatmul.f32.gmra.mxu0 %v6831
      %v7215 = vpop.f32.mrf.mxu0
      %v7216 = vadd.f32 %v7103, %v7215
      %7217 = vmatmul.f32.gmra.mxu0 %v6838
      %v7218 = vpop.f32.mrf.mxu0
      %v7219 = vadd.f32 %v7106, %v7218
      %7220 = vmatmul.f32.gmra.mxu0 %v6846
      %v7221 = vpop.f32.mrf.mxu0
      %v7222 = vadd.f32 %v7109, %v7221
      %7223 = vmatmul.f32.gmra.mxu0 %v6853
      %v7224 = vpop.f32.mrf.mxu0
      %v7225 = vadd.f32 %v7112, %v7224
      %7226 = vdwg.mxu0
      %7227 = vmatpush.msra.mxu0 %v7000
      %7228 = vmatpush.msra.mxu0 %v6999
      %7229 = vmatpush.msra.mxu0 %v6998
      %7230 = vmatpush.msra.mxu0 %v6997
      %7231 = vmatpush.msra.mxu0 %v6996
      %7232 = vmatpush.msra.mxu0 %v6995
      %7233 = vmatpush.msra.mxu0 %v6994
      %7234 = vmatpush.msra.mxu0 %v6993
      %7235 = vmatpush.msra.mxu0 %v6992
      %7236 = vmatpush.msra.mxu0 %v6991
      %7237 = vmatpush.msra.mxu0 %v6990
      %7238 = vmatpush.msra.mxu0 %v6989
      %7239 = vmatpush.msra.mxu0 %v6988
      %7240 = vmatpush.msra.mxu0 %v6987
      %7241 = vmatpush.msra.mxu0 %v6986
      %7242 = vmatpush.msra.mxu0 %v6985
      %7243 = vmatmul.f32.gmra.mxu0 %v6624
      %v7244 = vpop.f32.mrf.mxu0
      %v7245 = vadd.f32 %v7132, %v7244
      %7246 = vmatmul.f32.gmra.mxu0 %v6630
      %v7247 = vpop.f32.mrf.mxu0
      %v7248 = vadd.f32 %v7135, %v7247
      %7249 = vmatmul.f32.gmra.mxu0 %v6639
      %v7250 = vpop.f32.mrf.mxu0
      %v7251 = vadd.f32 %v7138, %v7250
      %7252 = vmatmul.f32.gmra.mxu0 %v6645
      %v7253 = vpop.f32.mrf.mxu0
      %v7254 = vadd.f32 %v7141, %v7253
      %7255 = vmatmul.f32.gmra.mxu0 %v6654
      %v7256 = vpop.f32.mrf.mxu0
      %v7257 = vadd.f32 %v7144, %v7256
      %7258 = vmatmul.f32.gmra.mxu0 %v6660
      %v7259 = vpop.f32.mrf.mxu0
      %v7260 = vadd.f32 %v7147, %v7259
      %7261 = vmatmul.f32.gmra.mxu0 %v6669
      %v7262 = vpop.f32.mrf.mxu0
      %v7263 = vadd.f32 %v7150, %v7262
      %7264 = vmatmul.f32.gmra.mxu0 %v6675
      %v7265 = vpop.f32.mrf.mxu0
      %v7266 = vadd.f32 %v7153, %v7265
      %7267 = vmatmul.f32.gmra.mxu0 %v6684
      %v7268 = vpop.f32.mrf.mxu0
      %v7269 = vadd.f32 %v7156, %v7268
      %7270 = vmatmul.f32.gmra.mxu0 %v6690
      %v7271 = vpop.f32.mrf.mxu0
      %v7272 = vadd.f32 %v7159, %v7271
      %7273 = vmatmul.f32.gmra.mxu0 %v6699
      %v7274 = vpop.f32.mrf.mxu0
      %v7275 = vadd.f32 %v7162, %v7274
      %7276 = vmatmul.f32.gmra.mxu0 %v6705
      %v7277 = vpop.f32.mrf.mxu0
      %v7278 = vadd.f32 %v7165, %v7277
      %7279 = vmatmul.f32.gmra.mxu0 %v6714
      %v7280 = vpop.f32.mrf.mxu0
      %v7281 = vadd.f32 %v7168, %v7280
      %7282 = vmatmul.f32.gmra.mxu0 %v6720
      %v7283 = vpop.f32.mrf.mxu0
      %v7284 = vadd.f32 %v7171, %v7283
      %7285 = vmatmul.f32.gmra.mxu0 %v6729
      %v7286 = vpop.f32.mrf.mxu0
      %v7287 = vadd.f32 %v7174, %v7286
      %7288 = vmatmul.f32.gmra.mxu0 %v6735
      %v7289 = vpop.f32.mrf.mxu0
      %v7290 = vadd.f32 %v7177, %v7289
      %7291 = vmatmul.f32.gmra.mxu0 %v6744
      %v7292 = vpop.f32.mrf.mxu0
      %v7293 = vadd.f32 %v7180, %v7292
      %7294 = vmatmul.f32.gmra.mxu0 %v6750
      %v7295 = vpop.f32.mrf.mxu0
      %v7296 = vadd.f32 %v7183, %v7295
      %7297 = vmatmul.f32.gmra.mxu0 %v6759
      %v7298 = vpop.f32.mrf.mxu0
      %v7299 = vadd.f32 %v7186, %v7298
      %7300 = vmatmul.f32.gmra.mxu0 %v6765
      %v7301 = vpop.f32.mrf.mxu0
      %v7302 = vadd.f32 %v7189, %v7301
      %7303 = vmatmul.f32.gmra.mxu0 %v6774
      %v7304 = vpop.f32.mrf.mxu0
      %v7305 = vadd.f32 %v7192, %v7304
      %7306 = vmatmul.f32.gmra.mxu0 %v6780
      %v7307 = vpop.f32.mrf.mxu0
      %v7308 = vadd.f32 %v7195, %v7307
      %7309 = vmatmul.f32.gmra.mxu0 %v6789
      %v7310 = vpop.f32.mrf.mxu0
      %v7311 = vadd.f32 %v7198, %v7310
      %7312 = vmatmul.f32.gmra.mxu0 %v6795
      %v7313 = vpop.f32.mrf.mxu0
      %v7314 = vadd.f32 %v7201, %v7313
      %7315 = vmatmul.f32.gmra.mxu0 %v6804
      %v7316 = vpop.f32.mrf.mxu0
      %v7317 = vadd.f32 %v7204, %v7316
      %7318 = vmatmul.f32.gmra.mxu0 %v6810
      %v7319 = vpop.f32.mrf.mxu0
      %v7320 = vadd.f32 %v7207, %v7319
      %7321 = vmatmul.f32.gmra.mxu0 %v6819
      %v7322 = vpop.f32.mrf.mxu0
      %v7323 = vadd.f32 %v7210, %v7322
      %7324 = vmatmul.f32.gmra.mxu0 %v6825
      %v7325 = vpop.f32.mrf.mxu0
      %v7326 = vadd.f32 %v7213, %v7325
      %7327 = vmatmul.f32.gmra.mxu0 %v6834
      %v7328 = vpop.f32.mrf.mxu0
      %v7329 = vadd.f32 %v7216, %v7328
      %7330 = vmatmul.f32.gmra.mxu0 %v6840
      %v7331 = vpop.f32.mrf.mxu0
      %v7332 = vadd.f32 %v7219, %v7331
      %7333 = vmatmul.f32.gmra.mxu0 %v6849
      %v7334 = vpop.f32.mrf.mxu0
      %v7335 = vadd.f32 %v7222, %v7334
      %7336 = vmatmul.f32.gmra.mxu0 %v6855
      %v7337 = vpop.f32.mrf.mxu0
      %v7338 = vadd.f32 %v7225, %v7337
      %7339 = vdwg.mxu0
      %v7340 = vadd.f32 %v6233, %v7245
      %v7341 = vadd.f32 %v6236, %v7248
      %v7342 = vadd.f32 %v6239, %v7251
      %v7343 = vadd.f32 %v6242, %v7254
      %v7344 = vadd.f32 %v6245, %v7257
      %v7345 = vadd.f32 %v6248, %v7260
      %v7346 = vadd.f32 %v6251, %v7263
      %v7347 = vadd.f32 %v6254, %v7266
      %v7348 = vadd.f32 %v6257, %v7269
      %v7349 = vadd.f32 %v6260, %v7272
      %v7350 = vadd.f32 %v6263, %v7275
      %v7351 = vadd.f32 %v6266, %v7278
      %v7352 = vadd.f32 %v6269, %v7281
      %v7353 = vadd.f32 %v6272, %v7284
      %v7354 = vadd.f32 %v6275, %v7287
      %v7355 = vadd.f32 %v6278, %v7290
      %v7356 = vadd.f32 %v6281, %v7293
      %v7357 = vadd.f32 %v6284, %v7296
      %v7358 = vadd.f32 %v6287, %v7299
      %v7359 = vadd.f32 %v6290, %v7302
      %v7360 = vadd.f32 %v6293, %v7305
      %v7361 = vadd.f32 %v6296, %v7308
      %v7362 = vadd.f32 %v6299, %v7311
      %v7363 = vadd.f32 %v6302, %v7314
      %v7364 = vadd.f32 %v6305, %v7317
      %v7365 = vadd.f32 %v6308, %v7320
      %v7366 = vadd.f32 %v6311, %v7323
      %v7367 = vadd.f32 %v6314, %v7326
      %v7368 = vadd.f32 %v6317, %v7329
      %v7369 = vadd.f32 %v6320, %v7332
      %v7370 = vadd.f32 %v6323, %v7335
      %v7371 = vadd.f32 %v6326, %v7338
      %v7372 = vld [vmem:[%s4783] sm:$0x80]
      %v7373 = vld [vmem:[%s4783 + $0x8] sm:$0x80]
      %v7374 = vld [vmem:[%s4783 + $0x10] sm:$0x80]
      %v7375 = vld [vmem:[%s4783 + $0x18] sm:$0xff]
      %v7376 = vld [vmem:[%s4783 + $0x20] sm:$0xff]
      %v7377 = vld [vmem:[%s4783 + $0x28] sm:$0xff]
      %v7378 = vld [vmem:[%s4783 + $0x30] sm:$0x7f]
      %v7379 = vld [vmem:[%s4783 + $0x38] sm:$0x7f]
      %v7380 = vld [vmem:[%s4783 + $0x40] sm:$0x7f]
      %v7381 = vld [vmem:[%s4783 + $0x60] sm:$0x80]
      %v7382 = vld [vmem:[%s4783 + $0x68] sm:$0x80]
      %v7383 = vld [vmem:[%s4783 + $0x70] sm:$0x80]
      %v7384 = vld [vmem:[%s4783 + $0x78] sm:$0xff]
      %v7385 = vld [vmem:[%s4783 + $0x80] sm:$0xff]
      %v7386 = vld [vmem:[%s4783 + $0x88] sm:$0xff]
      %v7387 = vld [vmem:[%s4783 + $0x90] sm:$0x7f]
      %v7388 = vld [vmem:[%s4783 + $0x98] sm:$0x7f]
      %v7389 = vld [vmem:[%s4783 + $0xa0] sm:$0x7f]
      %v7390 = vld [vmem:[%s4783 + $0xc0] sm:$0x80]
      %v7391 = vld [vmem:[%s4783 + $0xc8] sm:$0x80]
      %v7392 = vld [vmem:[%s4783 + $0xd0] sm:$0x80]
      %v7393 = vld [vmem:[%s4783 + $0xd8] sm:$0xff]
      %v7394 = vld [vmem:[%s4783 + $0xe0] sm:$0xff]
      %v7395 = vld [vmem:[%s4783 + $0xe8] sm:$0xff]
      %v7396 = vld [vmem:[%s4783 + $0xf0] sm:$0x7f]
      %v7397 = vld [vmem:[%s4783 + $0xf8] sm:$0x7f]
      %v7398 = vld [vmem:[%s4783 + $0x100] sm:$0x7f]
      %v7399 = vld [vmem:[%s4783 + $0x120] sm:$0x80]
      %v7400 = vld [vmem:[%s4783 + $0x128] sm:$0x80]
      %v7401 = vld [vmem:[%s4783 + $0x130] sm:$0x80]
      %v7402 = vld [vmem:[%s4783 + $0x138] sm:$0xff]
      %v7403 = vld [vmem:[%s4783 + $0x140] sm:$0xff]
      %v7404 = vld [vmem:[%s4783 + $0x148] sm:$0xff]
      %v7405 = vld [vmem:[%s4783 + $0x150] sm:$0x7f]
      %v7406 = vld [vmem:[%s4783 + $0x158] sm:$0x7f]
      %v7407 = vld [vmem:[%s4783 + $0x160] sm:$0x7f]
      %v7408 = vld [vmem:[%s4783 + $0x180] sm:$0x80]
      %v7409 = vld [vmem:[%s4783 + $0x188] sm:$0x80]
      %v7410 = vld [vmem:[%s4783 + $0x190] sm:$0x80]
      %v7411 = vld [vmem:[%s4783 + $0x198] sm:$0xff]
      %v7412 = vld [vmem:[%s4783 + $0x1a0] sm:$0xff]
      %v7413 = vld [vmem:[%s4783 + $0x1a8] sm:$0xff]
      %v7414 = vld [vmem:[%s4783 + $0x1b0] sm:$0x7f]
      %v7415 = vld [vmem:[%s4783 + $0x1b8] sm:$0x7f]
      %v7416 = vld [vmem:[%s4783 + $0x1c0] sm:$0x7f]
      %v7417 = vld [vmem:[%s4783 + $0x1e0] sm:$0x80]
      %v7418 = vld [vmem:[%s4783 + $0x1e8] sm:$0x80]
      %v7419 = vld [vmem:[%s4783 + $0x1f0] sm:$0x80]
      %v7420 = vld [vmem:[%s4783 + $0x1f8] sm:$0xff]
      %v7421 = vld [vmem:[%s4783 + $0x200] sm:$0xff]
      %v7422 = vld [vmem:[%s4783 + $0x208] sm:$0xff]
      %v7423 = vld [vmem:[%s4783 + $0x210] sm:$0x7f]
      %v7424 = vld [vmem:[%s4783 + $0x218] sm:$0x7f]
      %v7425 = vld [vmem:[%s4783 + $0x220] sm:$0x7f]
      %v7426 = vld [vmem:[%s4783 + $0x240] sm:$0x80]
      %v7427 = vld [vmem:[%s4783 + $0x248] sm:$0x80]
      %v7428 = vld [vmem:[%s4783 + $0x250] sm:$0x80]
      %v7429 = vld [vmem:[%s4783 + $0x258] sm:$0xff]
      %v7430 = vld [vmem:[%s4783 + $0x260] sm:$0xff]
      %v7431 = vld [vmem:[%s4783 + $0x268] sm:$0xff]
      %v7432 = vld [vmem:[%s4783 + $0x270] sm:$0x7f]
      %v7433 = vld [vmem:[%s4783 + $0x278] sm:$0x7f]
      %v7434 = vld [vmem:[%s4783 + $0x280] sm:$0x7f]
      %v7435 = vld [vmem:[%s4783 + $0x2a0] sm:$0x80]
      %v7436 = vld [vmem:[%s4783 + $0x2a8] sm:$0x80]
      %v7437 = vld [vmem:[%s4783 + $0x2b0] sm:$0x80]
      %v7438 = vld [vmem:[%s4783 + $0x2b8] sm:$0xff]
      %v7439 = vld [vmem:[%s4783 + $0x2c0] sm:$0xff]
      %v7440 = vld [vmem:[%s4783 + $0x2c8] sm:$0xff]
      %v7441 = vld [vmem:[%s4783 + $0x2d0] sm:$0x7f]
      %v7442 = vld [vmem:[%s4783 + $0x2d8] sm:$0x7f]
      %v7443 = vld [vmem:[%s4783 + $0x2e0] sm:$0x7f]
      %v7444 = vld [vmem:[%s4783 + $0x300] sm:$0x80]
      %v7445 = vld [vmem:[%s4783 + $0x308] sm:$0x80]
      %v7446 = vld [vmem:[%s4783 + $0x310] sm:$0x80]
      %v7447 = vld [vmem:[%s4783 + $0x318] sm:$0xff]
      %v7448 = vld [vmem:[%s4783 + $0x320] sm:$0xff]
      %v7449 = vld [vmem:[%s4783 + $0x328] sm:$0xff]
      %v7450 = vld [vmem:[%s4783 + $0x330] sm:$0x7f]
      %v7451 = vld [vmem:[%s4783 + $0x338] sm:$0x7f]
      %v7452 = vld [vmem:[%s4783 + $0x340] sm:$0x7f]
      %v7453 = vld [vmem:[%s4783 + $0x360] sm:$0x80]
      %v7454 = vld [vmem:[%s4783 + $0x368] sm:$0x80]
      %v7455 = vld [vmem:[%s4783 + $0x370] sm:$0x80]
      %v7456 = vld [vmem:[%s4783 + $0x378] sm:$0xff]
      %v7457 = vld [vmem:[%s4783 + $0x380] sm:$0xff]
      %v7458 = vld [vmem:[%s4783 + $0x388] sm:$0xff]
      %v7459 = vld [vmem:[%s4783 + $0x390] sm:$0x7f]
      %v7460 = vld [vmem:[%s4783 + $0x398] sm:$0x7f]
      %v7461 = vld [vmem:[%s4783 + $0x3a0] sm:$0x7f]
      %v7462 = vld [vmem:[%s4783 + $0x3c0] sm:$0x80]
      %v7463 = vld [vmem:[%s4783 + $0x3c8] sm:$0x80]
      %v7464 = vld [vmem:[%s4783 + $0x3d0] sm:$0x80]
      %v7465 = vld [vmem:[%s4783 + $0x3d8] sm:$0xff]
      %v7466 = vld [vmem:[%s4783 + $0x3e0] sm:$0xff]
      %v7467 = vld [vmem:[%s4783 + $0x3e8] sm:$0xff]
      %v7468 = vld [vmem:[%s4783 + $0x3f0] sm:$0x7f]
      %v7469 = vld [vmem:[%s4783 + $0x3f8] sm:$0x7f]
      %v7470 = vld [vmem:[%s4783 + $0x400] sm:$0x7f]
      %v7471 = vld [vmem:[%s4783 + $0x420] sm:$0x80]
      %v7472 = vld [vmem:[%s4783 + $0x428] sm:$0x80]
      %v7473 = vld [vmem:[%s4783 + $0x430] sm:$0x80]
      %v7474 = vld [vmem:[%s4783 + $0x438] sm:$0xff]
      %v7475 = vld [vmem:[%s4783 + $0x440] sm:$0xff]
      %v7476 = vld [vmem:[%s4783 + $0x448] sm:$0xff]
      %v7477 = vld [vmem:[%s4783 + $0x450] sm:$0x7f]
      %v7478 = vld [vmem:[%s4783 + $0x458] sm:$0x7f]
      %v7479 = vld [vmem:[%s4783 + $0x460] sm:$0x7f]
      %v7480 = vld [vmem:[%s4783 + $0x480] sm:$0x80]
      %v7481 = vld [vmem:[%s4783 + $0x488] sm:$0x80]
      %v7482 = vld [vmem:[%s4783 + $0x490] sm:$0x80]
      %v7483 = vld [vmem:[%s4783 + $0x498] sm:$0xff]
      %v7484 = vld [vmem:[%s4783 + $0x4a0] sm:$0xff]
      %v7485 = vld [vmem:[%s4783 + $0x4a8] sm:$0xff]
      %v7486 = vld [vmem:[%s4783 + $0x4b0] sm:$0x7f]
      %v7487 = vld [vmem:[%s4783 + $0x4b8] sm:$0x7f]
      %v7488 = vld [vmem:[%s4783 + $0x4c0] sm:$0x7f]
      %v7489 = vld [vmem:[%s4783 + $0x4e0] sm:$0x80]
      %v7490 = vld [vmem:[%s4783 + $0x4e8] sm:$0x80]
      %v7491 = vld [vmem:[%s4783 + $0x4f0] sm:$0x80]
      %v7492 = vld [vmem:[%s4783 + $0x4f8] sm:$0xff]
      %v7493 = vld [vmem:[%s4783 + $0x500] sm:$0xff]
      %v7494 = vld [vmem:[%s4783 + $0x508] sm:$0xff]
      %v7495 = vld [vmem:[%s4783 + $0x510] sm:$0x7f]
      %v7496 = vld [vmem:[%s4783 + $0x518] sm:$0x7f]
      %v7497 = vld [vmem:[%s4783 + $0x520] sm:$0x7f]
      %v7498 = vld [vmem:[%s4783 + $0x540] sm:$0x80]
      %v7499 = vld [vmem:[%s4783 + $0x548] sm:$0x80]
      %v7500 = vld [vmem:[%s4783 + $0x550] sm:$0x80]
      %v7501 = vld [vmem:[%s4783 + $0x558] sm:$0xff]
      %v7502 = vld [vmem:[%s4783 + $0x560] sm:$0xff]
      %v7503 = vld [vmem:[%s4783 + $0x568] sm:$0xff]
      %v7504 = vld [vmem:[%s4783 + $0x570] sm:$0x7f]
      %v7505 = vld [vmem:[%s4783 + $0x578] sm:$0x7f]
      %v7506 = vld [vmem:[%s4783 + $0x580] sm:$0x7f]
      %v7507 = vld [vmem:[%s4783 + $0x5a0] sm:$0x80]
      %v7508 = vld [vmem:[%s4783 + $0x5a8] sm:$0x80]
      %v7509 = vld [vmem:[%s4783 + $0x5b0] sm:$0x80]
      %v7510 = vld [vmem:[%s4783 + $0x5b8] sm:$0xff]
      %v7511 = vld [vmem:[%s4783 + $0x5c0] sm:$0xff]
      %v7512 = vld [vmem:[%s4783 + $0x5c8] sm:$0xff]
      %v7513 = vld [vmem:[%s4783 + $0x5d0] sm:$0x7f]
      %v7514 = vld [vmem:[%s4783 + $0x5d8] sm:$0x7f]
      %v7515 = vld [vmem:[%s4783 + $0x5e0] sm:$0x7f]
      %v7660 = vrot.slane %v7372, 7
      %v7661 = vrot.slane %v7375, 7
      %v7662 = vsel %vm5168, %v7660, %v7661
      %v7663 = vrot.slane %v7373, 7
      %v7664 = vrot.slane %v7376, 7
      %v7665 = vsel %vm5168, %v7663, %v7664
      %v7666 = vrot.slane %v7374, 7
      %v7667 = vrot.slane %v7377, 7
      %v7668 = vsel %vm5168, %v7666, %v7667
      %v7669 = vrot.slane %v7378, 7
      %v7670 = vsel %vm5168, %v7661, %v7669
      %v7671 = vrot.slane %v7379, 7
      %v7672 = vsel %vm5168, %v7664, %v7671
      %v7673 = vrot.slane %v7380, 7
      %v7674 = vsel %vm5168, %v7667, %v7673
      %v7675 = vrot.slane %v7381, 7
      %v7676 = vrot.slane %v7384, 7
      %v7677 = vsel %vm5168, %v7675, %v7676
      %v7678 = vrot.slane %v7382, 7
      %v7679 = vrot.slane %v7385, 7
      %v7680 = vsel %vm5168, %v7678, %v7679
      %v7681 = vrot.slane %v7383, 7
      %v7682 = vrot.slane %v7386, 7
      %v7683 = vsel %vm5168, %v7681, %v7682
      %v7684 = vrot.slane %v7387, 7
      %v7685 = vsel %vm5168, %v7676, %v7684
      %v7686 = vrot.slane %v7388, 7
      %v7687 = vsel %vm5168, %v7679, %v7686
      %v7688 = vrot.slane %v7389, 7
      %v7689 = vsel %vm5168, %v7682, %v7688
      %v7690 = vrot.slane %v7390, 7
      %v7691 = vrot.slane %v7393, 7
      %v7692 = vsel %vm5168, %v7690, %v7691
      %v7693 = vrot.slane %v7391, 7
      %v7694 = vrot.slane %v7394, 7
      %v7695 = vsel %vm5168, %v7693, %v7694
      %v7696 = vrot.slane %v7392, 7
      %v7697 = vrot.slane %v7395, 7
      %v7698 = vsel %vm5168, %v7696, %v7697
      %v7699 = vrot.slane %v7396, 7
      %v7700 = vsel %vm5168, %v7691, %v7699
      %v7701 = vrot.slane %v7397, 7
      %v7702 = vsel %vm5168, %v7694, %v7701
      %v7703 = vrot.slane %v7398, 7
      %v7704 = vsel %vm5168, %v7697, %v7703
      %v7705 = vrot.slane %v7399, 7
      %v7706 = vrot.slane %v7402, 7
      %v7707 = vsel %vm5168, %v7705, %v7706
      %v7708 = vrot.slane %v7400, 7
      %v7709 = vrot.slane %v7403, 7
      %v7710 = vsel %vm5168, %v7708, %v7709
      %v7711 = vrot.slane %v7401, 7
      %v7712 = vrot.slane %v7404, 7
      %v7713 = vsel %vm5168, %v7711, %v7712
      %v7714 = vrot.slane %v7405, 7
      %v7715 = vsel %vm5168, %v7706, %v7714
      %v7716 = vrot.slane %v7406, 7
      %v7717 = vsel %vm5168, %v7709, %v7716
      %v7718 = vrot.slane %v7407, 7
      %v7719 = vsel %vm5168, %v7712, %v7718
      %v7720 = vrot.slane %v7408, 7
      %v7721 = vrot.slane %v7411, 7
      %v7722 = vsel %vm5168, %v7720, %v7721
      %v7723 = vrot.slane %v7409, 7
      %v7724 = vrot.slane %v7412, 7
      %v7725 = vsel %vm5168, %v7723, %v7724
      %v7726 = vrot.slane %v7410, 7
      %v7727 = vrot.slane %v7413, 7
      %v7728 = vsel %vm5168, %v7726, %v7727
      %v7729 = vrot.slane %v7414, 7
      %v7730 = vsel %vm5168, %v7721, %v7729
      %v7731 = vrot.slane %v7415, 7
      %v7732 = vsel %vm5168, %v7724, %v7731
      %v7733 = vrot.slane %v7416, 7
      %v7734 = vsel %vm5168, %v7727, %v7733
      %v7735 = vrot.slane %v7417, 7
      %v7736 = vrot.slane %v7420, 7
      %v7737 = vsel %vm5168, %v7735, %v7736
      %v7738 = vrot.slane %v7418, 7
      %v7739 = vrot.slane %v7421, 7
      %v7740 = vsel %vm5168, %v7738, %v7739
      %v7741 = vrot.slane %v7419, 7
      %v7742 = vrot.slane %v7422, 7
      %v7743 = vsel %vm5168, %v7741, %v7742
      %v7744 = vrot.slane %v7423, 7
      %v7745 = vsel %vm5168, %v7736, %v7744
      %v7746 = vrot.slane %v7424, 7
      %v7747 = vsel %vm5168, %v7739, %v7746
      %v7748 = vrot.slane %v7425, 7
      %v7749 = vsel %vm5168, %v7742, %v7748
      %v7750 = vrot.slane %v7426, 7
      %v7751 = vrot.slane %v7429, 7
      %v7752 = vsel %vm5168, %v7750, %v7751
      %v7753 = vrot.slane %v7427, 7
      %v7754 = vrot.slane %v7430, 7
      %v7755 = vsel %vm5168, %v7753, %v7754
      %v7756 = vrot.slane %v7428, 7
      %v7757 = vrot.slane %v7431, 7
      %v7758 = vsel %vm5168, %v7756, %v7757
      %v7759 = vrot.slane %v7432, 7
      %v7760 = vsel %vm5168, %v7751, %v7759
      %v7761 = vrot.slane %v7433, 7
      %v7762 = vsel %vm5168, %v7754, %v7761
      %v7763 = vrot.slane %v7434, 7
      %v7764 = vsel %vm5168, %v7757, %v7763
      %v7765 = vrot.slane %v7435, 7
      %v7766 = vrot.slane %v7438, 7
      %v7767 = vsel %vm5168, %v7765, %v7766
      %v7768 = vrot.slane %v7436, 7
      %v7769 = vrot.slane %v7439, 7
      %v7770 = vsel %vm5168, %v7768, %v7769
      %v7771 = vrot.slane %v7437, 7
      %v7772 = vrot.slane %v7440, 7
      %v7773 = vsel %vm5168, %v7771, %v7772
      %v7774 = vrot.slane %v7441, 7
      %v7775 = vsel %vm5168, %v7766, %v7774
      %v7776 = vrot.slane %v7442, 7
      %v7777 = vsel %vm5168, %v7769, %v7776
      %v7778 = vrot.slane %v7443, 7
      %v7779 = vsel %vm5168, %v7772, %v7778
      %v7780 = vrot.slane %v7444, 7
      %v7781 = vrot.slane %v7447, 7
      %v7782 = vsel %vm5168, %v7780, %v7781
      %v7783 = vrot.slane %v7445, 7
      %v7784 = vrot.slane %v7448, 7
      %v7785 = vsel %vm5168, %v7783, %v7784
      %v7786 = vrot.slane %v7446, 7
      %v7787 = vrot.slane %v7449, 7
      %v7788 = vsel %vm5168, %v7786, %v7787
      %v7789 = vrot.slane %v7450, 7
      %v7790 = vsel %vm5168, %v7781, %v7789
      %v7791 = vrot.slane %v7451, 7
      %v7792 = vsel %vm5168, %v7784, %v7791
      %v7793 = vrot.slane %v7452, 7
      %v7794 = vsel %vm5168, %v7787, %v7793
      %v7795 = vrot.slane %v7453, 7
      %v7796 = vrot.slane %v7456, 7
      %v7797 = vsel %vm5168, %v7795, %v7796
      %v7798 = vrot.slane %v7454, 7
      %v7799 = vrot.slane %v7457, 7
      %v7800 = vsel %vm5168, %v7798, %v7799
      %v7801 = vrot.slane %v7455, 7
      %v7802 = vrot.slane %v7458, 7
      %v7803 = vsel %vm5168, %v7801, %v7802
      %v7804 = vrot.slane %v7459, 7
      %v7805 = vsel %vm5168, %v7796, %v7804
      %v7806 = vrot.slane %v7460, 7
      %v7807 = vsel %vm5168, %v7799, %v7806
      %v7808 = vrot.slane %v7461, 7
      %v7809 = vsel %vm5168, %v7802, %v7808
      %v7810 = vrot.slane %v7462, 7
      %v7811 = vrot.slane %v7465, 7
      %v7812 = vsel %vm5168, %v7810, %v7811
      %v7813 = vrot.slane %v7463, 7
      %v7814 = vrot.slane %v7466, 7
      %v7815 = vsel %vm5168, %v7813, %v7814
      %v7816 = vrot.slane %v7464, 7
      %v7817 = vrot.slane %v7467, 7
      %v7818 = vsel %vm5168, %v7816, %v7817
      %v7819 = vrot.slane %v7468, 7
      %v7820 = vsel %vm5168, %v7811, %v7819
      %v7821 = vrot.slane %v7469, 7
      %v7822 = vsel %vm5168, %v7814, %v7821
      %v7823 = vrot.slane %v7470, 7
      %v7824 = vsel %vm5168, %v7817, %v7823
      %v7825 = vrot.slane %v7471, 7
      %v7826 = vrot.slane %v7474, 7
      %v7827 = vsel %vm5168, %v7825, %v7826
      %v7828 = vrot.slane %v7472, 7
      %v7829 = vrot.slane %v7475, 7
      %v7830 = vsel %vm5168, %v7828, %v7829
      %v7831 = vrot.slane %v7473, 7
      %v7832 = vrot.slane %v7476, 7
      %v7833 = vsel %vm5168, %v7831, %v7832
      %v7834 = vrot.slane %v7477, 7
      %v7835 = vsel %vm5168, %v7826, %v7834
      %v7836 = vrot.slane %v7478, 7
      %v7837 = vsel %vm5168, %v7829, %v7836
      %v7838 = vrot.slane %v7479, 7
      %v7839 = vsel %vm5168, %v7832, %v7838
      %v7840 = vrot.slane %v7480, 7
      %v7841 = vrot.slane %v7483, 7
      %v7842 = vsel %vm5168, %v7840, %v7841
      %v7843 = vrot.slane %v7481, 7
      %v7844 = vrot.slane %v7484, 7
      %v7845 = vsel %vm5168, %v7843, %v7844
      %v7846 = vrot.slane %v7482, 7
      %v7847 = vrot.slane %v7485, 7
      %v7848 = vsel %vm5168, %v7846, %v7847
      %v7849 = vrot.slane %v7486, 7
      %v7850 = vsel %vm5168, %v7841, %v7849
      %v7851 = vrot.slane %v7487, 7
      %v7852 = vsel %vm5168, %v7844, %v7851
      %v7853 = vrot.slane %v7488, 7
      %v7854 = vsel %vm5168, %v7847, %v7853
      %v7855 = vrot.slane %v7489, 7
      %v7856 = vrot.slane %v7492, 7
      %v7857 = vsel %vm5168, %v7855, %v7856
      %v7858 = vrot.slane %v7490, 7
      %v7859 = vrot.slane %v7493, 7
      %v7860 = vsel %vm5168, %v7858, %v7859
      %v7861 = vrot.slane %v7491, 7
      %v7862 = vrot.slane %v7494, 7
      %v7863 = vsel %vm5168, %v7861, %v7862
      %v7864 = vrot.slane %v7495, 7
      %v7865 = vsel %vm5168, %v7856, %v7864
      %v7866 = vrot.slane %v7496, 7
      %v7867 = vsel %vm5168, %v7859, %v7866
      %v7868 = vrot.slane %v7497, 7
      %v7869 = vsel %vm5168, %v7862, %v7868
      %v7870 = vrot.slane %v7498, 7
      %v7871 = vrot.slane %v7501, 7
      %v7872 = vsel %vm5168, %v7870, %v7871
      %v7873 = vrot.slane %v7499, 7
      %v7874 = vrot.slane %v7502, 7
      %v7875 = vsel %vm5168, %v7873, %v7874
      %v7876 = vrot.slane %v7500, 7
      %v7877 = vrot.slane %v7503, 7
      %v7878 = vsel %vm5168, %v7876, %v7877
      %v7879 = vrot.slane %v7504, 7
      %v7880 = vsel %vm5168, %v7871, %v7879
      %v7881 = vrot.slane %v7505, 7
      %v7882 = vsel %vm5168, %v7874, %v7881
      %v7883 = vrot.slane %v7506, 7
      %v7884 = vsel %vm5168, %v7877, %v7883
      %v7885 = vrot.slane %v7507, 7
      %v7886 = vrot.slane %v7510, 7
      %v7887 = vsel %vm5168, %v7885, %v7886
      %v7888 = vrot.slane %v7508, 7
      %v7889 = vrot.slane %v7511, 7
      %v7890 = vsel %vm5168, %v7888, %v7889
      %v7891 = vrot.slane %v7509, 7
      %v7892 = vrot.slane %v7512, 7
      %v7893 = vsel %vm5168, %v7891, %v7892
      %v7894 = vrot.slane %v7513, 7
      %v7895 = vsel %vm5168, %v7886, %v7894
      %v7896 = vrot.slane %v7514, 7
      %v7897 = vsel %vm5168, %v7889, %v7896
      %v7898 = vrot.slane %v7515, 7
      %v7899 = vsel %vm5168, %v7892, %v7898
      %s7996 = scalar_lea.vmem %s5, 1152
      %v7997 = vld [vmem:[%s7996] sm:$0xff]
      %v7998 = vld [vmem:[%s7996 + $0x8] sm:$0xff]
      %v7999 = vld [vmem:[%s7996 + $0x10] sm:$0xff]
      %v8000 = vld [vmem:[%s7996 + $0x18] sm:$0xff]
      %v8001 = vld [vmem:[%s7996 + $0x20] sm:$0xff]
      %v8002 = vld [vmem:[%s7996 + $0x28] sm:$0xff]
      %v8003 = vld [vmem:[%s7996 + $0x30] sm:$0xff]
      %v8004 = vld [vmem:[%s7996 + $0x38] sm:$0xff]
      %v8005 = vld [vmem:[%s7996 + $0x40] sm:$0xff]
      %v8006 = vld [vmem:[%s7996 + $0x48] sm:$0xff]
      %v8007 = vld [vmem:[%s7996 + $0x50] sm:$0xff]
      %v8008 = vld [vmem:[%s7996 + $0x58] sm:$0xff]
      %v8009 = vld [vmem:[%s7996 + $0x60] sm:$0xff]
      %v8010 = vld [vmem:[%s7996 + $0x68] sm:$0xff]
      %v8011 = vld [vmem:[%s7996 + $0x70] sm:$0xff]
      %v8012 = vld [vmem:[%s7996 + $0x78] sm:$0xff]
      %v8013 = vld [vmem:[%s7996 + $0x80] sm:$0xff]
      %v8014 = vld [vmem:[%s7996 + $0x88] sm:$0xff]
      %v8015 = vld [vmem:[%s7996 + $0x90] sm:$0xff]
      %v8016 = vld [vmem:[%s7996 + $0x98] sm:$0xff]
      %v8017 = vld [vmem:[%s7996 + $0xa0] sm:$0xff]
      %v8018 = vld [vmem:[%s7996 + $0xa8] sm:$0xff]
      %v8019 = vld [vmem:[%s7996 + $0xb0] sm:$0xff]
      %v8020 = vld [vmem:[%s7996 + $0xb8] sm:$0xff]
      %v8021 = vld [vmem:[%s7996 + $0xc0] sm:$0xff]
      %v8022 = vld [vmem:[%s7996 + $0xc8] sm:$0xff]
      %v8023 = vld [vmem:[%s7996 + $0xd0] sm:$0xff]
      %v8024 = vld [vmem:[%s7996 + $0xd8] sm:$0xff]
      %v8025 = vld [vmem:[%s7996 + $0xe0] sm:$0xff]
      %v8026 = vld [vmem:[%s7996 + $0xe8] sm:$0xff]
      %v8027 = vld [vmem:[%s7996 + $0xf0] sm:$0xff]
      %v8028 = vld [vmem:[%s7996 + $0xf8] sm:$0xff]
      %v8029 = vld [vmem:[%s7996 + $0x100] sm:$0xff]
      %v8030 = vld [vmem:[%s7996 + $0x108] sm:$0xff]
      %v8031 = vld [vmem:[%s7996 + $0x110] sm:$0xff]
      %v8032 = vld [vmem:[%s7996 + $0x118] sm:$0xff]
      %v8033 = vld [vmem:[%s7996 + $0x120] sm:$0xff]
      %v8034 = vld [vmem:[%s7996 + $0x128] sm:$0xff]
      %v8035 = vld [vmem:[%s7996 + $0x130] sm:$0xff]
      %v8036 = vld [vmem:[%s7996 + $0x138] sm:$0xff]
      %v8037 = vld [vmem:[%s7996 + $0x140] sm:$0xff]
      %v8038 = vld [vmem:[%s7996 + $0x148] sm:$0xff]
      %v8039 = vld [vmem:[%s7996 + $0x150] sm:$0xff]
      %v8040 = vld [vmem:[%s7996 + $0x158] sm:$0xff]
      %v8041 = vld [vmem:[%s7996 + $0x160] sm:$0xff]
      %v8042 = vld [vmem:[%s7996 + $0x168] sm:$0xff]
      %v8043 = vld [vmem:[%s7996 + $0x170] sm:$0xff]
      %v8044 = vld [vmem:[%s7996 + $0x178] sm:$0xff]
      %8045 = vmatpush.msra.mxu0 %v8012
      %8046 = vmatpush.msra.mxu0 %v8011
      %8047 = vmatpush.msra.mxu0 %v8010
      %8048 = vmatpush.msra.mxu0 %v8009
      %8049 = vmatpush.msra.mxu0 %v8008
      %8050 = vmatpush.msra.mxu0 %v8007
      %8051 = vmatpush.msra.mxu0 %v8006
      %8052 = vmatpush.msra.mxu0 %v8005
      %8053 = vmatpush.msra.mxu0 %v8004
      %8054 = vmatpush.msra.mxu0 %v8003
      %8055 = vmatpush.msra.mxu0 %v8002
      %8056 = vmatpush.msra.mxu0 %v8001
      %8057 = vmatpush.msra.mxu0 %v8000
      %8058 = vmatpush.msra.mxu0 %v7999
      %8059 = vmatpush.msra.mxu0 %v7998
      %8060 = vmatpush.msra.mxu0 %v7997
      %8061 = vmatmul.f32.gmra.mxu0 %v7662
      %v8062 = vpop.f32.mrf.mxu0
      %v8063 = vadd.f32 0.0, %v8062
      %8064 = vmatmul.f32.gmra.mxu0 %v7670
      %v8065 = vpop.f32.mrf.mxu0
      %v8066 = vadd.f32 0.0, %v8065
      %8067 = vmatmul.f32.gmra.mxu0 %v7677
      %v8068 = vpop.f32.mrf.mxu0
      %v8069 = vadd.f32 0.0, %v8068
      %8070 = vmatmul.f32.gmra.mxu0 %v7685
      %v8071 = vpop.f32.mrf.mxu0
      %v8072 = vadd.f32 0.0, %v8071
      %8073 = vmatmul.f32.gmra.mxu0 %v7692
      %v8074 = vpop.f32.mrf.mxu0
      %v8075 = vadd.f32 0.0, %v8074
      %8076 = vmatmul.f32.gmra.mxu0 %v7700
      %v8077 = vpop.f32.mrf.mxu0
      %v8078 = vadd.f32 0.0, %v8077
      %8079 = vmatmul.f32.gmra.mxu0 %v7707
      %v8080 = vpop.f32.mrf.mxu0
      %v8081 = vadd.f32 0.0, %v8080
      %8082 = vmatmul.f32.gmra.mxu0 %v7715
      %v8083 = vpop.f32.mrf.mxu0
      %v8084 = vadd.f32 0.0, %v8083
      %8085 = vmatmul.f32.gmra.mxu0 %v7722
      %v8086 = vpop.f32.mrf.mxu0
      %v8087 = vadd.f32 0.0, %v8086
      %8088 = vmatmul.f32.gmra.mxu0 %v7730
      %v8089 = vpop.f32.mrf.mxu0
      %v8090 = vadd.f32 0.0, %v8089
      %8091 = vmatmul.f32.gmra.mxu0 %v7737
      %v8092 = vpop.f32.mrf.mxu0
      %v8093 = vadd.f32 0.0, %v8092
      %8094 = vmatmul.f32.gmra.mxu0 %v7745
      %v8095 = vpop.f32.mrf.mxu0
      %v8096 = vadd.f32 0.0, %v8095
      %8097 = vmatmul.f32.gmra.mxu0 %v7752
      %v8098 = vpop.f32.mrf.mxu0
      %v8099 = vadd.f32 0.0, %v8098
      %8100 = vmatmul.f32.gmra.mxu0 %v7760
      %v8101 = vpop.f32.mrf.mxu0
      %v8102 = vadd.f32 0.0, %v8101
      %8103 = vmatmul.f32.gmra.mxu0 %v7767
      %v8104 = vpop.f32.mrf.mxu0
      %v8105 = vadd.f32 0.0, %v8104
      %8106 = vmatmul.f32.gmra.mxu0 %v7775
      %v8107 = vpop.f32.mrf.mxu0
      %v8108 = vadd.f32 0.0, %v8107
      %8109 = vmatmul.f32.gmra.mxu0 %v7782
      %v8110 = vpop.f32.mrf.mxu0
      %v8111 = vadd.f32 0.0, %v8110
      %8112 = vmatmul.f32.gmra.mxu0 %v7790
      %v8113 = vpop.f32.mrf.mxu0
      %v8114 = vadd.f32 0.0, %v8113
      %8115 = vmatmul.f32.gmra.mxu0 %v7797
      %v8116 = vpop.f32.mrf.mxu0
      %v8117 = vadd.f32 0.0, %v8116
      %8118 = vmatmul.f32.gmra.mxu0 %v7805
      %v8119 = vpop.f32.mrf.mxu0
      %v8120 = vadd.f32 0.0, %v8119
      %8121 = vmatmul.f32.gmra.mxu0 %v7812
      %v8122 = vpop.f32.mrf.mxu0
      %v8123 = vadd.f32 0.0, %v8122
      %8124 = vmatmul.f32.gmra.mxu0 %v7820
      %v8125 = vpop.f32.mrf.mxu0
      %v8126 = vadd.f32 0.0, %v8125
      %8127 = vmatmul.f32.gmra.mxu0 %v7827
      %v8128 = vpop.f32.mrf.mxu0
      %v8129 = vadd.f32 0.0, %v8128
      %8130 = vmatmul.f32.gmra.mxu0 %v7835
      %v8131 = vpop.f32.mrf.mxu0
      %v8132 = vadd.f32 0.0, %v8131
      %8133 = vmatmul.f32.gmra.mxu0 %v7842
      %v8134 = vpop.f32.mrf.mxu0
      %v8135 = vadd.f32 0.0, %v8134
      %8136 = vmatmul.f32.gmra.mxu0 %v7850
      %v8137 = vpop.f32.mrf.mxu0
      %v8138 = vadd.f32 0.0, %v8137
      %8139 = vmatmul.f32.gmra.mxu0 %v7857
      %v8140 = vpop.f32.mrf.mxu0
      %v8141 = vadd.f32 0.0, %v8140
      %8142 = vmatmul.f32.gmra.mxu0 %v7865
      %v8143 = vpop.f32.mrf.mxu0
      %v8144 = vadd.f32 0.0, %v8143
      %8145 = vmatmul.f32.gmra.mxu0 %v7872
      %v8146 = vpop.f32.mrf.mxu0
      %v8147 = vadd.f32 0.0, %v8146
      %8148 = vmatmul.f32.gmra.mxu0 %v7880
      %v8149 = vpop.f32.mrf.mxu0
      %v8150 = vadd.f32 0.0, %v8149
      %8151 = vmatmul.f32.gmra.mxu0 %v7887
      %v8152 = vpop.f32.mrf.mxu0
      %v8153 = vadd.f32 0.0, %v8152
      %8154 = vmatmul.f32.gmra.mxu0 %v7895
      %v8155 = vpop.f32.mrf.mxu0
      %v8156 = vadd.f32 0.0, %v8155
      %8157 = vdwg.mxu0
      %8158 = vmatpush.msra.mxu0 %v8028
      %8159 = vmatpush.msra.mxu0 %v8027
      %8160 = vmatpush.msra.mxu0 %v8026
      %8161 = vmatpush.msra.mxu0 %v8025
      %8162 = vmatpush.msra.mxu0 %v8024
      %8163 = vmatpush.msra.mxu0 %v8023
      %8164 = vmatpush.msra.mxu0 %v8022
      %8165 = vmatpush.msra.mxu0 %v8021
      %8166 = vmatpush.msra.mxu0 %v8020
      %8167 = vmatpush.msra.mxu0 %v8019
      %8168 = vmatpush.msra.mxu0 %v8018
      %8169 = vmatpush.msra.mxu0 %v8017
      %8170 = vmatpush.msra.mxu0 %v8016
      %8171 = vmatpush.msra.mxu0 %v8015
      %8172 = vmatpush.msra.mxu0 %v8014
      %8173 = vmatpush.msra.mxu0 %v8013
      %8174 = vmatmul.f32.gmra.mxu0 %v7665
      %v8175 = vpop.f32.mrf.mxu0
      %v8176 = vadd.f32 %v8063, %v8175
      %8177 = vmatmul.f32.gmra.mxu0 %v7672
      %v8178 = vpop.f32.mrf.mxu0
      %v8179 = vadd.f32 %v8066, %v8178
      %8180 = vmatmul.f32.gmra.mxu0 %v7680
      %v8181 = vpop.f32.mrf.mxu0
      %v8182 = vadd.f32 %v8069, %v8181
      %8183 = vmatmul.f32.gmra.mxu0 %v7687
      %v8184 = vpop.f32.mrf.mxu0
      %v8185 = vadd.f32 %v8072, %v8184
      %8186 = vmatmul.f32.gmra.mxu0 %v7695
      %v8187 = vpop.f32.mrf.mxu0
      %v8188 = vadd.f32 %v8075, %v8187
      %8189 = vmatmul.f32.gmra.mxu0 %v7702
      %v8190 = vpop.f32.mrf.mxu0
      %v8191 = vadd.f32 %v8078, %v8190
      %8192 = vmatmul.f32.gmra.mxu0 %v7710
      %v8193 = vpop.f32.mrf.mxu0
      %v8194 = vadd.f32 %v8081, %v8193
      %8195 = vmatmul.f32.gmra.mxu0 %v7717
      %v8196 = vpop.f32.mrf.mxu0
      %v8197 = vadd.f32 %v8084, %v8196
      %8198 = vmatmul.f32.gmra.mxu0 %v7725
      %v8199 = vpop.f32.mrf.mxu0
      %v8200 = vadd.f32 %v8087, %v8199
      %8201 = vmatmul.f32.gmra.mxu0 %v7732
      %v8202 = vpop.f32.mrf.mxu0
      %v8203 = vadd.f32 %v8090, %v8202
      %8204 = vmatmul.f32.gmra.mxu0 %v7740
      %v8205 = vpop.f32.mrf.mxu0
      %v8206 = vadd.f32 %v8093, %v8205
      %8207 = vmatmul.f32.gmra.mxu0 %v7747
      %v8208 = vpop.f32.mrf.mxu0
      %v8209 = vadd.f32 %v8096, %v8208
      %8210 = vmatmul.f32.gmra.mxu0 %v7755
      %v8211 = vpop.f32.mrf.mxu0
      %v8212 = vadd.f32 %v8099, %v8211
      %8213 = vmatmul.f32.gmra.mxu0 %v7762
      %v8214 = vpop.f32.mrf.mxu0
      %v8215 = vadd.f32 %v8102, %v8214
      %8216 = vmatmul.f32.gmra.mxu0 %v7770
      %v8217 = vpop.f32.mrf.mxu0
      %v8218 = vadd.f32 %v8105, %v8217
      %8219 = vmatmul.f32.gmra.mxu0 %v7777
      %v8220 = vpop.f32.mrf.mxu0
      %v8221 = vadd.f32 %v8108, %v8220
      %8222 = vmatmul.f32.gmra.mxu0 %v7785
      %v8223 = vpop.f32.mrf.mxu0
      %v8224 = vadd.f32 %v8111, %v8223
      %8225 = vmatmul.f32.gmra.mxu0 %v7792
      %v8226 = vpop.f32.mrf.mxu0
      %v8227 = vadd.f32 %v8114, %v8226
      %8228 = vmatmul.f32.gmra.mxu0 %v7800
      %v8229 = vpop.f32.mrf.mxu0
      %v8230 = vadd.f32 %v8117, %v8229
      %8231 = vmatmul.f32.gmra.mxu0 %v7807
      %v8232 = vpop.f32.mrf.mxu0
      %v8233 = vadd.f32 %v8120, %v8232
      %8234 = vmatmul.f32.gmra.mxu0 %v7815
      %v8235 = vpop.f32.mrf.mxu0
      %v8236 = vadd.f32 %v8123, %v8235
      %8237 = vmatmul.f32.gmra.mxu0 %v7822
      %v8238 = vpop.f32.mrf.mxu0
      %v8239 = vadd.f32 %v8126, %v8238
      %8240 = vmatmul.f32.gmra.mxu0 %v7830
      %v8241 = vpop.f32.mrf.mxu0
      %v8242 = vadd.f32 %v8129, %v8241
      %8243 = vmatmul.f32.gmra.mxu0 %v7837
      %v8244 = vpop.f32.mrf.mxu0
      %v8245 = vadd.f32 %v8132, %v8244
      %8246 = vmatmul.f32.gmra.mxu0 %v7845
      %v8247 = vpop.f32.mrf.mxu0
      %v8248 = vadd.f32 %v8135, %v8247
      %8249 = vmatmul.f32.gmra.mxu0 %v7852
      %v8250 = vpop.f32.mrf.mxu0
      %v8251 = vadd.f32 %v8138, %v8250
      %8252 = vmatmul.f32.gmra.mxu0 %v7860
      %v8253 = vpop.f32.mrf.mxu0
      %v8254 = vadd.f32 %v8141, %v8253
      %8255 = vmatmul.f32.gmra.mxu0 %v7867
      %v8256 = vpop.f32.mrf.mxu0
      %v8257 = vadd.f32 %v8144, %v8256
      %8258 = vmatmul.f32.gmra.mxu0 %v7875
      %v8259 = vpop.f32.mrf.mxu0
      %v8260 = vadd.f32 %v8147, %v8259
      %8261 = vmatmul.f32.gmra.mxu0 %v7882
      %v8262 = vpop.f32.mrf.mxu0
      %v8263 = vadd.f32 %v8150, %v8262
      %8264 = vmatmul.f32.gmra.mxu0 %v7890
      %v8265 = vpop.f32.mrf.mxu0
      %v8266 = vadd.f32 %v8153, %v8265
      %8267 = vmatmul.f32.gmra.mxu0 %v7897
      %v8268 = vpop.f32.mrf.mxu0
      %v8269 = vadd.f32 %v8156, %v8268
      %8270 = vdwg.mxu0
      %8271 = vmatpush.msra.mxu0 %v8044
      %8272 = vmatpush.msra.mxu0 %v8043
      %8273 = vmatpush.msra.mxu0 %v8042
      %8274 = vmatpush.msra.mxu0 %v8041
      %8275 = vmatpush.msra.mxu0 %v8040
      %8276 = vmatpush.msra.mxu0 %v8039
      %8277 = vmatpush.msra.mxu0 %v8038
      %8278 = vmatpush.msra.mxu0 %v8037
      %8279 = vmatpush.msra.mxu0 %v8036
      %8280 = vmatpush.msra.mxu0 %v8035
      %8281 = vmatpush.msra.mxu0 %v8034
      %8282 = vmatpush.msra.mxu0 %v8033
      %8283 = vmatpush.msra.mxu0 %v8032
      %8284 = vmatpush.msra.mxu0 %v8031
      %8285 = vmatpush.msra.mxu0 %v8030
      %8286 = vmatpush.msra.mxu0 %v8029
      %8287 = vmatmul.f32.gmra.mxu0 %v7668
      %v8288 = vpop.f32.mrf.mxu0
      %v8289 = vadd.f32 %v8176, %v8288
      %8290 = vmatmul.f32.gmra.mxu0 %v7674
      %v8291 = vpop.f32.mrf.mxu0
      %v8292 = vadd.f32 %v8179, %v8291
      %8293 = vmatmul.f32.gmra.mxu0 %v7683
      %v8294 = vpop.f32.mrf.mxu0
      %v8295 = vadd.f32 %v8182, %v8294
      %8296 = vmatmul.f32.gmra.mxu0 %v7689
      %v8297 = vpop.f32.mrf.mxu0
      %v8298 = vadd.f32 %v8185, %v8297
      %8299 = vmatmul.f32.gmra.mxu0 %v7698
      %v8300 = vpop.f32.mrf.mxu0
      %v8301 = vadd.f32 %v8188, %v8300
      %8302 = vmatmul.f32.gmra.mxu0 %v7704
      %v8303 = vpop.f32.mrf.mxu0
      %v8304 = vadd.f32 %v8191, %v8303
      %8305 = vmatmul.f32.gmra.mxu0 %v7713
      %v8306 = vpop.f32.mrf.mxu0
      %v8307 = vadd.f32 %v8194, %v8306
      %8308 = vmatmul.f32.gmra.mxu0 %v7719
      %v8309 = vpop.f32.mrf.mxu0
      %v8310 = vadd.f32 %v8197, %v8309
      %8311 = vmatmul.f32.gmra.mxu0 %v7728
      %v8312 = vpop.f32.mrf.mxu0
      %v8313 = vadd.f32 %v8200, %v8312
      %8314 = vmatmul.f32.gmra.mxu0 %v7734
      %v8315 = vpop.f32.mrf.mxu0
      %v8316 = vadd.f32 %v8203, %v8315
      %8317 = vmatmul.f32.gmra.mxu0 %v7743
      %v8318 = vpop.f32.mrf.mxu0
      %v8319 = vadd.f32 %v8206, %v8318
      %8320 = vmatmul.f32.gmra.mxu0 %v7749
      %v8321 = vpop.f32.mrf.mxu0
      %v8322 = vadd.f32 %v8209, %v8321
      %8323 = vmatmul.f32.gmra.mxu0 %v7758
      %v8324 = vpop.f32.mrf.mxu0
      %v8325 = vadd.f32 %v8212, %v8324
      %8326 = vmatmul.f32.gmra.mxu0 %v7764
      %v8327 = vpop.f32.mrf.mxu0
      %v8328 = vadd.f32 %v8215, %v8327
      %8329 = vmatmul.f32.gmra.mxu0 %v7773
      %v8330 = vpop.f32.mrf.mxu0
      %v8331 = vadd.f32 %v8218, %v8330
      %8332 = vmatmul.f32.gmra.mxu0 %v7779
      %v8333 = vpop.f32.mrf.mxu0
      %v8334 = vadd.f32 %v8221, %v8333
      %8335 = vmatmul.f32.gmra.mxu0 %v7788
      %v8336 = vpop.f32.mrf.mxu0
      %v8337 = vadd.f32 %v8224, %v8336
      %8338 = vmatmul.f32.gmra.mxu0 %v7794
      %v8339 = vpop.f32.mrf.mxu0
      %v8340 = vadd.f32 %v8227, %v8339
      %8341 = vmatmul.f32.gmra.mxu0 %v7803
      %v8342 = vpop.f32.mrf.mxu0
      %v8343 = vadd.f32 %v8230, %v8342
      %8344 = vmatmul.f32.gmra.mxu0 %v7809
      %v8345 = vpop.f32.mrf.mxu0
      %v8346 = vadd.f32 %v8233, %v8345
      %8347 = vmatmul.f32.gmra.mxu0 %v7818
      %v8348 = vpop.f32.mrf.mxu0
      %v8349 = vadd.f32 %v8236, %v8348
      %8350 = vmatmul.f32.gmra.mxu0 %v7824
      %v8351 = vpop.f32.mrf.mxu0
      %v8352 = vadd.f32 %v8239, %v8351
      %8353 = vmatmul.f32.gmra.mxu0 %v7833
      %v8354 = vpop.f32.mrf.mxu0
      %v8355 = vadd.f32 %v8242, %v8354
      %8356 = vmatmul.f32.gmra.mxu0 %v7839
      %v8357 = vpop.f32.mrf.mxu0
      %v8358 = vadd.f32 %v8245, %v8357
      %8359 = vmatmul.f32.gmra.mxu0 %v7848
      %v8360 = vpop.f32.mrf.mxu0
      %v8361 = vadd.f32 %v8248, %v8360
      %8362 = vmatmul.f32.gmra.mxu0 %v7854
      %v8363 = vpop.f32.mrf.mxu0
      %v8364 = vadd.f32 %v8251, %v8363
      %8365 = vmatmul.f32.gmra.mxu0 %v7863
      %v8366 = vpop.f32.mrf.mxu0
      %v8367 = vadd.f32 %v8254, %v8366
      %8368 = vmatmul.f32.gmra.mxu0 %v7869
      %v8369 = vpop.f32.mrf.mxu0
      %v8370 = vadd.f32 %v8257, %v8369
      %8371 = vmatmul.f32.gmra.mxu0 %v7878
      %v8372 = vpop.f32.mrf.mxu0
      %v8373 = vadd.f32 %v8260, %v8372
      %8374 = vmatmul.f32.gmra.mxu0 %v7884
      %v8375 = vpop.f32.mrf.mxu0
      %v8376 = vadd.f32 %v8263, %v8375
      %8377 = vmatmul.f32.gmra.mxu0 %v7893
      %v8378 = vpop.f32.mrf.mxu0
      %v8379 = vadd.f32 %v8266, %v8378
      %8380 = vmatmul.f32.gmra.mxu0 %v7899
      %v8381 = vpop.f32.mrf.mxu0
      %v8382 = vadd.f32 %v8269, %v8381
      %8383 = vdwg.mxu0
      %v8384 = vadd.f32 %v7340, %v8289
      %v8385 = vadd.f32 %v7341, %v8292
      %v8386 = vadd.f32 %v7342, %v8295
      %v8387 = vadd.f32 %v7343, %v8298
      %v8388 = vadd.f32 %v7344, %v8301
      %v8389 = vadd.f32 %v7345, %v8304
      %v8390 = vadd.f32 %v7346, %v8307
      %v8391 = vadd.f32 %v7347, %v8310
      %v8392 = vadd.f32 %v7348, %v8313
      %v8393 = vadd.f32 %v7349, %v8316
      %v8394 = vadd.f32 %v7350, %v8319
      %v8395 = vadd.f32 %v7351, %v8322
      %v8396 = vadd.f32 %v7352, %v8325
      %v8397 = vadd.f32 %v7353, %v8328
      %v8398 = vadd.f32 %v7354, %v8331
      %v8399 = vadd.f32 %v7355, %v8334
      %v8400 = vadd.f32 %v7356, %v8337
      %v8401 = vadd.f32 %v7357, %v8340
      %v8402 = vadd.f32 %v7358, %v8343
      %v8403 = vadd.f32 %v7359, %v8346
      %v8404 = vadd.f32 %v7360, %v8349
      %v8405 = vadd.f32 %v7361, %v8352
      %v8406 = vadd.f32 %v7362, %v8355
      %v8407 = vadd.f32 %v7363, %v8358
      %v8408 = vadd.f32 %v7364, %v8361
      %v8409 = vadd.f32 %v7365, %v8364
      %v8410 = vadd.f32 %v7366, %v8367
      %v8411 = vadd.f32 %v7367, %v8370
      %v8412 = vadd.f32 %v7368, %v8373
      %v8413 = vadd.f32 %v7369, %v8376
      %v8414 = vadd.f32 %v7370, %v8379
      %v8415 = vadd.f32 %v7371, %v8382
      %v8416 = vld [vmem:[%s4783 + $0x30] sm:$0xff]
      %v8417 = vld [vmem:[%s4783 + $0x38] sm:$0xff]
      %v8418 = vld [vmem:[%s4783 + $0x40] sm:$0xff]
      %v8419 = vld [vmem:[%s4783 + $0x90] sm:$0xff]
      %v8420 = vld [vmem:[%s4783 + $0x98] sm:$0xff]
      %v8421 = vld [vmem:[%s4783 + $0xa0] sm:$0xff]
      %v8422 = vld [vmem:[%s4783 + $0xf0] sm:$0xff]
      %v8423 = vld [vmem:[%s4783 + $0xf8] sm:$0xff]
      %v8424 = vld [vmem:[%s4783 + $0x100] sm:$0xff]
      %v8425 = vld [vmem:[%s4783 + $0x150] sm:$0xff]
      %v8426 = vld [vmem:[%s4783 + $0x158] sm:$0xff]
      %v8427 = vld [vmem:[%s4783 + $0x160] sm:$0xff]
      %v8428 = vld [vmem:[%s4783 + $0x1b0] sm:$0xff]
      %v8429 = vld [vmem:[%s4783 + $0x1b8] sm:$0xff]
      %v8430 = vld [vmem:[%s4783 + $0x1c0] sm:$0xff]
      %v8431 = vld [vmem:[%s4783 + $0x210] sm:$0xff]
      %v8432 = vld [vmem:[%s4783 + $0x218] sm:$0xff]
      %v8433 = vld [vmem:[%s4783 + $0x220] sm:$0xff]
      %v8434 = vld [vmem:[%s4783 + $0x270] sm:$0xff]
      %v8435 = vld [vmem:[%s4783 + $0x278] sm:$0xff]
      %v8436 = vld [vmem:[%s4783 + $0x280] sm:$0xff]
      %v8437 = vld [vmem:[%s4783 + $0x2d0] sm:$0xff]
      %v8438 = vld [vmem:[%s4783 + $0x2d8] sm:$0xff]
      %v8439 = vld [vmem:[%s4783 + $0x2e0] sm:$0xff]
      %v8440 = vld [vmem:[%s4783 + $0x330] sm:$0xff]
      %v8441 = vld [vmem:[%s4783 + $0x338] sm:$0xff]
      %v8442 = vld [vmem:[%s4783 + $0x340] sm:$0xff]
      %v8443 = vld [vmem:[%s4783 + $0x390] sm:$0xff]
      %v8444 = vld [vmem:[%s4783 + $0x398] sm:$0xff]
      %v8445 = vld [vmem:[%s4783 + $0x3a0] sm:$0xff]
      %v8446 = vld [vmem:[%s4783 + $0x3f0] sm:$0xff]
      %v8447 = vld [vmem:[%s4783 + $0x3f8] sm:$0xff]
      %v8448 = vld [vmem:[%s4783 + $0x400] sm:$0xff]
      %v8449 = vld [vmem:[%s4783 + $0x450] sm:$0xff]
      %v8450 = vld [vmem:[%s4783 + $0x458] sm:$0xff]
      %v8451 = vld [vmem:[%s4783 + $0x460] sm:$0xff]
      %v8452 = vld [vmem:[%s4783 + $0x4b0] sm:$0xff]
      %v8453 = vld [vmem:[%s4783 + $0x4b8] sm:$0xff]
      %v8454 = vld [vmem:[%s4783 + $0x4c0] sm:$0xff]
      %v8455 = vld [vmem:[%s4783 + $0x510] sm:$0xff]
      %v8456 = vld [vmem:[%s4783 + $0x518] sm:$0xff]
      %v8457 = vld [vmem:[%s4783 + $0x520] sm:$0xff]
      %v8458 = vld [vmem:[%s4783 + $0x570] sm:$0xff]
      %v8459 = vld [vmem:[%s4783 + $0x578] sm:$0xff]
      %v8460 = vld [vmem:[%s4783 + $0x580] sm:$0xff]
      %v8461 = vld [vmem:[%s4783 + $0x5d0] sm:$0xff]
      %v8462 = vld [vmem:[%s4783 + $0x5d8] sm:$0xff]
      %v8463 = vld [vmem:[%s4783 + $0x5e0] sm:$0xff]
      %s8464 = scalar_lea.vmem %s5, 1536
      %v8465 = vld [vmem:[%s8464] sm:$0xff]
      %v8466 = vld [vmem:[%s8464 + $0x8] sm:$0xff]
      %v8467 = vld [vmem:[%s8464 + $0x10] sm:$0xff]
      %v8468 = vld [vmem:[%s8464 + $0x18] sm:$0xff]
      %v8469 = vld [vmem:[%s8464 + $0x20] sm:$0xff]
      %v8470 = vld [vmem:[%s8464 + $0x28] sm:$0xff]
      %v8471 = vld [vmem:[%s8464 + $0x30] sm:$0xff]
      %v8472 = vld [vmem:[%s8464 + $0x38] sm:$0xff]
      %v8473 = vld [vmem:[%s8464 + $0x40] sm:$0xff]
      %v8474 = vld [vmem:[%s8464 + $0x48] sm:$0xff]
      %v8475 = vld [vmem:[%s8464 + $0x50] sm:$0xff]
      %v8476 = vld [vmem:[%s8464 + $0x58] sm:$0xff]
      %v8477 = vld [vmem:[%s8464 + $0x60] sm:$0xff]
      %v8478 = vld [vmem:[%s8464 + $0x68] sm:$0xff]
      %v8479 = vld [vmem:[%s8464 + $0x70] sm:$0xff]
      %v8480 = vld [vmem:[%s8464 + $0x78] sm:$0xff]
      %v8481 = vld [vmem:[%s8464 + $0x80] sm:$0xff]
      %v8482 = vld [vmem:[%s8464 + $0x88] sm:$0xff]
      %v8483 = vld [vmem:[%s8464 + $0x90] sm:$0xff]
      %v8484 = vld [vmem:[%s8464 + $0x98] sm:$0xff]
      %v8485 = vld [vmem:[%s8464 + $0xa0] sm:$0xff]
      %v8486 = vld [vmem:[%s8464 + $0xa8] sm:$0xff]
      %v8487 = vld [vmem:[%s8464 + $0xb0] sm:$0xff]
      %v8488 = vld [vmem:[%s8464 + $0xb8] sm:$0xff]
      %v8489 = vld [vmem:[%s8464 + $0xc0] sm:$0xff]
      %v8490 = vld [vmem:[%s8464 + $0xc8] sm:$0xff]
      %v8491 = vld [vmem:[%s8464 + $0xd0] sm:$0xff]
      %v8492 = vld [vmem:[%s8464 + $0xd8] sm:$0xff]
      %v8493 = vld [vmem:[%s8464 + $0xe0] sm:$0xff]
      %v8494 = vld [vmem:[%s8464 + $0xe8] sm:$0xff]
      %v8495 = vld [vmem:[%s8464 + $0xf0] sm:$0xff]
      %v8496 = vld [vmem:[%s8464 + $0xf8] sm:$0xff]
      %v8497 = vld [vmem:[%s8464 + $0x100] sm:$0xff]
      %v8498 = vld [vmem:[%s8464 + $0x108] sm:$0xff]
      %v8499 = vld [vmem:[%s8464 + $0x110] sm:$0xff]
      %v8500 = vld [vmem:[%s8464 + $0x118] sm:$0xff]
      %v8501 = vld [vmem:[%s8464 + $0x120] sm:$0xff]
      %v8502 = vld [vmem:[%s8464 + $0x128] sm:$0xff]
      %v8503 = vld [vmem:[%s8464 + $0x130] sm:$0xff]
      %v8504 = vld [vmem:[%s8464 + $0x138] sm:$0xff]
      %v8505 = vld [vmem:[%s8464 + $0x140] sm:$0xff]
      %v8506 = vld [vmem:[%s8464 + $0x148] sm:$0xff]
      %v8507 = vld [vmem:[%s8464 + $0x150] sm:$0xff]
      %v8508 = vld [vmem:[%s8464 + $0x158] sm:$0xff]
      %v8509 = vld [vmem:[%s8464 + $0x160] sm:$0xff]
      %v8510 = vld [vmem:[%s8464 + $0x168] sm:$0xff]
      %v8511 = vld [vmem:[%s8464 + $0x170] sm:$0xff]
      %v8512 = vld [vmem:[%s8464 + $0x178] sm:$0xff]
      %8513 = vmatpush.msra.mxu0 %v8480
      %8514 = vmatpush.msra.mxu0 %v8479
      %8515 = vmatpush.msra.mxu0 %v8478
      %8516 = vmatpush.msra.mxu0 %v8477
      %8517 = vmatpush.msra.mxu0 %v8476
      %8518 = vmatpush.msra.mxu0 %v8475
      %8519 = vmatpush.msra.mxu0 %v8474
      %8520 = vmatpush.msra.mxu0 %v8473
      %8521 = vmatpush.msra.mxu0 %v8472
      %8522 = vmatpush.msra.mxu0 %v8471
      %8523 = vmatpush.msra.mxu0 %v8470
      %8524 = vmatpush.msra.mxu0 %v8469
      %8525 = vmatpush.msra.mxu0 %v8468
      %8526 = vmatpush.msra.mxu0 %v8467
      %8527 = vmatpush.msra.mxu0 %v8466
      %8528 = vmatpush.msra.mxu0 %v8465
      %8529 = vmatmul.f32.gmra.mxu0 %v7375
      %v8530 = vpop.f32.mrf.mxu0
      %v8531 = vadd.f32 0.0, %v8530
      %8532 = vmatmul.f32.gmra.mxu0 %v8416
      %v8533 = vpop.f32.mrf.mxu0
      %v8534 = vadd.f32 0.0, %v8533
      %8535 = vmatmul.f32.gmra.mxu0 %v7384
      %v8536 = vpop.f32.mrf.mxu0
      %v8537 = vadd.f32 0.0, %v8536
      %8538 = vmatmul.f32.gmra.mxu0 %v8419
      %v8539 = vpop.f32.mrf.mxu0
      %v8540 = vadd.f32 0.0, %v8539
      %8541 = vmatmul.f32.gmra.mxu0 %v7393
      %v8542 = vpop.f32.mrf.mxu0
      %v8543 = vadd.f32 0.0, %v8542
      %8544 = vmatmul.f32.gmra.mxu0 %v8422
      %v8545 = vpop.f32.mrf.mxu0
      %v8546 = vadd.f32 0.0, %v8545
      %8547 = vmatmul.f32.gmra.mxu0 %v7402
      %v8548 = vpop.f32.mrf.mxu0
      %v8549 = vadd.f32 0.0, %v8548
      %8550 = vmatmul.f32.gmra.mxu0 %v8425
      %v8551 = vpop.f32.mrf.mxu0
      %v8552 = vadd.f32 0.0, %v8551
      %8553 = vmatmul.f32.gmra.mxu0 %v7411
      %v8554 = vpop.f32.mrf.mxu0
      %v8555 = vadd.f32 0.0, %v8554
      %8556 = vmatmul.f32.gmra.mxu0 %v8428
      %v8557 = vpop.f32.mrf.mxu0
      %v8558 = vadd.f32 0.0, %v8557
      %8559 = vmatmul.f32.gmra.mxu0 %v7420
      %v8560 = vpop.f32.mrf.mxu0
      %v8561 = vadd.f32 0.0, %v8560
      %8562 = vmatmul.f32.gmra.mxu0 %v8431
      %v8563 = vpop.f32.mrf.mxu0
      %v8564 = vadd.f32 0.0, %v8563
      %8565 = vmatmul.f32.gmra.mxu0 %v7429
      %v8566 = vpop.f32.mrf.mxu0
      %v8567 = vadd.f32 0.0, %v8566
      %8568 = vmatmul.f32.gmra.mxu0 %v8434
      %v8569 = vpop.f32.mrf.mxu0
      %v8570 = vadd.f32 0.0, %v8569
      %8571 = vmatmul.f32.gmra.mxu0 %v7438
      %v8572 = vpop.f32.mrf.mxu0
      %v8573 = vadd.f32 0.0, %v8572
      %8574 = vmatmul.f32.gmra.mxu0 %v8437
      %v8575 = vpop.f32.mrf.mxu0
      %v8576 = vadd.f32 0.0, %v8575
      %8577 = vmatmul.f32.gmra.mxu0 %v7447
      %v8578 = vpop.f32.mrf.mxu0
      %v8579 = vadd.f32 0.0, %v8578
      %8580 = vmatmul.f32.gmra.mxu0 %v8440
      %v8581 = vpop.f32.mrf.mxu0
      %v8582 = vadd.f32 0.0, %v8581
      %8583 = vmatmul.f32.gmra.mxu0 %v7456
      %v8584 = vpop.f32.mrf.mxu0
      %v8585 = vadd.f32 0.0, %v8584
      %8586 = vmatmul.f32.gmra.mxu0 %v8443
      %v8587 = vpop.f32.mrf.mxu0
      %v8588 = vadd.f32 0.0, %v8587
      %8589 = vmatmul.f32.gmra.mxu0 %v7465
      %v8590 = vpop.f32.mrf.mxu0
      %v8591 = vadd.f32 0.0, %v8590
      %8592 = vmatmul.f32.gmra.mxu0 %v8446
      %v8593 = vpop.f32.mrf.mxu0
      %v8594 = vadd.f32 0.0, %v8593
      %8595 = vmatmul.f32.gmra.mxu0 %v7474
      %v8596 = vpop.f32.mrf.mxu0
      %v8597 = vadd.f32 0.0, %v8596
      %8598 = vmatmul.f32.gmra.mxu0 %v8449
      %v8599 = vpop.f32.mrf.mxu0
      %v8600 = vadd.f32 0.0, %v8599
      %8601 = vmatmul.f32.gmra.mxu0 %v7483
      %v8602 = vpop.f32.mrf.mxu0
      %v8603 = vadd.f32 0.0, %v8602
      %8604 = vmatmul.f32.gmra.mxu0 %v8452
      %v8605 = vpop.f32.mrf.mxu0
      %v8606 = vadd.f32 0.0, %v8605
      %8607 = vmatmul.f32.gmra.mxu0 %v7492
      %v8608 = vpop.f32.mrf.mxu0
      %v8609 = vadd.f32 0.0, %v8608
      %8610 = vmatmul.f32.gmra.mxu0 %v8455
      %v8611 = vpop.f32.mrf.mxu0
      %v8612 = vadd.f32 0.0, %v8611
      %8613 = vmatmul.f32.gmra.mxu0 %v7501
      %v8614 = vpop.f32.mrf.mxu0
      %v8615 = vadd.f32 0.0, %v8614
      %8616 = vmatmul.f32.gmra.mxu0 %v8458
      %v8617 = vpop.f32.mrf.mxu0
      %v8618 = vadd.f32 0.0, %v8617
      %8619 = vmatmul.f32.gmra.mxu0 %v7510
      %v8620 = vpop.f32.mrf.mxu0
      %v8621 = vadd.f32 0.0, %v8620
      %8622 = vmatmul.f32.gmra.mxu0 %v8461
      %v8623 = vpop.f32.mrf.mxu0
      %v8624 = vadd.f32 0.0, %v8623
      %8625 = vdwg.mxu0
      %8626 = vmatpush.msra.mxu0 %v8496
      %8627 = vmatpush.msra.mxu0 %v8495
      %8628 = vmatpush.msra.mxu0 %v8494
      %8629 = vmatpush.msra.mxu0 %v8493
      %8630 = vmatpush.msra.mxu0 %v8492
      %8631 = vmatpush.msra.mxu0 %v8491
      %8632 = vmatpush.msra.mxu0 %v8490
      %8633 = vmatpush.msra.mxu0 %v8489
      %8634 = vmatpush.msra.mxu0 %v8488
      %8635 = vmatpush.msra.mxu0 %v8487
      %8636 = vmatpush.msra.mxu0 %v8486
      %8637 = vmatpush.msra.mxu0 %v8485
      %8638 = vmatpush.msra.mxu0 %v8484
      %8639 = vmatpush.msra.mxu0 %v8483
      %8640 = vmatpush.msra.mxu0 %v8482
      %8641 = vmatpush.msra.mxu0 %v8481
      %8642 = vmatmul.f32.gmra.mxu0 %v7376
      %v8643 = vpop.f32.mrf.mxu0
      %v8644 = vadd.f32 %v8531, %v8643
      %8645 = vmatmul.f32.gmra.mxu0 %v8417
      %v8646 = vpop.f32.mrf.mxu0
      %v8647 = vadd.f32 %v8534, %v8646
      %8648 = vmatmul.f32.gmra.mxu0 %v7385
      %v8649 = vpop.f32.mrf.mxu0
      %v8650 = vadd.f32 %v8537, %v8649
      %8651 = vmatmul.f32.gmra.mxu0 %v8420
      %v8652 = vpop.f32.mrf.mxu0
      %v8653 = vadd.f32 %v8540, %v8652
      %8654 = vmatmul.f32.gmra.mxu0 %v7394
      %v8655 = vpop.f32.mrf.mxu0
      %v8656 = vadd.f32 %v8543, %v8655
      %8657 = vmatmul.f32.gmra.mxu0 %v8423
      %v8658 = vpop.f32.mrf.mxu0
      %v8659 = vadd.f32 %v8546, %v8658
      %8660 = vmatmul.f32.gmra.mxu0 %v7403
      %v8661 = vpop.f32.mrf.mxu0
      %v8662 = vadd.f32 %v8549, %v8661
      %8663 = vmatmul.f32.gmra.mxu0 %v8426
      %v8664 = vpop.f32.mrf.mxu0
      %v8665 = vadd.f32 %v8552, %v8664
      %8666 = vmatmul.f32.gmra.mxu0 %v7412
      %v8667 = vpop.f32.mrf.mxu0
      %v8668 = vadd.f32 %v8555, %v8667
      %8669 = vmatmul.f32.gmra.mxu0 %v8429
      %v8670 = vpop.f32.mrf.mxu0
      %v8671 = vadd.f32 %v8558, %v8670
      %8672 = vmatmul.f32.gmra.mxu0 %v7421
      %v8673 = vpop.f32.mrf.mxu0
      %v8674 = vadd.f32 %v8561, %v8673
      %8675 = vmatmul.f32.gmra.mxu0 %v8432
      %v8676 = vpop.f32.mrf.mxu0
      %v8677 = vadd.f32 %v8564, %v8676
      %8678 = vmatmul.f32.gmra.mxu0 %v7430
      %v8679 = vpop.f32.mrf.mxu0
      %v8680 = vadd.f32 %v8567, %v8679
      %8681 = vmatmul.f32.gmra.mxu0 %v8435
      %v8682 = vpop.f32.mrf.mxu0
      %v8683 = vadd.f32 %v8570, %v8682
      %8684 = vmatmul.f32.gmra.mxu0 %v7439
      %v8685 = vpop.f32.mrf.mxu0
      %v8686 = vadd.f32 %v8573, %v8685
      %8687 = vmatmul.f32.gmra.mxu0 %v8438
      %v8688 = vpop.f32.mrf.mxu0
      %v8689 = vadd.f32 %v8576, %v8688
      %8690 = vmatmul.f32.gmra.mxu0 %v7448
      %v8691 = vpop.f32.mrf.mxu0
      %v8692 = vadd.f32 %v8579, %v8691
      %8693 = vmatmul.f32.gmra.mxu0 %v8441
      %v8694 = vpop.f32.mrf.mxu0
      %v8695 = vadd.f32 %v8582, %v8694
      %8696 = vmatmul.f32.gmra.mxu0 %v7457
      %v8697 = vpop.f32.mrf.mxu0
      %v8698 = vadd.f32 %v8585, %v8697
      %8699 = vmatmul.f32.gmra.mxu0 %v8444
      %v8700 = vpop.f32.mrf.mxu0
      %v8701 = vadd.f32 %v8588, %v8700
      %8702 = vmatmul.f32.gmra.mxu0 %v7466
      %v8703 = vpop.f32.mrf.mxu0
      %v8704 = vadd.f32 %v8591, %v8703
      %8705 = vmatmul.f32.gmra.mxu0 %v8447
      %v8706 = vpop.f32.mrf.mxu0
      %v8707 = vadd.f32 %v8594, %v8706
      %8708 = vmatmul.f32.gmra.mxu0 %v7475
      %v8709 = vpop.f32.mrf.mxu0
      %v8710 = vadd.f32 %v8597, %v8709
      %8711 = vmatmul.f32.gmra.mxu0 %v8450
      %v8712 = vpop.f32.mrf.mxu0
      %v8713 = vadd.f32 %v8600, %v8712
      %8714 = vmatmul.f32.gmra.mxu0 %v7484
      %v8715 = vpop.f32.mrf.mxu0
      %v8716 = vadd.f32 %v8603, %v8715
      %8717 = vmatmul.f32.gmra.mxu0 %v8453
      %v8718 = vpop.f32.mrf.mxu0
      %v8719 = vadd.f32 %v8606, %v8718
      %8720 = vmatmul.f32.gmra.mxu0 %v7493
      %v8721 = vpop.f32.mrf.mxu0
      %v8722 = vadd.f32 %v8609, %v8721
      %8723 = vmatmul.f32.gmra.mxu0 %v8456
      %v8724 = vpop.f32.mrf.mxu0
      %v8725 = vadd.f32 %v8612, %v8724
      %8726 = vmatmul.f32.gmra.mxu0 %v7502
      %v8727 = vpop.f32.mrf.mxu0
      %v8728 = vadd.f32 %v8615, %v8727
      %8729 = vmatmul.f32.gmra.mxu0 %v8459
      %v8730 = vpop.f32.mrf.mxu0
      %v8731 = vadd.f32 %v8618, %v8730
      %8732 = vmatmul.f32.gmra.mxu0 %v7511
      %v8733 = vpop.f32.mrf.mxu0
      %v8734 = vadd.f32 %v8621, %v8733
      %8735 = vmatmul.f32.gmra.mxu0 %v8462
      %v8736 = vpop.f32.mrf.mxu0
      %v8737 = vadd.f32 %v8624, %v8736
      %8738 = vdwg.mxu0
      %8739 = vmatpush.msra.mxu0 %v8512
      %8740 = vmatpush.msra.mxu0 %v8511
      %8741 = vmatpush.msra.mxu0 %v8510
      %8742 = vmatpush.msra.mxu0 %v8509
      %8743 = vmatpush.msra.mxu0 %v8508
      %8744 = vmatpush.msra.mxu0 %v8507
      %8745 = vmatpush.msra.mxu0 %v8506
      %8746 = vmatpush.msra.mxu0 %v8505
      %8747 = vmatpush.msra.mxu0 %v8504
      %8748 = vmatpush.msra.mxu0 %v8503
      %8749 = vmatpush.msra.mxu0 %v8502
      %8750 = vmatpush.msra.mxu0 %v8501
      %8751 = vmatpush.msra.mxu0 %v8500
      %8752 = vmatpush.msra.mxu0 %v8499
      %8753 = vmatpush.msra.mxu0 %v8498
      %8754 = vmatpush.msra.mxu0 %v8497
      %8755 = vmatmul.f32.gmra.mxu0 %v7377
      %v8756 = vpop.f32.mrf.mxu0
      %v8757 = vadd.f32 %v8644, %v8756
      %8758 = vmatmul.f32.gmra.mxu0 %v8418
      %v8759 = vpop.f32.mrf.mxu0
      %v8760 = vadd.f32 %v8647, %v8759
      %8761 = vmatmul.f32.gmra.mxu0 %v7386
      %v8762 = vpop.f32.mrf.mxu0
      %v8763 = vadd.f32 %v8650, %v8762
      %8764 = vmatmul.f32.gmra.mxu0 %v8421
      %v8765 = vpop.f32.mrf.mxu0
      %v8766 = vadd.f32 %v8653, %v8765
      %8767 = vmatmul.f32.gmra.mxu0 %v7395
      %v8768 = vpop.f32.mrf.mxu0
      %v8769 = vadd.f32 %v8656, %v8768
      %8770 = vmatmul.f32.gmra.mxu0 %v8424
      %v8771 = vpop.f32.mrf.mxu0
      %v8772 = vadd.f32 %v8659, %v8771
      %8773 = vmatmul.f32.gmra.mxu0 %v7404
      %v8774 = vpop.f32.mrf.mxu0
      %v8775 = vadd.f32 %v8662, %v8774
      %8776 = vmatmul.f32.gmra.mxu0 %v8427
      %v8777 = vpop.f32.mrf.mxu0
      %v8778 = vadd.f32 %v8665, %v8777
      %8779 = vmatmul.f32.gmra.mxu0 %v7413
      %v8780 = vpop.f32.mrf.mxu0
      %v8781 = vadd.f32 %v8668, %v8780
      %8782 = vmatmul.f32.gmra.mxu0 %v8430
      %v8783 = vpop.f32.mrf.mxu0
      %v8784 = vadd.f32 %v8671, %v8783
      %8785 = vmatmul.f32.gmra.mxu0 %v7422
      %v8786 = vpop.f32.mrf.mxu0
      %v8787 = vadd.f32 %v8674, %v8786
      %8788 = vmatmul.f32.gmra.mxu0 %v8433
      %v8789 = vpop.f32.mrf.mxu0
      %v8790 = vadd.f32 %v8677, %v8789
      %8791 = vmatmul.f32.gmra.mxu0 %v7431
      %v8792 = vpop.f32.mrf.mxu0
      %v8793 = vadd.f32 %v8680, %v8792
      %8794 = vmatmul.f32.gmra.mxu0 %v8436
      %v8795 = vpop.f32.mrf.mxu0
      %v8796 = vadd.f32 %v8683, %v8795
      %8797 = vmatmul.f32.gmra.mxu0 %v7440
      %v8798 = vpop.f32.mrf.mxu0
      %v8799 = vadd.f32 %v8686, %v8798
      %8800 = vmatmul.f32.gmra.mxu0 %v8439
      %v8801 = vpop.f32.mrf.mxu0
      %v8802 = vadd.f32 %v8689, %v8801
      %8803 = vmatmul.f32.gmra.mxu0 %v7449
      %v8804 = vpop.f32.mrf.mxu0
      %v8805 = vadd.f32 %v8692, %v8804
      %8806 = vmatmul.f32.gmra.mxu0 %v8442
      %v8807 = vpop.f32.mrf.mxu0
      %v8808 = vadd.f32 %v8695, %v8807
      %8809 = vmatmul.f32.gmra.mxu0 %v7458
      %v8810 = vpop.f32.mrf.mxu0
      %v8811 = vadd.f32 %v8698, %v8810
      %8812 = vmatmul.f32.gmra.mxu0 %v8445
      %v8813 = vpop.f32.mrf.mxu0
      %v8814 = vadd.f32 %v8701, %v8813
      %8815 = vmatmul.f32.gmra.mxu0 %v7467
      %v8816 = vpop.f32.mrf.mxu0
      %v8817 = vadd.f32 %v8704, %v8816
      %8818 = vmatmul.f32.gmra.mxu0 %v8448
      %v8819 = vpop.f32.mrf.mxu0
      %v8820 = vadd.f32 %v8707, %v8819
      %8821 = vmatmul.f32.gmra.mxu0 %v7476
      %v8822 = vpop.f32.mrf.mxu0
      %v8823 = vadd.f32 %v8710, %v8822
      %8824 = vmatmul.f32.gmra.mxu0 %v8451
      %v8825 = vpop.f32.mrf.mxu0
      %v8826 = vadd.f32 %v8713, %v8825
      %8827 = vmatmul.f32.gmra.mxu0 %v7485
      %v8828 = vpop.f32.mrf.mxu0
      %v8829 = vadd.f32 %v8716, %v8828
      %8830 = vmatmul.f32.gmra.mxu0 %v8454
      %v8831 = vpop.f32.mrf.mxu0
      %v8832 = vadd.f32 %v8719, %v8831
      %8833 = vmatmul.f32.gmra.mxu0 %v7494
      %v8834 = vpop.f32.mrf.mxu0
      %v8835 = vadd.f32 %v8722, %v8834
      %8836 = vmatmul.f32.gmra.mxu0 %v8457
      %v8837 = vpop.f32.mrf.mxu0
      %v8838 = vadd.f32 %v8725, %v8837
      %8839 = vmatmul.f32.gmra.mxu0 %v7503
      %v8840 = vpop.f32.mrf.mxu0
      %v8841 = vadd.f32 %v8728, %v8840
      %8842 = vmatmul.f32.gmra.mxu0 %v8460
      %v8843 = vpop.f32.mrf.mxu0
      %v8844 = vadd.f32 %v8731, %v8843
      %8845 = vmatmul.f32.gmra.mxu0 %v7512
      %v8846 = vpop.f32.mrf.mxu0
      %v8847 = vadd.f32 %v8734, %v8846
      %8848 = vmatmul.f32.gmra.mxu0 %v8463
      %v8849 = vpop.f32.mrf.mxu0
      %v8850 = vadd.f32 %v8737, %v8849
      %8851 = vdwg.mxu0
      %v8852 = vadd.f32 %v8384, %v8757
      %v8853 = vadd.f32 %v8385, %v8760
      %v8854 = vadd.f32 %v8386, %v8763
      %v8855 = vadd.f32 %v8387, %v8766
      %v8856 = vadd.f32 %v8388, %v8769
      %v8857 = vadd.f32 %v8389, %v8772
      %v8858 = vadd.f32 %v8390, %v8775
      %v8859 = vadd.f32 %v8391, %v8778
      %v8860 = vadd.f32 %v8392, %v8781
      %v8861 = vadd.f32 %v8393, %v8784
      %v8862 = vadd.f32 %v8394, %v8787
      %v8863 = vadd.f32 %v8395, %v8790
      %v8864 = vadd.f32 %v8396, %v8793
      %v8865 = vadd.f32 %v8397, %v8796
      %v8866 = vadd.f32 %v8398, %v8799
      %v8867 = vadd.f32 %v8399, %v8802
      %v8868 = vadd.f32 %v8400, %v8805
      %v8869 = vadd.f32 %v8401, %v8808
      %v8870 = vadd.f32 %v8402, %v8811
      %v8871 = vadd.f32 %v8403, %v8814
      %v8872 = vadd.f32 %v8404, %v8817
      %v8873 = vadd.f32 %v8405, %v8820
      %v8874 = vadd.f32 %v8406, %v8823
      %v8875 = vadd.f32 %v8407, %v8826
      %v8876 = vadd.f32 %v8408, %v8829
      %v8877 = vadd.f32 %v8409, %v8832
      %v8878 = vadd.f32 %v8410, %v8835
      %v8879 = vadd.f32 %v8411, %v8838
      %v8880 = vadd.f32 %v8412, %v8841
      %v8881 = vadd.f32 %v8413, %v8844
      %v8882 = vadd.f32 %v8414, %v8847
      %v8883 = vadd.f32 %v8415, %v8850
      %v8884 = vld [vmem:[%s4783 + $0x18] sm:$0xfe]
      %v8885 = vld [vmem:[%s4783 + $0x20] sm:$0xfe]
      %v8886 = vld [vmem:[%s4783 + $0x28] sm:$0xfe]
      %v8887 = vld [vmem:[%s4783 + $0x30] sm:$0xff]
      %v8888 = vld [vmem:[%s4783 + $0x38] sm:$0xff]
      %v8889 = vld [vmem:[%s4783 + $0x40] sm:$0xff]
      %v8890 = vld [vmem:[%s4783 + $0x48] sm:$0x1]
      %v8891 = vld [vmem:[%s4783 + $0x50] sm:$0x1]
      %v8892 = vld [vmem:[%s4783 + $0x58] sm:$0x1]
      %v8893 = vld [vmem:[%s4783 + $0x78] sm:$0xfe]
      %v8894 = vld [vmem:[%s4783 + $0x80] sm:$0xfe]
      %v8895 = vld [vmem:[%s4783 + $0x88] sm:$0xfe]
      %v8896 = vld [vmem:[%s4783 + $0x90] sm:$0xff]
      %v8897 = vld [vmem:[%s4783 + $0x98] sm:$0xff]
      %v8898 = vld [vmem:[%s4783 + $0xa0] sm:$0xff]
      %v8899 = vld [vmem:[%s4783 + $0xa8] sm:$0x1]
      %v8900 = vld [vmem:[%s4783 + $0xb0] sm:$0x1]
      %v8901 = vld [vmem:[%s4783 + $0xb8] sm:$0x1]
      %v8902 = vld [vmem:[%s4783 + $0xd8] sm:$0xfe]
      %v8903 = vld [vmem:[%s4783 + $0xe0] sm:$0xfe]
      %v8904 = vld [vmem:[%s4783 + $0xe8] sm:$0xfe]
      %v8905 = vld [vmem:[%s4783 + $0xf0] sm:$0xff]
      %v8906 = vld [vmem:[%s4783 + $0xf8] sm:$0xff]
      %v8907 = vld [vmem:[%s4783 + $0x100] sm:$0xff]
      %v8908 = vld [vmem:[%s4783 + $0x108] sm:$0x1]
      %v8909 = vld [vmem:[%s4783 + $0x110] sm:$0x1]
      %v8910 = vld [vmem:[%s4783 + $0x118] sm:$0x1]
      %v8911 = vld [vmem:[%s4783 + $0x138] sm:$0xfe]
      %v8912 = vld [vmem:[%s4783 + $0x140] sm:$0xfe]
      %v8913 = vld [vmem:[%s4783 + $0x148] sm:$0xfe]
      %v8914 = vld [vmem:[%s4783 + $0x150] sm:$0xff]
      %v8915 = vld [vmem:[%s4783 + $0x158] sm:$0xff]
      %v8916 = vld [vmem:[%s4783 + $0x160] sm:$0xff]
      %v8917 = vld [vmem:[%s4783 + $0x168] sm:$0x1]
      %v8918 = vld [vmem:[%s4783 + $0x170] sm:$0x1]
      %v8919 = vld [vmem:[%s4783 + $0x178] sm:$0x1]
      %v8920 = vld [vmem:[%s4783 + $0x198] sm:$0xfe]
      %v8921 = vld [vmem:[%s4783 + $0x1a0] sm:$0xfe]
      %v8922 = vld [vmem:[%s4783 + $0x1a8] sm:$0xfe]
      %v8923 = vld [vmem:[%s4783 + $0x1b0] sm:$0xff]
      %v8924 = vld [vmem:[%s4783 + $0x1b8] sm:$0xff]
      %v8925 = vld [vmem:[%s4783 + $0x1c0] sm:$0xff]
      %v8926 = vld [vmem:[%s4783 + $0x1c8] sm:$0x1]
      %v8927 = vld [vmem:[%s4783 + $0x1d0] sm:$0x1]
      %v8928 = vld [vmem:[%s4783 + $0x1d8] sm:$0x1]
      %v8929 = vld [vmem:[%s4783 + $0x1f8] sm:$0xfe]
      %v8930 = vld [vmem:[%s4783 + $0x200] sm:$0xfe]
      %v8931 = vld [vmem:[%s4783 + $0x208] sm:$0xfe]
      %v8932 = vld [vmem:[%s4783 + $0x210] sm:$0xff]
      %v8933 = vld [vmem:[%s4783 + $0x218] sm:$0xff]
      %v8934 = vld [vmem:[%s4783 + $0x220] sm:$0xff]
      %v8935 = vld [vmem:[%s4783 + $0x228] sm:$0x1]
      %v8936 = vld [vmem:[%s4783 + $0x230] sm:$0x1]
      %v8937 = vld [vmem:[%s4783 + $0x238] sm:$0x1]
      %v8938 = vld [vmem:[%s4783 + $0x258] sm:$0xfe]
      %v8939 = vld [vmem:[%s4783 + $0x260] sm:$0xfe]
      %v8940 = vld [vmem:[%s4783 + $0x268] sm:$0xfe]
      %v8941 = vld [vmem:[%s4783 + $0x270] sm:$0xff]
      %v8942 = vld [vmem:[%s4783 + $0x278] sm:$0xff]
      %v8943 = vld [vmem:[%s4783 + $0x280] sm:$0xff]
      %v8944 = vld [vmem:[%s4783 + $0x288] sm:$0x1]
      %v8945 = vld [vmem:[%s4783 + $0x290] sm:$0x1]
      %v8946 = vld [vmem:[%s4783 + $0x298] sm:$0x1]
      %v8947 = vld [vmem:[%s4783 + $0x2b8] sm:$0xfe]
      %v8948 = vld [vmem:[%s4783 + $0x2c0] sm:$0xfe]
      %v8949 = vld [vmem:[%s4783 + $0x2c8] sm:$0xfe]
      %v8950 = vld [vmem:[%s4783 + $0x2d0] sm:$0xff]
      %v8951 = vld [vmem:[%s4783 + $0x2d8] sm:$0xff]
      %v8952 = vld [vmem:[%s4783 + $0x2e0] sm:$0xff]
      %v8953 = vld [vmem:[%s4783 + $0x2e8] sm:$0x1]
      %v8954 = vld [vmem:[%s4783 + $0x2f0] sm:$0x1]
      %v8955 = vld [vmem:[%s4783 + $0x2f8] sm:$0x1]
      %v8956 = vld [vmem:[%s4783 + $0x318] sm:$0xfe]
      %v8957 = vld [vmem:[%s4783 + $0x320] sm:$0xfe]
      %v8958 = vld [vmem:[%s4783 + $0x328] sm:$0xfe]
      %v8959 = vld [vmem:[%s4783 + $0x330] sm:$0xff]
      %v8960 = vld [vmem:[%s4783 + $0x338] sm:$0xff]
      %v8961 = vld [vmem:[%s4783 + $0x340] sm:$0xff]
      %v8962 = vld [vmem:[%s4783 + $0x348] sm:$0x1]
      %v8963 = vld [vmem:[%s4783 + $0x350] sm:$0x1]
      %v8964 = vld [vmem:[%s4783 + $0x358] sm:$0x1]
      %v8965 = vld [vmem:[%s4783 + $0x378] sm:$0xfe]
      %v8966 = vld [vmem:[%s4783 + $0x380] sm:$0xfe]
      %v8967 = vld [vmem:[%s4783 + $0x388] sm:$0xfe]
      %v8968 = vld [vmem:[%s4783 + $0x390] sm:$0xff]
      %v8969 = vld [vmem:[%s4783 + $0x398] sm:$0xff]
      %v8970 = vld [vmem:[%s4783 + $0x3a0] sm:$0xff]
      %v8971 = vld [vmem:[%s4783 + $0x3a8] sm:$0x1]
      %v8972 = vld [vmem:[%s4783 + $0x3b0] sm:$0x1]
      %v8973 = vld [vmem:[%s4783 + $0x3b8] sm:$0x1]
      %v8974 = vld [vmem:[%s4783 + $0x3d8] sm:$0xfe]
      %v8975 = vld [vmem:[%s4783 + $0x3e0] sm:$0xfe]
      %v8976 = vld [vmem:[%s4783 + $0x3e8] sm:$0xfe]
      %v8977 = vld [vmem:[%s4783 + $0x3f0] sm:$0xff]
      %v8978 = vld [vmem:[%s4783 + $0x3f8] sm:$0xff]
      %v8979 = vld [vmem:[%s4783 + $0x400] sm:$0xff]
      %v8980 = vld [vmem:[%s4783 + $0x408] sm:$0x1]
      %v8981 = vld [vmem:[%s4783 + $0x410] sm:$0x1]
      %v8982 = vld [vmem:[%s4783 + $0x418] sm:$0x1]
      %v8983 = vld [vmem:[%s4783 + $0x438] sm:$0xfe]
      %v8984 = vld [vmem:[%s4783 + $0x440] sm:$0xfe]
      %v8985 = vld [vmem:[%s4783 + $0x448] sm:$0xfe]
      %v8986 = vld [vmem:[%s4783 + $0x450] sm:$0xff]
      %v8987 = vld [vmem:[%s4783 + $0x458] sm:$0xff]
      %v8988 = vld [vmem:[%s4783 + $0x460] sm:$0xff]
      %v8989 = vld [vmem:[%s4783 + $0x468] sm:$0x1]
      %v8990 = vld [vmem:[%s4783 + $0x470] sm:$0x1]
      %v8991 = vld [vmem:[%s4783 + $0x478] sm:$0x1]
      %v8992 = vld [vmem:[%s4783 + $0x498] sm:$0xfe]
      %v8993 = vld [vmem:[%s4783 + $0x4a0] sm:$0xfe]
      %v8994 = vld [vmem:[%s4783 + $0x4a8] sm:$0xfe]
      %v8995 = vld [vmem:[%s4783 + $0x4b0] sm:$0xff]
      %v8996 = vld [vmem:[%s4783 + $0x4b8] sm:$0xff]
      %v8997 = vld [vmem:[%s4783 + $0x4c0] sm:$0xff]
      %v8998 = vld [vmem:[%s4783 + $0x4c8] sm:$0x1]
      %v8999 = vld [vmem:[%s4783 + $0x4d0] sm:$0x1]
      %v9000 = vld [vmem:[%s4783 + $0x4d8] sm:$0x1]
      %v9001 = vld [vmem:[%s4783 + $0x4f8] sm:$0xfe]
      %v9002 = vld [vmem:[%s4783 + $0x500] sm:$0xfe]
      %v9003 = vld [vmem:[%s4783 + $0x508] sm:$0xfe]
      %v9004 = vld [vmem:[%s4783 + $0x510] sm:$0xff]
      %v9005 = vld [vmem:[%s4783 + $0x518] sm:$0xff]
      %v9006 = vld [vmem:[%s4783 + $0x520] sm:$0xff]
      %v9007 = vld [vmem:[%s4783 + $0x528] sm:$0x1]
      %v9008 = vld [vmem:[%s4783 + $0x530] sm:$0x1]
      %v9009 = vld [vmem:[%s4783 + $0x538] sm:$0x1]
      %v9010 = vld [vmem:[%s4783 + $0x558] sm:$0xfe]
      %v9011 = vld [vmem:[%s4783 + $0x560] sm:$0xfe]
      %v9012 = vld [vmem:[%s4783 + $0x568] sm:$0xfe]
      %v9013 = vld [vmem:[%s4783 + $0x570] sm:$0xff]
      %v9014 = vld [vmem:[%s4783 + $0x578] sm:$0xff]
      %v9015 = vld [vmem:[%s4783 + $0x580] sm:$0xff]
      %v9016 = vld [vmem:[%s4783 + $0x588] sm:$0x1]
      %v9017 = vld [vmem:[%s4783 + $0x590] sm:$0x1]
      %v9018 = vld [vmem:[%s4783 + $0x598] sm:$0x1]
      %v9019 = vld [vmem:[%s4783 + $0x5b8] sm:$0xfe]
      %v9020 = vld [vmem:[%s4783 + $0x5c0] sm:$0xfe]
      %v9021 = vld [vmem:[%s4783 + $0x5c8] sm:$0xfe]
      %v9022 = vld [vmem:[%s4783 + $0x5d0] sm:$0xff]
      %v9023 = vld [vmem:[%s4783 + $0x5d8] sm:$0xff]
      %v9024 = vld [vmem:[%s4783 + $0x5e0] sm:$0xff]
      %v9025 = vld [vmem:[%s4783 + $0x5e8] sm:$0x1]
      %v9026 = vld [vmem:[%s4783 + $0x5f0] sm:$0x1]
      %v9027 = vld [vmem:[%s4783 + $0x5f8] sm:$0x1]
      %v9172 = vrot.slane %v8884, 1
      %v9173 = vrot.slane %v8887, 1
      %v9174 = vsel %vm710, %v9172, %v9173
      %v9175 = vrot.slane %v8885, 1
      %v9176 = vrot.slane %v8888, 1
      %v9177 = vsel %vm710, %v9175, %v9176
      %v9178 = vrot.slane %v8886, 1
      %v9179 = vrot.slane %v8889, 1
      %v9180 = vsel %vm710, %v9178, %v9179
      %v9181 = vrot.slane %v8890, 1
      %v9182 = vsel %vm710, %v9173, %v9181
      %v9183 = vrot.slane %v8891, 1
      %v9184 = vsel %vm710, %v9176, %v9183
      %v9185 = vrot.slane %v8892, 1
      %v9186 = vsel %vm710, %v9179, %v9185
      %v9187 = vrot.slane %v8893, 1
      %v9188 = vrot.slane %v8896, 1
      %v9189 = vsel %vm710, %v9187, %v9188
      %v9190 = vrot.slane %v8894, 1
      %v9191 = vrot.slane %v8897, 1
      %v9192 = vsel %vm710, %v9190, %v9191
      %v9193 = vrot.slane %v8895, 1
      %v9194 = vrot.slane %v8898, 1
      %v9195 = vsel %vm710, %v9193, %v9194
      %v9196 = vrot.slane %v8899, 1
      %v9197 = vsel %vm710, %v9188, %v9196
      %v9198 = vrot.slane %v8900, 1
      %v9199 = vsel %vm710, %v9191, %v9198
      %v9200 = vrot.slane %v8901, 1
      %v9201 = vsel %vm710, %v9194, %v9200
      %v9202 = vrot.slane %v8902, 1
      %v9203 = vrot.slane %v8905, 1
      %v9204 = vsel %vm710, %v9202, %v9203
      %v9205 = vrot.slane %v8903, 1
      %v9206 = vrot.slane %v8906, 1
      %v9207 = vsel %vm710, %v9205, %v9206
      %v9208 = vrot.slane %v8904, 1
      %v9209 = vrot.slane %v8907, 1
      %v9210 = vsel %vm710, %v9208, %v9209
      %v9211 = vrot.slane %v8908, 1
      %v9212 = vsel %vm710, %v9203, %v9211
      %v9213 = vrot.slane %v8909, 1
      %v9214 = vsel %vm710, %v9206, %v9213
      %v9215 = vrot.slane %v8910, 1
      %v9216 = vsel %vm710, %v9209, %v9215
      %v9217 = vrot.slane %v8911, 1
      %v9218 = vrot.slane %v8914, 1
      %v9219 = vsel %vm710, %v9217, %v9218
      %v9220 = vrot.slane %v8912, 1
      %v9221 = vrot.slane %v8915, 1
      %v9222 = vsel %vm710, %v9220, %v9221
      %v9223 = vrot.slane %v8913, 1
      %v9224 = vrot.slane %v8916, 1
      %v9225 = vsel %vm710, %v9223, %v9224
      %v9226 = vrot.slane %v8917, 1
      %v9227 = vsel %vm710, %v9218, %v9226
      %v9228 = vrot.slane %v8918, 1
      %v9229 = vsel %vm710, %v9221, %v9228
      %v9230 = vrot.slane %v8919, 1
      %v9231 = vsel %vm710, %v9224, %v9230
      %v9232 = vrot.slane %v8920, 1
      %v9233 = vrot.slane %v8923, 1
      %v9234 = vsel %vm710, %v9232, %v9233
      %v9235 = vrot.slane %v8921, 1
      %v9236 = vrot.slane %v8924, 1
      %v9237 = vsel %vm710, %v9235, %v9236
      %v9238 = vrot.slane %v8922, 1
      %v9239 = vrot.slane %v8925, 1
      %v9240 = vsel %vm710, %v9238, %v9239
      %v9241 = vrot.slane %v8926, 1
      %v9242 = vsel %vm710, %v9233, %v9241
      %v9243 = vrot.slane %v8927, 1
      %v9244 = vsel %vm710, %v9236, %v9243
      %v9245 = vrot.slane %v8928, 1
      %v9246 = vsel %vm710, %v9239, %v9245
      %v9247 = vrot.slane %v8929, 1
      %v9248 = vrot.slane %v8932, 1
      %v9249 = vsel %vm710, %v9247, %v9248
      %v9250 = vrot.slane %v8930, 1
      %v9251 = vrot.slane %v8933, 1
      %v9252 = vsel %vm710, %v9250, %v9251
      %v9253 = vrot.slane %v8931, 1
      %v9254 = vrot.slane %v8934, 1
      %v9255 = vsel %vm710, %v9253, %v9254
      %v9256 = vrot.slane %v8935, 1
      %v9257 = vsel %vm710, %v9248, %v9256
      %v9258 = vrot.slane %v8936, 1
      %v9259 = vsel %vm710, %v9251, %v9258
      %v9260 = vrot.slane %v8937, 1
      %v9261 = vsel %vm710, %v9254, %v9260
      %v9262 = vrot.slane %v8938, 1
      %v9263 = vrot.slane %v8941, 1
      %v9264 = vsel %vm710, %v9262, %v9263
      %v9265 = vrot.slane %v8939, 1
      %v9266 = vrot.slane %v8942, 1
      %v9267 = vsel %vm710, %v9265, %v9266
      %v9268 = vrot.slane %v8940, 1
      %v9269 = vrot.slane %v8943, 1
      %v9270 = vsel %vm710, %v9268, %v9269
      %v9271 = vrot.slane %v8944, 1
      %v9272 = vsel %vm710, %v9263, %v9271
      %v9273 = vrot.slane %v8945, 1
      %v9274 = vsel %vm710, %v9266, %v9273
      %v9275 = vrot.slane %v8946, 1
      %v9276 = vsel %vm710, %v9269, %v9275
      %v9277 = vrot.slane %v8947, 1
      %v9278 = vrot.slane %v8950, 1
      %v9279 = vsel %vm710, %v9277, %v9278
      %v9280 = vrot.slane %v8948, 1
      %v9281 = vrot.slane %v8951, 1
      %v9282 = vsel %vm710, %v9280, %v9281
      %v9283 = vrot.slane %v8949, 1
      %v9284 = vrot.slane %v8952, 1
      %v9285 = vsel %vm710, %v9283, %v9284
      %v9286 = vrot.slane %v8953, 1
      %v9287 = vsel %vm710, %v9278, %v9286
      %v9288 = vrot.slane %v8954, 1
      %v9289 = vsel %vm710, %v9281, %v9288
      %v9290 = vrot.slane %v8955, 1
      %v9291 = vsel %vm710, %v9284, %v9290
      %v9292 = vrot.slane %v8956, 1
      %v9293 = vrot.slane %v8959, 1
      %v9294 = vsel %vm710, %v9292, %v9293
      %v9295 = vrot.slane %v8957, 1
      %v9296 = vrot.slane %v8960, 1
      %v9297 = vsel %vm710, %v9295, %v9296
      %v9298 = vrot.slane %v8958, 1
      %v9299 = vrot.slane %v8961, 1
      %v9300 = vsel %vm710, %v9298, %v9299
      %v9301 = vrot.slane %v8962, 1
      %v9302 = vsel %vm710, %v9293, %v9301
      %v9303 = vrot.slane %v8963, 1
      %v9304 = vsel %vm710, %v9296, %v9303
      %v9305 = vrot.slane %v8964, 1
      %v9306 = vsel %vm710, %v9299, %v9305
      %v9307 = vrot.slane %v8965, 1
      %v9308 = vrot.slane %v8968, 1
      %v9309 = vsel %vm710, %v9307, %v9308
      %v9310 = vrot.slane %v8966, 1
      %v9311 = vrot.slane %v8969, 1
      %v9312 = vsel %vm710, %v9310, %v9311
      %v9313 = vrot.slane %v8967, 1
      %v9314 = vrot.slane %v8970, 1
      %v9315 = vsel %vm710, %v9313, %v9314
      %v9316 = vrot.slane %v8971, 1
      %v9317 = vsel %vm710, %v9308, %v9316
      %v9318 = vrot.slane %v8972, 1
      %v9319 = vsel %vm710, %v9311, %v9318
      %v9320 = vrot.slane %v8973, 1
      %v9321 = vsel %vm710, %v9314, %v9320
      %v9322 = vrot.slane %v8974, 1
      %v9323 = vrot.slane %v8977, 1
      %v9324 = vsel %vm710, %v9322, %v9323
      %v9325 = vrot.slane %v8975, 1
      %v9326 = vrot.slane %v8978, 1
      %v9327 = vsel %vm710, %v9325, %v9326
      %v9328 = vrot.slane %v8976, 1
      %v9329 = vrot.slane %v8979, 1
      %v9330 = vsel %vm710, %v9328, %v9329
      %v9331 = vrot.slane %v8980, 1
      %v9332 = vsel %vm710, %v9323, %v9331
      %v9333 = vrot.slane %v8981, 1
      %v9334 = vsel %vm710, %v9326, %v9333
      %v9335 = vrot.slane %v8982, 1
      %v9336 = vsel %vm710, %v9329, %v9335
      %v9337 = vrot.slane %v8983, 1
      %v9338 = vrot.slane %v8986, 1
      %v9339 = vsel %vm710, %v9337, %v9338
      %v9340 = vrot.slane %v8984, 1
      %v9341 = vrot.slane %v8987, 1
      %v9342 = vsel %vm710, %v9340, %v9341
      %v9343 = vrot.slane %v8985, 1
      %v9344 = vrot.slane %v8988, 1
      %v9345 = vsel %vm710, %v9343, %v9344
      %v9346 = vrot.slane %v8989, 1
      %v9347 = vsel %vm710, %v9338, %v9346
      %v9348 = vrot.slane %v8990, 1
      %v9349 = vsel %vm710, %v9341, %v9348
      %v9350 = vrot.slane %v8991, 1
      %v9351 = vsel %vm710, %v9344, %v9350
      %v9352 = vrot.slane %v8992, 1
      %v9353 = vrot.slane %v8995, 1
      %v9354 = vsel %vm710, %v9352, %v9353
      %v9355 = vrot.slane %v8993, 1
      %v9356 = vrot.slane %v8996, 1
      %v9357 = vsel %vm710, %v9355, %v9356
      %v9358 = vrot.slane %v8994, 1
      %v9359 = vrot.slane %v8997, 1
      %v9360 = vsel %vm710, %v9358, %v9359
      %v9361 = vrot.slane %v8998, 1
      %v9362 = vsel %vm710, %v9353, %v9361
      %v9363 = vrot.slane %v8999, 1
      %v9364 = vsel %vm710, %v9356, %v9363
      %v9365 = vrot.slane %v9000, 1
      %v9366 = vsel %vm710, %v9359, %v9365
      %v9367 = vrot.slane %v9001, 1
      %v9368 = vrot.slane %v9004, 1
      %v9369 = vsel %vm710, %v9367, %v9368
      %v9370 = vrot.slane %v9002, 1
      %v9371 = vrot.slane %v9005, 1
      %v9372 = vsel %vm710, %v9370, %v9371
      %v9373 = vrot.slane %v9003, 1
      %v9374 = vrot.slane %v9006, 1
      %v9375 = vsel %vm710, %v9373, %v9374
      %v9376 = vrot.slane %v9007, 1
      %v9377 = vsel %vm710, %v9368, %v9376
      %v9378 = vrot.slane %v9008, 1
      %v9379 = vsel %vm710, %v9371, %v9378
      %v9380 = vrot.slane %v9009, 1
      %v9381 = vsel %vm710, %v9374, %v9380
      %v9382 = vrot.slane %v9010, 1
      %v9383 = vrot.slane %v9013, 1
      %v9384 = vsel %vm710, %v9382, %v9383
      %v9385 = vrot.slane %v9011, 1
      %v9386 = vrot.slane %v9014, 1
      %v9387 = vsel %vm710, %v9385, %v9386
      %v9388 = vrot.slane %v9012, 1
      %v9389 = vrot.slane %v9015, 1
      %v9390 = vsel %vm710, %v9388, %v9389
      %v9391 = vrot.slane %v9016, 1
      %v9392 = vsel %vm710, %v9383, %v9391
      %v9393 = vrot.slane %v9017, 1
      %v9394 = vsel %vm710, %v9386, %v9393
      %v9395 = vrot.slane %v9018, 1
      %v9396 = vsel %vm710, %v9389, %v9395
      %v9397 = vrot.slane %v9019, 1
      %v9398 = vrot.slane %v9022, 1
      %v9399 = vsel %vm710, %v9397, %v9398
      %v9400 = vrot.slane %v9020, 1
      %v9401 = vrot.slane %v9023, 1
      %v9402 = vsel %vm710, %v9400, %v9401
      %v9403 = vrot.slane %v9021, 1
      %v9404 = vrot.slane %v9024, 1
      %v9405 = vsel %vm710, %v9403, %v9404
      %v9406 = vrot.slane %v9025, 1
      %v9407 = vsel %vm710, %v9398, %v9406
      %v9408 = vrot.slane %v9026, 1
      %v9409 = vsel %vm710, %v9401, %v9408
      %v9410 = vrot.slane %v9027, 1
      %v9411 = vsel %vm710, %v9404, %v9410
      %s9508 = scalar_lea.vmem %s5, 1920
      %v9509 = vld [vmem:[%s9508] sm:$0xff]
      %v9510 = vld [vmem:[%s9508 + $0x8] sm:$0xff]
      %v9511 = vld [vmem:[%s9508 + $0x10] sm:$0xff]
      %v9512 = vld [vmem:[%s9508 + $0x18] sm:$0xff]
      %v9513 = vld [vmem:[%s9508 + $0x20] sm:$0xff]
      %v9514 = vld [vmem:[%s9508 + $0x28] sm:$0xff]
      %v9515 = vld [vmem:[%s9508 + $0x30] sm:$0xff]
      %v9516 = vld [vmem:[%s9508 + $0x38] sm:$0xff]
      %v9517 = vld [vmem:[%s9508 + $0x40] sm:$0xff]
      %v9518 = vld [vmem:[%s9508 + $0x48] sm:$0xff]
      %v9519 = vld [vmem:[%s9508 + $0x50] sm:$0xff]
      %v9520 = vld [vmem:[%s9508 + $0x58] sm:$0xff]
      %v9521 = vld [vmem:[%s9508 + $0x60] sm:$0xff]
      %v9522 = vld [vmem:[%s9508 + $0x68] sm:$0xff]
      %v9523 = vld [vmem:[%s9508 + $0x70] sm:$0xff]
      %v9524 = vld [vmem:[%s9508 + $0x78] sm:$0xff]
      %v9525 = vld [vmem:[%s9508 + $0x80] sm:$0xff]
      %v9526 = vld [vmem:[%s9508 + $0x88] sm:$0xff]
      %v9527 = vld [vmem:[%s9508 + $0x90] sm:$0xff]
      %v9528 = vld [vmem:[%s9508 + $0x98] sm:$0xff]
      %v9529 = vld [vmem:[%s9508 + $0xa0] sm:$0xff]
      %v9530 = vld [vmem:[%s9508 + $0xa8] sm:$0xff]
      %v9531 = vld [vmem:[%s9508 + $0xb0] sm:$0xff]
      %v9532 = vld [vmem:[%s9508 + $0xb8] sm:$0xff]
      %v9533 = vld [vmem:[%s9508 + $0xc0] sm:$0xff]
      %v9534 = vld [vmem:[%s9508 + $0xc8] sm:$0xff]
      %v9535 = vld [vmem:[%s9508 + $0xd0] sm:$0xff]
      %v9536 = vld [vmem:[%s9508 + $0xd8] sm:$0xff]
      %v9537 = vld [vmem:[%s9508 + $0xe0] sm:$0xff]
      %v9538 = vld [vmem:[%s9508 + $0xe8] sm:$0xff]
      %v9539 = vld [vmem:[%s9508 + $0xf0] sm:$0xff]
      %v9540 = vld [vmem:[%s9508 + $0xf8] sm:$0xff]
      %v9541 = vld [vmem:[%s9508 + $0x100] sm:$0xff]
      %v9542 = vld [vmem:[%s9508 + $0x108] sm:$0xff]
      %v9543 = vld [vmem:[%s9508 + $0x110] sm:$0xff]
      %v9544 = vld [vmem:[%s9508 + $0x118] sm:$0xff]
      %v9545 = vld [vmem:[%s9508 + $0x120] sm:$0xff]
      %v9546 = vld [vmem:[%s9508 + $0x128] sm:$0xff]
      %v9547 = vld [vmem:[%s9508 + $0x130] sm:$0xff]
      %v9548 = vld [vmem:[%s9508 + $0x138] sm:$0xff]
      %v9549 = vld [vmem:[%s9508 + $0x140] sm:$0xff]
      %v9550 = vld [vmem:[%s9508 + $0x148] sm:$0xff]
      %v9551 = vld [vmem:[%s9508 + $0x150] sm:$0xff]
      %v9552 = vld [vmem:[%s9508 + $0x158] sm:$0xff]
      %v9553 = vld [vmem:[%s9508 + $0x160] sm:$0xff]
      %v9554 = vld [vmem:[%s9508 + $0x168] sm:$0xff]
      %v9555 = vld [vmem:[%s9508 + $0x170] sm:$0xff]
      %v9556 = vld [vmem:[%s9508 + $0x178] sm:$0xff]
      %9557 = vmatpush.msra.mxu0 %v9524
      %9558 = vmatpush.msra.mxu0 %v9523
      %9559 = vmatpush.msra.mxu0 %v9522
      %9560 = vmatpush.msra.mxu0 %v9521
      %9561 = vmatpush.msra.mxu0 %v9520
      %9562 = vmatpush.msra.mxu0 %v9519
      %9563 = vmatpush.msra.mxu0 %v9518
      %9564 = vmatpush.msra.mxu0 %v9517
      %9565 = vmatpush.msra.mxu0 %v9516
      %9566 = vmatpush.msra.mxu0 %v9515
      %9567 = vmatpush.msra.mxu0 %v9514
      %9568 = vmatpush.msra.mxu0 %v9513
      %9569 = vmatpush.msra.mxu0 %v9512
      %9570 = vmatpush.msra.mxu0 %v9511
      %9571 = vmatpush.msra.mxu0 %v9510
      %9572 = vmatpush.msra.mxu0 %v9509
      %9573 = vmatmul.f32.gmra.mxu0 %v9174
      %v9574 = vpop.f32.mrf.mxu0
      %v9575 = vadd.f32 0.0, %v9574
      %9576 = vmatmul.f32.gmra.mxu0 %v9182
      %v9577 = vpop.f32.mrf.mxu0
      %v9578 = vadd.f32 0.0, %v9577
      %9579 = vmatmul.f32.gmra.mxu0 %v9189
      %v9580 = vpop.f32.mrf.mxu0
      %v9581 = vadd.f32 0.0, %v9580
      %9582 = vmatmul.f32.gmra.mxu0 %v9197
      %v9583 = vpop.f32.mrf.mxu0
      %v9584 = vadd.f32 0.0, %v9583
      %9585 = vmatmul.f32.gmra.mxu0 %v9204
      %v9586 = vpop.f32.mrf.mxu0
      %v9587 = vadd.f32 0.0, %v9586
      %9588 = vmatmul.f32.gmra.mxu0 %v9212
      %v9589 = vpop.f32.mrf.mxu0
      %v9590 = vadd.f32 0.0, %v9589
      %9591 = vmatmul.f32.gmra.mxu0 %v9219
      %v9592 = vpop.f32.mrf.mxu0
      %v9593 = vadd.f32 0.0, %v9592
      %9594 = vmatmul.f32.gmra.mxu0 %v9227
      %v9595 = vpop.f32.mrf.mxu0
      %v9596 = vadd.f32 0.0, %v9595
      %9597 = vmatmul.f32.gmra.mxu0 %v9234
      %v9598 = vpop.f32.mrf.mxu0
      %v9599 = vadd.f32 0.0, %v9598
      %9600 = vmatmul.f32.gmra.mxu0 %v9242
      %v9601 = vpop.f32.mrf.mxu0
      %v9602 = vadd.f32 0.0, %v9601
      %9603 = vmatmul.f32.gmra.mxu0 %v9249
      %v9604 = vpop.f32.mrf.mxu0
      %v9605 = vadd.f32 0.0, %v9604
      %9606 = vmatmul.f32.gmra.mxu0 %v9257
      %v9607 = vpop.f32.mrf.mxu0
      %v9608 = vadd.f32 0.0, %v9607
      %9609 = vmatmul.f32.gmra.mxu0 %v9264
      %v9610 = vpop.f32.mrf.mxu0
      %v9611 = vadd.f32 0.0, %v9610
      %9612 = vmatmul.f32.gmra.mxu0 %v9272
      %v9613 = vpop.f32.mrf.mxu0
      %v9614 = vadd.f32 0.0, %v9613
      %9615 = vmatmul.f32.gmra.mxu0 %v9279
      %v9616 = vpop.f32.mrf.mxu0
      %v9617 = vadd.f32 0.0, %v9616
      %9618 = vmatmul.f32.gmra.mxu0 %v9287
      %v9619 = vpop.f32.mrf.mxu0
      %v9620 = vadd.f32 0.0, %v9619
      %9621 = vmatmul.f32.gmra.mxu0 %v9294
      %v9622 = vpop.f32.mrf.mxu0
      %v9623 = vadd.f32 0.0, %v9622
      %9624 = vmatmul.f32.gmra.mxu0 %v9302
      %v9625 = vpop.f32.mrf.mxu0
      %v9626 = vadd.f32 0.0, %v9625
      %9627 = vmatmul.f32.gmra.mxu0 %v9309
      %v9628 = vpop.f32.mrf.mxu0
      %v9629 = vadd.f32 0.0, %v9628
      %9630 = vmatmul.f32.gmra.mxu0 %v9317
      %v9631 = vpop.f32.mrf.mxu0
      %v9632 = vadd.f32 0.0, %v9631
      %9633 = vmatmul.f32.gmra.mxu0 %v9324
      %v9634 = vpop.f32.mrf.mxu0
      %v9635 = vadd.f32 0.0, %v9634
      %9636 = vmatmul.f32.gmra.mxu0 %v9332
      %v9637 = vpop.f32.mrf.mxu0
      %v9638 = vadd.f32 0.0, %v9637
      %9639 = vmatmul.f32.gmra.mxu0 %v9339
      %v9640 = vpop.f32.mrf.mxu0
      %v9641 = vadd.f32 0.0, %v9640
      %9642 = vmatmul.f32.gmra.mxu0 %v9347
      %v9643 = vpop.f32.mrf.mxu0
      %v9644 = vadd.f32 0.0, %v9643
      %9645 = vmatmul.f32.gmra.mxu0 %v9354
      %v9646 = vpop.f32.mrf.mxu0
      %v9647 = vadd.f32 0.0, %v9646
      %9648 = vmatmul.f32.gmra.mxu0 %v9362
      %v9649 = vpop.f32.mrf.mxu0
      %v9650 = vadd.f32 0.0, %v9649
      %9651 = vmatmul.f32.gmra.mxu0 %v9369
      %v9652 = vpop.f32.mrf.mxu0
      %v9653 = vadd.f32 0.0, %v9652
      %9654 = vmatmul.f32.gmra.mxu0 %v9377
      %v9655 = vpop.f32.mrf.mxu0
      %v9656 = vadd.f32 0.0, %v9655
      %9657 = vmatmul.f32.gmra.mxu0 %v9384
      %v9658 = vpop.f32.mrf.mxu0
      %v9659 = vadd.f32 0.0, %v9658
      %9660 = vmatmul.f32.gmra.mxu0 %v9392
      %v9661 = vpop.f32.mrf.mxu0
      %v9662 = vadd.f32 0.0, %v9661
      %9663 = vmatmul.f32.gmra.mxu0 %v9399
      %v9664 = vpop.f32.mrf.mxu0
      %v9665 = vadd.f32 0.0, %v9664
      %9666 = vmatmul.f32.gmra.mxu0 %v9407
      %v9667 = vpop.f32.mrf.mxu0
      %v9668 = vadd.f32 0.0, %v9667
      %9669 = vdwg.mxu0
      %9670 = vmatpush.msra.mxu0 %v9540
      %9671 = vmatpush.msra.mxu0 %v9539
      %9672 = vmatpush.msra.mxu0 %v9538
      %9673 = vmatpush.msra.mxu0 %v9537
      %9674 = vmatpush.msra.mxu0 %v9536
      %9675 = vmatpush.msra.mxu0 %v9535
      %9676 = vmatpush.msra.mxu0 %v9534
      %9677 = vmatpush.msra.mxu0 %v9533
      %9678 = vmatpush.msra.mxu0 %v9532
      %9679 = vmatpush.msra.mxu0 %v9531
      %9680 = vmatpush.msra.mxu0 %v9530
      %9681 = vmatpush.msra.mxu0 %v9529
      %9682 = vmatpush.msra.mxu0 %v9528
      %9683 = vmatpush.msra.mxu0 %v9527
      %9684 = vmatpush.msra.mxu0 %v9526
      %9685 = vmatpush.msra.mxu0 %v9525
      %9686 = vmatmul.f32.gmra.mxu0 %v9177
      %v9687 = vpop.f32.mrf.mxu0
      %v9688 = vadd.f32 %v9575, %v9687
      %9689 = vmatmul.f32.gmra.mxu0 %v9184
      %v9690 = vpop.f32.mrf.mxu0
      %v9691 = vadd.f32 %v9578, %v9690
      %9692 = vmatmul.f32.gmra.mxu0 %v9192
      %v9693 = vpop.f32.mrf.mxu0
      %v9694 = vadd.f32 %v9581, %v9693
      %9695 = vmatmul.f32.gmra.mxu0 %v9199
      %v9696 = vpop.f32.mrf.mxu0
      %v9697 = vadd.f32 %v9584, %v9696
      %9698 = vmatmul.f32.gmra.mxu0 %v9207
      %v9699 = vpop.f32.mrf.mxu0
      %v9700 = vadd.f32 %v9587, %v9699
      %9701 = vmatmul.f32.gmra.mxu0 %v9214
      %v9702 = vpop.f32.mrf.mxu0
      %v9703 = vadd.f32 %v9590, %v9702
      %9704 = vmatmul.f32.gmra.mxu0 %v9222
      %v9705 = vpop.f32.mrf.mxu0
      %v9706 = vadd.f32 %v9593, %v9705
      %9707 = vmatmul.f32.gmra.mxu0 %v9229
      %v9708 = vpop.f32.mrf.mxu0
      %v9709 = vadd.f32 %v9596, %v9708
      %9710 = vmatmul.f32.gmra.mxu0 %v9237
      %v9711 = vpop.f32.mrf.mxu0
      %v9712 = vadd.f32 %v9599, %v9711
      %9713 = vmatmul.f32.gmra.mxu0 %v9244
      %v9714 = vpop.f32.mrf.mxu0
      %v9715 = vadd.f32 %v9602, %v9714
      %9716 = vmatmul.f32.gmra.mxu0 %v9252
      %v9717 = vpop.f32.mrf.mxu0
      %v9718 = vadd.f32 %v9605, %v9717
      %9719 = vmatmul.f32.gmra.mxu0 %v9259
      %v9720 = vpop.f32.mrf.mxu0
      %v9721 = vadd.f32 %v9608, %v9720
      %9722 = vmatmul.f32.gmra.mxu0 %v9267
      %v9723 = vpop.f32.mrf.mxu0
      %v9724 = vadd.f32 %v9611, %v9723
      %9725 = vmatmul.f32.gmra.mxu0 %v9274
      %v9726 = vpop.f32.mrf.mxu0
      %v9727 = vadd.f32 %v9614, %v9726
      %9728 = vmatmul.f32.gmra.mxu0 %v9282
      %v9729 = vpop.f32.mrf.mxu0
      %v9730 = vadd.f32 %v9617, %v9729
      %9731 = vmatmul.f32.gmra.mxu0 %v9289
      %v9732 = vpop.f32.mrf.mxu0
      %v9733 = vadd.f32 %v9620, %v9732
      %9734 = vmatmul.f32.gmra.mxu0 %v9297
      %v9735 = vpop.f32.mrf.mxu0
      %v9736 = vadd.f32 %v9623, %v9735
      %9737 = vmatmul.f32.gmra.mxu0 %v9304
      %v9738 = vpop.f32.mrf.mxu0
      %v9739 = vadd.f32 %v9626, %v9738
      %9740 = vmatmul.f32.gmra.mxu0 %v9312
      %v9741 = vpop.f32.mrf.mxu0
      %v9742 = vadd.f32 %v9629, %v9741
      %9743 = vmatmul.f32.gmra.mxu0 %v9319
      %v9744 = vpop.f32.mrf.mxu0
      %v9745 = vadd.f32 %v9632, %v9744
      %9746 = vmatmul.f32.gmra.mxu0 %v9327
      %v9747 = vpop.f32.mrf.mxu0
      %v9748 = vadd.f32 %v9635, %v9747
      %9749 = vmatmul.f32.gmra.mxu0 %v9334
      %v9750 = vpop.f32.mrf.mxu0
      %v9751 = vadd.f32 %v9638, %v9750
      %9752 = vmatmul.f32.gmra.mxu0 %v9342
      %v9753 = vpop.f32.mrf.mxu0
      %v9754 = vadd.f32 %v9641, %v9753
      %9755 = vmatmul.f32.gmra.mxu0 %v9349
      %v9756 = vpop.f32.mrf.mxu0
      %v9757 = vadd.f32 %v9644, %v9756
      %9758 = vmatmul.f32.gmra.mxu0 %v9357
      %v9759 = vpop.f32.mrf.mxu0
      %v9760 = vadd.f32 %v9647, %v9759
      %9761 = vmatmul.f32.gmra.mxu0 %v9364
      %v9762 = vpop.f32.mrf.mxu0
      %v9763 = vadd.f32 %v9650, %v9762
      %9764 = vmatmul.f32.gmra.mxu0 %v9372
      %v9765 = vpop.f32.mrf.mxu0
      %v9766 = vadd.f32 %v9653, %v9765
      %9767 = vmatmul.f32.gmra.mxu0 %v9379
      %v9768 = vpop.f32.mrf.mxu0
      %v9769 = vadd.f32 %v9656, %v9768
      %9770 = vmatmul.f32.gmra.mxu0 %v9387
      %v9771 = vpop.f32.mrf.mxu0
      %v9772 = vadd.f32 %v9659, %v9771
      %9773 = vmatmul.f32.gmra.mxu0 %v9394
      %v9774 = vpop.f32.mrf.mxu0
      %v9775 = vadd.f32 %v9662, %v9774
      %9776 = vmatmul.f32.gmra.mxu0 %v9402
      %v9777 = vpop.f32.mrf.mxu0
      %v9778 = vadd.f32 %v9665, %v9777
      %9779 = vmatmul.f32.gmra.mxu0 %v9409
      %v9780 = vpop.f32.mrf.mxu0
      %v9781 = vadd.f32 %v9668, %v9780
      %9782 = vdwg.mxu0
      %9783 = vmatpush.msra.mxu0 %v9556
      %9784 = vmatpush.msra.mxu0 %v9555
      %9785 = vmatpush.msra.mxu0 %v9554
      %9786 = vmatpush.msra.mxu0 %v9553
      %9787 = vmatpush.msra.mxu0 %v9552
      %9788 = vmatpush.msra.mxu0 %v9551
      %9789 = vmatpush.msra.mxu0 %v9550
      %9790 = vmatpush.msra.mxu0 %v9549
      %9791 = vmatpush.msra.mxu0 %v9548
      %9792 = vmatpush.msra.mxu0 %v9547
      %9793 = vmatpush.msra.mxu0 %v9546
      %9794 = vmatpush.msra.mxu0 %v9545
      %9795 = vmatpush.msra.mxu0 %v9544
      %9796 = vmatpush.msra.mxu0 %v9543
      %9797 = vmatpush.msra.mxu0 %v9542
      %9798 = vmatpush.msra.mxu0 %v9541
      %9799 = vmatmul.f32.gmra.mxu0 %v9180
      %v9800 = vpop.f32.mrf.mxu0
      %v9801 = vadd.f32 %v9688, %v9800
      %9802 = vmatmul.f32.gmra.mxu0 %v9186
      %v9803 = vpop.f32.mrf.mxu0
      %v9804 = vadd.f32 %v9691, %v9803
      %9805 = vmatmul.f32.gmra.mxu0 %v9195
      %v9806 = vpop.f32.mrf.mxu0
      %v9807 = vadd.f32 %v9694, %v9806
      %9808 = vmatmul.f32.gmra.mxu0 %v9201
      %v9809 = vpop.f32.mrf.mxu0
      %v9810 = vadd.f32 %v9697, %v9809
      %9811 = vmatmul.f32.gmra.mxu0 %v9210
      %v9812 = vpop.f32.mrf.mxu0
      %v9813 = vadd.f32 %v9700, %v9812
      %9814 = vmatmul.f32.gmra.mxu0 %v9216
      %v9815 = vpop.f32.mrf.mxu0
      %v9816 = vadd.f32 %v9703, %v9815
      %9817 = vmatmul.f32.gmra.mxu0 %v9225
      %v9818 = vpop.f32.mrf.mxu0
      %v9819 = vadd.f32 %v9706, %v9818
      %9820 = vmatmul.f32.gmra.mxu0 %v9231
      %v9821 = vpop.f32.mrf.mxu0
      %v9822 = vadd.f32 %v9709, %v9821
      %9823 = vmatmul.f32.gmra.mxu0 %v9240
      %v9824 = vpop.f32.mrf.mxu0
      %v9825 = vadd.f32 %v9712, %v9824
      %9826 = vmatmul.f32.gmra.mxu0 %v9246
      %v9827 = vpop.f32.mrf.mxu0
      %v9828 = vadd.f32 %v9715, %v9827
      %9829 = vmatmul.f32.gmra.mxu0 %v9255
      %v9830 = vpop.f32.mrf.mxu0
      %v9831 = vadd.f32 %v9718, %v9830
      %9832 = vmatmul.f32.gmra.mxu0 %v9261
      %v9833 = vpop.f32.mrf.mxu0
      %v9834 = vadd.f32 %v9721, %v9833
      %9835 = vmatmul.f32.gmra.mxu0 %v9270
      %v9836 = vpop.f32.mrf.mxu0
      %v9837 = vadd.f32 %v9724, %v9836
      %9838 = vmatmul.f32.gmra.mxu0 %v9276
      %v9839 = vpop.f32.mrf.mxu0
      %v9840 = vadd.f32 %v9727, %v9839
      %9841 = vmatmul.f32.gmra.mxu0 %v9285
      %v9842 = vpop.f32.mrf.mxu0
      %v9843 = vadd.f32 %v9730, %v9842
      %9844 = vmatmul.f32.gmra.mxu0 %v9291
      %v9845 = vpop.f32.mrf.mxu0
      %v9846 = vadd.f32 %v9733, %v9845
      %9847 = vmatmul.f32.gmra.mxu0 %v9300
      %v9848 = vpop.f32.mrf.mxu0
      %v9849 = vadd.f32 %v9736, %v9848
      %9850 = vmatmul.f32.gmra.mxu0 %v9306
      %v9851 = vpop.f32.mrf.mxu0
      %v9852 = vadd.f32 %v9739, %v9851
      %9853 = vmatmul.f32.gmra.mxu0 %v9315
      %v9854 = vpop.f32.mrf.mxu0
      %v9855 = vadd.f32 %v9742, %v9854
      %9856 = vmatmul.f32.gmra.mxu0 %v9321
      %v9857 = vpop.f32.mrf.mxu0
      %v9858 = vadd.f32 %v9745, %v9857
      %9859 = vmatmul.f32.gmra.mxu0 %v9330
      %v9860 = vpop.f32.mrf.mxu0
      %v9861 = vadd.f32 %v9748, %v9860
      %9862 = vmatmul.f32.gmra.mxu0 %v9336
      %v9863 = vpop.f32.mrf.mxu0
      %v9864 = vadd.f32 %v9751, %v9863
      %9865 = vmatmul.f32.gmra.mxu0 %v9345
      %v9866 = vpop.f32.mrf.mxu0
      %v9867 = vadd.f32 %v9754, %v9866
      %9868 = vmatmul.f32.gmra.mxu0 %v9351
      %v9869 = vpop.f32.mrf.mxu0
      %v9870 = vadd.f32 %v9757, %v9869
      %9871 = vmatmul.f32.gmra.mxu0 %v9360
      %v9872 = vpop.f32.mrf.mxu0
      %v9873 = vadd.f32 %v9760, %v9872
      %9874 = vmatmul.f32.gmra.mxu0 %v9366
      %v9875 = vpop.f32.mrf.mxu0
      %v9876 = vadd.f32 %v9763, %v9875
      %9877 = vmatmul.f32.gmra.mxu0 %v9375
      %v9878 = vpop.f32.mrf.mxu0
      %v9879 = vadd.f32 %v9766, %v9878
      %9880 = vmatmul.f32.gmra.mxu0 %v9381
      %v9881 = vpop.f32.mrf.mxu0
      %v9882 = vadd.f32 %v9769, %v9881
      %9883 = vmatmul.f32.gmra.mxu0 %v9390
      %v9884 = vpop.f32.mrf.mxu0
      %v9885 = vadd.f32 %v9772, %v9884
      %9886 = vmatmul.f32.gmra.mxu0 %v9396
      %v9887 = vpop.f32.mrf.mxu0
      %v9888 = vadd.f32 %v9775, %v9887
      %9889 = vmatmul.f32.gmra.mxu0 %v9405
      %v9890 = vpop.f32.mrf.mxu0
      %v9891 = vadd.f32 %v9778, %v9890
      %9892 = vmatmul.f32.gmra.mxu0 %v9411
      %v9893 = vpop.f32.mrf.mxu0
      %v9894 = vadd.f32 %v9781, %v9893
      %9895 = vdwg.mxu0
      %v9896 = vadd.f32 %v8852, %v9801
      %v9897 = vadd.f32 %v8853, %v9804
      %v9898 = vadd.f32 %v8854, %v9807
      %v9899 = vadd.f32 %v8855, %v9810
      %v9900 = vadd.f32 %v8856, %v9813
      %v9901 = vadd.f32 %v8857, %v9816
      %v9902 = vadd.f32 %v8858, %v9819
      %v9903 = vadd.f32 %v8859, %v9822
      %v9904 = vadd.f32 %v8860, %v9825
      %v9905 = vadd.f32 %v8861, %v9828
      %v9906 = vadd.f32 %v8862, %v9831
      %v9907 = vadd.f32 %v8863, %v9834
      %v9908 = vadd.f32 %v8864, %v9837
      %v9909 = vadd.f32 %v8865, %v9840
      %v9910 = vadd.f32 %v8866, %v9843
      %v9911 = vadd.f32 %v8867, %v9846
      %v9912 = vadd.f32 %v8868, %v9849
      %v9913 = vadd.f32 %v8869, %v9852
      %v9914 = vadd.f32 %v8870, %v9855
      %v9915 = vadd.f32 %v8871, %v9858
      %v9916 = vadd.f32 %v8872, %v9861
      %v9917 = vadd.f32 %v8873, %v9864
      %v9918 = vadd.f32 %v8874, %v9867
      %v9919 = vadd.f32 %v8875, %v9870
      %v9920 = vadd.f32 %v8876, %v9873
      %v9921 = vadd.f32 %v8877, %v9876
      %v9922 = vadd.f32 %v8878, %v9879
      %v9923 = vadd.f32 %v8879, %v9882
      %v9924 = vadd.f32 %v8880, %v9885
      %v9925 = vadd.f32 %v8881, %v9888
      %v9926 = vadd.f32 %v8882, %v9891
      %v9927 = vadd.f32 %v8883, %v9894
      %s9928 = scalar_lea.vmem [#allocation3], 192
      %v9929 = vld [vmem:[%s9928] sm:$0x80]
      %v9930 = vld [vmem:[%s9928 + $0x8] sm:$0x80]
      %v9931 = vld [vmem:[%s9928 + $0x10] sm:$0x80]
      %v9932 = vld [vmem:[%s9928 + $0x18] sm:$0xff]
      %v9933 = vld [vmem:[%s9928 + $0x20] sm:$0xff]
      %v9934 = vld [vmem:[%s9928 + $0x28] sm:$0xff]
      %v9935 = vld [vmem:[%s9928 + $0x30] sm:$0x7f]
      %v9936 = vld [vmem:[%s9928 + $0x38] sm:$0x7f]
      %v9937 = vld [vmem:[%s9928 + $0x40] sm:$0x7f]
      %v9938 = vld [vmem:[%s9928 + $0x60] sm:$0x80]
      %v9939 = vld [vmem:[%s9928 + $0x68] sm:$0x80]
      %v9940 = vld [vmem:[%s9928 + $0x70] sm:$0x80]
      %v9941 = vld [vmem:[%s9928 + $0x78] sm:$0xff]
      %v9942 = vld [vmem:[%s9928 + $0x80] sm:$0xff]
      %v9943 = vld [vmem:[%s9928 + $0x88] sm:$0xff]
      %v9944 = vld [vmem:[%s9928 + $0x90] sm:$0x7f]
      %v9945 = vld [vmem:[%s9928 + $0x98] sm:$0x7f]
      %v9946 = vld [vmem:[%s9928 + $0xa0] sm:$0x7f]
      %v9947 = vld [vmem:[%s9928 + $0xc0] sm:$0x80]
      %v9948 = vld [vmem:[%s9928 + $0xc8] sm:$0x80]
      %v9949 = vld [vmem:[%s9928 + $0xd0] sm:$0x80]
      %v9950 = vld [vmem:[%s9928 + $0xd8] sm:$0xff]
      %v9951 = vld [vmem:[%s9928 + $0xe0] sm:$0xff]
      %v9952 = vld [vmem:[%s9928 + $0xe8] sm:$0xff]
      %v9953 = vld [vmem:[%s9928 + $0xf0] sm:$0x7f]
      %v9954 = vld [vmem:[%s9928 + $0xf8] sm:$0x7f]
      %v9955 = vld [vmem:[%s9928 + $0x100] sm:$0x7f]
      %v9956 = vld [vmem:[%s9928 + $0x120] sm:$0x80]
      %v9957 = vld [vmem:[%s9928 + $0x128] sm:$0x80]
      %v9958 = vld [vmem:[%s9928 + $0x130] sm:$0x80]
      %v9959 = vld [vmem:[%s9928 + $0x138] sm:$0xff]
      %v9960 = vld [vmem:[%s9928 + $0x140] sm:$0xff]
      %v9961 = vld [vmem:[%s9928 + $0x148] sm:$0xff]
      %v9962 = vld [vmem:[%s9928 + $0x150] sm:$0x7f]
      %v9963 = vld [vmem:[%s9928 + $0x158] sm:$0x7f]
      %v9964 = vld [vmem:[%s9928 + $0x160] sm:$0x7f]
      %v9965 = vld [vmem:[%s9928 + $0x180] sm:$0x80]
      %v9966 = vld [vmem:[%s9928 + $0x188] sm:$0x80]
      %v9967 = vld [vmem:[%s9928 + $0x190] sm:$0x80]
      %v9968 = vld [vmem:[%s9928 + $0x198] sm:$0xff]
      %v9969 = vld [vmem:[%s9928 + $0x1a0] sm:$0xff]
      %v9970 = vld [vmem:[%s9928 + $0x1a8] sm:$0xff]
      %v9971 = vld [vmem:[%s9928 + $0x1b0] sm:$0x7f]
      %v9972 = vld [vmem:[%s9928 + $0x1b8] sm:$0x7f]
      %v9973 = vld [vmem:[%s9928 + $0x1c0] sm:$0x7f]
      %v9974 = vld [vmem:[%s9928 + $0x1e0] sm:$0x80]
      %v9975 = vld [vmem:[%s9928 + $0x1e8] sm:$0x80]
      %v9976 = vld [vmem:[%s9928 + $0x1f0] sm:$0x80]
      %v9977 = vld [vmem:[%s9928 + $0x1f8] sm:$0xff]
      %v9978 = vld [vmem:[%s9928 + $0x200] sm:$0xff]
      %v9979 = vld [vmem:[%s9928 + $0x208] sm:$0xff]
      %v9980 = vld [vmem:[%s9928 + $0x210] sm:$0x7f]
      %v9981 = vld [vmem:[%s9928 + $0x218] sm:$0x7f]
      %v9982 = vld [vmem:[%s9928 + $0x220] sm:$0x7f]
      %v9983 = vld [vmem:[%s9928 + $0x240] sm:$0x80]
      %v9984 = vld [vmem:[%s9928 + $0x248] sm:$0x80]
      %v9985 = vld [vmem:[%s9928 + $0x250] sm:$0x80]
      %v9986 = vld [vmem:[%s9928 + $0x258] sm:$0xff]
      %v9987 = vld [vmem:[%s9928 + $0x260] sm:$0xff]
      %v9988 = vld [vmem:[%s9928 + $0x268] sm:$0xff]
      %v9989 = vld [vmem:[%s9928 + $0x270] sm:$0x7f]
      %v9990 = vld [vmem:[%s9928 + $0x278] sm:$0x7f]
      %v9991 = vld [vmem:[%s9928 + $0x280] sm:$0x7f]
      %v9992 = vld [vmem:[%s9928 + $0x2a0] sm:$0x80]
      %v9993 = vld [vmem:[%s9928 + $0x2a8] sm:$0x80]
      %v9994 = vld [vmem:[%s9928 + $0x2b0] sm:$0x80]
      %v9995 = vld [vmem:[%s9928 + $0x2b8] sm:$0xff]
      %v9996 = vld [vmem:[%s9928 + $0x2c0] sm:$0xff]
      %v9997 = vld [vmem:[%s9928 + $0x2c8] sm:$0xff]
      %v9998 = vld [vmem:[%s9928 + $0x2d0] sm:$0x7f]
      %v9999 = vld [vmem:[%s9928 + $0x2d8] sm:$0x7f]
      %v10000 = vld [vmem:[%s9928 + $0x2e0] sm:$0x7f]
      %v10001 = vld [vmem:[%s9928 + $0x300] sm:$0x80]
      %v10002 = vld [vmem:[%s9928 + $0x308] sm:$0x80]
      %v10003 = vld [vmem:[%s9928 + $0x310] sm:$0x80]
      %v10004 = vld [vmem:[%s9928 + $0x318] sm:$0xff]
      %v10005 = vld [vmem:[%s9928 + $0x320] sm:$0xff]
      %v10006 = vld [vmem:[%s9928 + $0x328] sm:$0xff]
      %v10007 = vld [vmem:[%s9928 + $0x330] sm:$0x7f]
      %v10008 = vld [vmem:[%s9928 + $0x338] sm:$0x7f]
      %v10009 = vld [vmem:[%s9928 + $0x340] sm:$0x7f]
      %v10010 = vld [vmem:[%s9928 + $0x360] sm:$0x80]
      %v10011 = vld [vmem:[%s9928 + $0x368] sm:$0x80]
      %v10012 = vld [vmem:[%s9928 + $0x370] sm:$0x80]
      %v10013 = vld [vmem:[%s9928 + $0x378] sm:$0xff]
      %v10014 = vld [vmem:[%s9928 + $0x380] sm:$0xff]
      %v10015 = vld [vmem:[%s9928 + $0x388] sm:$0xff]
      %v10016 = vld [vmem:[%s9928 + $0x390] sm:$0x7f]
      %v10017 = vld [vmem:[%s9928 + $0x398] sm:$0x7f]
      %v10018 = vld [vmem:[%s9928 + $0x3a0] sm:$0x7f]
      %v10019 = vld [vmem:[%s9928 + $0x3c0] sm:$0x80]
      %v10020 = vld [vmem:[%s9928 + $0x3c8] sm:$0x80]
      %v10021 = vld [vmem:[%s9928 + $0x3d0] sm:$0x80]
      %v10022 = vld [vmem:[%s9928 + $0x3d8] sm:$0xff]
      %v10023 = vld [vmem:[%s9928 + $0x3e0] sm:$0xff]
      %v10024 = vld [vmem:[%s9928 + $0x3e8] sm:$0xff]
      %v10025 = vld [vmem:[%s9928 + $0x3f0] sm:$0x7f]
      %v10026 = vld [vmem:[%s9928 + $0x3f8] sm:$0x7f]
      %v10027 = vld [vmem:[%s9928 + $0x400] sm:$0x7f]
      %v10028 = vld [vmem:[%s9928 + $0x420] sm:$0x80]
      %v10029 = vld [vmem:[%s9928 + $0x428] sm:$0x80]
      %v10030 = vld [vmem:[%s9928 + $0x430] sm:$0x80]
      %v10031 = vld [vmem:[%s9928 + $0x438] sm:$0xff]
      %v10032 = vld [vmem:[%s9928 + $0x440] sm:$0xff]
      %v10033 = vld [vmem:[%s9928 + $0x448] sm:$0xff]
      %v10034 = vld [vmem:[%s9928 + $0x450] sm:$0x7f]
      %v10035 = vld [vmem:[%s9928 + $0x458] sm:$0x7f]
      %v10036 = vld [vmem:[%s9928 + $0x460] sm:$0x7f]
      %v10037 = vld [vmem:[%s9928 + $0x480] sm:$0x80]
      %v10038 = vld [vmem:[%s9928 + $0x488] sm:$0x80]
      %v10039 = vld [vmem:[%s9928 + $0x490] sm:$0x80]
      %v10040 = vld [vmem:[%s9928 + $0x498] sm:$0xff]
      %v10041 = vld [vmem:[%s9928 + $0x4a0] sm:$0xff]
      %v10042 = vld [vmem:[%s9928 + $0x4a8] sm:$0xff]
      %v10043 = vld [vmem:[%s9928 + $0x4b0] sm:$0x7f]
      %v10044 = vld [vmem:[%s9928 + $0x4b8] sm:$0x7f]
      %v10045 = vld [vmem:[%s9928 + $0x4c0] sm:$0x7f]
      %v10046 = vld [vmem:[%s9928 + $0x4e0] sm:$0x80]
      %v10047 = vld [vmem:[%s9928 + $0x4e8] sm:$0x80]
      %v10048 = vld [vmem:[%s9928 + $0x4f0] sm:$0x80]
      %v10049 = vld [vmem:[%s9928 + $0x4f8] sm:$0xff]
      %v10050 = vld [vmem:[%s9928 + $0x500] sm:$0xff]
      %v10051 = vld [vmem:[%s9928 + $0x508] sm:$0xff]
      %v10052 = vld [vmem:[%s9928 + $0x510] sm:$0x7f]
      %v10053 = vld [vmem:[%s9928 + $0x518] sm:$0x7f]
      %v10054 = vld [vmem:[%s9928 + $0x520] sm:$0x7f]
      %v10055 = vld [vmem:[%s9928 + $0x540] sm:$0x80]
      %v10056 = vld [vmem:[%s9928 + $0x548] sm:$0x80]
      %v10057 = vld [vmem:[%s9928 + $0x550] sm:$0x80]
      %v10058 = vld [vmem:[%s9928 + $0x558] sm:$0xff]
      %v10059 = vld [vmem:[%s9928 + $0x560] sm:$0xff]
      %v10060 = vld [vmem:[%s9928 + $0x568] sm:$0xff]
      %v10061 = vld [vmem:[%s9928 + $0x570] sm:$0x7f]
      %v10062 = vld [vmem:[%s9928 + $0x578] sm:$0x7f]
      %v10063 = vld [vmem:[%s9928 + $0x580] sm:$0x7f]
      %v10064 = vld [vmem:[%s9928 + $0x5a0] sm:$0x80]
      %v10065 = vld [vmem:[%s9928 + $0x5a8] sm:$0x80]
      %v10066 = vld [vmem:[%s9928 + $0x5b0] sm:$0x80]
      %v10067 = vld [vmem:[%s9928 + $0x5b8] sm:$0xff]
      %v10068 = vld [vmem:[%s9928 + $0x5c0] sm:$0xff]
      %v10069 = vld [vmem:[%s9928 + $0x5c8] sm:$0xff]
      %v10070 = vld [vmem:[%s9928 + $0x5d0] sm:$0x7f]
      %v10071 = vld [vmem:[%s9928 + $0x5d8] sm:$0x7f]
      %v10072 = vld [vmem:[%s9928 + $0x5e0] sm:$0x7f]
      %v10217 = vrot.slane %v9929, 7
      %v10218 = vrot.slane %v9932, 7
      %v10219 = vsel %vm5168, %v10217, %v10218
      %v10220 = vrot.slane %v9930, 7
      %v10221 = vrot.slane %v9933, 7
      %v10222 = vsel %vm5168, %v10220, %v10221
      %v10223 = vrot.slane %v9931, 7
      %v10224 = vrot.slane %v9934, 7
      %v10225 = vsel %vm5168, %v10223, %v10224
      %v10226 = vrot.slane %v9935, 7
      %v10227 = vsel %vm5168, %v10218, %v10226
      %v10228 = vrot.slane %v9936, 7
      %v10229 = vsel %vm5168, %v10221, %v10228
      %v10230 = vrot.slane %v9937, 7
      %v10231 = vsel %vm5168, %v10224, %v10230
      %v10232 = vrot.slane %v9938, 7
      %v10233 = vrot.slane %v9941, 7
      %v10234 = vsel %vm5168, %v10232, %v10233
      %v10235 = vrot.slane %v9939, 7
      %v10236 = vrot.slane %v9942, 7
      %v10237 = vsel %vm5168, %v10235, %v10236
      %v10238 = vrot.slane %v9940, 7
      %v10239 = vrot.slane %v9943, 7
      %v10240 = vsel %vm5168, %v10238, %v10239
      %v10241 = vrot.slane %v9944, 7
      %v10242 = vsel %vm5168, %v10233, %v10241
      %v10243 = vrot.slane %v9945, 7
      %v10244 = vsel %vm5168, %v10236, %v10243
      %v10245 = vrot.slane %v9946, 7
      %v10246 = vsel %vm5168, %v10239, %v10245
      %v10247 = vrot.slane %v9947, 7
      %v10248 = vrot.slane %v9950, 7
      %v10249 = vsel %vm5168, %v10247, %v10248
      %v10250 = vrot.slane %v9948, 7
      %v10251 = vrot.slane %v9951, 7
      %v10252 = vsel %vm5168, %v10250, %v10251
      %v10253 = vrot.slane %v9949, 7
      %v10254 = vrot.slane %v9952, 7
      %v10255 = vsel %vm5168, %v10253, %v10254
      %v10256 = vrot.slane %v9953, 7
      %v10257 = vsel %vm5168, %v10248, %v10256
      %v10258 = vrot.slane %v9954, 7
      %v10259 = vsel %vm5168, %v10251, %v10258
      %v10260 = vrot.slane %v9955, 7
      %v10261 = vsel %vm5168, %v10254, %v10260
      %v10262 = vrot.slane %v9956, 7
      %v10263 = vrot.slane %v9959, 7
      %v10264 = vsel %vm5168, %v10262, %v10263
      %v10265 = vrot.slane %v9957, 7
      %v10266 = vrot.slane %v9960, 7
      %v10267 = vsel %vm5168, %v10265, %v10266
      %v10268 = vrot.slane %v9958, 7
      %v10269 = vrot.slane %v9961, 7
      %v10270 = vsel %vm5168, %v10268, %v10269
      %v10271 = vrot.slane %v9962, 7
      %v10272 = vsel %vm5168, %v10263, %v10271
      %v10273 = vrot.slane %v9963, 7
      %v10274 = vsel %vm5168, %v10266, %v10273
      %v10275 = vrot.slane %v9964, 7
      %v10276 = vsel %vm5168, %v10269, %v10275
      %v10277 = vrot.slane %v9965, 7
      %v10278 = vrot.slane %v9968, 7
      %v10279 = vsel %vm5168, %v10277, %v10278
      %v10280 = vrot.slane %v9966, 7
      %v10281 = vrot.slane %v9969, 7
      %v10282 = vsel %vm5168, %v10280, %v10281
      %v10283 = vrot.slane %v9967, 7
      %v10284 = vrot.slane %v9970, 7
      %v10285 = vsel %vm5168, %v10283, %v10284
      %v10286 = vrot.slane %v9971, 7
      %v10287 = vsel %vm5168, %v10278, %v10286
      %v10288 = vrot.slane %v9972, 7
      %v10289 = vsel %vm5168, %v10281, %v10288
      %v10290 = vrot.slane %v9973, 7
      %v10291 = vsel %vm5168, %v10284, %v10290
      %v10292 = vrot.slane %v9974, 7
      %v10293 = vrot.slane %v9977, 7
      %v10294 = vsel %vm5168, %v10292, %v10293
      %v10295 = vrot.slane %v9975, 7
      %v10296 = vrot.slane %v9978, 7
      %v10297 = vsel %vm5168, %v10295, %v10296
      %v10298 = vrot.slane %v9976, 7
      %v10299 = vrot.slane %v9979, 7
      %v10300 = vsel %vm5168, %v10298, %v10299
      %v10301 = vrot.slane %v9980, 7
      %v10302 = vsel %vm5168, %v10293, %v10301
      %v10303 = vrot.slane %v9981, 7
      %v10304 = vsel %vm5168, %v10296, %v10303
      %v10305 = vrot.slane %v9982, 7
      %v10306 = vsel %vm5168, %v10299, %v10305
      %v10307 = vrot.slane %v9983, 7
      %v10308 = vrot.slane %v9986, 7
      %v10309 = vsel %vm5168, %v10307, %v10308
      %v10310 = vrot.slane %v9984, 7
      %v10311 = vrot.slane %v9987, 7
      %v10312 = vsel %vm5168, %v10310, %v10311
      %v10313 = vrot.slane %v9985, 7
      %v10314 = vrot.slane %v9988, 7
      %v10315 = vsel %vm5168, %v10313, %v10314
      %v10316 = vrot.slane %v9989, 7
      %v10317 = vsel %vm5168, %v10308, %v10316
      %v10318 = vrot.slane %v9990, 7
      %v10319 = vsel %vm5168, %v10311, %v10318
      %v10320 = vrot.slane %v9991, 7
      %v10321 = vsel %vm5168, %v10314, %v10320
      %v10322 = vrot.slane %v9992, 7
      %v10323 = vrot.slane %v9995, 7
      %v10324 = vsel %vm5168, %v10322, %v10323
      %v10325 = vrot.slane %v9993, 7
      %v10326 = vrot.slane %v9996, 7
      %v10327 = vsel %vm5168, %v10325, %v10326
      %v10328 = vrot.slane %v9994, 7
      %v10329 = vrot.slane %v9997, 7
      %v10330 = vsel %vm5168, %v10328, %v10329
      %v10331 = vrot.slane %v9998, 7
      %v10332 = vsel %vm5168, %v10323, %v10331
      %v10333 = vrot.slane %v9999, 7
      %v10334 = vsel %vm5168, %v10326, %v10333
      %v10335 = vrot.slane %v10000, 7
      %v10336 = vsel %vm5168, %v10329, %v10335
      %v10337 = vrot.slane %v10001, 7
      %v10338 = vrot.slane %v10004, 7
      %v10339 = vsel %vm5168, %v10337, %v10338
      %v10340 = vrot.slane %v10002, 7
      %v10341 = vrot.slane %v10005, 7
      %v10342 = vsel %vm5168, %v10340, %v10341
      %v10343 = vrot.slane %v10003, 7
      %v10344 = vrot.slane %v10006, 7
      %v10345 = vsel %vm5168, %v10343, %v10344
      %v10346 = vrot.slane %v10007, 7
      %v10347 = vsel %vm5168, %v10338, %v10346
      %v10348 = vrot.slane %v10008, 7
      %v10349 = vsel %vm5168, %v10341, %v10348
      %v10350 = vrot.slane %v10009, 7
      %v10351 = vsel %vm5168, %v10344, %v10350
      %v10352 = vrot.slane %v10010, 7
      %v10353 = vrot.slane %v10013, 7
      %v10354 = vsel %vm5168, %v10352, %v10353
      %v10355 = vrot.slane %v10011, 7
      %v10356 = vrot.slane %v10014, 7
      %v10357 = vsel %vm5168, %v10355, %v10356
      %v10358 = vrot.slane %v10012, 7
      %v10359 = vrot.slane %v10015, 7
      %v10360 = vsel %vm5168, %v10358, %v10359
      %v10361 = vrot.slane %v10016, 7
      %v10362 = vsel %vm5168, %v10353, %v10361
      %v10363 = vrot.slane %v10017, 7
      %v10364 = vsel %vm5168, %v10356, %v10363
      %v10365 = vrot.slane %v10018, 7
      %v10366 = vsel %vm5168, %v10359, %v10365
      %v10367 = vrot.slane %v10019, 7
      %v10368 = vrot.slane %v10022, 7
      %v10369 = vsel %vm5168, %v10367, %v10368
      %v10370 = vrot.slane %v10020, 7
      %v10371 = vrot.slane %v10023, 7
      %v10372 = vsel %vm5168, %v10370, %v10371
      %v10373 = vrot.slane %v10021, 7
      %v10374 = vrot.slane %v10024, 7
      %v10375 = vsel %vm5168, %v10373, %v10374
      %v10376 = vrot.slane %v10025, 7
      %v10377 = vsel %vm5168, %v10368, %v10376
      %v10378 = vrot.slane %v10026, 7
      %v10379 = vsel %vm5168, %v10371, %v10378
      %v10380 = vrot.slane %v10027, 7
      %v10381 = vsel %vm5168, %v10374, %v10380
      %v10382 = vrot.slane %v10028, 7
      %v10383 = vrot.slane %v10031, 7
      %v10384 = vsel %vm5168, %v10382, %v10383
      %v10385 = vrot.slane %v10029, 7
      %v10386 = vrot.slane %v10032, 7
      %v10387 = vsel %vm5168, %v10385, %v10386
      %v10388 = vrot.slane %v10030, 7
      %v10389 = vrot.slane %v10033, 7
      %v10390 = vsel %vm5168, %v10388, %v10389
      %v10391 = vrot.slane %v10034, 7
      %v10392 = vsel %vm5168, %v10383, %v10391
      %v10393 = vrot.slane %v10035, 7
      %v10394 = vsel %vm5168, %v10386, %v10393
      %v10395 = vrot.slane %v10036, 7
      %v10396 = vsel %vm5168, %v10389, %v10395
      %v10397 = vrot.slane %v10037, 7
      %v10398 = vrot.slane %v10040, 7
      %v10399 = vsel %vm5168, %v10397, %v10398
      %v10400 = vrot.slane %v10038, 7
      %v10401 = vrot.slane %v10041, 7
      %v10402 = vsel %vm5168, %v10400, %v10401
      %v10403 = vrot.slane %v10039, 7
      %v10404 = vrot.slane %v10042, 7
      %v10405 = vsel %vm5168, %v10403, %v10404
      %v10406 = vrot.slane %v10043, 7
      %v10407 = vsel %vm5168, %v10398, %v10406
      %v10408 = vrot.slane %v10044, 7
      %v10409 = vsel %vm5168, %v10401, %v10408
      %v10410 = vrot.slane %v10045, 7
      %v10411 = vsel %vm5168, %v10404, %v10410
      %v10412 = vrot.slane %v10046, 7
      %v10413 = vrot.slane %v10049, 7
      %v10414 = vsel %vm5168, %v10412, %v10413
      %v10415 = vrot.slane %v10047, 7
      %v10416 = vrot.slane %v10050, 7
      %v10417 = vsel %vm5168, %v10415, %v10416
      %v10418 = vrot.slane %v10048, 7
      %v10419 = vrot.slane %v10051, 7
      %v10420 = vsel %vm5168, %v10418, %v10419
      %v10421 = vrot.slane %v10052, 7
      %v10422 = vsel %vm5168, %v10413, %v10421
      %v10423 = vrot.slane %v10053, 7
      %v10424 = vsel %vm5168, %v10416, %v10423
      %v10425 = vrot.slane %v10054, 7
      %v10426 = vsel %vm5168, %v10419, %v10425
      %v10427 = vrot.slane %v10055, 7
      %v10428 = vrot.slane %v10058, 7
      %v10429 = vsel %vm5168, %v10427, %v10428
      %v10430 = vrot.slane %v10056, 7
      %v10431 = vrot.slane %v10059, 7
      %v10432 = vsel %vm5168, %v10430, %v10431
      %v10433 = vrot.slane %v10057, 7
      %v10434 = vrot.slane %v10060, 7
      %v10435 = vsel %vm5168, %v10433, %v10434
      %v10436 = vrot.slane %v10061, 7
      %v10437 = vsel %vm5168, %v10428, %v10436
      %v10438 = vrot.slane %v10062, 7
      %v10439 = vsel %vm5168, %v10431, %v10438
      %v10440 = vrot.slane %v10063, 7
      %v10441 = vsel %vm5168, %v10434, %v10440
      %v10442 = vrot.slane %v10064, 7
      %v10443 = vrot.slane %v10067, 7
      %v10444 = vsel %vm5168, %v10442, %v10443
      %v10445 = vrot.slane %v10065, 7
      %v10446 = vrot.slane %v10068, 7
      %v10447 = vsel %vm5168, %v10445, %v10446
      %v10448 = vrot.slane %v10066, 7
      %v10449 = vrot.slane %v10069, 7
      %v10450 = vsel %vm5168, %v10448, %v10449
      %v10451 = vrot.slane %v10070, 7
      %v10452 = vsel %vm5168, %v10443, %v10451
      %v10453 = vrot.slane %v10071, 7
      %v10454 = vsel %vm5168, %v10446, %v10453
      %v10455 = vrot.slane %v10072, 7
      %v10456 = vsel %vm5168, %v10449, %v10455
      %s10553 = scalar_lea.vmem %s5, 2304
      %v10554 = vld [vmem:[%s10553] sm:$0xff]
      %v10555 = vld [vmem:[%s10553 + $0x8] sm:$0xff]
      %v10556 = vld [vmem:[%s10553 + $0x10] sm:$0xff]
      %v10557 = vld [vmem:[%s10553 + $0x18] sm:$0xff]
      %v10558 = vld [vmem:[%s10553 + $0x20] sm:$0xff]
      %v10559 = vld [vmem:[%s10553 + $0x28] sm:$0xff]
      %v10560 = vld [vmem:[%s10553 + $0x30] sm:$0xff]
      %v10561 = vld [vmem:[%s10553 + $0x38] sm:$0xff]
      %v10562 = vld [vmem:[%s10553 + $0x40] sm:$0xff]
      %v10563 = vld [vmem:[%s10553 + $0x48] sm:$0xff]
      %v10564 = vld [vmem:[%s10553 + $0x50] sm:$0xff]
      %v10565 = vld [vmem:[%s10553 + $0x58] sm:$0xff]
      %v10566 = vld [vmem:[%s10553 + $0x60] sm:$0xff]
      %v10567 = vld [vmem:[%s10553 + $0x68] sm:$0xff]
      %v10568 = vld [vmem:[%s10553 + $0x70] sm:$0xff]
      %v10569 = vld [vmem:[%s10553 + $0x78] sm:$0xff]
      %v10570 = vld [vmem:[%s10553 + $0x80] sm:$0xff]
      %v10571 = vld [vmem:[%s10553 + $0x88] sm:$0xff]
      %v10572 = vld [vmem:[%s10553 + $0x90] sm:$0xff]
      %v10573 = vld [vmem:[%s10553 + $0x98] sm:$0xff]
      %v10574 = vld [vmem:[%s10553 + $0xa0] sm:$0xff]
      %v10575 = vld [vmem:[%s10553 + $0xa8] sm:$0xff]
      %v10576 = vld [vmem:[%s10553 + $0xb0] sm:$0xff]
      %v10577 = vld [vmem:[%s10553 + $0xb8] sm:$0xff]
      %v10578 = vld [vmem:[%s10553 + $0xc0] sm:$0xff]
      %v10579 = vld [vmem:[%s10553 + $0xc8] sm:$0xff]
      %v10580 = vld [vmem:[%s10553 + $0xd0] sm:$0xff]
      %v10581 = vld [vmem:[%s10553 + $0xd8] sm:$0xff]
      %v10582 = vld [vmem:[%s10553 + $0xe0] sm:$0xff]
      %v10583 = vld [vmem:[%s10553 + $0xe8] sm:$0xff]
      %v10584 = vld [vmem:[%s10553 + $0xf0] sm:$0xff]
      %v10585 = vld [vmem:[%s10553 + $0xf8] sm:$0xff]
      %v10586 = vld [vmem:[%s10553 + $0x100] sm:$0xff]
      %v10587 = vld [vmem:[%s10553 + $0x108] sm:$0xff]
      %v10588 = vld [vmem:[%s10553 + $0x110] sm:$0xff]
      %v10589 = vld [vmem:[%s10553 + $0x118] sm:$0xff]
      %v10590 = vld [vmem:[%s10553 + $0x120] sm:$0xff]
      %v10591 = vld [vmem:[%s10553 + $0x128] sm:$0xff]
      %v10592 = vld [vmem:[%s10553 + $0x130] sm:$0xff]
      %v10593 = vld [vmem:[%s10553 + $0x138] sm:$0xff]
      %v10594 = vld [vmem:[%s10553 + $0x140] sm:$0xff]
      %v10595 = vld [vmem:[%s10553 + $0x148] sm:$0xff]
      %v10596 = vld [vmem:[%s10553 + $0x150] sm:$0xff]
      %v10597 = vld [vmem:[%s10553 + $0x158] sm:$0xff]
      %v10598 = vld [vmem:[%s10553 + $0x160] sm:$0xff]
      %v10599 = vld [vmem:[%s10553 + $0x168] sm:$0xff]
      %v10600 = vld [vmem:[%s10553 + $0x170] sm:$0xff]
      %v10601 = vld [vmem:[%s10553 + $0x178] sm:$0xff]
      %10602 = vmatpush.msra.mxu0 %v10569
      %10603 = vmatpush.msra.mxu0 %v10568
      %10604 = vmatpush.msra.mxu0 %v10567
      %10605 = vmatpush.msra.mxu0 %v10566
      %10606 = vmatpush.msra.mxu0 %v10565
      %10607 = vmatpush.msra.mxu0 %v10564
      %10608 = vmatpush.msra.mxu0 %v10563
      %10609 = vmatpush.msra.mxu0 %v10562
      %10610 = vmatpush.msra.mxu0 %v10561
      %10611 = vmatpush.msra.mxu0 %v10560
      %10612 = vmatpush.msra.mxu0 %v10559
      %10613 = vmatpush.msra.mxu0 %v10558
      %10614 = vmatpush.msra.mxu0 %v10557
      %10615 = vmatpush.msra.mxu0 %v10556
      %10616 = vmatpush.msra.mxu0 %v10555
      %10617 = vmatpush.msra.mxu0 %v10554
      %10618 = vmatmul.f32.gmra.mxu0 %v10219
      %v10619 = vpop.f32.mrf.mxu0
      %v10620 = vadd.f32 0.0, %v10619
      %10621 = vmatmul.f32.gmra.mxu0 %v10227
      %v10622 = vpop.f32.mrf.mxu0
      %v10623 = vadd.f32 0.0, %v10622
      %10624 = vmatmul.f32.gmra.mxu0 %v10234
      %v10625 = vpop.f32.mrf.mxu0
      %v10626 = vadd.f32 0.0, %v10625
      %10627 = vmatmul.f32.gmra.mxu0 %v10242
      %v10628 = vpop.f32.mrf.mxu0
      %v10629 = vadd.f32 0.0, %v10628
      %10630 = vmatmul.f32.gmra.mxu0 %v10249
      %v10631 = vpop.f32.mrf.mxu0
      %v10632 = vadd.f32 0.0, %v10631
      %10633 = vmatmul.f32.gmra.mxu0 %v10257
      %v10634 = vpop.f32.mrf.mxu0
      %v10635 = vadd.f32 0.0, %v10634
      %10636 = vmatmul.f32.gmra.mxu0 %v10264
      %v10637 = vpop.f32.mrf.mxu0
      %v10638 = vadd.f32 0.0, %v10637
      %10639 = vmatmul.f32.gmra.mxu0 %v10272
      %v10640 = vpop.f32.mrf.mxu0
      %v10641 = vadd.f32 0.0, %v10640
      %10642 = vmatmul.f32.gmra.mxu0 %v10279
      %v10643 = vpop.f32.mrf.mxu0
      %v10644 = vadd.f32 0.0, %v10643
      %10645 = vmatmul.f32.gmra.mxu0 %v10287
      %v10646 = vpop.f32.mrf.mxu0
      %v10647 = vadd.f32 0.0, %v10646
      %10648 = vmatmul.f32.gmra.mxu0 %v10294
      %v10649 = vpop.f32.mrf.mxu0
      %v10650 = vadd.f32 0.0, %v10649
      %10651 = vmatmul.f32.gmra.mxu0 %v10302
      %v10652 = vpop.f32.mrf.mxu0
      %v10653 = vadd.f32 0.0, %v10652
      %10654 = vmatmul.f32.gmra.mxu0 %v10309
      %v10655 = vpop.f32.mrf.mxu0
      %v10656 = vadd.f32 0.0, %v10655
      %10657 = vmatmul.f32.gmra.mxu0 %v10317
      %v10658 = vpop.f32.mrf.mxu0
      %v10659 = vadd.f32 0.0, %v10658
      %10660 = vmatmul.f32.gmra.mxu0 %v10324
      %v10661 = vpop.f32.mrf.mxu0
      %v10662 = vadd.f32 0.0, %v10661
      %10663 = vmatmul.f32.gmra.mxu0 %v10332
      %v10664 = vpop.f32.mrf.mxu0
      %v10665 = vadd.f32 0.0, %v10664
      %10666 = vmatmul.f32.gmra.mxu0 %v10339
      %v10667 = vpop.f32.mrf.mxu0
      %v10668 = vadd.f32 0.0, %v10667
      %10669 = vmatmul.f32.gmra.mxu0 %v10347
      %v10670 = vpop.f32.mrf.mxu0
      %v10671 = vadd.f32 0.0, %v10670
      %10672 = vmatmul.f32.gmra.mxu0 %v10354
      %v10673 = vpop.f32.mrf.mxu0
      %v10674 = vadd.f32 0.0, %v10673
      %10675 = vmatmul.f32.gmra.mxu0 %v10362
      %v10676 = vpop.f32.mrf.mxu0
      %v10677 = vadd.f32 0.0, %v10676
      %10678 = vmatmul.f32.gmra.mxu0 %v10369
      %v10679 = vpop.f32.mrf.mxu0
      %v10680 = vadd.f32 0.0, %v10679
      %10681 = vmatmul.f32.gmra.mxu0 %v10377
      %v10682 = vpop.f32.mrf.mxu0
      %v10683 = vadd.f32 0.0, %v10682
      %10684 = vmatmul.f32.gmra.mxu0 %v10384
      %v10685 = vpop.f32.mrf.mxu0
      %v10686 = vadd.f32 0.0, %v10685
      %10687 = vmatmul.f32.gmra.mxu0 %v10392
      %v10688 = vpop.f32.mrf.mxu0
      %v10689 = vadd.f32 0.0, %v10688
      %10690 = vmatmul.f32.gmra.mxu0 %v10399
      %v10691 = vpop.f32.mrf.mxu0
      %v10692 = vadd.f32 0.0, %v10691
      %10693 = vmatmul.f32.gmra.mxu0 %v10407
      %v10694 = vpop.f32.mrf.mxu0
      %v10695 = vadd.f32 0.0, %v10694
      %10696 = vmatmul.f32.gmra.mxu0 %v10414
      %v10697 = vpop.f32.mrf.mxu0
      %v10698 = vadd.f32 0.0, %v10697
      %10699 = vmatmul.f32.gmra.mxu0 %v10422
      %v10700 = vpop.f32.mrf.mxu0
      %v10701 = vadd.f32 0.0, %v10700
      %10702 = vmatmul.f32.gmra.mxu0 %v10429
      %v10703 = vpop.f32.mrf.mxu0
      %v10704 = vadd.f32 0.0, %v10703
      %10705 = vmatmul.f32.gmra.mxu0 %v10437
      %v10706 = vpop.f32.mrf.mxu0
      %v10707 = vadd.f32 0.0, %v10706
      %10708 = vmatmul.f32.gmra.mxu0 %v10444
      %v10709 = vpop.f32.mrf.mxu0
      %v10710 = vadd.f32 0.0, %v10709
      %10711 = vmatmul.f32.gmra.mxu0 %v10452
      %v10712 = vpop.f32.mrf.mxu0
      %v10713 = vadd.f32 0.0, %v10712
      %10714 = vdwg.mxu0
      %10715 = vmatpush.msra.mxu0 %v10585
      %10716 = vmatpush.msra.mxu0 %v10584
      %10717 = vmatpush.msra.mxu0 %v10583
      %10718 = vmatpush.msra.mxu0 %v10582
      %10719 = vmatpush.msra.mxu0 %v10581
      %10720 = vmatpush.msra.mxu0 %v10580
      %10721 = vmatpush.msra.mxu0 %v10579
      %10722 = vmatpush.msra.mxu0 %v10578
      %10723 = vmatpush.msra.mxu0 %v10577
      %10724 = vmatpush.msra.mxu0 %v10576
      %10725 = vmatpush.msra.mxu0 %v10575
      %10726 = vmatpush.msra.mxu0 %v10574
      %10727 = vmatpush.msra.mxu0 %v10573
      %10728 = vmatpush.msra.mxu0 %v10572
      %10729 = vmatpush.msra.mxu0 %v10571
      %10730 = vmatpush.msra.mxu0 %v10570
      %10731 = vmatmul.f32.gmra.mxu0 %v10222
      %v10732 = vpop.f32.mrf.mxu0
      %v10733 = vadd.f32 %v10620, %v10732
      %10734 = vmatmul.f32.gmra.mxu0 %v10229
      %v10735 = vpop.f32.mrf.mxu0
      %v10736 = vadd.f32 %v10623, %v10735
      %10737 = vmatmul.f32.gmra.mxu0 %v10237
      %v10738 = vpop.f32.mrf.mxu0
      %v10739 = vadd.f32 %v10626, %v10738
      %10740 = vmatmul.f32.gmra.mxu0 %v10244
      %v10741 = vpop.f32.mrf.mxu0
      %v10742 = vadd.f32 %v10629, %v10741
      %10743 = vmatmul.f32.gmra.mxu0 %v10252
      %v10744 = vpop.f32.mrf.mxu0
      %v10745 = vadd.f32 %v10632, %v10744
      %10746 = vmatmul.f32.gmra.mxu0 %v10259
      %v10747 = vpop.f32.mrf.mxu0
      %v10748 = vadd.f32 %v10635, %v10747
      %10749 = vmatmul.f32.gmra.mxu0 %v10267
      %v10750 = vpop.f32.mrf.mxu0
      %v10751 = vadd.f32 %v10638, %v10750
      %10752 = vmatmul.f32.gmra.mxu0 %v10274
      %v10753 = vpop.f32.mrf.mxu0
      %v10754 = vadd.f32 %v10641, %v10753
      %10755 = vmatmul.f32.gmra.mxu0 %v10282
      %v10756 = vpop.f32.mrf.mxu0
      %v10757 = vadd.f32 %v10644, %v10756
      %10758 = vmatmul.f32.gmra.mxu0 %v10289
      %v10759 = vpop.f32.mrf.mxu0
      %v10760 = vadd.f32 %v10647, %v10759
      %10761 = vmatmul.f32.gmra.mxu0 %v10297
      %v10762 = vpop.f32.mrf.mxu0
      %v10763 = vadd.f32 %v10650, %v10762
      %10764 = vmatmul.f32.gmra.mxu0 %v10304
      %v10765 = vpop.f32.mrf.mxu0
      %v10766 = vadd.f32 %v10653, %v10765
      %10767 = vmatmul.f32.gmra.mxu0 %v10312
      %v10768 = vpop.f32.mrf.mxu0
      %v10769 = vadd.f32 %v10656, %v10768
      %10770 = vmatmul.f32.gmra.mxu0 %v10319
      %v10771 = vpop.f32.mrf.mxu0
      %v10772 = vadd.f32 %v10659, %v10771
      %10773 = vmatmul.f32.gmra.mxu0 %v10327
      %v10774 = vpop.f32.mrf.mxu0
      %v10775 = vadd.f32 %v10662, %v10774
      %10776 = vmatmul.f32.gmra.mxu0 %v10334
      %v10777 = vpop.f32.mrf.mxu0
      %v10778 = vadd.f32 %v10665, %v10777
      %10779 = vmatmul.f32.gmra.mxu0 %v10342
      %v10780 = vpop.f32.mrf.mxu0
      %v10781 = vadd.f32 %v10668, %v10780
      %10782 = vmatmul.f32.gmra.mxu0 %v10349
      %v10783 = vpop.f32.mrf.mxu0
      %v10784 = vadd.f32 %v10671, %v10783
      %10785 = vmatmul.f32.gmra.mxu0 %v10357
      %v10786 = vpop.f32.mrf.mxu0
      %v10787 = vadd.f32 %v10674, %v10786
      %10788 = vmatmul.f32.gmra.mxu0 %v10364
      %v10789 = vpop.f32.mrf.mxu0
      %v10790 = vadd.f32 %v10677, %v10789
      %10791 = vmatmul.f32.gmra.mxu0 %v10372
      %v10792 = vpop.f32.mrf.mxu0
      %v10793 = vadd.f32 %v10680, %v10792
      %10794 = vmatmul.f32.gmra.mxu0 %v10379
      %v10795 = vpop.f32.mrf.mxu0
      %v10796 = vadd.f32 %v10683, %v10795
      %10797 = vmatmul.f32.gmra.mxu0 %v10387
      %v10798 = vpop.f32.mrf.mxu0
      %v10799 = vadd.f32 %v10686, %v10798
      %10800 = vmatmul.f32.gmra.mxu0 %v10394
      %v10801 = vpop.f32.mrf.mxu0
      %v10802 = vadd.f32 %v10689, %v10801
      %10803 = vmatmul.f32.gmra.mxu0 %v10402
      %v10804 = vpop.f32.mrf.mxu0
      %v10805 = vadd.f32 %v10692, %v10804
      %10806 = vmatmul.f32.gmra.mxu0 %v10409
      %v10807 = vpop.f32.mrf.mxu0
      %v10808 = vadd.f32 %v10695, %v10807
      %10809 = vmatmul.f32.gmra.mxu0 %v10417
      %v10810 = vpop.f32.mrf.mxu0
      %v10811 = vadd.f32 %v10698, %v10810
      %10812 = vmatmul.f32.gmra.mxu0 %v10424
      %v10813 = vpop.f32.mrf.mxu0
      %v10814 = vadd.f32 %v10701, %v10813
      %10815 = vmatmul.f32.gmra.mxu0 %v10432
      %v10816 = vpop.f32.mrf.mxu0
      %v10817 = vadd.f32 %v10704, %v10816
      %10818 = vmatmul.f32.gmra.mxu0 %v10439
      %v10819 = vpop.f32.mrf.mxu0
      %v10820 = vadd.f32 %v10707, %v10819
      %10821 = vmatmul.f32.gmra.mxu0 %v10447
      %v10822 = vpop.f32.mrf.mxu0
      %v10823 = vadd.f32 %v10710, %v10822
      %10824 = vmatmul.f32.gmra.mxu0 %v10454
      %v10825 = vpop.f32.mrf.mxu0
      %v10826 = vadd.f32 %v10713, %v10825
      %10827 = vdwg.mxu0
      %10828 = vmatpush.msra.mxu0 %v10601
      %10829 = vmatpush.msra.mxu0 %v10600
      %10830 = vmatpush.msra.mxu0 %v10599
      %10831 = vmatpush.msra.mxu0 %v10598
      %10832 = vmatpush.msra.mxu0 %v10597
      %10833 = vmatpush.msra.mxu0 %v10596
      %10834 = vmatpush.msra.mxu0 %v10595
      %10835 = vmatpush.msra.mxu0 %v10594
      %10836 = vmatpush.msra.mxu0 %v10593
      %10837 = vmatpush.msra.mxu0 %v10592
      %10838 = vmatpush.msra.mxu0 %v10591
      %10839 = vmatpush.msra.mxu0 %v10590
      %10840 = vmatpush.msra.mxu0 %v10589
      %10841 = vmatpush.msra.mxu0 %v10588
      %10842 = vmatpush.msra.mxu0 %v10587
      %10843 = vmatpush.msra.mxu0 %v10586
      %10844 = vmatmul.f32.gmra.mxu0 %v10225
      %v10845 = vpop.f32.mrf.mxu0
      %v10846 = vadd.f32 %v10733, %v10845
      %10847 = vmatmul.f32.gmra.mxu0 %v10231
      %v10848 = vpop.f32.mrf.mxu0
      %v10849 = vadd.f32 %v10736, %v10848
      %10850 = vmatmul.f32.gmra.mxu0 %v10240
      %v10851 = vpop.f32.mrf.mxu0
      %v10852 = vadd.f32 %v10739, %v10851
      %10853 = vmatmul.f32.gmra.mxu0 %v10246
      %v10854 = vpop.f32.mrf.mxu0
      %v10855 = vadd.f32 %v10742, %v10854
      %10856 = vmatmul.f32.gmra.mxu0 %v10255
      %v10857 = vpop.f32.mrf.mxu0
      %v10858 = vadd.f32 %v10745, %v10857
      %10859 = vmatmul.f32.gmra.mxu0 %v10261
      %v10860 = vpop.f32.mrf.mxu0
      %v10861 = vadd.f32 %v10748, %v10860
      %10862 = vmatmul.f32.gmra.mxu0 %v10270
      %v10863 = vpop.f32.mrf.mxu0
      %v10864 = vadd.f32 %v10751, %v10863
      %10865 = vmatmul.f32.gmra.mxu0 %v10276
      %v10866 = vpop.f32.mrf.mxu0
      %v10867 = vadd.f32 %v10754, %v10866
      %10868 = vmatmul.f32.gmra.mxu0 %v10285
      %v10869 = vpop.f32.mrf.mxu0
      %v10870 = vadd.f32 %v10757, %v10869
      %10871 = vmatmul.f32.gmra.mxu0 %v10291
      %v10872 = vpop.f32.mrf.mxu0
      %v10873 = vadd.f32 %v10760, %v10872
      %10874 = vmatmul.f32.gmra.mxu0 %v10300
      %v10875 = vpop.f32.mrf.mxu0
      %v10876 = vadd.f32 %v10763, %v10875
      %10877 = vmatmul.f32.gmra.mxu0 %v10306
      %v10878 = vpop.f32.mrf.mxu0
      %v10879 = vadd.f32 %v10766, %v10878
      %10880 = vmatmul.f32.gmra.mxu0 %v10315
      %v10881 = vpop.f32.mrf.mxu0
      %v10882 = vadd.f32 %v10769, %v10881
      %10883 = vmatmul.f32.gmra.mxu0 %v10321
      %v10884 = vpop.f32.mrf.mxu0
      %v10885 = vadd.f32 %v10772, %v10884
      %10886 = vmatmul.f32.gmra.mxu0 %v10330
      %v10887 = vpop.f32.mrf.mxu0
      %v10888 = vadd.f32 %v10775, %v10887
      %10889 = vmatmul.f32.gmra.mxu0 %v10336
      %v10890 = vpop.f32.mrf.mxu0
      %v10891 = vadd.f32 %v10778, %v10890
      %10892 = vmatmul.f32.gmra.mxu0 %v10345
      %v10893 = vpop.f32.mrf.mxu0
      %v10894 = vadd.f32 %v10781, %v10893
      %10895 = vmatmul.f32.gmra.mxu0 %v10351
      %v10896 = vpop.f32.mrf.mxu0
      %v10897 = vadd.f32 %v10784, %v10896
      %10898 = vmatmul.f32.gmra.mxu0 %v10360
      %v10899 = vpop.f32.mrf.mxu0
      %v10900 = vadd.f32 %v10787, %v10899
      %10901 = vmatmul.f32.gmra.mxu0 %v10366
      %v10902 = vpop.f32.mrf.mxu0
      %v10903 = vadd.f32 %v10790, %v10902
      %10904 = vmatmul.f32.gmra.mxu0 %v10375
      %v10905 = vpop.f32.mrf.mxu0
      %v10906 = vadd.f32 %v10793, %v10905
      %10907 = vmatmul.f32.gmra.mxu0 %v10381
      %v10908 = vpop.f32.mrf.mxu0
      %v10909 = vadd.f32 %v10796, %v10908
      %10910 = vmatmul.f32.gmra.mxu0 %v10390
      %v10911 = vpop.f32.mrf.mxu0
      %v10912 = vadd.f32 %v10799, %v10911
      %10913 = vmatmul.f32.gmra.mxu0 %v10396
      %v10914 = vpop.f32.mrf.mxu0
      %v10915 = vadd.f32 %v10802, %v10914
      %10916 = vmatmul.f32.gmra.mxu0 %v10405
      %v10917 = vpop.f32.mrf.mxu0
      %v10918 = vadd.f32 %v10805, %v10917
      %10919 = vmatmul.f32.gmra.mxu0 %v10411
      %v10920 = vpop.f32.mrf.mxu0
      %v10921 = vadd.f32 %v10808, %v10920
      %10922 = vmatmul.f32.gmra.mxu0 %v10420
      %v10923 = vpop.f32.mrf.mxu0
      %v10924 = vadd.f32 %v10811, %v10923
      %10925 = vmatmul.f32.gmra.mxu0 %v10426
      %v10926 = vpop.f32.mrf.mxu0
      %v10927 = vadd.f32 %v10814, %v10926
      %10928 = vmatmul.f32.gmra.mxu0 %v10435
      %v10929 = vpop.f32.mrf.mxu0
      %v10930 = vadd.f32 %v10817, %v10929
      %10931 = vmatmul.f32.gmra.mxu0 %v10441
      %v10932 = vpop.f32.mrf.mxu0
      %v10933 = vadd.f32 %v10820, %v10932
      %10934 = vmatmul.f32.gmra.mxu0 %v10450
      %v10935 = vpop.f32.mrf.mxu0
      %v10936 = vadd.f32 %v10823, %v10935
      %10937 = vmatmul.f32.gmra.mxu0 %v10456
      %v10938 = vpop.f32.mrf.mxu0
      %v10939 = vadd.f32 %v10826, %v10938
      %10940 = vdwg.mxu0
      %v10941 = vadd.f32 %v9896, %v10846
      %v10942 = vadd.f32 %v9897, %v10849
      %v10943 = vadd.f32 %v9898, %v10852
      %v10944 = vadd.f32 %v9899, %v10855
      %v10945 = vadd.f32 %v9900, %v10858
      %v10946 = vadd.f32 %v9901, %v10861
      %v10947 = vadd.f32 %v9902, %v10864
      %v10948 = vadd.f32 %v9903, %v10867
      %v10949 = vadd.f32 %v9904, %v10870
      %v10950 = vadd.f32 %v9905, %v10873
      %v10951 = vadd.f32 %v9906, %v10876
      %v10952 = vadd.f32 %v9907, %v10879
      %v10953 = vadd.f32 %v9908, %v10882
      %v10954 = vadd.f32 %v9909, %v10885
      %v10955 = vadd.f32 %v9910, %v10888
      %v10956 = vadd.f32 %v9911, %v10891
      %v10957 = vadd.f32 %v9912, %v10894
      %v10958 = vadd.f32 %v9913, %v10897
      %v10959 = vadd.f32 %v9914, %v10900
      %v10960 = vadd.f32 %v9915, %v10903
      %v10961 = vadd.f32 %v9916, %v10906
      %v10962 = vadd.f32 %v9917, %v10909
      %v10963 = vadd.f32 %v9918, %v10912
      %v10964 = vadd.f32 %v9919, %v10915
      %v10965 = vadd.f32 %v9920, %v10918
      %v10966 = vadd.f32 %v9921, %v10921
      %v10967 = vadd.f32 %v9922, %v10924
      %v10968 = vadd.f32 %v9923, %v10927
      %v10969 = vadd.f32 %v9924, %v10930
      %v10970 = vadd.f32 %v9925, %v10933
      %v10971 = vadd.f32 %v9926, %v10936
      %v10972 = vadd.f32 %v9927, %v10939
      %v10973 = vld [vmem:[%s9928 + $0x30] sm:$0xff]
      %v10974 = vld [vmem:[%s9928 + $0x38] sm:$0xff]
      %v10975 = vld [vmem:[%s9928 + $0x40] sm:$0xff]
      %v10976 = vld [vmem:[%s9928 + $0x90] sm:$0xff]
      %v10977 = vld [vmem:[%s9928 + $0x98] sm:$0xff]
      %v10978 = vld [vmem:[%s9928 + $0xa0] sm:$0xff]
      %v10979 = vld [vmem:[%s9928 + $0xf0] sm:$0xff]
      %v10980 = vld [vmem:[%s9928 + $0xf8] sm:$0xff]
      %v10981 = vld [vmem:[%s9928 + $0x100] sm:$0xff]
      %v10982 = vld [vmem:[%s9928 + $0x150] sm:$0xff]
      %v10983 = vld [vmem:[%s9928 + $0x158] sm:$0xff]
      %v10984 = vld [vmem:[%s9928 + $0x160] sm:$0xff]
      %v10985 = vld [vmem:[%s9928 + $0x1b0] sm:$0xff]
      %v10986 = vld [vmem:[%s9928 + $0x1b8] sm:$0xff]
      %v10987 = vld [vmem:[%s9928 + $0x1c0] sm:$0xff]
      %v10988 = vld [vmem:[%s9928 + $0x210] sm:$0xff]
      %v10989 = vld [vmem:[%s9928 + $0x218] sm:$0xff]
      %v10990 = vld [vmem:[%s9928 + $0x220] sm:$0xff]
      %v10991 = vld [vmem:[%s9928 + $0x270] sm:$0xff]
      %v10992 = vld [vmem:[%s9928 + $0x278] sm:$0xff]
      %v10993 = vld [vmem:[%s9928 + $0x280] sm:$0xff]
      %v10994 = vld [vmem:[%s9928 + $0x2d0] sm:$0xff]
      %v10995 = vld [vmem:[%s9928 + $0x2d8] sm:$0xff]
      %v10996 = vld [vmem:[%s9928 + $0x2e0] sm:$0xff]
      %v10997 = vld [vmem:[%s9928 + $0x330] sm:$0xff]
      %v10998 = vld [vmem:[%s9928 + $0x338] sm:$0xff]
      %v10999 = vld [vmem:[%s9928 + $0x340] sm:$0xff]
      %v11000 = vld [vmem:[%s9928 + $0x390] sm:$0xff]
      %v11001 = vld [vmem:[%s9928 + $0x398] sm:$0xff]
      %v11002 = vld [vmem:[%s9928 + $0x3a0] sm:$0xff]
      %v11003 = vld [vmem:[%s9928 + $0x3f0] sm:$0xff]
      %v11004 = vld [vmem:[%s9928 + $0x3f8] sm:$0xff]
      %v11005 = vld [vmem:[%s9928 + $0x400] sm:$0xff]
      %v11006 = vld [vmem:[%s9928 + $0x450] sm:$0xff]
      %v11007 = vld [vmem:[%s9928 + $0x458] sm:$0xff]
      %v11008 = vld [vmem:[%s9928 + $0x460] sm:$0xff]
      %v11009 = vld [vmem:[%s9928 + $0x4b0] sm:$0xff]
      %v11010 = vld [vmem:[%s9928 + $0x4b8] sm:$0xff]
      %v11011 = vld [vmem:[%s9928 + $0x4c0] sm:$0xff]
      %v11012 = vld [vmem:[%s9928 + $0x510] sm:$0xff]
      %v11013 = vld [vmem:[%s9928 + $0x518] sm:$0xff]
      %v11014 = vld [vmem:[%s9928 + $0x520] sm:$0xff]
      %v11015 = vld [vmem:[%s9928 + $0x570] sm:$0xff]
      %v11016 = vld [vmem:[%s9928 + $0x578] sm:$0xff]
      %v11017 = vld [vmem:[%s9928 + $0x580] sm:$0xff]
      %v11018 = vld [vmem:[%s9928 + $0x5d0] sm:$0xff]
      %v11019 = vld [vmem:[%s9928 + $0x5d8] sm:$0xff]
      %v11020 = vld [vmem:[%s9928 + $0x5e0] sm:$0xff]
      %s11021 = scalar_lea.vmem %s5, 2688
      %v11022 = vld [vmem:[%s11021] sm:$0xff]
      %v11023 = vld [vmem:[%s11021 + $0x8] sm:$0xff]
      %v11024 = vld [vmem:[%s11021 + $0x10] sm:$0xff]
      %v11025 = vld [vmem:[%s11021 + $0x18] sm:$0xff]
      %v11026 = vld [vmem:[%s11021 + $0x20] sm:$0xff]
      %v11027 = vld [vmem:[%s11021 + $0x28] sm:$0xff]
      %v11028 = vld [vmem:[%s11021 + $0x30] sm:$0xff]
      %v11029 = vld [vmem:[%s11021 + $0x38] sm:$0xff]
      %v11030 = vld [vmem:[%s11021 + $0x40] sm:$0xff]
      %v11031 = vld [vmem:[%s11021 + $0x48] sm:$0xff]
      %v11032 = vld [vmem:[%s11021 + $0x50] sm:$0xff]
      %v11033 = vld [vmem:[%s11021 + $0x58] sm:$0xff]
      %v11034 = vld [vmem:[%s11021 + $0x60] sm:$0xff]
      %v11035 = vld [vmem:[%s11021 + $0x68] sm:$0xff]
      %v11036 = vld [vmem:[%s11021 + $0x70] sm:$0xff]
      %v11037 = vld [vmem:[%s11021 + $0x78] sm:$0xff]
      %v11038 = vld [vmem:[%s11021 + $0x80] sm:$0xff]
      %v11039 = vld [vmem:[%s11021 + $0x88] sm:$0xff]
      %v11040 = vld [vmem:[%s11021 + $0x90] sm:$0xff]
      %v11041 = vld [vmem:[%s11021 + $0x98] sm:$0xff]
      %v11042 = vld [vmem:[%s11021 + $0xa0] sm:$0xff]
      %v11043 = vld [vmem:[%s11021 + $0xa8] sm:$0xff]
      %v11044 = vld [vmem:[%s11021 + $0xb0] sm:$0xff]
      %v11045 = vld [vmem:[%s11021 + $0xb8] sm:$0xff]
      %v11046 = vld [vmem:[%s11021 + $0xc0] sm:$0xff]
      %v11047 = vld [vmem:[%s11021 + $0xc8] sm:$0xff]
      %v11048 = vld [vmem:[%s11021 + $0xd0] sm:$0xff]
      %v11049 = vld [vmem:[%s11021 + $0xd8] sm:$0xff]
      %v11050 = vld [vmem:[%s11021 + $0xe0] sm:$0xff]
      %v11051 = vld [vmem:[%s11021 + $0xe8] sm:$0xff]
      %v11052 = vld [vmem:[%s11021 + $0xf0] sm:$0xff]
      %v11053 = vld [vmem:[%s11021 + $0xf8] sm:$0xff]
      %v11054 = vld [vmem:[%s11021 + $0x100] sm:$0xff]
      %v11055 = vld [vmem:[%s11021 + $0x108] sm:$0xff]
      %v11056 = vld [vmem:[%s11021 + $0x110] sm:$0xff]
      %v11057 = vld [vmem:[%s11021 + $0x118] sm:$0xff]
      %v11058 = vld [vmem:[%s11021 + $0x120] sm:$0xff]
      %v11059 = vld [vmem:[%s11021 + $0x128] sm:$0xff]
      %v11060 = vld [vmem:[%s11021 + $0x130] sm:$0xff]
      %v11061 = vld [vmem:[%s11021 + $0x138] sm:$0xff]
      %v11062 = vld [vmem:[%s11021 + $0x140] sm:$0xff]
      %v11063 = vld [vmem:[%s11021 + $0x148] sm:$0xff]
      %v11064 = vld [vmem:[%s11021 + $0x150] sm:$0xff]
      %v11065 = vld [vmem:[%s11021 + $0x158] sm:$0xff]
      %v11066 = vld [vmem:[%s11021 + $0x160] sm:$0xff]
      %v11067 = vld [vmem:[%s11021 + $0x168] sm:$0xff]
      %v11068 = vld [vmem:[%s11021 + $0x170] sm:$0xff]
      %v11069 = vld [vmem:[%s11021 + $0x178] sm:$0xff]
      %11070 = vmatpush.msra.mxu0 %v11037
      %11071 = vmatpush.msra.mxu0 %v11036
      %11072 = vmatpush.msra.mxu0 %v11035
      %11073 = vmatpush.msra.mxu0 %v11034
      %11074 = vmatpush.msra.mxu0 %v11033
      %11075 = vmatpush.msra.mxu0 %v11032
      %11076 = vmatpush.msra.mxu0 %v11031
      %11077 = vmatpush.msra.mxu0 %v11030
      %11078 = vmatpush.msra.mxu0 %v11029
      %11079 = vmatpush.msra.mxu0 %v11028
      %11080 = vmatpush.msra.mxu0 %v11027
      %11081 = vmatpush.msra.mxu0 %v11026
      %11082 = vmatpush.msra.mxu0 %v11025
      %11083 = vmatpush.msra.mxu0 %v11024
      %11084 = vmatpush.msra.mxu0 %v11023
      %11085 = vmatpush.msra.mxu0 %v11022
      %11086 = vmatmul.f32.gmra.mxu0 %v9932
      %v11087 = vpop.f32.mrf.mxu0
      %v11088 = vadd.f32 0.0, %v11087
      %11089 = vmatmul.f32.gmra.mxu0 %v10973
      %v11090 = vpop.f32.mrf.mxu0
      %v11091 = vadd.f32 0.0, %v11090
      %11092 = vmatmul.f32.gmra.mxu0 %v9941
      %v11093 = vpop.f32.mrf.mxu0
      %v11094 = vadd.f32 0.0, %v11093
      %11095 = vmatmul.f32.gmra.mxu0 %v10976
      %v11096 = vpop.f32.mrf.mxu0
      %v11097 = vadd.f32 0.0, %v11096
      %11098 = vmatmul.f32.gmra.mxu0 %v9950
      %v11099 = vpop.f32.mrf.mxu0
      %v11100 = vadd.f32 0.0, %v11099
      %11101 = vmatmul.f32.gmra.mxu0 %v10979
      %v11102 = vpop.f32.mrf.mxu0
      %v11103 = vadd.f32 0.0, %v11102
      %11104 = vmatmul.f32.gmra.mxu0 %v9959
      %v11105 = vpop.f32.mrf.mxu0
      %v11106 = vadd.f32 0.0, %v11105
      %11107 = vmatmul.f32.gmra.mxu0 %v10982
      %v11108 = vpop.f32.mrf.mxu0
      %v11109 = vadd.f32 0.0, %v11108
      %11110 = vmatmul.f32.gmra.mxu0 %v9968
      %v11111 = vpop.f32.mrf.mxu0
      %v11112 = vadd.f32 0.0, %v11111
      %11113 = vmatmul.f32.gmra.mxu0 %v10985
      %v11114 = vpop.f32.mrf.mxu0
      %v11115 = vadd.f32 0.0, %v11114
      %11116 = vmatmul.f32.gmra.mxu0 %v9977
      %v11117 = vpop.f32.mrf.mxu0
      %v11118 = vadd.f32 0.0, %v11117
      %11119 = vmatmul.f32.gmra.mxu0 %v10988
      %v11120 = vpop.f32.mrf.mxu0
      %v11121 = vadd.f32 0.0, %v11120
      %11122 = vmatmul.f32.gmra.mxu0 %v9986
      %v11123 = vpop.f32.mrf.mxu0
      %v11124 = vadd.f32 0.0, %v11123
      %11125 = vmatmul.f32.gmra.mxu0 %v10991
      %v11126 = vpop.f32.mrf.mxu0
      %v11127 = vadd.f32 0.0, %v11126
      %11128 = vmatmul.f32.gmra.mxu0 %v9995
      %v11129 = vpop.f32.mrf.mxu0
      %v11130 = vadd.f32 0.0, %v11129
      %11131 = vmatmul.f32.gmra.mxu0 %v10994
      %v11132 = vpop.f32.mrf.mxu0
      %v11133 = vadd.f32 0.0, %v11132
      %11134 = vmatmul.f32.gmra.mxu0 %v10004
      %v11135 = vpop.f32.mrf.mxu0
      %v11136 = vadd.f32 0.0, %v11135
      %11137 = vmatmul.f32.gmra.mxu0 %v10997
      %v11138 = vpop.f32.mrf.mxu0
      %v11139 = vadd.f32 0.0, %v11138
      %11140 = vmatmul.f32.gmra.mxu0 %v10013
      %v11141 = vpop.f32.mrf.mxu0
      %v11142 = vadd.f32 0.0, %v11141
      %11143 = vmatmul.f32.gmra.mxu0 %v11000
      %v11144 = vpop.f32.mrf.mxu0
      %v11145 = vadd.f32 0.0, %v11144
      %11146 = vmatmul.f32.gmra.mxu0 %v10022
      %v11147 = vpop.f32.mrf.mxu0
      %v11148 = vadd.f32 0.0, %v11147
      %11149 = vmatmul.f32.gmra.mxu0 %v11003
      %v11150 = vpop.f32.mrf.mxu0
      %v11151 = vadd.f32 0.0, %v11150
      %11152 = vmatmul.f32.gmra.mxu0 %v10031
      %v11153 = vpop.f32.mrf.mxu0
      %v11154 = vadd.f32 0.0, %v11153
      %11155 = vmatmul.f32.gmra.mxu0 %v11006
      %v11156 = vpop.f32.mrf.mxu0
      %v11157 = vadd.f32 0.0, %v11156
      %11158 = vmatmul.f32.gmra.mxu0 %v10040
      %v11159 = vpop.f32.mrf.mxu0
      %v11160 = vadd.f32 0.0, %v11159
      %11161 = vmatmul.f32.gmra.mxu0 %v11009
      %v11162 = vpop.f32.mrf.mxu0
      %v11163 = vadd.f32 0.0, %v11162
      %11164 = vmatmul.f32.gmra.mxu0 %v10049
      %v11165 = vpop.f32.mrf.mxu0
      %v11166 = vadd.f32 0.0, %v11165
      %11167 = vmatmul.f32.gmra.mxu0 %v11012
      %v11168 = vpop.f32.mrf.mxu0
      %v11169 = vadd.f32 0.0, %v11168
      %11170 = vmatmul.f32.gmra.mxu0 %v10058
      %v11171 = vpop.f32.mrf.mxu0
      %v11172 = vadd.f32 0.0, %v11171
      %11173 = vmatmul.f32.gmra.mxu0 %v11015
      %v11174 = vpop.f32.mrf.mxu0
      %v11175 = vadd.f32 0.0, %v11174
      %11176 = vmatmul.f32.gmra.mxu0 %v10067
      %v11177 = vpop.f32.mrf.mxu0
      %v11178 = vadd.f32 0.0, %v11177
      %11179 = vmatmul.f32.gmra.mxu0 %v11018
      %v11180 = vpop.f32.mrf.mxu0
      %v11181 = vadd.f32 0.0, %v11180
      %11182 = vdwg.mxu0
      %11183 = vmatpush.msra.mxu0 %v11053
      %11184 = vmatpush.msra.mxu0 %v11052
      %11185 = vmatpush.msra.mxu0 %v11051
      %11186 = vmatpush.msra.mxu0 %v11050
      %11187 = vmatpush.msra.mxu0 %v11049
      %11188 = vmatpush.msra.mxu0 %v11048
      %11189 = vmatpush.msra.mxu0 %v11047
      %11190 = vmatpush.msra.mxu0 %v11046
      %11191 = vmatpush.msra.mxu0 %v11045
      %11192 = vmatpush.msra.mxu0 %v11044
      %11193 = vmatpush.msra.mxu0 %v11043
      %11194 = vmatpush.msra.mxu0 %v11042
      %11195 = vmatpush.msra.mxu0 %v11041
      %11196 = vmatpush.msra.mxu0 %v11040
      %11197 = vmatpush.msra.mxu0 %v11039
      %11198 = vmatpush.msra.mxu0 %v11038
      %11199 = vmatmul.f32.gmra.mxu0 %v9933
      %v11200 = vpop.f32.mrf.mxu0
      %v11201 = vadd.f32 %v11088, %v11200
      %11202 = vmatmul.f32.gmra.mxu0 %v10974
      %v11203 = vpop.f32.mrf.mxu0
      %v11204 = vadd.f32 %v11091, %v11203
      %11205 = vmatmul.f32.gmra.mxu0 %v9942
      %v11206 = vpop.f32.mrf.mxu0
      %v11207 = vadd.f32 %v11094, %v11206
      %11208 = vmatmul.f32.gmra.mxu0 %v10977
      %v11209 = vpop.f32.mrf.mxu0
      %v11210 = vadd.f32 %v11097, %v11209
      %11211 = vmatmul.f32.gmra.mxu0 %v9951
      %v11212 = vpop.f32.mrf.mxu0
      %v11213 = vadd.f32 %v11100, %v11212
      %11214 = vmatmul.f32.gmra.mxu0 %v10980
      %v11215 = vpop.f32.mrf.mxu0
      %v11216 = vadd.f32 %v11103, %v11215
      %11217 = vmatmul.f32.gmra.mxu0 %v9960
      %v11218 = vpop.f32.mrf.mxu0
      %v11219 = vadd.f32 %v11106, %v11218
      %11220 = vmatmul.f32.gmra.mxu0 %v10983
      %v11221 = vpop.f32.mrf.mxu0
      %v11222 = vadd.f32 %v11109, %v11221
      %11223 = vmatmul.f32.gmra.mxu0 %v9969
      %v11224 = vpop.f32.mrf.mxu0
      %v11225 = vadd.f32 %v11112, %v11224
      %11226 = vmatmul.f32.gmra.mxu0 %v10986
      %v11227 = vpop.f32.mrf.mxu0
      %v11228 = vadd.f32 %v11115, %v11227
      %11229 = vmatmul.f32.gmra.mxu0 %v9978
      %v11230 = vpop.f32.mrf.mxu0
      %v11231 = vadd.f32 %v11118, %v11230
      %11232 = vmatmul.f32.gmra.mxu0 %v10989
      %v11233 = vpop.f32.mrf.mxu0
      %v11234 = vadd.f32 %v11121, %v11233
      %11235 = vmatmul.f32.gmra.mxu0 %v9987
      %v11236 = vpop.f32.mrf.mxu0
      %v11237 = vadd.f32 %v11124, %v11236
      %11238 = vmatmul.f32.gmra.mxu0 %v10992
      %v11239 = vpop.f32.mrf.mxu0
      %v11240 = vadd.f32 %v11127, %v11239
      %11241 = vmatmul.f32.gmra.mxu0 %v9996
      %v11242 = vpop.f32.mrf.mxu0
      %v11243 = vadd.f32 %v11130, %v11242
      %11244 = vmatmul.f32.gmra.mxu0 %v10995
      %v11245 = vpop.f32.mrf.mxu0
      %v11246 = vadd.f32 %v11133, %v11245
      %11247 = vmatmul.f32.gmra.mxu0 %v10005
      %v11248 = vpop.f32.mrf.mxu0
      %v11249 = vadd.f32 %v11136, %v11248
      %11250 = vmatmul.f32.gmra.mxu0 %v10998
      %v11251 = vpop.f32.mrf.mxu0
      %v11252 = vadd.f32 %v11139, %v11251
      %11253 = vmatmul.f32.gmra.mxu0 %v10014
      %v11254 = vpop.f32.mrf.mxu0
      %v11255 = vadd.f32 %v11142, %v11254
      %11256 = vmatmul.f32.gmra.mxu0 %v11001
      %v11257 = vpop.f32.mrf.mxu0
      %v11258 = vadd.f32 %v11145, %v11257
      %11259 = vmatmul.f32.gmra.mxu0 %v10023
      %v11260 = vpop.f32.mrf.mxu0
      %v11261 = vadd.f32 %v11148, %v11260
      %11262 = vmatmul.f32.gmra.mxu0 %v11004
      %v11263 = vpop.f32.mrf.mxu0
      %v11264 = vadd.f32 %v11151, %v11263
      %11265 = vmatmul.f32.gmra.mxu0 %v10032
      %v11266 = vpop.f32.mrf.mxu0
      %v11267 = vadd.f32 %v11154, %v11266
      %11268 = vmatmul.f32.gmra.mxu0 %v11007
      %v11269 = vpop.f32.mrf.mxu0
      %v11270 = vadd.f32 %v11157, %v11269
      %11271 = vmatmul.f32.gmra.mxu0 %v10041
      %v11272 = vpop.f32.mrf.mxu0
      %v11273 = vadd.f32 %v11160, %v11272
      %11274 = vmatmul.f32.gmra.mxu0 %v11010
      %v11275 = vpop.f32.mrf.mxu0
      %v11276 = vadd.f32 %v11163, %v11275
      %11277 = vmatmul.f32.gmra.mxu0 %v10050
      %v11278 = vpop.f32.mrf.mxu0
      %v11279 = vadd.f32 %v11166, %v11278
      %11280 = vmatmul.f32.gmra.mxu0 %v11013
      %v11281 = vpop.f32.mrf.mxu0
      %v11282 = vadd.f32 %v11169, %v11281
      %11283 = vmatmul.f32.gmra.mxu0 %v10059
      %v11284 = vpop.f32.mrf.mxu0
      %v11285 = vadd.f32 %v11172, %v11284
      %11286 = vmatmul.f32.gmra.mxu0 %v11016
      %v11287 = vpop.f32.mrf.mxu0
      %v11288 = vadd.f32 %v11175, %v11287
      %11289 = vmatmul.f32.gmra.mxu0 %v10068
      %v11290 = vpop.f32.mrf.mxu0
      %v11291 = vadd.f32 %v11178, %v11290
      %11292 = vmatmul.f32.gmra.mxu0 %v11019
      %v11293 = vpop.f32.mrf.mxu0
      %v11294 = vadd.f32 %v11181, %v11293
      %11295 = vdwg.mxu0
      %11296 = vmatpush.msra.mxu0 %v11069
      %11297 = vmatpush.msra.mxu0 %v11068
      %11298 = vmatpush.msra.mxu0 %v11067
      %11299 = vmatpush.msra.mxu0 %v11066
      %11300 = vmatpush.msra.mxu0 %v11065
      %11301 = vmatpush.msra.mxu0 %v11064
      %11302 = vmatpush.msra.mxu0 %v11063
      %11303 = vmatpush.msra.mxu0 %v11062
      %11304 = vmatpush.msra.mxu0 %v11061
      %11305 = vmatpush.msra.mxu0 %v11060
      %11306 = vmatpush.msra.mxu0 %v11059
      %11307 = vmatpush.msra.mxu0 %v11058
      %11308 = vmatpush.msra.mxu0 %v11057
      %11309 = vmatpush.msra.mxu0 %v11056
      %11310 = vmatpush.msra.mxu0 %v11055
      %11311 = vmatpush.msra.mxu0 %v11054
      %11312 = vmatmul.f32.gmra.mxu0 %v9934
      %v11313 = vpop.f32.mrf.mxu0
      %v11314 = vadd.f32 %v11201, %v11313
      %11315 = vmatmul.f32.gmra.mxu0 %v10975
      %v11316 = vpop.f32.mrf.mxu0
      %v11317 = vadd.f32 %v11204, %v11316
      %11318 = vmatmul.f32.gmra.mxu0 %v9943
      %v11319 = vpop.f32.mrf.mxu0
      %v11320 = vadd.f32 %v11207, %v11319
      %11321 = vmatmul.f32.gmra.mxu0 %v10978
      %v11322 = vpop.f32.mrf.mxu0
      %v11323 = vadd.f32 %v11210, %v11322
      %11324 = vmatmul.f32.gmra.mxu0 %v9952
      %v11325 = vpop.f32.mrf.mxu0
      %v11326 = vadd.f32 %v11213, %v11325
      %11327 = vmatmul.f32.gmra.mxu0 %v10981
      %v11328 = vpop.f32.mrf.mxu0
      %v11329 = vadd.f32 %v11216, %v11328
      %11330 = vmatmul.f32.gmra.mxu0 %v9961
      %v11331 = vpop.f32.mrf.mxu0
      %v11332 = vadd.f32 %v11219, %v11331
      %11333 = vmatmul.f32.gmra.mxu0 %v10984
      %v11334 = vpop.f32.mrf.mxu0
      %v11335 = vadd.f32 %v11222, %v11334
      %11336 = vmatmul.f32.gmra.mxu0 %v9970
      %v11337 = vpop.f32.mrf.mxu0
      %v11338 = vadd.f32 %v11225, %v11337
      %11339 = vmatmul.f32.gmra.mxu0 %v10987
      %v11340 = vpop.f32.mrf.mxu0
      %v11341 = vadd.f32 %v11228, %v11340
      %11342 = vmatmul.f32.gmra.mxu0 %v9979
      %v11343 = vpop.f32.mrf.mxu0
      %v11344 = vadd.f32 %v11231, %v11343
      %11345 = vmatmul.f32.gmra.mxu0 %v10990
      %v11346 = vpop.f32.mrf.mxu0
      %v11347 = vadd.f32 %v11234, %v11346
      %11348 = vmatmul.f32.gmra.mxu0 %v9988
      %v11349 = vpop.f32.mrf.mxu0
      %v11350 = vadd.f32 %v11237, %v11349
      %11351 = vmatmul.f32.gmra.mxu0 %v10993
      %v11352 = vpop.f32.mrf.mxu0
      %v11353 = vadd.f32 %v11240, %v11352
      %11354 = vmatmul.f32.gmra.mxu0 %v9997
      %v11355 = vpop.f32.mrf.mxu0
      %v11356 = vadd.f32 %v11243, %v11355
      %11357 = vmatmul.f32.gmra.mxu0 %v10996
      %v11358 = vpop.f32.mrf.mxu0
      %v11359 = vadd.f32 %v11246, %v11358
      %11360 = vmatmul.f32.gmra.mxu0 %v10006
      %v11361 = vpop.f32.mrf.mxu0
      %v11362 = vadd.f32 %v11249, %v11361
      %11363 = vmatmul.f32.gmra.mxu0 %v10999
      %v11364 = vpop.f32.mrf.mxu0
      %v11365 = vadd.f32 %v11252, %v11364
      %11366 = vmatmul.f32.gmra.mxu0 %v10015
      %v11367 = vpop.f32.mrf.mxu0
      %v11368 = vadd.f32 %v11255, %v11367
      %11369 = vmatmul.f32.gmra.mxu0 %v11002
      %v11370 = vpop.f32.mrf.mxu0
      %v11371 = vadd.f32 %v11258, %v11370
      %11372 = vmatmul.f32.gmra.mxu0 %v10024
      %v11373 = vpop.f32.mrf.mxu0
      %v11374 = vadd.f32 %v11261, %v11373
      %11375 = vmatmul.f32.gmra.mxu0 %v11005
      %v11376 = vpop.f32.mrf.mxu0
      %v11377 = vadd.f32 %v11264, %v11376
      %11378 = vmatmul.f32.gmra.mxu0 %v10033
      %v11379 = vpop.f32.mrf.mxu0
      %v11380 = vadd.f32 %v11267, %v11379
      %11381 = vmatmul.f32.gmra.mxu0 %v11008
      %v11382 = vpop.f32.mrf.mxu0
      %v11383 = vadd.f32 %v11270, %v11382
      %11384 = vmatmul.f32.gmra.mxu0 %v10042
      %v11385 = vpop.f32.mrf.mxu0
      %v11386 = vadd.f32 %v11273, %v11385
      %11387 = vmatmul.f32.gmra.mxu0 %v11011
      %v11388 = vpop.f32.mrf.mxu0
      %v11389 = vadd.f32 %v11276, %v11388
      %11390 = vmatmul.f32.gmra.mxu0 %v10051
      %v11391 = vpop.f32.mrf.mxu0
      %v11392 = vadd.f32 %v11279, %v11391
      %11393 = vmatmul.f32.gmra.mxu0 %v11014
      %v11394 = vpop.f32.mrf.mxu0
      %v11395 = vadd.f32 %v11282, %v11394
      %11396 = vmatmul.f32.gmra.mxu0 %v10060
      %v11397 = vpop.f32.mrf.mxu0
      %v11398 = vadd.f32 %v11285, %v11397
      %11399 = vmatmul.f32.gmra.mxu0 %v11017
      %v11400 = vpop.f32.mrf.mxu0
      %v11401 = vadd.f32 %v11288, %v11400
      %11402 = vmatmul.f32.gmra.mxu0 %v10069
      %v11403 = vpop.f32.mrf.mxu0
      %v11404 = vadd.f32 %v11291, %v11403
      %11405 = vmatmul.f32.gmra.mxu0 %v11020
      %v11406 = vpop.f32.mrf.mxu0
      %v11407 = vadd.f32 %v11294, %v11406
      %11408 = vdwg.mxu0
      %v11409 = vadd.f32 %v10941, %v11314
      %v11410 = vadd.f32 %v10942, %v11317
      %v11411 = vadd.f32 %v10943, %v11320
      %v11412 = vadd.f32 %v10944, %v11323
      %v11413 = vadd.f32 %v10945, %v11326
      %v11414 = vadd.f32 %v10946, %v11329
      %v11415 = vadd.f32 %v10947, %v11332
      %v11416 = vadd.f32 %v10948, %v11335
      %v11417 = vadd.f32 %v10949, %v11338
      %v11418 = vadd.f32 %v10950, %v11341
      %v11419 = vadd.f32 %v10951, %v11344
      %v11420 = vadd.f32 %v10952, %v11347
      %v11421 = vadd.f32 %v10953, %v11350
      %v11422 = vadd.f32 %v10954, %v11353
      %v11423 = vadd.f32 %v10955, %v11356
      %v11424 = vadd.f32 %v10956, %v11359
      %v11425 = vadd.f32 %v10957, %v11362
      %v11426 = vadd.f32 %v10958, %v11365
      %v11427 = vadd.f32 %v10959, %v11368
      %v11428 = vadd.f32 %v10960, %v11371
      %v11429 = vadd.f32 %v10961, %v11374
      %v11430 = vadd.f32 %v10962, %v11377
      %v11431 = vadd.f32 %v10963, %v11380
      %v11432 = vadd.f32 %v10964, %v11383
      %v11433 = vadd.f32 %v10965, %v11386
      %v11434 = vadd.f32 %v10966, %v11389
      %v11435 = vadd.f32 %v10967, %v11392
      %v11436 = vadd.f32 %v10968, %v11395
      %v11437 = vadd.f32 %v10969, %v11398
      %v11438 = vadd.f32 %v10970, %v11401
      %v11439 = vadd.f32 %v10971, %v11404
      %v11440 = vadd.f32 %v10972, %v11407
      %v11441 = vld [vmem:[%s9928 + $0x18] sm:$0xfe]
      %v11442 = vld [vmem:[%s9928 + $0x20] sm:$0xfe]
      %v11443 = vld [vmem:[%s9928 + $0x28] sm:$0xfe]
      %v11444 = vld [vmem:[%s9928 + $0x30] sm:$0xff]
      %v11445 = vld [vmem:[%s9928 + $0x38] sm:$0xff]
      %v11446 = vld [vmem:[%s9928 + $0x40] sm:$0xff]
      %v11447 = vld [vmem:[%s9928 + $0x48] sm:$0x1]
      %v11448 = vld [vmem:[%s9928 + $0x50] sm:$0x1]
      %v11449 = vld [vmem:[%s9928 + $0x58] sm:$0x1]
      %v11450 = vld [vmem:[%s9928 + $0x78] sm:$0xfe]
      %v11451 = vld [vmem:[%s9928 + $0x80] sm:$0xfe]
      %v11452 = vld [vmem:[%s9928 + $0x88] sm:$0xfe]
      %v11453 = vld [vmem:[%s9928 + $0x90] sm:$0xff]
      %v11454 = vld [vmem:[%s9928 + $0x98] sm:$0xff]
      %v11455 = vld [vmem:[%s9928 + $0xa0] sm:$0xff]
      %v11456 = vld [vmem:[%s9928 + $0xa8] sm:$0x1]
      %v11457 = vld [vmem:[%s9928 + $0xb0] sm:$0x1]
      %v11458 = vld [vmem:[%s9928 + $0xb8] sm:$0x1]
      %v11459 = vld [vmem:[%s9928 + $0xd8] sm:$0xfe]
      %v11460 = vld [vmem:[%s9928 + $0xe0] sm:$0xfe]
      %v11461 = vld [vmem:[%s9928 + $0xe8] sm:$0xfe]
      %v11462 = vld [vmem:[%s9928 + $0xf0] sm:$0xff]
      %v11463 = vld [vmem:[%s9928 + $0xf8] sm:$0xff]
      %v11464 = vld [vmem:[%s9928 + $0x100] sm:$0xff]
      %v11465 = vld [vmem:[%s9928 + $0x108] sm:$0x1]
      %v11466 = vld [vmem:[%s9928 + $0x110] sm:$0x1]
      %v11467 = vld [vmem:[%s9928 + $0x118] sm:$0x1]
      %v11468 = vld [vmem:[%s9928 + $0x138] sm:$0xfe]
      %v11469 = vld [vmem:[%s9928 + $0x140] sm:$0xfe]
      %v11470 = vld [vmem:[%s9928 + $0x148] sm:$0xfe]
      %v11471 = vld [vmem:[%s9928 + $0x150] sm:$0xff]
      %v11472 = vld [vmem:[%s9928 + $0x158] sm:$0xff]
      %v11473 = vld [vmem:[%s9928 + $0x160] sm:$0xff]
      %v11474 = vld [vmem:[%s9928 + $0x168] sm:$0x1]
      %v11475 = vld [vmem:[%s9928 + $0x170] sm:$0x1]
      %v11476 = vld [vmem:[%s9928 + $0x178] sm:$0x1]
      %v11477 = vld [vmem:[%s9928 + $0x198] sm:$0xfe]
      %v11478 = vld [vmem:[%s9928 + $0x1a0] sm:$0xfe]
      %v11479 = vld [vmem:[%s9928 + $0x1a8] sm:$0xfe]
      %v11480 = vld [vmem:[%s9928 + $0x1b0] sm:$0xff]
      %v11481 = vld [vmem:[%s9928 + $0x1b8] sm:$0xff]
      %v11482 = vld [vmem:[%s9928 + $0x1c0] sm:$0xff]
      %v11483 = vld [vmem:[%s9928 + $0x1c8] sm:$0x1]
      %v11484 = vld [vmem:[%s9928 + $0x1d0] sm:$0x1]
      %v11485 = vld [vmem:[%s9928 + $0x1d8] sm:$0x1]
      %v11486 = vld [vmem:[%s9928 + $0x1f8] sm:$0xfe]
      %v11487 = vld [vmem:[%s9928 + $0x200] sm:$0xfe]
      %v11488 = vld [vmem:[%s9928 + $0x208] sm:$0xfe]
      %v11489 = vld [vmem:[%s9928 + $0x210] sm:$0xff]
      %v11490 = vld [vmem:[%s9928 + $0x218] sm:$0xff]
      %v11491 = vld [vmem:[%s9928 + $0x220] sm:$0xff]
      %v11492 = vld [vmem:[%s9928 + $0x228] sm:$0x1]
      %v11493 = vld [vmem:[%s9928 + $0x230] sm:$0x1]
      %v11494 = vld [vmem:[%s9928 + $0x238] sm:$0x1]
      %v11495 = vld [vmem:[%s9928 + $0x258] sm:$0xfe]
      %v11496 = vld [vmem:[%s9928 + $0x260] sm:$0xfe]
      %v11497 = vld [vmem:[%s9928 + $0x268] sm:$0xfe]
      %v11498 = vld [vmem:[%s9928 + $0x270] sm:$0xff]
      %v11499 = vld [vmem:[%s9928 + $0x278] sm:$0xff]
      %v11500 = vld [vmem:[%s9928 + $0x280] sm:$0xff]
      %v11501 = vld [vmem:[%s9928 + $0x288] sm:$0x1]
      %v11502 = vld [vmem:[%s9928 + $0x290] sm:$0x1]
      %v11503 = vld [vmem:[%s9928 + $0x298] sm:$0x1]
      %v11504 = vld [vmem:[%s9928 + $0x2b8] sm:$0xfe]
      %v11505 = vld [vmem:[%s9928 + $0x2c0] sm:$0xfe]
      %v11506 = vld [vmem:[%s9928 + $0x2c8] sm:$0xfe]
      %v11507 = vld [vmem:[%s9928 + $0x2d0] sm:$0xff]
      %v11508 = vld [vmem:[%s9928 + $0x2d8] sm:$0xff]
      %v11509 = vld [vmem:[%s9928 + $0x2e0] sm:$0xff]
      %v11510 = vld [vmem:[%s9928 + $0x2e8] sm:$0x1]
      %v11511 = vld [vmem:[%s9928 + $0x2f0] sm:$0x1]
      %v11512 = vld [vmem:[%s9928 + $0x2f8] sm:$0x1]
      %v11513 = vld [vmem:[%s9928 + $0x318] sm:$0xfe]
      %v11514 = vld [vmem:[%s9928 + $0x320] sm:$0xfe]
      %v11515 = vld [vmem:[%s9928 + $0x328] sm:$0xfe]
      %v11516 = vld [vmem:[%s9928 + $0x330] sm:$0xff]
      %v11517 = vld [vmem:[%s9928 + $0x338] sm:$0xff]
      %v11518 = vld [vmem:[%s9928 + $0x340] sm:$0xff]
      %v11519 = vld [vmem:[%s9928 + $0x348] sm:$0x1]
      %v11520 = vld [vmem:[%s9928 + $0x350] sm:$0x1]
      %v11521 = vld [vmem:[%s9928 + $0x358] sm:$0x1]
      %v11522 = vld [vmem:[%s9928 + $0x378] sm:$0xfe]
      %v11523 = vld [vmem:[%s9928 + $0x380] sm:$0xfe]
      %v11524 = vld [vmem:[%s9928 + $0x388] sm:$0xfe]
      %v11525 = vld [vmem:[%s9928 + $0x390] sm:$0xff]
      %v11526 = vld [vmem:[%s9928 + $0x398] sm:$0xff]
      %v11527 = vld [vmem:[%s9928 + $0x3a0] sm:$0xff]
      %v11528 = vld [vmem:[%s9928 + $0x3a8] sm:$0x1]
      %v11529 = vld [vmem:[%s9928 + $0x3b0] sm:$0x1]
      %v11530 = vld [vmem:[%s9928 + $0x3b8] sm:$0x1]
      %v11531 = vld [vmem:[%s9928 + $0x3d8] sm:$0xfe]
      %v11532 = vld [vmem:[%s9928 + $0x3e0] sm:$0xfe]
      %v11533 = vld [vmem:[%s9928 + $0x3e8] sm:$0xfe]
      %v11534 = vld [vmem:[%s9928 + $0x3f0] sm:$0xff]
      %v11535 = vld [vmem:[%s9928 + $0x3f8] sm:$0xff]
      %v11536 = vld [vmem:[%s9928 + $0x400] sm:$0xff]
      %v11537 = vld [vmem:[%s9928 + $0x408] sm:$0x1]
      %v11538 = vld [vmem:[%s9928 + $0x410] sm:$0x1]
      %v11539 = vld [vmem:[%s9928 + $0x418] sm:$0x1]
      %v11540 = vld [vmem:[%s9928 + $0x438] sm:$0xfe]
      %v11541 = vld [vmem:[%s9928 + $0x440] sm:$0xfe]
      %v11542 = vld [vmem:[%s9928 + $0x448] sm:$0xfe]
      %v11543 = vld [vmem:[%s9928 + $0x450] sm:$0xff]
      %v11544 = vld [vmem:[%s9928 + $0x458] sm:$0xff]
      %v11545 = vld [vmem:[%s9928 + $0x460] sm:$0xff]
      %v11546 = vld [vmem:[%s9928 + $0x468] sm:$0x1]
      %v11547 = vld [vmem:[%s9928 + $0x470] sm:$0x1]
      %v11548 = vld [vmem:[%s9928 + $0x478] sm:$0x1]
      %v11549 = vld [vmem:[%s9928 + $0x498] sm:$0xfe]
      %v11550 = vld [vmem:[%s9928 + $0x4a0] sm:$0xfe]
      %v11551 = vld [vmem:[%s9928 + $0x4a8] sm:$0xfe]
      %v11552 = vld [vmem:[%s9928 + $0x4b0] sm:$0xff]
      %v11553 = vld [vmem:[%s9928 + $0x4b8] sm:$0xff]
      %v11554 = vld [vmem:[%s9928 + $0x4c0] sm:$0xff]
      %v11555 = vld [vmem:[%s9928 + $0x4c8] sm:$0x1]
      %v11556 = vld [vmem:[%s9928 + $0x4d0] sm:$0x1]
      %v11557 = vld [vmem:[%s9928 + $0x4d8] sm:$0x1]
      %v11558 = vld [vmem:[%s9928 + $0x4f8] sm:$0xfe]
      %v11559 = vld [vmem:[%s9928 + $0x500] sm:$0xfe]
      %v11560 = vld [vmem:[%s9928 + $0x508] sm:$0xfe]
      %v11561 = vld [vmem:[%s9928 + $0x510] sm:$0xff]
      %v11562 = vld [vmem:[%s9928 + $0x518] sm:$0xff]
      %v11563 = vld [vmem:[%s9928 + $0x520] sm:$0xff]
      %v11564 = vld [vmem:[%s9928 + $0x528] sm:$0x1]
      %v11565 = vld [vmem:[%s9928 + $0x530] sm:$0x1]
      %v11566 = vld [vmem:[%s9928 + $0x538] sm:$0x1]
      %v11567 = vld [vmem:[%s9928 + $0x558] sm:$0xfe]
      %v11568 = vld [vmem:[%s9928 + $0x560] sm:$0xfe]
      %v11569 = vld [vmem:[%s9928 + $0x568] sm:$0xfe]
      %v11570 = vld [vmem:[%s9928 + $0x570] sm:$0xff]
      %v11571 = vld [vmem:[%s9928 + $0x578] sm:$0xff]
      %v11572 = vld [vmem:[%s9928 + $0x580] sm:$0xff]
      %v11573 = vld [vmem:[%s9928 + $0x588] sm:$0x1]
      %v11574 = vld [vmem:[%s9928 + $0x590] sm:$0x1]
      %v11575 = vld [vmem:[%s9928 + $0x598] sm:$0x1]
      %v11576 = vld [vmem:[%s9928 + $0x5b8] sm:$0xfe]
      %v11577 = vld [vmem:[%s9928 + $0x5c0] sm:$0xfe]
      %v11578 = vld [vmem:[%s9928 + $0x5c8] sm:$0xfe]
      %v11579 = vld [vmem:[%s9928 + $0x5d0] sm:$0xff]
      %v11580 = vld [vmem:[%s9928 + $0x5d8] sm:$0xff]
      %v11581 = vld [vmem:[%s9928 + $0x5e0] sm:$0xff]
      %v11582 = vld [vmem:[%s9928 + $0x5e8] sm:$0x1]
      %v11583 = vld [vmem:[%s9928 + $0x5f0] sm:$0x1]
      %v11584 = vld [vmem:[%s9928 + $0x5f8] sm:$0x1]
      %v11729 = vrot.slane %v11441, 1
      %v11730 = vrot.slane %v11444, 1
      %v11731 = vsel %vm710, %v11729, %v11730
      %v11732 = vrot.slane %v11442, 1
      %v11733 = vrot.slane %v11445, 1
      %v11734 = vsel %vm710, %v11732, %v11733
      %v11735 = vrot.slane %v11443, 1
      %v11736 = vrot.slane %v11446, 1
      %v11737 = vsel %vm710, %v11735, %v11736
      %v11738 = vrot.slane %v11447, 1
      %v11739 = vsel %vm710, %v11730, %v11738
      %v11740 = vrot.slane %v11448, 1
      %v11741 = vsel %vm710, %v11733, %v11740
      %v11742 = vrot.slane %v11449, 1
      %v11743 = vsel %vm710, %v11736, %v11742
      %v11744 = vrot.slane %v11450, 1
      %v11745 = vrot.slane %v11453, 1
      %v11746 = vsel %vm710, %v11744, %v11745
      %v11747 = vrot.slane %v11451, 1
      %v11748 = vrot.slane %v11454, 1
      %v11749 = vsel %vm710, %v11747, %v11748
      %v11750 = vrot.slane %v11452, 1
      %v11751 = vrot.slane %v11455, 1
      %v11752 = vsel %vm710, %v11750, %v11751
      %v11753 = vrot.slane %v11456, 1
      %v11754 = vsel %vm710, %v11745, %v11753
      %v11755 = vrot.slane %v11457, 1
      %v11756 = vsel %vm710, %v11748, %v11755
      %v11757 = vrot.slane %v11458, 1
      %v11758 = vsel %vm710, %v11751, %v11757
      %v11759 = vrot.slane %v11459, 1
      %v11760 = vrot.slane %v11462, 1
      %v11761 = vsel %vm710, %v11759, %v11760
      %v11762 = vrot.slane %v11460, 1
      %v11763 = vrot.slane %v11463, 1
      %v11764 = vsel %vm710, %v11762, %v11763
      %v11765 = vrot.slane %v11461, 1
      %v11766 = vrot.slane %v11464, 1
      %v11767 = vsel %vm710, %v11765, %v11766
      %v11768 = vrot.slane %v11465, 1
      %v11769 = vsel %vm710, %v11760, %v11768
      %v11770 = vrot.slane %v11466, 1
      %v11771 = vsel %vm710, %v11763, %v11770
      %v11772 = vrot.slane %v11467, 1
      %v11773 = vsel %vm710, %v11766, %v11772
      %v11774 = vrot.slane %v11468, 1
      %v11775 = vrot.slane %v11471, 1
      %v11776 = vsel %vm710, %v11774, %v11775
      %v11777 = vrot.slane %v11469, 1
      %v11778 = vrot.slane %v11472, 1
      %v11779 = vsel %vm710, %v11777, %v11778
      %v11780 = vrot.slane %v11470, 1
      %v11781 = vrot.slane %v11473, 1
      %v11782 = vsel %vm710, %v11780, %v11781
      %v11783 = vrot.slane %v11474, 1
      %v11784 = vsel %vm710, %v11775, %v11783
      %v11785 = vrot.slane %v11475, 1
      %v11786 = vsel %vm710, %v11778, %v11785
      %v11787 = vrot.slane %v11476, 1
      %v11788 = vsel %vm710, %v11781, %v11787
      %v11789 = vrot.slane %v11477, 1
      %v11790 = vrot.slane %v11480, 1
      %v11791 = vsel %vm710, %v11789, %v11790
      %v11792 = vrot.slane %v11478, 1
      %v11793 = vrot.slane %v11481, 1
      %v11794 = vsel %vm710, %v11792, %v11793
      %v11795 = vrot.slane %v11479, 1
      %v11796 = vrot.slane %v11482, 1
      %v11797 = vsel %vm710, %v11795, %v11796
      %v11798 = vrot.slane %v11483, 1
      %v11799 = vsel %vm710, %v11790, %v11798
      %v11800 = vrot.slane %v11484, 1
      %v11801 = vsel %vm710, %v11793, %v11800
      %v11802 = vrot.slane %v11485, 1
      %v11803 = vsel %vm710, %v11796, %v11802
      %v11804 = vrot.slane %v11486, 1
      %v11805 = vrot.slane %v11489, 1
      %v11806 = vsel %vm710, %v11804, %v11805
      %v11807 = vrot.slane %v11487, 1
      %v11808 = vrot.slane %v11490, 1
      %v11809 = vsel %vm710, %v11807, %v11808
      %v11810 = vrot.slane %v11488, 1
      %v11811 = vrot.slane %v11491, 1
      %v11812 = vsel %vm710, %v11810, %v11811
      %v11813 = vrot.slane %v11492, 1
      %v11814 = vsel %vm710, %v11805, %v11813
      %v11815 = vrot.slane %v11493, 1
      %v11816 = vsel %vm710, %v11808, %v11815
      %v11817 = vrot.slane %v11494, 1
      %v11818 = vsel %vm710, %v11811, %v11817
      %v11819 = vrot.slane %v11495, 1
      %v11820 = vrot.slane %v11498, 1
      %v11821 = vsel %vm710, %v11819, %v11820
      %v11822 = vrot.slane %v11496, 1
      %v11823 = vrot.slane %v11499, 1
      %v11824 = vsel %vm710, %v11822, %v11823
      %v11825 = vrot.slane %v11497, 1
      %v11826 = vrot.slane %v11500, 1
      %v11827 = vsel %vm710, %v11825, %v11826
      %v11828 = vrot.slane %v11501, 1
      %v11829 = vsel %vm710, %v11820, %v11828
      %v11830 = vrot.slane %v11502, 1
      %v11831 = vsel %vm710, %v11823, %v11830
      %v11832 = vrot.slane %v11503, 1
      %v11833 = vsel %vm710, %v11826, %v11832
      %v11834 = vrot.slane %v11504, 1
      %v11835 = vrot.slane %v11507, 1
      %v11836 = vsel %vm710, %v11834, %v11835
      %v11837 = vrot.slane %v11505, 1
      %v11838 = vrot.slane %v11508, 1
      %v11839 = vsel %vm710, %v11837, %v11838
      %v11840 = vrot.slane %v11506, 1
      %v11841 = vrot.slane %v11509, 1
      %v11842 = vsel %vm710, %v11840, %v11841
      %v11843 = vrot.slane %v11510, 1
      %v11844 = vsel %vm710, %v11835, %v11843
      %v11845 = vrot.slane %v11511, 1
      %v11846 = vsel %vm710, %v11838, %v11845
      %v11847 = vrot.slane %v11512, 1
      %v11848 = vsel %vm710, %v11841, %v11847
      %v11849 = vrot.slane %v11513, 1
      %v11850 = vrot.slane %v11516, 1
      %v11851 = vsel %vm710, %v11849, %v11850
      %v11852 = vrot.slane %v11514, 1
      %v11853 = vrot.slane %v11517, 1
      %v11854 = vsel %vm710, %v11852, %v11853
      %v11855 = vrot.slane %v11515, 1
      %v11856 = vrot.slane %v11518, 1
      %v11857 = vsel %vm710, %v11855, %v11856
      %v11858 = vrot.slane %v11519, 1
      %v11859 = vsel %vm710, %v11850, %v11858
      %v11860 = vrot.slane %v11520, 1
      %v11861 = vsel %vm710, %v11853, %v11860
      %v11862 = vrot.slane %v11521, 1
      %v11863 = vsel %vm710, %v11856, %v11862
      %v11864 = vrot.slane %v11522, 1
      %v11865 = vrot.slane %v11525, 1
      %v11866 = vsel %vm710, %v11864, %v11865
      %v11867 = vrot.slane %v11523, 1
      %v11868 = vrot.slane %v11526, 1
      %v11869 = vsel %vm710, %v11867, %v11868
      %v11870 = vrot.slane %v11524, 1
      %v11871 = vrot.slane %v11527, 1
      %v11872 = vsel %vm710, %v11870, %v11871
      %v11873 = vrot.slane %v11528, 1
      %v11874 = vsel %vm710, %v11865, %v11873
      %v11875 = vrot.slane %v11529, 1
      %v11876 = vsel %vm710, %v11868, %v11875
      %v11877 = vrot.slane %v11530, 1
      %v11878 = vsel %vm710, %v11871, %v11877
      %v11879 = vrot.slane %v11531, 1
      %v11880 = vrot.slane %v11534, 1
      %v11881 = vsel %vm710, %v11879, %v11880
      %v11882 = vrot.slane %v11532, 1
      %v11883 = vrot.slane %v11535, 1
      %v11884 = vsel %vm710, %v11882, %v11883
      %v11885 = vrot.slane %v11533, 1
      %v11886 = vrot.slane %v11536, 1
      %v11887 = vsel %vm710, %v11885, %v11886
      %v11888 = vrot.slane %v11537, 1
      %v11889 = vsel %vm710, %v11880, %v11888
      %v11890 = vrot.slane %v11538, 1
      %v11891 = vsel %vm710, %v11883, %v11890
      %v11892 = vrot.slane %v11539, 1
      %v11893 = vsel %vm710, %v11886, %v11892
      %v11894 = vrot.slane %v11540, 1
      %v11895 = vrot.slane %v11543, 1
      %v11896 = vsel %vm710, %v11894, %v11895
      %v11897 = vrot.slane %v11541, 1
      %v11898 = vrot.slane %v11544, 1
      %v11899 = vsel %vm710, %v11897, %v11898
      %v11900 = vrot.slane %v11542, 1
      %v11901 = vrot.slane %v11545, 1
      %v11902 = vsel %vm710, %v11900, %v11901
      %v11903 = vrot.slane %v11546, 1
      %v11904 = vsel %vm710, %v11895, %v11903
      %v11905 = vrot.slane %v11547, 1
      %v11906 = vsel %vm710, %v11898, %v11905
      %v11907 = vrot.slane %v11548, 1
      %v11908 = vsel %vm710, %v11901, %v11907
      %v11909 = vrot.slane %v11549, 1
      %v11910 = vrot.slane %v11552, 1
      %v11911 = vsel %vm710, %v11909, %v11910
      %v11912 = vrot.slane %v11550, 1
      %v11913 = vrot.slane %v11553, 1
      %v11914 = vsel %vm710, %v11912, %v11913
      %v11915 = vrot.slane %v11551, 1
      %v11916 = vrot.slane %v11554, 1
      %v11917 = vsel %vm710, %v11915, %v11916
      %v11918 = vrot.slane %v11555, 1
      %v11919 = vsel %vm710, %v11910, %v11918
      %v11920 = vrot.slane %v11556, 1
      %v11921 = vsel %vm710, %v11913, %v11920
      %v11922 = vrot.slane %v11557, 1
      %v11923 = vsel %vm710, %v11916, %v11922
      %v11924 = vrot.slane %v11558, 1
      %v11925 = vrot.slane %v11561, 1
      %v11926 = vsel %vm710, %v11924, %v11925
      %v11927 = vrot.slane %v11559, 1
      %v11928 = vrot.slane %v11562, 1
      %v11929 = vsel %vm710, %v11927, %v11928
      %v11930 = vrot.slane %v11560, 1
      %v11931 = vrot.slane %v11563, 1
      %v11932 = vsel %vm710, %v11930, %v11931
      %v11933 = vrot.slane %v11564, 1
      %v11934 = vsel %vm710, %v11925, %v11933
      %v11935 = vrot.slane %v11565, 1
      %v11936 = vsel %vm710, %v11928, %v11935
      %v11937 = vrot.slane %v11566, 1
      %v11938 = vsel %vm710, %v11931, %v11937
      %v11939 = vrot.slane %v11567, 1
      %v11940 = vrot.slane %v11570, 1
      %v11941 = vsel %vm710, %v11939, %v11940
      %v11942 = vrot.slane %v11568, 1
      %v11943 = vrot.slane %v11571, 1
      %v11944 = vsel %vm710, %v11942, %v11943
      %v11945 = vrot.slane %v11569, 1
      %v11946 = vrot.slane %v11572, 1
      %v11947 = vsel %vm710, %v11945, %v11946
      %v11948 = vrot.slane %v11573, 1
      %v11949 = vsel %vm710, %v11940, %v11948
      %v11950 = vrot.slane %v11574, 1
      %v11951 = vsel %vm710, %v11943, %v11950
      %v11952 = vrot.slane %v11575, 1
      %v11953 = vsel %vm710, %v11946, %v11952
      %v11954 = vrot.slane %v11576, 1
      %v11955 = vrot.slane %v11579, 1
      %v11956 = vsel %vm710, %v11954, %v11955
      %v11957 = vrot.slane %v11577, 1
      %v11958 = vrot.slane %v11580, 1
      %v11959 = vsel %vm710, %v11957, %v11958
      %v11960 = vrot.slane %v11578, 1
      %v11961 = vrot.slane %v11581, 1
      %v11962 = vsel %vm710, %v11960, %v11961
      %v11963 = vrot.slane %v11582, 1
      %v11964 = vsel %vm710, %v11955, %v11963
      %v11965 = vrot.slane %v11583, 1
      %v11966 = vsel %vm710, %v11958, %v11965
      %v11967 = vrot.slane %v11584, 1
      %v11968 = vsel %vm710, %v11961, %v11967
      %s12065 = scalar_lea.vmem %s5, 3072
      %v12066 = vld [vmem:[%s12065] sm:$0xff]
      %v12067 = vld [vmem:[%s12065 + $0x8] sm:$0xff]
      %v12068 = vld [vmem:[%s12065 + $0x10] sm:$0xff]
      %v12069 = vld [vmem:[%s12065 + $0x18] sm:$0xff]
      %v12070 = vld [vmem:[%s12065 + $0x20] sm:$0xff]
      %v12071 = vld [vmem:[%s12065 + $0x28] sm:$0xff]
      %v12072 = vld [vmem:[%s12065 + $0x30] sm:$0xff]
      %v12073 = vld [vmem:[%s12065 + $0x38] sm:$0xff]
      %v12074 = vld [vmem:[%s12065 + $0x40] sm:$0xff]
      %v12075 = vld [vmem:[%s12065 + $0x48] sm:$0xff]
      %v12076 = vld [vmem:[%s12065 + $0x50] sm:$0xff]
      %v12077 = vld [vmem:[%s12065 + $0x58] sm:$0xff]
      %v12078 = vld [vmem:[%s12065 + $0x60] sm:$0xff]
      %v12079 = vld [vmem:[%s12065 + $0x68] sm:$0xff]
      %v12080 = vld [vmem:[%s12065 + $0x70] sm:$0xff]
      %v12081 = vld [vmem:[%s12065 + $0x78] sm:$0xff]
      %v12082 = vld [vmem:[%s12065 + $0x80] sm:$0xff]
      %v12083 = vld [vmem:[%s12065 + $0x88] sm:$0xff]
      %v12084 = vld [vmem:[%s12065 + $0x90] sm:$0xff]
      %v12085 = vld [vmem:[%s12065 + $0x98] sm:$0xff]
      %v12086 = vld [vmem:[%s12065 + $0xa0] sm:$0xff]
      %v12087 = vld [vmem:[%s12065 + $0xa8] sm:$0xff]
      %v12088 = vld [vmem:[%s12065 + $0xb0] sm:$0xff]
      %v12089 = vld [vmem:[%s12065 + $0xb8] sm:$0xff]
      %v12090 = vld [vmem:[%s12065 + $0xc0] sm:$0xff]
      %v12091 = vld [vmem:[%s12065 + $0xc8] sm:$0xff]
      %v12092 = vld [vmem:[%s12065 + $0xd0] sm:$0xff]
      %v12093 = vld [vmem:[%s12065 + $0xd8] sm:$0xff]
      %v12094 = vld [vmem:[%s12065 + $0xe0] sm:$0xff]
      %v12095 = vld [vmem:[%s12065 + $0xe8] sm:$0xff]
      %v12096 = vld [vmem:[%s12065 + $0xf0] sm:$0xff]
      %v12097 = vld [vmem:[%s12065 + $0xf8] sm:$0xff]
      %v12098 = vld [vmem:[%s12065 + $0x100] sm:$0xff]
      %v12099 = vld [vmem:[%s12065 + $0x108] sm:$0xff]
      %v12100 = vld [vmem:[%s12065 + $0x110] sm:$0xff]
      %v12101 = vld [vmem:[%s12065 + $0x118] sm:$0xff]
      %v12102 = vld [vmem:[%s12065 + $0x120] sm:$0xff]
      %v12103 = vld [vmem:[%s12065 + $0x128] sm:$0xff]
      %v12104 = vld [vmem:[%s12065 + $0x130] sm:$0xff]
      %v12105 = vld [vmem:[%s12065 + $0x138] sm:$0xff]
      %v12106 = vld [vmem:[%s12065 + $0x140] sm:$0xff]
      %v12107 = vld [vmem:[%s12065 + $0x148] sm:$0xff]
      %v12108 = vld [vmem:[%s12065 + $0x150] sm:$0xff]
      %v12109 = vld [vmem:[%s12065 + $0x158] sm:$0xff]
      %v12110 = vld [vmem:[%s12065 + $0x160] sm:$0xff]
      %v12111 = vld [vmem:[%s12065 + $0x168] sm:$0xff]
      %v12112 = vld [vmem:[%s12065 + $0x170] sm:$0xff]
      %v12113 = vld [vmem:[%s12065 + $0x178] sm:$0xff]
      %12114 = vmatpush.msra.mxu0 %v12081
      %12115 = vmatpush.msra.mxu0 %v12080
      %12116 = vmatpush.msra.mxu0 %v12079
      %12117 = vmatpush.msra.mxu0 %v12078
      %12118 = vmatpush.msra.mxu0 %v12077
      %12119 = vmatpush.msra.mxu0 %v12076
      %12120 = vmatpush.msra.mxu0 %v12075
      %12121 = vmatpush.msra.mxu0 %v12074
      %12122 = vmatpush.msra.mxu0 %v12073
      %12123 = vmatpush.msra.mxu0 %v12072
      %12124 = vmatpush.msra.mxu0 %v12071
      %12125 = vmatpush.msra.mxu0 %v12070
      %12126 = vmatpush.msra.mxu0 %v12069
      %12127 = vmatpush.msra.mxu0 %v12068
      %12128 = vmatpush.msra.mxu0 %v12067
      %12129 = vmatpush.msra.mxu0 %v12066
      %12130 = vmatmul.f32.gmra.mxu0 %v11731
      %v12131 = vpop.f32.mrf.mxu0
      %v12132 = vadd.f32 0.0, %v12131
      %12133 = vmatmul.f32.gmra.mxu0 %v11739
      %v12134 = vpop.f32.mrf.mxu0
      %v12135 = vadd.f32 0.0, %v12134
      %12136 = vmatmul.f32.gmra.mxu0 %v11746
      %v12137 = vpop.f32.mrf.mxu0
      %v12138 = vadd.f32 0.0, %v12137
      %12139 = vmatmul.f32.gmra.mxu0 %v11754
      %v12140 = vpop.f32.mrf.mxu0
      %v12141 = vadd.f32 0.0, %v12140
      %12142 = vmatmul.f32.gmra.mxu0 %v11761
      %v12143 = vpop.f32.mrf.mxu0
      %v12144 = vadd.f32 0.0, %v12143
      %12145 = vmatmul.f32.gmra.mxu0 %v11769
      %v12146 = vpop.f32.mrf.mxu0
      %v12147 = vadd.f32 0.0, %v12146
      %12148 = vmatmul.f32.gmra.mxu0 %v11776
      %v12149 = vpop.f32.mrf.mxu0
      %v12150 = vadd.f32 0.0, %v12149
      %12151 = vmatmul.f32.gmra.mxu0 %v11784
      %v12152 = vpop.f32.mrf.mxu0
      %v12153 = vadd.f32 0.0, %v12152
      %12154 = vmatmul.f32.gmra.mxu0 %v11791
      %v12155 = vpop.f32.mrf.mxu0
      %v12156 = vadd.f32 0.0, %v12155
      %12157 = vmatmul.f32.gmra.mxu0 %v11799
      %v12158 = vpop.f32.mrf.mxu0
      %v12159 = vadd.f32 0.0, %v12158
      %12160 = vmatmul.f32.gmra.mxu0 %v11806
      %v12161 = vpop.f32.mrf.mxu0
      %v12162 = vadd.f32 0.0, %v12161
      %12163 = vmatmul.f32.gmra.mxu0 %v11814
      %v12164 = vpop.f32.mrf.mxu0
      %v12165 = vadd.f32 0.0, %v12164
      %12166 = vmatmul.f32.gmra.mxu0 %v11821
      %v12167 = vpop.f32.mrf.mxu0
      %v12168 = vadd.f32 0.0, %v12167
      %12169 = vmatmul.f32.gmra.mxu0 %v11829
      %v12170 = vpop.f32.mrf.mxu0
      %v12171 = vadd.f32 0.0, %v12170
      %12172 = vmatmul.f32.gmra.mxu0 %v11836
      %v12173 = vpop.f32.mrf.mxu0
      %v12174 = vadd.f32 0.0, %v12173
      %12175 = vmatmul.f32.gmra.mxu0 %v11844
      %v12176 = vpop.f32.mrf.mxu0
      %v12177 = vadd.f32 0.0, %v12176
      %12178 = vmatmul.f32.gmra.mxu0 %v11851
      %v12179 = vpop.f32.mrf.mxu0
      %v12180 = vadd.f32 0.0, %v12179
      %12181 = vmatmul.f32.gmra.mxu0 %v11859
      %v12182 = vpop.f32.mrf.mxu0
      %v12183 = vadd.f32 0.0, %v12182
      %12184 = vmatmul.f32.gmra.mxu0 %v11866
      %v12185 = vpop.f32.mrf.mxu0
      %v12186 = vadd.f32 0.0, %v12185
      %12187 = vmatmul.f32.gmra.mxu0 %v11874
      %v12188 = vpop.f32.mrf.mxu0
      %v12189 = vadd.f32 0.0, %v12188
      %12190 = vmatmul.f32.gmra.mxu0 %v11881
      %v12191 = vpop.f32.mrf.mxu0
      %v12192 = vadd.f32 0.0, %v12191
      %12193 = vmatmul.f32.gmra.mxu0 %v11889
      %v12194 = vpop.f32.mrf.mxu0
      %v12195 = vadd.f32 0.0, %v12194
      %12196 = vmatmul.f32.gmra.mxu0 %v11896
      %v12197 = vpop.f32.mrf.mxu0
      %v12198 = vadd.f32 0.0, %v12197
      %12199 = vmatmul.f32.gmra.mxu0 %v11904
      %v12200 = vpop.f32.mrf.mxu0
      %v12201 = vadd.f32 0.0, %v12200
      %12202 = vmatmul.f32.gmra.mxu0 %v11911
      %v12203 = vpop.f32.mrf.mxu0
      %v12204 = vadd.f32 0.0, %v12203
      %12205 = vmatmul.f32.gmra.mxu0 %v11919
      %v12206 = vpop.f32.mrf.mxu0
      %v12207 = vadd.f32 0.0, %v12206
      %12208 = vmatmul.f32.gmra.mxu0 %v11926
      %v12209 = vpop.f32.mrf.mxu0
      %v12210 = vadd.f32 0.0, %v12209
      %12211 = vmatmul.f32.gmra.mxu0 %v11934
      %v12212 = vpop.f32.mrf.mxu0
      %v12213 = vadd.f32 0.0, %v12212
      %12214 = vmatmul.f32.gmra.mxu0 %v11941
      %v12215 = vpop.f32.mrf.mxu0
      %v12216 = vadd.f32 0.0, %v12215
      %12217 = vmatmul.f32.gmra.mxu0 %v11949
      %v12218 = vpop.f32.mrf.mxu0
      %v12219 = vadd.f32 0.0, %v12218
      %12220 = vmatmul.f32.gmra.mxu0 %v11956
      %v12221 = vpop.f32.mrf.mxu0
      %v12222 = vadd.f32 0.0, %v12221
      %12223 = vmatmul.f32.gmra.mxu0 %v11964
      %v12224 = vpop.f32.mrf.mxu0
      %v12225 = vadd.f32 0.0, %v12224
      %12226 = vdwg.mxu0
      %12227 = vmatpush.msra.mxu0 %v12097
      %12228 = vmatpush.msra.mxu0 %v12096
      %12229 = vmatpush.msra.mxu0 %v12095
      %12230 = vmatpush.msra.mxu0 %v12094
      %12231 = vmatpush.msra.mxu0 %v12093
      %12232 = vmatpush.msra.mxu0 %v12092
      %12233 = vmatpush.msra.mxu0 %v12091
      %12234 = vmatpush.msra.mxu0 %v12090
      %12235 = vmatpush.msra.mxu0 %v12089
      %12236 = vmatpush.msra.mxu0 %v12088
      %12237 = vmatpush.msra.mxu0 %v12087
      %12238 = vmatpush.msra.mxu0 %v12086
      %12239 = vmatpush.msra.mxu0 %v12085
      %12240 = vmatpush.msra.mxu0 %v12084
      %12241 = vmatpush.msra.mxu0 %v12083
      %12242 = vmatpush.msra.mxu0 %v12082
      %12243 = vmatmul.f32.gmra.mxu0 %v11734
      %v12244 = vpop.f32.mrf.mxu0
      %v12245 = vadd.f32 %v12132, %v12244
      %12246 = vmatmul.f32.gmra.mxu0 %v11741
      %v12247 = vpop.f32.mrf.mxu0
      %v12248 = vadd.f32 %v12135, %v12247
      %12249 = vmatmul.f32.gmra.mxu0 %v11749
      %v12250 = vpop.f32.mrf.mxu0
      %v12251 = vadd.f32 %v12138, %v12250
      %12252 = vmatmul.f32.gmra.mxu0 %v11756
      %v12253 = vpop.f32.mrf.mxu0
      %v12254 = vadd.f32 %v12141, %v12253
      %12255 = vmatmul.f32.gmra.mxu0 %v11764
      %v12256 = vpop.f32.mrf.mxu0
      %v12257 = vadd.f32 %v12144, %v12256
      %12258 = vmatmul.f32.gmra.mxu0 %v11771
      %v12259 = vpop.f32.mrf.mxu0
      %v12260 = vadd.f32 %v12147, %v12259
      %12261 = vmatmul.f32.gmra.mxu0 %v11779
      %v12262 = vpop.f32.mrf.mxu0
      %v12263 = vadd.f32 %v12150, %v12262
      %12264 = vmatmul.f32.gmra.mxu0 %v11786
      %v12265 = vpop.f32.mrf.mxu0
      %v12266 = vadd.f32 %v12153, %v12265
      %12267 = vmatmul.f32.gmra.mxu0 %v11794
      %v12268 = vpop.f32.mrf.mxu0
      %v12269 = vadd.f32 %v12156, %v12268
      %12270 = vmatmul.f32.gmra.mxu0 %v11801
      %v12271 = vpop.f32.mrf.mxu0
      %v12272 = vadd.f32 %v12159, %v12271
      %12273 = vmatmul.f32.gmra.mxu0 %v11809
      %v12274 = vpop.f32.mrf.mxu0
      %v12275 = vadd.f32 %v12162, %v12274
      %12276 = vmatmul.f32.gmra.mxu0 %v11816
      %v12277 = vpop.f32.mrf.mxu0
      %v12278 = vadd.f32 %v12165, %v12277
      %12279 = vmatmul.f32.gmra.mxu0 %v11824
      %v12280 = vpop.f32.mrf.mxu0
      %v12281 = vadd.f32 %v12168, %v12280
      %12282 = vmatmul.f32.gmra.mxu0 %v11831
      %v12283 = vpop.f32.mrf.mxu0
      %v12284 = vadd.f32 %v12171, %v12283
      %12285 = vmatmul.f32.gmra.mxu0 %v11839
      %v12286 = vpop.f32.mrf.mxu0
      %v12287 = vadd.f32 %v12174, %v12286
      %12288 = vmatmul.f32.gmra.mxu0 %v11846
      %v12289 = vpop.f32.mrf.mxu0
      %v12290 = vadd.f32 %v12177, %v12289
      %12291 = vmatmul.f32.gmra.mxu0 %v11854
      %v12292 = vpop.f32.mrf.mxu0
      %v12293 = vadd.f32 %v12180, %v12292
      %12294 = vmatmul.f32.gmra.mxu0 %v11861
      %v12295 = vpop.f32.mrf.mxu0
      %v12296 = vadd.f32 %v12183, %v12295
      %12297 = vmatmul.f32.gmra.mxu0 %v11869
      %v12298 = vpop.f32.mrf.mxu0
      %v12299 = vadd.f32 %v12186, %v12298
      %12300 = vmatmul.f32.gmra.mxu0 %v11876
      %v12301 = vpop.f32.mrf.mxu0
      %v12302 = vadd.f32 %v12189, %v12301
      %12303 = vmatmul.f32.gmra.mxu0 %v11884
      %v12304 = vpop.f32.mrf.mxu0
      %v12305 = vadd.f32 %v12192, %v12304
      %12306 = vmatmul.f32.gmra.mxu0 %v11891
      %v12307 = vpop.f32.mrf.mxu0
      %v12308 = vadd.f32 %v12195, %v12307
      %12309 = vmatmul.f32.gmra.mxu0 %v11899
      %v12310 = vpop.f32.mrf.mxu0
      %v12311 = vadd.f32 %v12198, %v12310
      %12312 = vmatmul.f32.gmra.mxu0 %v11906
      %v12313 = vpop.f32.mrf.mxu0
      %v12314 = vadd.f32 %v12201, %v12313
      %12315 = vmatmul.f32.gmra.mxu0 %v11914
      %v12316 = vpop.f32.mrf.mxu0
      %v12317 = vadd.f32 %v12204, %v12316
      %12318 = vmatmul.f32.gmra.mxu0 %v11921
      %v12319 = vpop.f32.mrf.mxu0
      %v12320 = vadd.f32 %v12207, %v12319
      %12321 = vmatmul.f32.gmra.mxu0 %v11929
      %v12322 = vpop.f32.mrf.mxu0
      %v12323 = vadd.f32 %v12210, %v12322
      %12324 = vmatmul.f32.gmra.mxu0 %v11936
      %v12325 = vpop.f32.mrf.mxu0
      %v12326 = vadd.f32 %v12213, %v12325
      %12327 = vmatmul.f32.gmra.mxu0 %v11944
      %v12328 = vpop.f32.mrf.mxu0
      %v12329 = vadd.f32 %v12216, %v12328
      %12330 = vmatmul.f32.gmra.mxu0 %v11951
      %v12331 = vpop.f32.mrf.mxu0
      %v12332 = vadd.f32 %v12219, %v12331
      %12333 = vmatmul.f32.gmra.mxu0 %v11959
      %v12334 = vpop.f32.mrf.mxu0
      %v12335 = vadd.f32 %v12222, %v12334
      %12336 = vmatmul.f32.gmra.mxu0 %v11966
      %v12337 = vpop.f32.mrf.mxu0
      %v12338 = vadd.f32 %v12225, %v12337
      %12339 = vdwg.mxu0
      %12340 = vmatpush.msra.mxu0 %v12113
      %12341 = vmatpush.msra.mxu0 %v12112
      %12342 = vmatpush.msra.mxu0 %v12111
      %12343 = vmatpush.msra.mxu0 %v12110
      %12344 = vmatpush.msra.mxu0 %v12109
      %12345 = vmatpush.msra.mxu0 %v12108
      %12346 = vmatpush.msra.mxu0 %v12107
      %12347 = vmatpush.msra.mxu0 %v12106
      %12348 = vmatpush.msra.mxu0 %v12105
      %12349 = vmatpush.msra.mxu0 %v12104
      %12350 = vmatpush.msra.mxu0 %v12103
      %12351 = vmatpush.msra.mxu0 %v12102
      %12352 = vmatpush.msra.mxu0 %v12101
      %12353 = vmatpush.msra.mxu0 %v12100
      %12354 = vmatpush.msra.mxu0 %v12099
      %12355 = vmatpush.msra.mxu0 %v12098
      %12356 = vmatmul.f32.gmra.mxu0 %v11737
      %v12357 = vpop.f32.mrf.mxu0
      %v12358 = vadd.f32 %v12245, %v12357
      %12359 = vmatmul.f32.gmra.mxu0 %v11743
      %v12360 = vpop.f32.mrf.mxu0
      %v12361 = vadd.f32 %v12248, %v12360
      %12362 = vmatmul.f32.gmra.mxu0 %v11752
      %v12363 = vpop.f32.mrf.mxu0
      %v12364 = vadd.f32 %v12251, %v12363
      %12365 = vmatmul.f32.gmra.mxu0 %v11758
      %v12366 = vpop.f32.mrf.mxu0
      %v12367 = vadd.f32 %v12254, %v12366
      %12368 = vmatmul.f32.gmra.mxu0 %v11767
      %v12369 = vpop.f32.mrf.mxu0
      %v12370 = vadd.f32 %v12257, %v12369
      %12371 = vmatmul.f32.gmra.mxu0 %v11773
      %v12372 = vpop.f32.mrf.mxu0
      %v12373 = vadd.f32 %v12260, %v12372
      %12374 = vmatmul.f32.gmra.mxu0 %v11782
      %v12375 = vpop.f32.mrf.mxu0
      %v12376 = vadd.f32 %v12263, %v12375
      %12377 = vmatmul.f32.gmra.mxu0 %v11788
      %v12378 = vpop.f32.mrf.mxu0
      %v12379 = vadd.f32 %v12266, %v12378
      %12380 = vmatmul.f32.gmra.mxu0 %v11797
      %v12381 = vpop.f32.mrf.mxu0
      %v12382 = vadd.f32 %v12269, %v12381
      %12383 = vmatmul.f32.gmra.mxu0 %v11803
      %v12384 = vpop.f32.mrf.mxu0
      %v12385 = vadd.f32 %v12272, %v12384
      %12386 = vmatmul.f32.gmra.mxu0 %v11812
      %v12387 = vpop.f32.mrf.mxu0
      %v12388 = vadd.f32 %v12275, %v12387
      %12389 = vmatmul.f32.gmra.mxu0 %v11818
      %v12390 = vpop.f32.mrf.mxu0
      %v12391 = vadd.f32 %v12278, %v12390
      %12392 = vmatmul.f32.gmra.mxu0 %v11827
      %v12393 = vpop.f32.mrf.mxu0
      %v12394 = vadd.f32 %v12281, %v12393
      %12395 = vmatmul.f32.gmra.mxu0 %v11833
      %v12396 = vpop.f32.mrf.mxu0
      %v12397 = vadd.f32 %v12284, %v12396
      %12398 = vmatmul.f32.gmra.mxu0 %v11842
      %v12399 = vpop.f32.mrf.mxu0
      %v12400 = vadd.f32 %v12287, %v12399
      %12401 = vmatmul.f32.gmra.mxu0 %v11848
      %v12402 = vpop.f32.mrf.mxu0
      %v12403 = vadd.f32 %v12290, %v12402
      %12404 = vmatmul.f32.gmra.mxu0 %v11857
      %v12405 = vpop.f32.mrf.mxu0
      %v12406 = vadd.f32 %v12293, %v12405
      %12407 = vmatmul.f32.gmra.mxu0 %v11863
      %v12408 = vpop.f32.mrf.mxu0
      %v12409 = vadd.f32 %v12296, %v12408
      %12410 = vmatmul.f32.gmra.mxu0 %v11872
      %v12411 = vpop.f32.mrf.mxu0
      %v12412 = vadd.f32 %v12299, %v12411
      %12413 = vmatmul.f32.gmra.mxu0 %v11878
      %v12414 = vpop.f32.mrf.mxu0
      %v12415 = vadd.f32 %v12302, %v12414
      %12416 = vmatmul.f32.gmra.mxu0 %v11887
      %v12417 = vpop.f32.mrf.mxu0
      %v12418 = vadd.f32 %v12305, %v12417
      %12419 = vmatmul.f32.gmra.mxu0 %v11893
      %v12420 = vpop.f32.mrf.mxu0
      %v12421 = vadd.f32 %v12308, %v12420
      %12422 = vmatmul.f32.gmra.mxu0 %v11902
      %v12423 = vpop.f32.mrf.mxu0
      %v12424 = vadd.f32 %v12311, %v12423
      %12425 = vmatmul.f32.gmra.mxu0 %v11908
      %v12426 = vpop.f32.mrf.mxu0
      %v12427 = vadd.f32 %v12314, %v12426
      %12428 = vmatmul.f32.gmra.mxu0 %v11917
      %v12429 = vpop.f32.mrf.mxu0
      %v12430 = vadd.f32 %v12317, %v12429
      %12431 = vmatmul.f32.gmra.mxu0 %v11923
      %v12432 = vpop.f32.mrf.mxu0
      %v12433 = vadd.f32 %v12320, %v12432
      %12434 = vmatmul.f32.gmra.mxu0 %v11932
      %v12435 = vpop.f32.mrf.mxu0
      %v12436 = vadd.f32 %v12323, %v12435
      %12437 = vmatmul.f32.gmra.mxu0 %v11938
      %v12438 = vpop.f32.mrf.mxu0
      %v12439 = vadd.f32 %v12326, %v12438
      %12440 = vmatmul.f32.gmra.mxu0 %v11947
      %v12441 = vpop.f32.mrf.mxu0
      %v12442 = vadd.f32 %v12329, %v12441
      %12443 = vmatmul.f32.gmra.mxu0 %v11953
      %v12444 = vpop.f32.mrf.mxu0
      %v12445 = vadd.f32 %v12332, %v12444
      %12446 = vmatmul.f32.gmra.mxu0 %v11962
      %v12447 = vpop.f32.mrf.mxu0
      %v12448 = vadd.f32 %v12335, %v12447
      %12449 = vmatmul.f32.gmra.mxu0 %v11968
      %v12450 = vpop.f32.mrf.mxu0
      %v12451 = vadd.f32 %v12338, %v12450
      %12452 = vdwg.mxu0
      %v12453 = vadd.f32 %v11409, %v12358
      %v12454 = vadd.f32 %v11410, %v12361
      %v12455 = vadd.f32 %v11411, %v12364
      %v12456 = vadd.f32 %v11412, %v12367
      %v12457 = vadd.f32 %v11413, %v12370
      %v12458 = vadd.f32 %v11414, %v12373
      %v12459 = vadd.f32 %v11415, %v12376
      %v12460 = vadd.f32 %v11416, %v12379
      %v12461 = vadd.f32 %v11417, %v12382
      %v12462 = vadd.f32 %v11418, %v12385
      %v12463 = vadd.f32 %v11419, %v12388
      %v12464 = vadd.f32 %v11420, %v12391
      %v12465 = vadd.f32 %v11421, %v12394
      %v12466 = vadd.f32 %v11422, %v12397
      %v12467 = vadd.f32 %v11423, %v12400
      %v12468 = vadd.f32 %v11424, %v12403
      %v12469 = vadd.f32 %v11425, %v12406
      %v12470 = vadd.f32 %v11426, %v12409
      %v12471 = vadd.f32 %v11427, %v12412
      %v12472 = vadd.f32 %v11428, %v12415
      %v12473 = vadd.f32 %v11429, %v12418
      %v12474 = vadd.f32 %v11430, %v12421
      %v12475 = vadd.f32 %v11431, %v12424
      %v12476 = vadd.f32 %v11432, %v12427
      %v12477 = vadd.f32 %v11433, %v12430
      %v12478 = vadd.f32 %v11434, %v12433
      %v12479 = vadd.f32 %v11435, %v12436
      %v12480 = vadd.f32 %v11436, %v12439
      %v12481 = vadd.f32 %v11437, %v12442
      %v12482 = vadd.f32 %v11438, %v12445
      %v12483 = vadd.f32 %v11439, %v12448
      %v12484 = vadd.f32 %v11440, %v12451
      %v12485 = vld [vmem:[%s6] sm:$0x1]
      %v12487 = vperm.slane %v12485, 0
      %v12489 = vadd.f32 %v12453, %v12487
      %v12490 = vadd.f32 %v12454, %v12487
      %v12491 = vadd.f32 %v12455, %v12487
      %v12492 = vadd.f32 %v12456, %v12487
      %v12493 = vadd.f32 %v12457, %v12487
      %v12494 = vadd.f32 %v12458, %v12487
      %v12495 = vadd.f32 %v12459, %v12487
      %v12496 = vadd.f32 %v12460, %v12487
      %v12497 = vadd.f32 %v12461, %v12487
      %v12498 = vadd.f32 %v12462, %v12487
      %v12499 = vadd.f32 %v12463, %v12487
      %v12500 = vadd.f32 %v12464, %v12487
      %v12501 = vadd.f32 %v12465, %v12487
      %v12502 = vadd.f32 %v12466, %v12487
      %v12503 = vadd.f32 %v12467, %v12487
      %v12504 = vadd.f32 %v12468, %v12487
      %v12505 = vadd.f32 %v12469, %v12487
      %v12506 = vadd.f32 %v12470, %v12487
      %v12507 = vadd.f32 %v12471, %v12487
      %v12508 = vadd.f32 %v12472, %v12487
      %v12509 = vadd.f32 %v12473, %v12487
      %v12510 = vadd.f32 %v12474, %v12487
      %v12511 = vadd.f32 %v12475, %v12487
      %v12512 = vadd.f32 %v12476, %v12487
      %v12513 = vadd.f32 %v12477, %v12487
      %v12514 = vadd.f32 %v12478, %v12487
      %v12515 = vadd.f32 %v12479, %v12487
      %v12516 = vadd.f32 %v12480, %v12487
      %v12517 = vadd.f32 %v12481, %v12487
      %v12518 = vadd.f32 %v12482, %v12487
      %v12519 = vadd.f32 %v12483, %v12487
      %v12520 = vadd.f32 %v12484, %v12487
      %vm12521 = vcmask 187392
      %12522 = vst.msk [vmem:[%s318] sm:$0xff] %vm12521, %v12489
      %12523 = vst.msk [vmem:[%s318 + $0x8] sm:$0xff] %vm12521, %v12490
      %12524 = vst.msk [vmem:[%s318 + $0x10] sm:$0xff] %vm12521, %v12491
      %12525 = vst.msk [vmem:[%s318 + $0x18] sm:$0xff] %vm12521, %v12492
      %12526 = vst.msk [vmem:[%s318 + $0x20] sm:$0xff] %vm12521, %v12493
      %12527 = vst.msk [vmem:[%s318 + $0x28] sm:$0xff] %vm12521, %v12494
      %12528 = vst.msk [vmem:[%s318 + $0x30] sm:$0xff] %vm12521, %v12495
      %12529 = vst.msk [vmem:[%s318 + $0x38] sm:$0xff] %vm12521, %v12496
      %12530 = vst.msk [vmem:[%s318 + $0x40] sm:$0xff] %vm12521, %v12497
      %12531 = vst.msk [vmem:[%s318 + $0x48] sm:$0xff] %vm12521, %v12498
      %12532 = vst.msk [vmem:[%s318 + $0x50] sm:$0xff] %vm12521, %v12499
      %12533 = vst.msk [vmem:[%s318 + $0x58] sm:$0xff] %vm12521, %v12500
      %12534 = vst.msk [vmem:[%s318 + $0x60] sm:$0xff] %vm12521, %v12501
      %12535 = vst.msk [vmem:[%s318 + $0x68] sm:$0xff] %vm12521, %v12502
      %12536 = vst.msk [vmem:[%s318 + $0x70] sm:$0xff] %vm12521, %v12503
      %12537 = vst.msk [vmem:[%s318 + $0x78] sm:$0xff] %vm12521, %v12504
      %12538 = vst.msk [vmem:[%s318 + $0x80] sm:$0xff] %vm12521, %v12505
      %12539 = vst.msk [vmem:[%s318 + $0x88] sm:$0xff] %vm12521, %v12506
      %12540 = vst.msk [vmem:[%s318 + $0x90] sm:$0xff] %vm12521, %v12507
      %12541 = vst.msk [vmem:[%s318 + $0x98] sm:$0xff] %vm12521, %v12508
      %12542 = vst.msk [vmem:[%s318 + $0xa0] sm:$0xff] %vm12521, %v12509
      %12543 = vst.msk [vmem:[%s318 + $0xa8] sm:$0xff] %vm12521, %v12510
      %12544 = vst.msk [vmem:[%s318 + $0xb0] sm:$0xff] %vm12521, %v12511
      %12545 = vst.msk [vmem:[%s318 + $0xb8] sm:$0xff] %vm12521, %v12512
      %12546 = vst.msk [vmem:[%s318 + $0xc0] sm:$0xff] %vm12521, %v12513
      %12547 = vst.msk [vmem:[%s318 + $0xc8] sm:$0xff] %vm12521, %v12514
      %12548 = vst.msk [vmem:[%s318 + $0xd0] sm:$0xff] %vm12521, %v12515
      %12549 = vst.msk [vmem:[%s318 + $0xd8] sm:$0xff] %vm12521, %v12516
      %12550 = vst.msk [vmem:[%s318 + $0xe0] sm:$0xff] %vm12521, %v12517
      %12551 = vst.msk [vmem:[%s318 + $0xe8] sm:$0xff] %vm12521, %v12518
      %12552 = vst.msk [vmem:[%s318 + $0xf0] sm:$0xff] %vm12521, %v12519
      %12553 = vst.msk [vmem:[%s318 + $0xf8] sm:$0xff] %vm12521, %v12520
      %p12554 = scmp.lt.s32.totalorder %s20, 1
      %s12555 = scalar_select %p12554, %s20, 1
      %s12556 = smul.addr %s12555, 32
      %s12557 = smul.addr %s12556, 8
      %s12558 = scalar_lea.vmem %s7, %s12557
      %p12559 = scmp.lt.s32.totalorder %s20, 1
      %s12560 = scalar_select %p12559, %s20, 1
      %s12561 = smul.addr %s12560, 32
      %s12562 = smul.addr %s12561, 8
      %s12563 = scalar_lea.vmem %s8, %s12562
      // Predicated region
      $region49: #{tpu_custom_call.1} parent=47 // pred_check
        %p12564 = pneg %p190
      $region50: #{tpu_custom_call.1} parent=47 // pred_check_branch
        %12566 = sbr.rel (%p12564) target = $region52
      $region51: #{tpu_custom_call.1} parent=47 // pred_region
        _
      $region52: #{tpu_custom_call.1} parent=47 // pred_fallthru
        _
      // Predicated region
      $region53: #{tpu_custom_call.1} parent=47 // pred_check
        %p12567 = pneg %p216
      $region54: #{tpu_custom_call.1} parent=47 // pred_check_branch
        %12569 = sbr.rel (%p12567) target = $region56
      $region55: #{tpu_custom_call.1} parent=47 // pred_region
        _
      $region56: #{tpu_custom_call.1} parent=47 // pred_fallthru
        _
    $region48: #{tpu_custom_call.1} parent=5 // pred_fallthru
      _
    %p12570 = scmp.le.s32.totalorder 2, %s15
    // Predicated region
    $region57: #{tpu_custom_call.1} parent=5 // pred_check
      %p12571 = pneg %p12570
    $region58: #{tpu_custom_call.1} parent=5 // pred_check_branch
      %12573 = sbr.rel (%p12571) target = $region60
    $region59: #{tpu_custom_call.1} parent=5 // pred_region
      %s12574 = ssub.s32 %s15, 2
      // Predicated region
      $region61: #{tpu_custom_call.1} parent=59 // pred_check
        %p12575 = pneg %p196
      $region62: #{tpu_custom_call.1} parent=59 // pred_check_branch
        %12577 = sbr.rel (%p12575) target = $region64
      $region63: #{tpu_custom_call.1} parent=59 // pred_region
        %p12578 = scmp.lt.s32.totalorder %s21, 1
        %s12579 = scalar_select %p12578, %s21, 1
        %s12580 = smul.addr %s12579, 32
        %s12581 = smul.addr %s12580, 8
        %s12582 = scalar_lea.vmem %s7, %s12581
      $region64: #{tpu_custom_call.1} parent=59 // pred_fallthru
        _
      // Predicated region
      $region65: #{tpu_custom_call.1} parent=59 // pred_check
        %p12583 = pneg %p222
      $region66: #{tpu_custom_call.1} parent=59 // pred_check_branch
        %12585 = sbr.rel (%p12583) target = $region68
      $region67: #{tpu_custom_call.1} parent=59 // pred_region
        %p12586 = scmp.lt.s32.totalorder %s21, 1
        %s12587 = scalar_select %p12586, %s21, 1
        %s12588 = smul.addr %s12587, 32
        %s12589 = smul.addr %s12588, 8
        %s12590 = scalar_lea.vmem %s8, %s12589
      $region68: #{tpu_custom_call.1} parent=59 // pred_fallthru
        _
    $region60: #{tpu_custom_call.1} parent=5 // pred_fallthru
      _
  $region6: #{tpu_custom_call.1} parent=0 // loop_footer
    %s19 = sadd.s32 1, %s15
  $region7: #{tpu_custom_call.1} parent=0 // loop_footer_branch
    %14 = sbr.rel target = $region3
  $region8: #{tpu_custom_call.1} parent=0 // loop_exit
    _

</llo_original>
